<compile_context>
chip_gen: v5e
topology: v5e:2x2
jax: 0.10.0
libtpu: 0.0.40
codegen_flags: <defaults>
</compile_context>

<pallas_src>
import functools

import jax
import jax.numpy as jnp
from jax.experimental import pallas as pl
from jax.experimental.pallas import tpu as pltpu


# ----------------------------- config ---------------------------------------
class Args:
    char_vocab_size = 50
    char_dim = 8
    char_channel_width = 3
    char_channel_size = 32
    word_dim = 32
    hidden_size = 32          # hidden*2 == char_channel_size + word_dim
    dropout_rate = 0.0


ARGS = Args()
B = 2
C_LEN = 16
Q_LEN = 8
WORD_LEN = 8
WORD_VOCAB = 100


# ----------------------------- kernels --------------------------------------
def _charconv_kernel(p_ref, w_ref, b_ref, o_ref, *, L, N):
    # p_ref: (L*N, KC) patches laid out l-major; one matmul + ReLU, then
    # max-pool over the L contiguous row-blocks of N rows each.
    y = jnp.dot(p_ref[...].astype(jnp.bfloat16), w_ref[...],
                preferred_element_type=jnp.float32) + b_ref[...]
    y = jnp.maximum(y, 0.0)                                    # (L*N, C)
    m = y[0:N]
    for l in range(1, L):                                      # L is static (=6)
        m = jnp.maximum(m, y[l * N:(l + 1) * N])
    o_ref[...] = m                                             # (N, C)


def _highway_kernel(x_ref, wl0, bl0, wg0, bg0, wl1, bl1, wg1, bg1, o_ref):
    # Both highway layers fused; x covers both c and q streams.
    x = x_ref[...]
    for wl, bl, wg, bg in ((wl0, bl0, wg0, bg0), (wl1, bl1, wg1, bg1)):
        xb = x.astype(jnp.bfloat16)
        h = jnp.maximum(
            jnp.dot(xb, wl[...], preferred_element_type=jnp.float32) + bl[...], 0.0)
        g = jax.nn.sigmoid(
            jnp.dot(xb, wg[...], preferred_element_type=jnp.float32) + bg[...])
        x = g * h + (1.0 - g) * x
    o_ref[...] = x


def _bilstm_kernel(x_ref, wih_ref, whh_ref, b_ref, o_ref,
                   pre_scr, h_scr, c_scr, *, T, Bz, H):
    # Fused bidirectional LSTM, single grid point.
    #   x_ref:   (T*Bz, 2D)  lanes [x_t | x_{T-1-t}]
    #   wih_ref: (2D, 8H) bf16 block-diag, columns grouped [i f g o] x [fwd|bwd]
    #   whh_ref: (2H, 8H) bf16 block-diag
    #   b_ref:   (1, 8H) f32
    #   o_ref:   (T, Bz, 2H); [:, :, :H] fwd(t), [:, :, H:] bwd step t (= time T-1-t)
    H2 = 2 * H

    # Phase 1: hoisted input-to-hidden matmul for all timesteps, both directions.
    pre_scr[...] = (jnp.dot(x_ref[...].astype(jnp.bfloat16), wih_ref[...],
                            preferred_element_type=jnp.float32) + b_ref[...])
    h_scr[...] = jnp.zeros_like(h_scr)
    c_scr[...] = jnp.zeros_like(c_scr)

    # Lane mask selecting the tanh (g) gate block; hoisted out of the loop.
    col = jax.lax.broadcasted_iota(jnp.int32, (Bz, 8 * H), 1)
    g_mask = (col >= 4 * H) & (col < 6 * H)

    def step(t, carry):
        pre_t = pre_scr[pl.ds(t * Bz, Bz), :]                  # (Bz, 8H)
        gates = pre_t + jnp.dot(h_scr[...].astype(jnp.bfloat16), whh_ref[...],
                                preferred_element_type=jnp.float32)
        # Full-width activations on the whole vector; pick tanh lanes by mask.
        acts = jnp.where(g_mask, jnp.tanh(gates), jax.nn.sigmoid(gates))
        i_g = acts[:, 0:H2]
        f_g = acts[:, H2:2 * H2]
        g_g = acts[:, 2 * H2:3 * H2]
        o_g = acts[:, 3 * H2:4 * H2]
        c_new = f_g * c_scr[...] + i_g * g_g
        h_new = o_g * jnp.tanh(c_new)
        c_scr[...] = c_new
        h_scr[...] = h_new
        o_ref[t] = h_new
        return carry

    jax.lax.fori_loop(0, T, step, 0, unroll=True)


def _attflow_kernel(c_ref, q_ref, wc_ref, wq_ref, wcq_ref, b_ref, g_ref):
    # Batched over B in one grid point.
    c = c_ref[...]                                             # (B, CL, 2H)
    q = q_ref[...]                                             # (B, QL, 2H)
    s_c = jnp.sum(c * wc_ref[...], axis=-1, keepdims=True)     # (B, CL, 1)
    s_q = jnp.sum(q * wq_ref[...], axis=-1)                    # (B, QL)
    s_cq = jnp.einsum('bid,bjd->bij',
                      (c * wcq_ref[...]).astype(jnp.bfloat16),
                      q.astype(jnp.bfloat16),
                      preferred_element_type=jnp.float32)      # (B, CL, QL)
    s = s_cq + s_c + s_q[:, None, :] + b_ref[...]              # (B, CL, QL)
    a = jax.nn.softmax(s, axis=-1)
    c2q = jnp.einsum('bij,bjd->bid', a.astype(jnp.bfloat16),
                     q.astype(jnp.bfloat16),
                     preferred_element_type=jnp.float32)       # (B, CL, 2H)
    smax = jnp.max(s, axis=-1, keepdims=True)                  # (B, CL, 1)
    b_att = jax.nn.softmax(smax, axis=1)                       # (B, CL, 1)
    q2c = jnp.sum(b_att * c, axis=1, keepdims=True)            # (B, 1, 2H)
    g_ref[...] = jnp.concatenate([c, c2q, c * c2q, c * q2c], axis=-1)


def _outproj_kernel(g_ref, m_ref, m2_ref, wg_ref, wm_ref, wm2_ref, b_ref, o_ref):
    # p_start / p_end computed together: column 0 = start, column 1 = end.
    y = (jnp.dot(g_ref[...].astype(jnp.bfloat16), wg_ref[...],
                 preferred_element_type=jnp.float32)
         + jnp.dot(m_ref[...].astype(jnp.bfloat16), wm_ref[...],
                   preferred_element_type=jnp.float32)
         + jnp.dot(m2_ref[...].astype(jnp.bfloat16), wm2_ref[...],
                   preferred_element_type=jnp.float32)
         + b_ref[...])
    o_ref[...] = y                                             # (M, 2)


# ----------------------------- wrappers -------------------------------------
def char_features(pp, chars):
    # chars: (N, word_len) int32 -> (N, char_channel_size)
    N, WL = chars.shape
    CD = ARGS.char_dim
    Wc = ARGS.char_channel_width
    L = WL - Wc + 1
    emb = pp["char_emb"][chars]                                # (N, WL, CD)  glue gather
    windows = [emb[:, w:w + L, :] for w in range(Wc)]
    patches = jnp.concatenate(windows, axis=-1)                # (N, L, Wc*CD)
    patches = jnp.transpose(patches, (1, 0, 2)).reshape(L * N, Wc * CD)  # l-major
    return pl.pallas_call(
        functools.partial(_charconv_kernel, L=L, N=N),
        out_shape=jax.ShapeDtypeStruct((N, ARGS.char_channel_size), jnp.float32),
    )(patches, pp["char_conv_wb"], pp["char_conv_b"])


def highway_call(x, pp):
    return pl.pallas_call(
        _highway_kernel,
        out_shape=jax.ShapeDtypeStruct(x.shape, jnp.float32),
    )(x, pp["hw_wl0b"], pp["hw_bl0"], pp["hw_wg0b"], pp["hw_bg0"],
      pp["hw_wl1b"], pp["hw_bl1"], pp["hw_wg1b"], pp["hw_bg1"])


def bilstm(x_btd, fused, H):
    # x: (B, T, D) -> (B, T, 2H); batch_first bidirectional LSTM, zero init.
    Bz, T, D = x_btd.shape
    xt = jnp.transpose(x_btd, (1, 0, 2))                       # (T, B, D)
    x_aug = jnp.concatenate([xt, xt[::-1]], axis=-1)           # (T, B, 2D)
    x_flat = x_aug.reshape(T * Bz, 2 * D)
    out = pl.pallas_call(
        functools.partial(_bilstm_kernel, T=T, Bz=Bz, H=H),
        out_shape=jax.ShapeDtypeStruct((T, Bz, 2 * H), jnp.float32),
        scratch_shapes=[pltpu.VMEM((T * Bz, 8 * H), jnp.float32),
                        pltpu.VMEM((Bz, 2 * H), jnp.float32),
                        pltpu.VMEM((Bz, 2 * H), jnp.float32)],
    )(x_flat, fused["wih"], fused["whh"], fused["b"])
    hf = out[:, :, :H]                                         # fwd, time order
    hb = out[::-1, :, H:]                                      # bwd, flip to time order
    h = jnp.concatenate([hf, hb], axis=-1)                     # (T, B, 2H)
    return jnp.transpose(h, (1, 0, 2))                         # (B, T, 2H)


def att_flow_call(c, q, pp):
    Bz, CL, H2 = c.shape
    return pl.pallas_call(
        _attflow_kernel,
        out_shape=jax.ShapeDtypeStruct((Bz, CL, 4 * H2), jnp.float32),
    )(c, q, pp["att_wc"], pp["att_wq"], pp["att_wcq"], pp["att_b_total"])


def outproj_call(g_flat, m_flat, m2_flat, pp):
    M = g_flat.shape[0]
    return pl.pallas_call(
        _outproj_kernel,
        out_shape=jax.ShapeDtypeStruct((M, 2), jnp.float32),
    )(g_flat, m_flat, m2_flat, pp["out_wg"], pp["out_wm"], pp["out_wm2"], pp["out_b"])


# ----------------------------- model ----------------------------------------
def bidaf_forward(pp, c_char, q_char, c_word, q_word):
    H = ARGS.hidden_size
    Bz, CL, WL = c_char.shape
    QL = q_char.shape[1]

    # char CNN: both streams in one launch
    chars = jnp.concatenate(
        [c_char.reshape(Bz * CL, WL), q_char.reshape(Bz * QL, WL)], axis=0)
    feat = char_features(pp, chars)                            # (Bz*(CL+QL), C)
    c_ch = feat[:Bz * CL].reshape(Bz, CL, ARGS.char_channel_size)
    q_ch = feat[Bz * CL:].reshape(Bz, QL, ARGS.char_channel_size)

    # word embeddings (glue gather)
    c_w = pp["word_emb"][c_word]
    q_w = pp["word_emb"][q_word]

    # highway: both layers, both streams, one launch
    xc = jnp.concatenate([c_ch, c_w], axis=-1).reshape(Bz * CL, 2 * H)
    xq = jnp.concatenate([q_ch, q_w], axis=-1).reshape(Bz * QL, 2 * H)
    hw = highway_call(jnp.concatenate([xc, xq], axis=0), pp)
    c = hw[:Bz * CL].reshape(Bz, CL, 2 * H)
    q = hw[Bz * CL:].reshape(Bz, QL, 2 * H)

    # contextual BiLSTMs (shared params)
    c = bilstm(c, pp["ctx_lstm"], H)
    q = bilstm(q, pp["ctx_lstm"], H)

    # attention flow
    g = att_flow_call(c, q, pp)                                # (Bz, CL, 8H)

    # modeling + output LSTMs
    m = bilstm(bilstm(g, pp["mod_lstm1"], H), pp["mod_lstm2"], H)
    m2 = bilstm(m, pp["out_lstm"], H)

    # fused output projections
    g_flat = g.reshape(Bz * CL, 8 * H)
    m_flat = m.reshape(Bz * CL, 2 * H)
    m2_flat = m2.reshape(Bz * CL, 2 * H)
    logits = outproj_call(g_flat, m_flat, m2_flat, pp)         # (Bz*CL, 2)
    p_start = logits[:, 0].reshape(Bz, CL)
    p_end = logits[:, 1].reshape(Bz, CL)
    return p_start, p_end


# ----------------------------- params ---------------------------------------
def init_params(key):
    H = ARGS.hidden_size
    H2 = 2 * H
    keys = iter(jax.random.split(key, 64))

    def u(shape, scale):
        return jax.random.uniform(next(keys), shape, jnp.float32, -scale, scale)

    p = {}
    char_emb = u((ARGS.char_vocab_size, ARGS.char_dim), 0.001)
    p["char_emb"] = char_emb.at[1].set(0.0)                    # padding_idx=1
    p["word_emb"] = u((WORD_VOCAB, ARGS.word_dim), 0.5)

    KC = ARGS.char_channel_width * ARGS.char_dim
    sc = 1.0 / (KC ** 0.5)
    p["char_conv_w"] = u((KC, ARGS.char_channel_size), sc)
    p["char_conv_b"] = u((1, ARGS.char_channel_size), sc)

    sh = 1.0 / (H2 ** 0.5)
    for i in range(2):
        p[f"hw_wl{i}"] = u((H2, H2), sh)
        p[f"hw_bl{i}"] = u((1, H2), sh)
        p[f"hw_wg{i}"] = u((H2, H2), sh)
        p[f"hw_bg{i}"] = u((1, H2), sh)

    def lstm_params(D):
        s = 1.0 / (H ** 0.5)
        return {
            "wih_f": u((D, 4 * H), s), "whh_f": u((H, 4 * H), s), "b_f": u((1, 4 * H), s),
            "wih_b": u((D, 4 * H), s), "whh_b": u((H, 4 * H), s), "b_b": u((1, 4 * H), s),
        }

    p["ctx_lstm"] = lstm_params(H2)
    p["mod_lstm1"] = lstm_params(8 * H)
    p["mod_lstm2"] = lstm_params(H2)
    p["out_lstm"] = lstm_params(H2)

    p["att_wc"] = u((1, H2), sh); p["att_bc"] = u((1, 1), sh)
    p["att_wq"] = u((1, H2), sh); p["att_bq"] = u((1, 1), sh)
    p["att_wcq"] = u((1, H2), sh); p["att_bcq"] = u((1, 1), sh)

    s8 = 1.0 / ((8 * H) ** 0.5)
    p["ps_wg"] = u((8 * H, 1), s8); p["ps_bg"] = u((1, 1), s8)
    p["ps_wm"] = u((H2, 1), sh);    p["ps_bm"] = u((1, 1), sh)
    p["pe_wg"] = u((8 * H, 1), s8); p["pe_bg"] = u((1, 1), s8)
    p["pe_wm"] = u((H2, 1), sh);    p["pe_bm"] = u((1, 1), sh)
    return p


def _blockify(wf, wb, H):
    # (Df, 4H), (Db, 4H) -> (Df+Db, 8H) block-diagonal with columns grouped
    # per-gate as [i_f i_b | f_f f_b | g_f g_b | o_f o_b].
    Df, Db = wf.shape[0], wb.shape[0]
    zf = jnp.zeros((Df, H), jnp.float32)
    zb = jnp.zeros((Db, H), jnp.float32)
    cols = []
    for k in range(4):
        cols.append(jnp.concatenate([wf[:, k * H:(k + 1) * H], zb], axis=0))
        cols.append(jnp.concatenate([zf, wb[:, k * H:(k + 1) * H]], axis=0))
    return jnp.concatenate(cols, axis=1)


def _biascat(bf, bb, H):
    parts = []
    for k in range(4):
        parts.append(bf[:, k * H:(k + 1) * H])
        parts.append(bb[:, k * H:(k + 1) * H])
    return jnp.concatenate(parts, axis=1)


def prepare_params(p):
    # One-time fusion / re-layout / bf16 cast of weights (done eagerly once).
    H = ARGS.hidden_size
    pp = dict(p)
    pp["char_conv_wb"] = p["char_conv_w"].astype(jnp.bfloat16)
    for i in range(2):
        pp[f"hw_wl{i}b"] = p[f"hw_wl{i}"].astype(jnp.bfloat16)
        pp[f"hw_wg{i}b"] = p[f"hw_wg{i}"].astype(jnp.bfloat16)
    for name in ("ctx_lstm", "mod_lstm1", "mod_lstm2", "out_lstm"):
        lp = p[name]
        pp[name] = {
            "wih": _blockify(lp["wih_f"], lp["wih_b"], H).astype(jnp.bfloat16),
            "whh": _blockify(lp["whh_f"], lp["whh_b"], H).astype(jnp.bfloat16),
            "b": _biascat(lp["b_f"], lp["b_b"], H),
        }
    pp["att_b_total"] = p["att_bc"] + p["att_bq"] + p["att_bcq"]          # (1, 1)
    zH2 = jnp.zeros((2 * H, 1), jnp.float32)
    pp["out_wg"] = jnp.concatenate([p["ps_wg"], p["pe_wg"]], axis=1).astype(jnp.bfloat16)
    pp["out_wm"] = jnp.concatenate([p["ps_wm"], zH2], axis=1).astype(jnp.bfloat16)
    pp["out_wm2"] = jnp.concatenate([zH2, p["pe_wm"]], axis=1).astype(jnp.bfloat16)
    pp["out_b"] = jnp.concatenate(
        [p["ps_bg"] + p["ps_bm"], p["pe_bg"] + p["pe_bm"]], axis=1)       # (1, 2)
    return pp


# ----------------------------- main ------------------------------------------
if __name__ == "__main__":
    key = jax.random.PRNGKey(0)
    kp, k1, k2, k3, k4 = jax.random.split(key, 5)
    params = init_params(kp)
    pp = prepare_params(params)

    c_char = jax.random.randint(k1, (B, C_LEN, WORD_LEN), 0, ARGS.char_vocab_size)
    q_char = jax.random.randint(k2, (B, Q_LEN, WORD_LEN), 0, ARGS.char_vocab_size)
    c_word = jax.random.randint(k3, (B, C_LEN), 0, WORD_VOCAB)
    q_word = jax.random.randint(k4, (B, Q_LEN), 0, WORD_VOCAB)

    p_start, p_end = jax.jit(bidaf_forward)(pp, c_char, q_char, c_word, q_word)
    jax.block_until_ready((p_start, p_end))
    assert p_start.shape == (B, C_LEN) and p_end.shape == (B, C_LEN)
    assert bool(jnp.all(jnp.isfinite(p_start))) and bool(jnp.all(jnp.isfinite(p_end)))
    print("KERNEL_OK")
</pallas_src>

<mosaic_0001>
module attributes {stable_mosaic.version = 11 : i64} {
  func.func @_charconv_kernel(%arg0: memref<288x24xf32, #tpu.memory_space<vmem>>, %arg1: memref<24x32xbf16, #tpu.memory_space<vmem>>, %arg2: memref<1x32xf32, #tpu.memory_space<vmem>>, %arg3: memref<48x32xf32, #tpu.memory_space<vmem>>) attributes {dimension_semantics = [], scalar_prefetch = 0 : i64, scratch_operands = 0 : i64, tpu.core_type = #tpu.core_type<tc>} {
    %c0 = arith.constant 0 : index
    %c0_0 = arith.constant 0 : index
    %0 = vector.load %arg0[%c0, %c0_0] : memref<288x24xf32, #tpu.memory_space<vmem>>, vector<288x24xf32>
    %1 = arith.truncf %0 : vector<288x24xf32> to vector<288x24xbf16>
    %c0_1 = arith.constant 0 : index
    %c0_2 = arith.constant 0 : index
    %2 = vector.load %arg1[%c0_1, %c0_2] : memref<24x32xbf16, #tpu.memory_space<vmem>>, vector<24x32xbf16>
    %cst = arith.constant dense<0.000000e+00> : vector<288x32xf32>
    %3 = tpu.matmul %1, %2, %cst {dimension_numbers = #tpu.dot_dimension_numbers<[1], [0], [0], [1], [0, 0, 1, 1], [], []>} : vector<288x24xbf16>, vector<24x32xbf16>, vector<288x32xf32> -> vector<288x32xf32>
    %c0_3 = arith.constant 0 : index
    %c0_4 = arith.constant 0 : index
    %4 = vector.load %arg2[%c0_3, %c0_4] : memref<1x32xf32, #tpu.memory_space<vmem>>, vector<1x32xf32>
    %5 = vector.broadcast %4 : vector<1x32xf32> to vector<288x32xf32>
    %6 = arith.addf %3, %5 : vector<288x32xf32>
    %cst_5 = arith.constant 0.000000e+00 : f32
    %7 = vector.broadcast %cst_5 : f32 to vector<288x32xf32>
    %8 = arith.maximumf %6, %7 : vector<288x32xf32>
    %9 = vector.extract_strided_slice %8 {offsets = [0, 0], sizes = [48, 32], strides = [1, 1]} : vector<288x32xf32> to vector<48x32xf32>
    %10 = vector.extract_strided_slice %8 {offsets = [48, 0], sizes = [48, 32], strides = [1, 1]} : vector<288x32xf32> to vector<48x32xf32>
    %11 = arith.maximumf %9, %10 : vector<48x32xf32>
    %12 = vector.extract_strided_slice %8 {offsets = [96, 0], sizes = [48, 32], strides = [1, 1]} : vector<288x32xf32> to vector<48x32xf32>
    %13 = arith.maximumf %11, %12 : vector<48x32xf32>
    %14 = vector.extract_strided_slice %8 {offsets = [144, 0], sizes = [48, 32], strides = [1, 1]} : vector<288x32xf32> to vector<48x32xf32>
    %15 = arith.maximumf %13, %14 : vector<48x32xf32>
    %16 = vector.extract_strided_slice %8 {offsets = [192, 0], sizes = [48, 32], strides = [1, 1]} : vector<288x32xf32> to vector<48x32xf32>
    %17 = arith.maximumf %15, %16 : vector<48x32xf32>
    %18 = vector.extract_strided_slice %8 {offsets = [240, 0], sizes = [48, 32], strides = [1, 1]} : vector<288x32xf32> to vector<48x32xf32>
    %19 = arith.maximumf %17, %18 : vector<48x32xf32>
    %c0_6 = arith.constant 0 : index
    %c0_7 = arith.constant 0 : index
    %20 = vector.load %arg3[%c0_6, %c0_7] : memref<48x32xf32, #tpu.memory_space<vmem>>, vector<48x32xf32>
    tpu.vector_store %arg3[%c0_6, %c0_7], %19 {strides = array<i32>} : memref<48x32xf32, #tpu.memory_space<vmem>>, vector<48x32xf32>,
    return
  }
}

module attributes {stable_mosaic.version = 11 : i64} {
  func.func @_highway_kernel(%arg0: memref<48x64xf32, #tpu.memory_space<vmem>>, %arg1: memref<64x64xbf16, #tpu.memory_space<vmem>>, %arg2: memref<1x64xf32, #tpu.memory_space<vmem>>, %arg3: memref<64x64xbf16, #tpu.memory_space<vmem>>, %arg4: memref<1x64xf32, #tpu.memory_space<vmem>>, %arg5: memref<64x64xbf16, #tpu.memory_space<vmem>>, %arg6: memref<1x64xf32, #tpu.memory_space<vmem>>, %arg7: memref<64x64xbf16, #tpu.memory_space<vmem>>, %arg8: memref<1x64xf32, #tpu.memory_space<vmem>>, %arg9: memref<48x64xf32, #tpu.memory_space<vmem>>) attributes {dimension_semantics = [], scalar_prefetch = 0 : i64, scratch_operands = 0 : i64, tpu.core_type = #tpu.core_type<tc>} {
    %c0 = arith.constant 0 : index
    %c0_0 = arith.constant 0 : index
    %0 = vector.load %arg0[%c0, %c0_0] : memref<48x64xf32, #tpu.memory_space<vmem>>, vector<48x64xf32>
    %1 = arith.truncf %0 : vector<48x64xf32> to vector<48x64xbf16>
    %c0_1 = arith.constant 0 : index
    %c0_2 = arith.constant 0 : index
    %2 = vector.load %arg1[%c0_1, %c0_2] : memref<64x64xbf16, #tpu.memory_space<vmem>>, vector<64x64xbf16>
    %cst = arith.constant dense<0.000000e+00> : vector<48x64xf32>
    %3 = tpu.matmul %1, %2, %cst {dimension_numbers = #tpu.dot_dimension_numbers<[1], [0], [0], [1], [0, 0, 1, 1], [], []>} : vector<48x64xbf16>, vector<64x64xbf16>, vector<48x64xf32> -> vector<48x64xf32>
    %c0_3 = arith.constant 0 : index
    %c0_4 = arith.constant 0 : index
    %4 = vector.load %arg2[%c0_3, %c0_4] : memref<1x64xf32, #tpu.memory_space<vmem>>, vector<1x64xf32>
    %5 = vector.broadcast %4 : vector<1x64xf32> to vector<48x64xf32>
    %6 = arith.addf %3, %5 : vector<48x64xf32>
    %cst_5 = arith.constant 0.000000e+00 : f32
    %7 = vector.broadcast %cst_5 : f32 to vector<48x64xf32>
    %8 = arith.maximumf %6, %7 : vector<48x64xf32>
    %c0_6 = arith.constant 0 : index
    %c0_7 = arith.constant 0 : index
    %9 = vector.load %arg3[%c0_6, %c0_7] : memref<64x64xbf16, #tpu.memory_space<vmem>>, vector<64x64xbf16>
    %cst_8 = arith.constant dense<0.000000e+00> : vector<48x64xf32>
    %10 = tpu.matmul %1, %9, %cst_8 {dimension_numbers = #tpu.dot_dimension_numbers<[1], [0], [0], [1], [0, 0, 1, 1], [], []>} : vector<48x64xbf16>, vector<64x64xbf16>, vector<48x64xf32> -> vector<48x64xf32>
    %c0_9 = arith.constant 0 : index
    %c0_10 = arith.constant 0 : index
    %11 = vector.load %arg4[%c0_9, %c0_10] : memref<1x64xf32, #tpu.memory_space<vmem>>, vector<1x64xf32>
    %12 = vector.broadcast %11 : vector<1x64xf32> to vector<48x64xf32>
    %13 = arith.addf %10, %12 : vector<48x64xf32>
    %14 = arith.negf %13 : vector<48x64xf32>
    %15 = math.exp %14 : vector<48x64xf32>
    %cst_11 = arith.constant 1.000000e+00 : f32
    %16 = vector.broadcast %cst_11 : f32 to vector<48x64xf32>
    %17 = arith.addf %16, %15 : vector<48x64xf32>
    %18 = arith.divf %16, %17 : vector<48x64xf32>
    %19 = arith.mulf %18, %8 : vector<48x64xf32>
    %cst_12 = arith.constant 1.000000e+00 : f32
    %20 = vector.broadcast %cst_12 : f32 to vector<48x64xf32>
    %21 = arith.subf %20, %18 : vector<48x64xf32>
    %22 = arith.mulf %21, %0 : vector<48x64xf32>
    %23 = arith.addf %19, %22 : vector<48x64xf32>
    %24 = arith.truncf %23 : vector<48x64xf32> to vector<48x64xbf16>
    %c0_13 = arith.constant 0 : index
    %c0_14 = arith.constant 0 : index
    %25 = vector.load %arg5[%c0_13, %c0_14] : memref<64x64xbf16, #tpu.memory_space<vmem>>, vector<64x64xbf16>
    %cst_15 = arith.constant dense<0.000000e+00> : vector<48x64xf32>
    %26 = tpu.matmul %24, %25, %cst_15 {dimension_numbers = #tpu.dot_dimension_numbers<[1], [0], [0], [1], [0, 0, 1, 1], [], []>} : vector<48x64xbf16>, vector<64x64xbf16>, vector<48x64xf32> -> vector<48x64xf32>
    %c0_16 = arith.constant 0 : index
    %c0_17 = arith.constant 0 : index
    %27 = vector.load %arg6[%c0_16, %c0_17] : memref<1x64xf32, #tpu.memory_space<vmem>>, vector<1x64xf32>
    %28 = vector.broadcast %27 : vector<1x64xf32> to vector<48x64xf32>
    %29 = arith.addf %26, %28 : vector<48x64xf32>
    %cst_18 = arith.constant 0.000000e+00 : f32
    %30 = vector.broadcast %cst_18 : f32 to vector<48x64xf32>
    %31 = arith.maximumf %29, %30 : vector<48x64xf32>
    %c0_19 = arith.constant 0 : index
    %c0_20 = arith.constant 0 : index
    %32 = vector.load %arg7[%c0_19, %c0_20] : memref<64x64xbf16, #tpu.memory_space<vmem>>, vector<64x64xbf16>
    %cst_21 = arith.constant dense<0.000000e+00> : vector<48x64xf32>
    %33 = tpu.matmul %24, %32, %cst_21 {dimension_numbers = #tpu.dot_dimension_numbers<[1], [0], [0], [1], [0, 0, 1, 1], [], []>} : vector<48x64xbf16>, vector<64x64xbf16>, vector<48x64xf32> -> vector<48x64xf32>
    %c0_22 = arith.constant 0 : index
    %c0_23 = arith.constant 0 : index
    %34 = vector.load %arg8[%c0_22, %c0_23] : memref<1x64xf32, #tpu.memory_space<vmem>>, vector<1x64xf32>
    %35 = vector.broadcast %34 : vector<1x64xf32> to vector<48x64xf32>
    %36 = arith.addf %33, %35 : vector<48x64xf32>
    %37 = arith.negf %36 : vector<48x64xf32>
    %38 = math.exp %37 : vector<48x64xf32>
    %cst_24 = arith.constant 1.000000e+00 : f32
    %39 = vector.broadcast %cst_24 : f32 to vector<48x64xf32>
    %40 = arith.addf %39, %38 : vector<48x64xf32>
    %41 = arith.divf %39, %40 : vector<48x64xf32>
    %42 = arith.mulf %41, %31 : vector<48x64xf32>
    %cst_25 = arith.constant 1.000000e+00 : f32
    %43 = vector.broadcast %cst_25 : f32 to vector<48x64xf32>
    %44 = arith.subf %43, %41 : vector<48x64xf32>
    %45 = arith.mulf %44, %23 : vector<48x64xf32>
    %46 = arith.addf %42, %45 : vector<48x64xf32>
    %c0_26 = arith.constant 0 : index
    %c0_27 = arith.constant 0 : index
    %47 = vector.load %arg9[%c0_26, %c0_27] : memref<48x64xf32, #tpu.memory_space<vmem>>, vector<48x64xf32>
    tpu.vector_store %arg9[%c0_26, %c0_27], %46 {strides = array<i32>} : memref<48x64xf32, #tpu.memory_space<vmem>>, vector<48x64xf32>,
    return
  }
}

module attributes {stable_mosaic.version = 11 : i64} {
  func.func @_bilstm_kernel(%arg0: memref<16x128xf32, #tpu.memory_space<vmem>>, %arg1: memref<128x256xbf16, #tpu.memory_space<vmem>>, %arg2: memref<64x256xbf16, #tpu.memory_space<vmem>>, %arg3: memref<1x256xf32, #tpu.memory_space<vmem>>, %arg4: memref<8x2x64xf32, #tpu.memory_space<vmem>>, %arg5: memref<16x256xf32, #tpu.memory_space<vmem>>, %arg6: memref<2x64xf32, #tpu.memory_space<vmem>>, %arg7: memref<2x64xf32, #tpu.memory_space<vmem>>) attributes {dimension_semantics = [], scalar_prefetch = 0 : i64, scratch_operands = 3 : i64, tpu.core_type = #tpu.core_type<tc>} {
    %c0 = arith.constant 0 : index
    %c0_0 = arith.constant 0 : index
    %0 = vector.load %arg0[%c0, %c0_0] : memref<16x128xf32, #tpu.memory_space<vmem>>, vector<16x128xf32>
    %1 = arith.truncf %0 : vector<16x128xf32> to vector<16x128xbf16>
    %c0_1 = arith.constant 0 : index
    %c0_2 = arith.constant 0 : index
    %2 = vector.load %arg1[%c0_1, %c0_2] : memref<128x256xbf16, #tpu.memory_space<vmem>>, vector<128x256xbf16>
    %cst = arith.constant dense<0.000000e+00> : vector<16x256xf32>
    %3 = tpu.matmul %1, %2, %cst {dimension_numbers = #tpu.dot_dimension_numbers<[1], [0], [0], [1], [0, 0, 1, 1], [], []>} : vector<16x128xbf16>, vector<128x256xbf16>, vector<16x256xf32> -> vector<16x256xf32>
    %c0_3 = arith.constant 0 : index
    %c0_4 = arith.constant 0 : index
    %4 = vector.load %arg3[%c0_3, %c0_4] : memref<1x256xf32, #tpu.memory_space<vmem>>, vector<1x256xf32>
    %5 = vector.broadcast %4 : vector<1x256xf32> to vector<16x256xf32>
    %6 = arith.addf %3, %5 : vector<16x256xf32>
    %c0_5 = arith.constant 0 : index
    %c0_6 = arith.constant 0 : index
    %7 = vector.load %arg5[%c0_5, %c0_6] : memref<16x256xf32, #tpu.memory_space<vmem>>, vector<16x256xf32>
    tpu.vector_store %arg5[%c0_5, %c0_6], %6 {strides = array<i32>} : memref<16x256xf32, #tpu.memory_space<vmem>>, vector<16x256xf32>,
    %cst_7 = arith.constant 0.000000e+00 : f32
    %8 = vector.broadcast %cst_7 : f32 to vector<2x64xf32>
    %c0_8 = arith.constant 0 : index
    %c0_9 = arith.constant 0 : index
    %9 = vector.load %arg6[%c0_8, %c0_9] : memref<2x64xf32, #tpu.memory_space<vmem>>, vector<2x64xf32>
    tpu.vector_store %arg6[%c0_8, %c0_9], %8 {strides = array<i32>} : memref<2x64xf32, #tpu.memory_space<vmem>>, vector<2x64xf32>,
    %cst_10 = arith.constant 0.000000e+00 : f32
    %10 = vector.broadcast %cst_10 : f32 to vector<2x64xf32>
    %c0_11 = arith.constant 0 : index
    %c0_12 = arith.constant 0 : index
    %11 = vector.load %arg7[%c0_11, %c0_12] : memref<2x64xf32, #tpu.memory_space<vmem>>, vector<2x64xf32>
    tpu.vector_store %arg7[%c0_11, %c0_12], %10 {strides = array<i32>} : memref<2x64xf32, #tpu.memory_space<vmem>>, vector<2x64xf32>,
    %12 = tpu.iota {dimensions = array<i32: 1>} : vector<2x256xi32>
    %c128_i32 = arith.constant 128 : i32
    %13 = vector.broadcast %c128_i32 : i32 to vector<2x256xi32>
    %14 = arith.cmpi sge, %12, %13 : vector<2x256xi32>
    %c192_i32 = arith.constant 192 : i32
    %15 = vector.broadcast %c192_i32 : i32 to vector<2x256xi32>
    %16 = arith.cmpi slt, %12, %15 : vector<2x256xi32>
    %17 = arith.andi %14, %16 : vector<2x256xi1>
    %c0_i32 = arith.constant 0 : i32
    %c2_i32 = arith.constant 2 : i32
    %18 = arith.muli %c0_i32, %c2_i32 : i32
    %19 = arith.index_cast %18 : i32 to index
    %c0_13 = arith.constant 0 : index
    %20 = vector.load %arg5[%19, %c0_13] : memref<16x256xf32, #tpu.memory_space<vmem>>, vector<2x256xf32>
    %c0_14 = arith.constant 0 : index
    %c0_15 = arith.constant 0 : index
    %21 = vector.load %arg6[%c0_14, %c0_15] : memref<2x64xf32, #tpu.memory_space<vmem>>, vector<2x64xf32>
    %22 = arith.truncf %21 : vector<2x64xf32> to vector<2x64xbf16>
    %c0_16 = arith.constant 0 : index
    %c0_17 = arith.constant 0 : index
    %23 = vector.load %arg2[%c0_16, %c0_17] : memref<64x256xbf16, #tpu.memory_space<vmem>>, vector<64x256xbf16>
    %cst_18 = arith.constant dense<0.000000e+00> : vector<2x256xf32>
    %24 = tpu.matmul %22, %23, %cst_18 {dimension_numbers = #tpu.dot_dimension_numbers<[1], [0], [0], [1], [0, 0, 1, 1], [], []>} : vector<2x64xbf16>, vector<64x256xbf16>, vector<2x256xf32> -> vector<2x256xf32>
    %25 = arith.addf %20, %24 : vector<2x256xf32>
    %26 = math.tanh %25 : vector<2x256xf32>
    %27 = arith.negf %25 : vector<2x256xf32>
    %28 = math.exp %27 : vector<2x256xf32>
    %cst_19 = arith.constant 1.000000e+00 : f32
    %29 = vector.broadcast %cst_19 : f32 to vector<2x256xf32>
    %30 = arith.addf %29, %28 : vector<2x256xf32>
    %31 = arith.divf %29, %30 : vector<2x256xf32>
    %32 = arith.select %17, %26, %31 : vector<2x256xi1>, vector<2x256xf32>
    %33 = vector.extract_strided_slice %32 {offsets = [0, 0], sizes = [2, 64], strides = [1, 1]} : vector<2x256xf32> to vector<2x64xf32>
    %34 = vector.extract_strided_slice %32 {offsets = [0, 64], sizes = [2, 64], strides = [1, 1]} : vector<2x256xf32> to vector<2x64xf32>
    %35 = vector.extract_strided_slice %32 {offsets = [0, 128], sizes = [2, 64], strides = [1, 1]} : vector<2x256xf32> to vector<2x64xf32>
    %36 = vector.extract_strided_slice %32 {offsets = [0, 192], sizes = [2, 64], strides = [1, 1]} : vector<2x256xf32> to vector<2x64xf32>
    %c0_20 = arith.constant 0 : index
    %c0_21 = arith.constant 0 : index
    %37 = vector.load %arg7[%c0_20, %c0_21] : memref<2x64xf32, #tpu.memory_space<vmem>>, vector<2x64xf32>
    %38 = arith.mulf %34, %37 : vector<2x64xf32>
    %39 = arith.mulf %33, %35 : vector<2x64xf32>
    %40 = arith.addf %38, %39 : vector<2x64xf32>
    %41 = math.tanh %40 : vector<2x64xf32>
    %42 = arith.mulf %36, %41 : vector<2x64xf32>
    %c0_22 = arith.constant 0 : index
    %c0_23 = arith.constant 0 : index
    %43 = vector.load %arg7[%c0_22, %c0_23] : memref<2x64xf32, #tpu.memory_space<vmem>>, vector<2x64xf32>
    tpu.vector_store %arg7[%c0_22, %c0_23], %40 {strides = array<i32>} : memref<2x64xf32, #tpu.memory_space<vmem>>, vector<2x64xf32>,
    %c0_24 = arith.constant 0 : index
    %c0_25 = arith.constant 0 : index
    %44 = vector.load %arg6[%c0_24, %c0_25] : memref<2x64xf32, #tpu.memory_space<vmem>>, vector<2x64xf32>
    tpu.vector_store %arg6[%c0_24, %c0_25], %42 {strides = array<i32>} : memref<2x64xf32, #tpu.memory_space<vmem>>, vector<2x64xf32>,
    %45 = arith.index_cast %c0_i32 : i32 to index
    %c0_26 = arith.constant 0 : index
    %c0_27 = arith.constant 0 : index
    %46 = vector.load %arg4[%45, %c0_26, %c0_27] : memref<8x2x64xf32, #tpu.memory_space<vmem>>, vector<1x2x64xf32>
    %47 = vector.shape_cast %46 : vector<1x2x64xf32> to vector<2x64xf32>
    %48 = vector.shape_cast %42 : vector<2x64xf32> to vector<1x2x64xf32>
    tpu.vector_store %arg4[%45, %c0_26, %c0_27], %48 {strides = array<i32>} : memref<8x2x64xf32, #tpu.memory_space<vmem>>, vector<1x2x64xf32>,
    %c1_i32 = arith.constant 1 : i32
    %c2_i32_28 = arith.constant 2 : i32
    %49 = arith.muli %c1_i32, %c2_i32_28 : i32
    %50 = arith.index_cast %49 : i32 to index
    %c0_29 = arith.constant 0 : index
    %51 = vector.load %arg5[%50, %c0_29] : memref<16x256xf32, #tpu.memory_space<vmem>>, vector<2x256xf32>
    %c0_30 = arith.constant 0 : index
    %c0_31 = arith.constant 0 : index
    %52 = vector.load %arg6[%c0_30, %c0_31] : memref<2x64xf32, #tpu.memory_space<vmem>>, vector<2x64xf32>
    %53 = arith.truncf %52 : vector<2x64xf32> to vector<2x64xbf16>
    %c0_32 = arith.constant 0 : index
    %c0_33 = arith.constant 0 : index
    %54 = vector.load %arg2[%c0_32, %c0_33] : memref<64x256xbf16, #tpu.memory_space<vmem>>, vector<64x256xbf16>
    %cst_34 = arith.constant dense<0.000000e+00> : vector<2x256xf32>
    %55 = tpu.matmul %53, %54, %cst_34 {dimension_numbers = #tpu.dot_dimension_numbers<[1], [0], [0], [1], [0, 0, 1, 1], [], []>} : vector<2x64xbf16>, vector<64x256xbf16>, vector<2x256xf32> -> vector<2x256xf32>
    %56 = arith.addf %51, %55 : vector<2x256xf32>
    %57 = math.tanh %56 : vector<2x256xf32>
    %58 = arith.negf %56 : vector<2x256xf32>
    %59 = math.exp %58 : vector<2x256xf32>
    %cst_35 = arith.constant 1.000000e+00 : f32
    %60 = vector.broadcast %cst_35 : f32 to vector<2x256xf32>
    %61 = arith.addf %60, %59 : vector<2x256xf32>
    %62 = arith.divf %60, %61 : vector<2x256xf32>
    %63 = arith.select %17, %57, %62 : vector<2x256xi1>, vector<2x256xf32>
    %64 = vector.extract_strided_slice %63 {offsets = [0, 0], sizes = [2, 64], strides = [1, 1]} : vector<2x256xf32> to vector<2x64xf32>
    %65 = vector.extract_strided_slice %63 {offsets = [0, 64], sizes = [2, 64], strides = [1, 1]} : vector<2x256xf32> to vector<2x64xf32>
    %66 = vector.extract_strided_slice %63 {offsets = [0, 128], sizes = [2, 64], strides = [1, 1]} : vector<2x256xf32> to vector<2x64xf32>
    %67 = vector.extract_strided_slice %63 {offsets = [0, 192], sizes = [2, 64], strides = [1, 1]} : vector<2x256xf32> to vector<2x64xf32>
    %c0_36 = arith.constant 0 : index
    %c0_37 = arith.constant 0 : index
    %68 = vector.load %arg7[%c0_36, %c0_37] : memref<2x64xf32, #tpu.memory_space<vmem>>, vector<2x64xf32>
    %69 = arith.mulf %65, %68 : vector<2x64xf32>
    %70 = arith.mulf %64, %66 : vector<2x64xf32>
    %71 = arith.addf %69, %70 : vector<2x64xf32>
    %72 = math.tanh %71 : vector<2x64xf32>
    %73 = arith.mulf %67, %72 : vector<2x64xf32>
    %c0_38 = arith.constant 0 : index
    %c0_39 = arith.constant 0 : index
    %74 = vector.load %arg7[%c0_38, %c0_39] : memref<2x64xf32, #tpu.memory_space<vmem>>, vector<2x64xf32>
    tpu.vector_store %arg7[%c0_38, %c0_39], %71 {strides = array<i32>} : memref<2x64xf32, #tpu.memory_space<vmem>>, vector<2x64xf32>,
    %c0_40 = arith.constant 0 : index
    %c0_41 = arith.constant 0 : index
    %75 = vector.load %arg6[%c0_40, %c0_41] : memref<2x64xf32, #tpu.memory_space<vmem>>, vector<2x64xf32>
    tpu.vector_store %arg6[%c0_40, %c0_41], %73 {strides = array<i32>} : memref<2x64xf32, #tpu.memory_space<vmem>>, vector<2x64xf32>,
    %76 = arith.index_cast %c1_i32 : i32 to index
    %c0_42 = arith.constant 0 : index
    %c0_43 = arith.constant 0 : index
    %77 = vector.load %arg4[%76, %c0_42, %c0_43] : memref<8x2x64xf32, #tpu.memory_space<vmem>>, vector<1x2x64xf32>
    %78 = vector.shape_cast %77 : vector<1x2x64xf32> to vector<2x64xf32>
    %79 = vector.shape_cast %73 : vector<2x64xf32> to vector<1x2x64xf32>
    tpu.vector_store %arg4[%76, %c0_42, %c0_43], %79 {strides = array<i32>} : memref<8x2x64xf32, #tpu.memory_space<vmem>>, vector<1x2x64xf32>,
    %c2_i32_44 = arith.constant 2 : i32
    %c2_i32_45 = arith.constant 2 : i32
    %80 = arith.muli %c2_i32_44, %c2_i32_45 : i32
    %81 = arith.index_cast %80 : i32 to index
    %c0_46 = arith.constant 0 : index
    %82 = vector.load %arg5[%81, %c0_46] : memref<16x256xf32, #tpu.memory_space<vmem>>, vector<2x256xf32>
    %c0_47 = arith.constant 0 : index
    %c0_48 = arith.constant 0 : index
    %83 = vector.load %arg6[%c0_47, %c0_48] : memref<2x64xf32, #tpu.memory_space<vmem>>, vector<2x64xf32>
    %84 = arith.truncf %83 : vector<2x64xf32> to vector<2x64xbf16>
    %c0_49 = arith.constant 0 : index
    %c0_50 = arith.constant 0 : index
    %85 = vector.load %arg2[%c0_49, %c0_50] : memref<64x256xbf16, #tpu.memory_space<vmem>>, vector<64x256xbf16>
    %cst_51 = arith.constant dense<0.000000e+00> : vector<2x256xf32>
    %86 = tpu.matmul %84, %85, %cst_51 {dimension_numbers = #tpu.dot_dimension_numbers<[1], [0], [0], [1], [0, 0, 1, 1], [], []>} : vector<2x64xbf16>, vector<64x256xbf16>, vector<2x256xf32> -> vector<2x256xf32>
    %87 = arith.addf %82, %86 : vector<2x256xf32>
    %88 = math.tanh %87 : vector<2x256xf32>
    %89 = arith.negf %87 : vector<2x256xf32>
    %90 = math.exp %89 : vector<2x256xf32>
    %cst_52 = arith.constant 1.000000e+00 : f32
    %91 = vector.broadcast %cst_52 : f32 to vector<2x256xf32>
    %92 = arith.addf %91, %90 : vector<2x256xf32>
    %93 = arith.divf %91, %92 : vector<2x256xf32>
    %94 = arith.select %17, %88, %93 : vector<2x256xi1>, vector<2x256xf32>
    %95 = vector.extract_strided_slice %94 {offsets = [0, 0], sizes = [2, 64], strides = [1, 1]} : vector<2x256xf32> to vector<2x64xf32>
    %96 = vector.extract_strided_slice %94 {offsets = [0, 64], sizes = [2, 64], strides = [1, 1]} : vector<2x256xf32> to vector<2x64xf32>
    %97 = vector.extract_strided_slice %94 {offsets = [0, 128], sizes = [2, 64], strides = [1, 1]} : vector<2x256xf32> to vector<2x64xf32>
    %98 = vector.extract_strided_slice %94 {offsets = [0, 192], sizes = [2, 64], strides = [1, 1]} : vector<2x256xf32> to vector<2x64xf32>
    %c0_53 = arith.constant 0 : index
    %c0_54 = arith.constant 0 : index
    %99 = vector.load %arg7[%c0_53, %c0_54] : memref<2x64xf32, #tpu.memory_space<vmem>>, vector<2x64xf32>
    %100 = arith.mulf %96, %99 : vector<2x64xf32>
    %101 = arith.mulf %95, %97 : vector<2x64xf32>
    %102 = arith.addf %100, %101 : vector<2x64xf32>
    %103 = math.tanh %102 : vector<2x64xf32>
    %104 = arith.mulf %98, %103 : vector<2x64xf32>
    %c0_55 = arith.constant 0 : index
    %c0_56 = arith.constant 0 : index
    %105 = vector.load %arg7[%c0_55, %c0_56] : memref<2x64xf32, #tpu.memory_space<vmem>>, vector<2x64xf32>
    tpu.vector_store %arg7[%c0_55, %c0_56], %102 {strides = array<i32>} : memref<2x64xf32, #tpu.memory_space<vmem>>, vector<2x64xf32>,
    %c0_57 = arith.constant 0 : index
    %c0_58 = arith.constant 0 : index
    %106 = vector.load %arg6[%c0_57, %c0_58] : memref<2x64xf32, #tpu.memory_space<vmem>>, vector<2x64xf32>
    tpu.vector_store %arg6[%c0_57, %c0_58], %104 {strides = array<i32>} : memref<2x64xf32, #tpu.memory_space<vmem>>, vector<2x64xf32>,
    %107 = arith.index_cast %c2_i32_44 : i32 to index
    %c0_59 = arith.constant 0 : index
    %c0_60 = arith.constant 0 : index
    %108 = vector.load %arg4[%107, %c0_59, %c0_60] : memref<8x2x64xf32, #tpu.memory_space<vmem>>, vector<1x2x64xf32>
    %109 = vector.shape_cast %108 : vector<1x2x64xf32> to vector<2x64xf32>
    %110 = vector.shape_cast %104 : vector<2x64xf32> to vector<1x2x64xf32>
    tpu.vector_store %arg4[%107, %c0_59, %c0_60], %110 {strides = array<i32>} : memref<8x2x64xf32, #tpu.memory_space<vmem>>, vector<1x2x64xf32>,
    %c3_i32 = arith.constant 3 : i32
    %c2_i32_61 = arith.constant 2 : i32
    %111 = arith.muli %c3_i32, %c2_i32_61 : i32
    %112 = arith.index_cast %111 : i32 to index
    %c0_62 = arith.constant 0 : index
    %113 = vector.load %arg5[%112, %c0_62] : memref<16x256xf32, #tpu.memory_space<vmem>>, vector<2x256xf32>
    %c0_63 = arith.constant 0 : index
    %c0_64 = arith.constant 0 : index
    %114 = vector.load %arg6[%c0_63, %c0_64] : memref<2x64xf32, #tpu.memory_space<vmem>>, vector<2x64xf32>
    %115 = arith.truncf %114 : vector<2x64xf32> to vector<2x64xbf16>
    %c0_65 = arith.constant 0 : index
    %c0_66 = arith.constant 0 : index
    %116 = vector.load %arg2[%c0_65, %c0_66] : memref<64x256xbf16, #tpu.memory_space<vmem>>, vector<64x256xbf16>
    %cst_67 = arith.constant dense<0.000000e+00> : vector<2x256xf32>
    %117 = tpu.matmul %115, %116, %cst_67 {dimension_numbers = #tpu.dot_dimension_numbers<[1], [0], [0], [1], [0, 0, 1, 1], [], []>} : vector<2x64xbf16>, vector<64x256xbf16>, vector<2x256xf32> -> vector<2x256xf32>
    %118 = arith.addf %113, %117 : vector<2x256xf32>
    %119 = math.tanh %118 : vector<2x256xf32>
    %120 = arith.negf %118 : vector<2x256xf32>
    %121 = math.exp %120 : vector<2x256xf32>
    %cst_68 = arith.constant 1.000000e+00 : f32
    %122 = vector.broadcast %cst_68 : f32 to vector<2x256xf32>
    %123 = arith.addf %122, %121 : vector<2x256xf32>
    %124 = arith.divf %122, %123 : vector<2x256xf32>
    %125 = arith.select %17, %119, %124 : vector<2x256xi1>, vector<2x256xf32>
    %126 = vector.extract_strided_slice %125 {offsets = [0, 0], sizes = [2, 64], strides = [1, 1]} : vector<2x256xf32> to vector<2x64xf32>
    %127 = vector.extract_strided_slice %125 {offsets = [0, 64], sizes = [2, 64], strides = [1, 1]} : vector<2x256xf32> to vector<2x64xf32>
    %128 = vector.extract_strided_slice %125 {offsets = [0, 128], sizes = [2, 64], strides = [1, 1]} : vector<2x256xf32> to vector<2x64xf32>
    %129 = vector.extract_strided_slice %125 {offsets = [0, 192], sizes = [2, 64], strides = [1, 1]} : vector<2x256xf32> to vector<2x64xf32>
    %c0_69 = arith.constant 0 : index
    %c0_70 = arith.constant 0 : index
    %130 = vector.load %arg7[%c0_69, %c0_70] : memref<2x64xf32, #tpu.memory_space<vmem>>, vector<2x64xf32>
    %131 = arith.mulf %127, %130 : vector<2x64xf32>
    %132 = arith.mulf %126, %128 : vector<2x64xf32>
    %133 = arith.addf %131, %132 : vector<2x64xf32>
    %134 = math.tanh %133 : vector<2x64xf32>
    %135 = arith.mulf %129, %134 : vector<2x64xf32>
    %c0_71 = arith.constant 0 : index
    %c0_72 = arith.constant 0 : index
    %136 = vector.load %arg7[%c0_71, %c0_72] : memref<2x64xf32, #tpu.memory_space<vmem>>, vector<2x64xf32>
    tpu.vector_store %arg7[%c0_71, %c0_72], %133 {strides = array<i32>} : memref<2x64xf32, #tpu.memory_space<vmem>>, vector<2x64xf32>,
    %c0_73 = arith.constant 0 : index
    %c0_74 = arith.constant 0 : index
    %137 = vector.load %arg6[%c0_73, %c0_74] : memref<2x64xf32, #tpu.memory_space<vmem>>, vector<2x64xf32>
    tpu.vector_store %arg6[%c0_73, %c0_74], %135 {strides = array<i32>} : memref<2x64xf32, #tpu.memory_space<vmem>>, vector<2x64xf32>,
    %138 = arith.index_cast %c3_i32 : i32 to index
    %c0_75 = arith.constant 0 : index
    %c0_76 = arith.constant 0 : index
    %139 = vector.load %arg4[%138, %c0_75, %c0_76] : memref<8x2x64xf32, #tpu.memory_space<vmem>>, vector<1x2x64xf32>
    %140 = vector.shape_cast %139 : vector<1x2x64xf32> to vector<2x64xf32>
    %141 = vector.shape_cast %135 : vector<2x64xf32> to vector<1x2x64xf32>
    tpu.vector_store %arg4[%138, %c0_75, %c0_76], %141 {strides = array<i32>} : memref<8x2x64xf32, #tpu.memory_space<vmem>>, vector<1x2x64xf32>,
    %c4_i32 = arith.constant 4 : i32
    %c2_i32_77 = arith.constant 2 : i32
    %142 = arith.muli %c4_i32, %c2_i32_77 : i32
    %143 = arith.index_cast %142 : i32 to index
    %c0_78 = arith.constant 0 : index
    %144 = vector.load %arg5[%143, %c0_78] : memref<16x256xf32, #tpu.memory_space<vmem>>, vector<2x256xf32>
    %c0_79 = arith.constant 0 : index
    %c0_80 = arith.constant 0 : index
    %145 = vector.load %arg6[%c0_79, %c0_80] : memref<2x64xf32, #tpu.memory_space<vmem>>, vector<2x64xf32>
    %146 = arith.truncf %145 : vector<2x64xf32> to vector<2x64xbf16>
    %c0_81 = arith.constant 0 : index
    %c0_82 = arith.constant 0 : index
    %147 = vector.load %arg2[%c0_81, %c0_82] : memref<64x256xbf16, #tpu.memory_space<vmem>>, vector<64x256xbf16>
    %cst_83 = arith.constant dense<0.000000e+00> : vector<2x256xf32>
    %148 = tpu.matmul %146, %147, %cst_83 {dimension_numbers = #tpu.dot_dimension_numbers<[1], [0], [0], [1], [0, 0, 1, 1], [], []>} : vector<2x64xbf16>, vector<64x256xbf16>, vector<2x256xf32> -> vector<2x256xf32>
    %149 = arith.addf %144, %148 : vector<2x256xf32>
    %150 = math.tanh %149 : vector<2x256xf32>
    %151 = arith.negf %149 : vector<2x256xf32>
    %152 = math.exp %151 : vector<2x256xf32>
    %cst_84 = arith.constant 1.000000e+00 : f32
    %153 = vector.broadcast %cst_84 : f32 to vector<2x256xf32>
    %154 = arith.addf %153, %152 : vector<2x256xf32>
    %155 = arith.divf %153, %154 : vector<2x256xf32>
    %156 = arith.select %17, %150, %155 : vector<2x256xi1>, vector<2x256xf32>
    %157 = vector.extract_strided_slice %156 {offsets = [0, 0], sizes = [2, 64], strides = [1, 1]} : vector<2x256xf32> to vector<2x64xf32>
    %158 = vector.extract_strided_slice %156 {offsets = [0, 64], sizes = [2, 64], strides = [1, 1]} : vector<2x256xf32> to vector<2x64xf32>
    %159 = vector.extract_strided_slice %156 {offsets = [0, 128], sizes = [2, 64], strides = [1, 1]} : vector<2x256xf32> to vector<2x64xf32>
    %160 = vector.extract_strided_slice %156 {offsets = [0, 192], sizes = [2, 64], strides = [1, 1]} : vector<2x256xf32> to vector<2x64xf32>
    %c0_85 = arith.constant 0 : index
    %c0_86 = arith.constant 0 : index
    %161 = vector.load %arg7[%c0_85, %c0_86] : memref<2x64xf32, #tpu.memory_space<vmem>>, vector<2x64xf32>
    %162 = arith.mulf %158, %161 : vector<2x64xf32>
    %163 = arith.mulf %157, %159 : vector<2x64xf32>
    %164 = arith.addf %162, %163 : vector<2x64xf32>
    %165 = math.tanh %164 : vector<2x64xf32>
    %166 = arith.mulf %160, %165 : vector<2x64xf32>
    %c0_87 = arith.constant 0 : index
    %c0_88 = arith.constant 0 : index
    %167 = vector.load %arg7[%c0_87, %c0_88] : memref<2x64xf32, #tpu.memory_space<vmem>>, vector<2x64xf32>
    tpu.vector_store %arg7[%c0_87, %c0_88], %164 {strides = array<i32>} : memref<2x64xf32, #tpu.memory_space<vmem>>, vector<2x64xf32>,
    %c0_89 = arith.constant 0 : index
    %c0_90 = arith.constant 0 : index
    %168 = vector.load %arg6[%c0_89, %c0_90] : memref<2x64xf32, #tpu.memory_space<vmem>>, vector<2x64xf32>
    tpu.vector_store %arg6[%c0_89, %c0_90], %166 {strides = array<i32>} : memref<2x64xf32, #tpu.memory_space<vmem>>, vector<2x64xf32>,
    %169 = arith.index_cast %c4_i32 : i32 to index
    %c0_91 = arith.constant 0 : index
    %c0_92 = arith.constant 0 : index
    %170 = vector.load %arg4[%169, %c0_91, %c0_92] : memref<8x2x64xf32, #tpu.memory_space<vmem>>, vector<1x2x64xf32>
    %171 = vector.shape_cast %170 : vector<1x2x64xf32> to vector<2x64xf32>
    %172 = vector.shape_cast %166 : vector<2x64xf32> to vector<1x2x64xf32>
    tpu.vector_store %arg4[%169, %c0_91, %c0_92], %172 {strides = array<i32>} : memref<8x2x64xf32, #tpu.memory_space<vmem>>, vector<1x2x64xf32>,
    %c5_i32 = arith.constant 5 : i32
    %c2_i32_93 = arith.constant 2 : i32
    %173 = arith.muli %c5_i32, %c2_i32_93 : i32
    %174 = arith.index_cast %173 : i32 to index
    %c0_94 = arith.constant 0 : index
    %175 = vector.load %arg5[%174, %c0_94] : memref<16x256xf32, #tpu.memory_space<vmem>>, vector<2x256xf32>
    %c0_95 = arith.constant 0 : index
    %c0_96 = arith.constant 0 : index
    %176 = vector.load %arg6[%c0_95, %c0_96] : memref<2x64xf32, #tpu.memory_space<vmem>>, vector<2x64xf32>
    %177 = arith.truncf %176 : vector<2x64xf32> to vector<2x64xbf16>
    %c0_97 = arith.constant 0 : index
    %c0_98 = arith.constant 0 : index
    %178 = vector.load %arg2[%c0_97, %c0_98] : memref<64x256xbf16, #tpu.memory_space<vmem>>, vector<64x256xbf16>
    %cst_99 = arith.constant dense<0.000000e+00> : vector<2x256xf32>
    %179 = tpu.matmul %177, %178, %cst_99 {dimension_numbers = #tpu.dot_dimension_numbers<[1], [0], [0], [1], [0, 0, 1, 1], [], []>} : vector<2x64xbf16>, vector<64x256xbf16>, vector<2x256xf32> -> vector<2x256xf32>
    %180 = arith.addf %175, %179 : vector<2x256xf32>
    %181 = math.tanh %180 : vector<2x256xf32>
    %182 = arith.negf %180 : vector<2x256xf32>
    %183 = math.exp %182 : vector<2x256xf32>
    %cst_100 = arith.constant 1.000000e+00 : f32
    %184 = vector.broadcast %cst_100 : f32 to vector<2x256xf32>
    %185 = arith.addf %184, %183 : vector<2x256xf32>
    %186 = arith.divf %184, %185 : vector<2x256xf32>
    %187 = arith.select %17, %181, %186 : vector<2x256xi1>, vector<2x256xf32>
    %188 = vector.extract_strided_slice %187 {offsets = [0, 0], sizes = [2, 64], strides = [1, 1]} : vector<2x256xf32> to vector<2x64xf32>
    %189 = vector.extract_strided_slice %187 {offsets = [0, 64], sizes = [2, 64], strides = [1, 1]} : vector<2x256xf32> to vector<2x64xf32>
    %190 = vector.extract_strided_slice %187 {offsets = [0, 128], sizes = [2, 64], strides = [1, 1]} : vector<2x256xf32> to vector<2x64xf32>
    %191 = vector.extract_strided_slice %187 {offsets = [0, 192], sizes = [2, 64], strides = [1, 1]} : vector<2x256xf32> to vector<2x64xf32>
    %c0_101 = arith.constant 0 : index
    %c0_102 = arith.constant 0 : index
    %192 = vector.load %arg7[%c0_101, %c0_102] : memref<2x64xf32, #tpu.memory_space<vmem>>, vector<2x64xf32>
    %193 = arith.mulf %189, %192 : vector<2x64xf32>
    %194 = arith.mulf %188, %190 : vector<2x64xf32>
    %195 = arith.addf %193, %194 : vector<2x64xf32>
    %196 = math.tanh %195 : vector<2x64xf32>
    %197 = arith.mulf %191, %196 : vector<2x64xf32>
    %c0_103 = arith.constant 0 : index
    %c0_104 = arith.constant 0 : index
    %198 = vector.load %arg7[%c0_103, %c0_104] : memref<2x64xf32, #tpu.memory_space<vmem>>, vector<2x64xf32>
    tpu.vector_store %arg7[%c0_103, %c0_104], %195 {strides = array<i32>} : memref<2x64xf32, #tpu.memory_space<vmem>>, vector<2x64xf32>,
    %c0_105 = arith.constant 0 : index
    %c0_106 = arith.constant 0 : index
    %199 = vector.load %arg6[%c0_105, %c0_106] : memref<2x64xf32, #tpu.memory_space<vmem>>, vector<2x64xf32>
    tpu.vector_store %arg6[%c0_105, %c0_106], %197 {strides = array<i32>} : memref<2x64xf32, #tpu.memory_space<vmem>>, vector<2x64xf32>,
    %200 = arith.index_cast %c5_i32 : i32 to index
    %c0_107 = arith.constant 0 : index
    %c0_108 = arith.constant 0 : index
    %201 = vector.load %arg4[%200, %c0_107, %c0_108] : memref<8x2x64xf32, #tpu.memory_space<vmem>>, vector<1x2x64xf32>
    %202 = vector.shape_cast %201 : vector<1x2x64xf32> to vector<2x64xf32>
    %203 = vector.shape_cast %197 : vector<2x64xf32> to vector<1x2x64xf32>
    tpu.vector_store %arg4[%200, %c0_107, %c0_108], %203 {strides = array<i32>} : memref<8x2x64xf32, #tpu.memory_space<vmem>>, vector<1x2x64xf32>,
    %c6_i32 = arith.constant 6 : i32
    %c2_i32_109 = arith.constant 2 : i32
    %204 = arith.muli %c6_i32, %c2_i32_109 : i32
    %205 = arith.index_cast %204 : i32 to index
    %c0_110 = arith.constant 0 : index
    %206 = vector.load %arg5[%205, %c0_110] : memref<16x256xf32, #tpu.memory_space<vmem>>, vector<2x256xf32>
    %c0_111 = arith.constant 0 : index
    %c0_112 = arith.constant 0 : index
    %207 = vector.load %arg6[%c0_111, %c0_112] : memref<2x64xf32, #tpu.memory_space<vmem>>, vector<2x64xf32>
    %208 = arith.truncf %207 : vector<2x64xf32> to vector<2x64xbf16>
    %c0_113 = arith.constant 0 : index
    %c0_114 = arith.constant 0 : index
    %209 = vector.load %arg2[%c0_113, %c0_114] : memref<64x256xbf16, #tpu.memory_space<vmem>>, vector<64x256xbf16>
    %cst_115 = arith.constant dense<0.000000e+00> : vector<2x256xf32>
    %210 = tpu.matmul %208, %209, %cst_115 {dimension_numbers = #tpu.dot_dimension_numbers<[1], [0], [0], [1], [0, 0, 1, 1], [], []>} : vector<2x64xbf16>, vector<64x256xbf16>, vector<2x256xf32> -> vector<2x256xf32>
    %211 = arith.addf %206, %210 : vector<2x256xf32>
    %212 = math.tanh %211 : vector<2x256xf32>
    %213 = arith.negf %211 : vector<2x256xf32>
    %214 = math.exp %213 : vector<2x256xf32>
    %cst_116 = arith.constant 1.000000e+00 : f32
    %215 = vector.broadcast %cst_116 : f32 to vector<2x256xf32>
    %216 = arith.addf %215, %214 : vector<2x256xf32>
    %217 = arith.divf %215, %216 : vector<2x256xf32>
    %218 = arith.select %17, %212, %217 : vector<2x256xi1>, vector<2x256xf32>
    %219 = vector.extract_strided_slice %218 {offsets = [0, 0], sizes = [2, 64], strides = [1, 1]} : vector<2x256xf32> to vector<2x64xf32>
    %220 = vector.extract_strided_slice %218 {offsets = [0, 64], sizes = [2, 64], strides = [1, 1]} : vector<2x256xf32> to vector<2x64xf32>
    %221 = vector.extract_strided_slice %218 {offsets = [0, 128], sizes = [2, 64], strides = [1, 1]} : vector<2x256xf32> to vector<2x64xf32>
    %222 = vector.extract_strided_slice %218 {offsets = [0, 192], sizes = [2, 64], strides = [1, 1]} : vector<2x256xf32> to vector<2x64xf32>
    %c0_117 = arith.constant 0 : index
    %c0_118 = arith.constant 0 : index
    %223 = vector.load %arg7[%c0_117, %c0_118] : memref<2x64xf32, #tpu.memory_space<vmem>>, vector<2x64xf32>
    %224 = arith.mulf %220, %223 : vector<2x64xf32>
    %225 = arith.mulf %219, %221 : vector<2x64xf32>
    %226 = arith.addf %224, %225 : vector<2x64xf32>
    %227 = math.tanh %226 : vector<2x64xf32>
    %228 = arith.mulf %222, %227 : vector<2x64xf32>
    %c0_119 = arith.constant 0 : index
    %c0_120 = arith.constant 0 : index
    %229 = vector.load %arg7[%c0_119, %c0_120] : memref<2x64xf32, #tpu.memory_space<vmem>>, vector<2x64xf32>
    tpu.vector_store %arg7[%c0_119, %c0_120], %226 {strides = array<i32>} : memref<2x64xf32, #tpu.memory_space<vmem>>, vector<2x64xf32>,
    %c0_121 = arith.constant 0 : index
    %c0_122 = arith.constant 0 : index
    %230 = vector.load %arg6[%c0_121, %c0_122] : memref<2x64xf32, #tpu.memory_space<vmem>>, vector<2x64xf32>
    tpu.vector_store %arg6[%c0_121, %c0_122], %228 {strides = array<i32>} : memref<2x64xf32, #tpu.memory_space<vmem>>, vector<2x64xf32>,
    %231 = arith.index_cast %c6_i32 : i32 to index
    %c0_123 = arith.constant 0 : index
    %c0_124 = arith.constant 0 : index
    %232 = vector.load %arg4[%231, %c0_123, %c0_124] : memref<8x2x64xf32, #tpu.memory_space<vmem>>, vector<1x2x64xf32>
    %233 = vector.shape_cast %232 : vector<1x2x64xf32> to vector<2x64xf32>
    %234 = vector.shape_cast %228 : vector<2x64xf32> to vector<1x2x64xf32>
    tpu.vector_store %arg4[%231, %c0_123, %c0_124], %234 {strides = array<i32>} : memref<8x2x64xf32, #tpu.memory_space<vmem>>, vector<1x2x64xf32>,
    %c7_i32 = arith.constant 7 : i32
    %c2_i32_125 = arith.constant 2 : i32
    %235 = arith.muli %c7_i32, %c2_i32_125 : i32
    %236 = arith.index_cast %235 : i32 to index
    %c0_126 = arith.constant 0 : index
    %237 = vector.load %arg5[%236, %c0_126] : memref<16x256xf32, #tpu.memory_space<vmem>>, vector<2x256xf32>
    %c0_127 = arith.constant 0 : index
    %c0_128 = arith.constant 0 : index
    %238 = vector.load %arg6[%c0_127, %c0_128] : memref<2x64xf32, #tpu.memory_space<vmem>>, vector<2x64xf32>
    %239 = arith.truncf %238 : vector<2x64xf32> to vector<2x64xbf16>
    %c0_129 = arith.constant 0 : index
    %c0_130 = arith.constant 0 : index
    %240 = vector.load %arg2[%c0_129, %c0_130] : memref<64x256xbf16, #tpu.memory_space<vmem>>, vector<64x256xbf16>
    %cst_131 = arith.constant dense<0.000000e+00> : vector<2x256xf32>
    %241 = tpu.matmul %239, %240, %cst_131 {dimension_numbers = #tpu.dot_dimension_numbers<[1], [0], [0], [1], [0, 0, 1, 1], [], []>} : vector<2x64xbf16>, vector<64x256xbf16>, vector<2x256xf32> -> vector<2x256xf32>
    %242 = arith.addf %237, %241 : vector<2x256xf32>
    %243 = math.tanh %242 : vector<2x256xf32>
    %244 = arith.negf %242 : vector<2x256xf32>
    %245 = math.exp %244 : vector<2x256xf32>
    %cst_132 = arith.constant 1.000000e+00 : f32
    %246 = vector.broadcast %cst_132 : f32 to vector<2x256xf32>
    %247 = arith.addf %246, %245 : vector<2x256xf32>
    %248 = arith.divf %246, %247 : vector<2x256xf32>
    %249 = arith.select %17, %243, %248 : vector<2x256xi1>, vector<2x256xf32>
    %250 = vector.extract_strided_slice %249 {offsets = [0, 0], sizes = [2, 64], strides = [1, 1]} : vector<2x256xf32> to vector<2x64xf32>
    %251 = vector.extract_strided_slice %249 {offsets = [0, 64], sizes = [2, 64], strides = [1, 1]} : vector<2x256xf32> to vector<2x64xf32>
    %252 = vector.extract_strided_slice %249 {offsets = [0, 128], sizes = [2, 64], strides = [1, 1]} : vector<2x256xf32> to vector<2x64xf32>
    %253 = vector.extract_strided_slice %249 {offsets = [0, 192], sizes = [2, 64], strides = [1, 1]} : vector<2x256xf32> to vector<2x64xf32>
    %c0_133 = arith.constant 0 : index
    %c0_134 = arith.constant 0 : index
    %254 = vector.load %arg7[%c0_133, %c0_134] : memref<2x64xf32, #tpu.memory_space<vmem>>, vector<2x64xf32>
    %255 = arith.mulf %251, %254 : vector<2x64xf32>
    %256 = arith.mulf %250, %252 : vector<2x64xf32>
    %257 = arith.addf %255, %256 : vector<2x64xf32>
    %258 = math.tanh %257 : vector<2x64xf32>
    %259 = arith.mulf %253, %258 : vector<2x64xf32>
    %c0_135 = arith.constant 0 : index
    %c0_136 = arith.constant 0 : index
    %260 = vector.load %arg7[%c0_135, %c0_136] : memref<2x64xf32, #tpu.memory_space<vmem>>, vector<2x64xf32>
    tpu.vector_store %arg7[%c0_135, %c0_136], %257 {strides = array<i32>} : memref<2x64xf32, #tpu.memory_space<vmem>>, vector<2x64xf32>,
    %c0_137 = arith.constant 0 : index
    %c0_138 = arith.constant 0 : index
    %261 = vector.load %arg6[%c0_137, %c0_138] : memref<2x64xf32, #tpu.memory_space<vmem>>, vector<2x64xf32>
    tpu.vector_store %arg6[%c0_137, %c0_138], %259 {strides = array<i32>} : memref<2x64xf32, #tpu.memory_space<vmem>>, vector<2x64xf32>,
    %262 = arith.index_cast %c7_i32 : i32 to index
    %c0_139 = arith.constant 0 : index
    %c0_140 = arith.constant 0 : index
    %263 = vector.load %arg4[%262, %c0_139, %c0_140] : memref<8x2x64xf32, #tpu.memory_space<vmem>>, vector<1x2x64xf32>
    %264 = vector.shape_cast %263 : vector<1x2x64xf32> to vector<2x64xf32>
    %265 = vector.shape_cast %259 : vector<2x64xf32> to vector<1x2x64xf32>
    tpu.vector_store %arg4[%262, %c0_139, %c0_140], %265 {strides = array<i32>} : memref<8x2x64xf32, #tpu.memory_space<vmem>>, vector<1x2x64xf32>,
    %c8_i32 = arith.constant 8 : i32
    return
  }
}

module attributes {stable_mosaic.version = 11 : i64} {
  func.func @_bilstm_kernel(%arg0: memref<32x128xf32, #tpu.memory_space<vmem>>, %arg1: memref<128x256xbf16, #tpu.memory_space<vmem>>, %arg2: memref<64x256xbf16, #tpu.memory_space<vmem>>, %arg3: memref<1x256xf32, #tpu.memory_space<vmem>>, %arg4: memref<16x2x64xf32, #tpu.memory_space<vmem>>, %arg5: memref<32x256xf32, #tpu.memory_space<vmem>>, %arg6: memref<2x64xf32, #tpu.memory_space<vmem>>, %arg7: memref<2x64xf32, #tpu.memory_space<vmem>>) attributes {dimension_semantics = [], scalar_prefetch = 0 : i64, scratch_operands = 3 : i64, tpu.core_type = #tpu.core_type<tc>} {
    %c0 = arith.constant 0 : index
    %c0_0 = arith.constant 0 : index
    %0 = vector.load %arg0[%c0, %c0_0] : memref<32x128xf32, #tpu.memory_space<vmem>>, vector<32x128xf32>
    %1 = arith.truncf %0 : vector<32x128xf32> to vector<32x128xbf16>
    %c0_1 = arith.constant 0 : index
    %c0_2 = arith.constant 0 : index
    %2 = vector.load %arg1[%c0_1, %c0_2] : memref<128x256xbf16, #tpu.memory_space<vmem>>, vector<128x256xbf16>
    %cst = arith.constant dense<0.000000e+00> : vector<32x256xf32>
    %3 = tpu.matmul %1, %2, %cst {dimension_numbers = #tpu.dot_dimension_numbers<[1], [0], [0], [1], [0, 0, 1, 1], [], []>} : vector<32x128xbf16>, vector<128x256xbf16>, vector<32x256xf32> -> vector<32x256xf32>
    %c0_3 = arith.constant 0 : index
    %c0_4 = arith.constant 0 : index
    %4 = vector.load %arg3[%c0_3, %c0_4] : memref<1x256xf32, #tpu.memory_space<vmem>>, vector<1x256xf32>
    %5 = vector.broadcast %4 : vector<1x256xf32> to vector<32x256xf32>
    %6 = arith.addf %3, %5 : vector<32x256xf32>
    %c0_5 = arith.constant 0 : index
    %c0_6 = arith.constant 0 : index
    %7 = vector.load %arg5[%c0_5, %c0_6] : memref<32x256xf32, #tpu.memory_space<vmem>>, vector<32x256xf32>
    tpu.vector_store %arg5[%c0_5, %c0_6], %6 {strides = array<i32>} : memref<32x256xf32, #tpu.memory_space<vmem>>, vector<32x256xf32>,
    %cst_7 = arith.constant 0.000000e+00 : f32
    %8 = vector.broadcast %cst_7 : f32 to vector<2x64xf32>
    %c0_8 = arith.constant 0 : index
    %c0_9 = arith.constant 0 : index
    %9 = vector.load %arg6[%c0_8, %c0_9] : memref<2x64xf32, #tpu.memory_space<vmem>>, vector<2x64xf32>
    tpu.vector_store %arg6[%c0_8, %c0_9], %8 {strides = array<i32>} : memref<2x64xf32, #tpu.memory_space<vmem>>, vector<2x64xf32>,
    %cst_10 = arith.constant 0.000000e+00 : f32
    %10 = vector.broadcast %cst_10 : f32 to vector<2x64xf32>
    %c0_11 = arith.constant 0 : index
    %c0_12 = arith.constant 0 : index
    %11 = vector.load %arg7[%c0_11, %c0_12] : memref<2x64xf32, #tpu.memory_space<vmem>>, vector<2x64xf32>
    tpu.vector_store %arg7[%c0_11, %c0_12], %10 {strides = array<i32>} : memref<2x64xf32, #tpu.memory_space<vmem>>, vector<2x64xf32>,
    %12 = tpu.iota {dimensions = array<i32: 1>} : vector<2x256xi32>
    %c128_i32 = arith.constant 128 : i32
    %13 = vector.broadcast %c128_i32 : i32 to vector<2x256xi32>
    %14 = arith.cmpi sge, %12, %13 : vector<2x256xi32>
    %c192_i32 = arith.constant 192 : i32
    %15 = vector.broadcast %c192_i32 : i32 to vector<2x256xi32>
    %16 = arith.cmpi slt, %12, %15 : vector<2x256xi32>
    %17 = arith.andi %14, %16 : vector<2x256xi1>
    %c0_i32 = arith.constant 0 : i32
    %c2_i32 = arith.constant 2 : i32
    %18 = arith.muli %c0_i32, %c2_i32 : i32
    %19 = arith.index_cast %18 : i32 to index
    %c0_13 = arith.constant 0 : index
    %20 = vector.load %arg5[%19, %c0_13] : memref<32x256xf32, #tpu.memory_space<vmem>>, vector<2x256xf32>
    %c0_14 = arith.constant 0 : index
    %c0_15 = arith.constant 0 : index
    %21 = vector.load %arg6[%c0_14, %c0_15] : memref<2x64xf32, #tpu.memory_space<vmem>>, vector<2x64xf32>
    %22 = arith.truncf %21 : vector<2x64xf32> to vector<2x64xbf16>
    %c0_16 = arith.constant 0 : index
    %c0_17 = arith.constant 0 : index
    %23 = vector.load %arg2[%c0_16, %c0_17] : memref<64x256xbf16, #tpu.memory_space<vmem>>, vector<64x256xbf16>
    %cst_18 = arith.constant dense<0.000000e+00> : vector<2x256xf32>
    %24 = tpu.matmul %22, %23, %cst_18 {dimension_numbers = #tpu.dot_dimension_numbers<[1], [0], [0], [1], [0, 0, 1, 1], [], []>} : vector<2x64xbf16>, vector<64x256xbf16>, vector<2x256xf32> -> vector<2x256xf32>
    %25 = arith.addf %20, %24 : vector<2x256xf32>
    %26 = math.tanh %25 : vector<2x256xf32>
    %27 = arith.negf %25 : vector<2x256xf32>
    %28 = math.exp %27 : vector<2x256xf32>
    %cst_19 = arith.constant 1.000000e+00 : f32
    %29 = vector.broadcast %cst_19 : f32 to vector<2x256xf32>
    %30 = arith.addf %29, %28 : vector<2x256xf32>
    %31 = arith.divf %29, %30 : vector<2x256xf32>
    %32 = arith.select %17, %26, %31 : vector<2x256xi1>, vector<2x256xf32>
    %33 = vector.extract_strided_slice %32 {offsets = [0, 0], sizes = [2, 64], strides = [1, 1]} : vector<2x256xf32> to vector<2x64xf32>
    %34 = vector.extract_strided_slice %32 {offsets = [0, 64], sizes = [2, 64], strides = [1, 1]} : vector<2x256xf32> to vector<2x64xf32>
    %35 = vector.extract_strided_slice %32 {offsets = [0, 128], sizes = [2, 64], strides = [1, 1]} : vector<2x256xf32> to vector<2x64xf32>
    %36 = vector.extract_strided_slice %32 {offsets = [0, 192], sizes = [2, 64], strides = [1, 1]} : vector<2x256xf32> to vector<2x64xf32>
    %c0_20 = arith.constant 0 : index
    %c0_21 = arith.constant 0 : index
    %37 = vector.load %arg7[%c0_20, %c0_21] : memref<2x64xf32, #tpu.memory_space<vmem>>, vector<2x64xf32>
    %38 = arith.mulf %34, %37 : vector<2x64xf32>
    %39 = arith.mulf %33, %35 : vector<2x64xf32>
    %40 = arith.addf %38, %39 : vector<2x64xf32>
    %41 = math.tanh %40 : vector<2x64xf32>
    %42 = arith.mulf %36, %41 : vector<2x64xf32>
    %c0_22 = arith.constant 0 : index
    %c0_23 = arith.constant 0 : index
    %43 = vector.load %arg7[%c0_22, %c0_23] : memref<2x64xf32, #tpu.memory_space<vmem>>, vector<2x64xf32>
    tpu.vector_store %arg7[%c0_22, %c0_23], %40 {strides = array<i32>} : memref<2x64xf32, #tpu.memory_space<vmem>>, vector<2x64xf32>,
    %c0_24 = arith.constant 0 : index
    %c0_25 = arith.constant 0 : index
    %44 = vector.load %arg6[%c0_24, %c0_25] : memref<2x64xf32, #tpu.memory_space<vmem>>, vector<2x64xf32>
    tpu.vector_store %arg6[%c0_24, %c0_25], %42 {strides = array<i32>} : memref<2x64xf32, #tpu.memory_space<vmem>>, vector<2x64xf32>,
    %45 = arith.index_cast %c0_i32 : i32 to index
    %c0_26 = arith.constant 0 : index
    %c0_27 = arith.constant 0 : index
    %46 = vector.load %arg4[%45, %c0_26, %c0_27] : memref<16x2x64xf32, #tpu.memory_space<vmem>>, vector<1x2x64xf32>
    %47 = vector.shape_cast %46 : vector<1x2x64xf32> to vector<2x64xf32>
    %48 = vector.shape_cast %42 : vector<2x64xf32> to vector<1x2x64xf32>
    tpu.vector_store %arg4[%45, %c0_26, %c0_27], %48 {strides = array<i32>} : memref<16x2x64xf32, #tpu.memory_space<vmem>>, vector<1x2x64xf32>,
    %c1_i32 = arith.constant 1 : i32
    %c2_i32_28 = arith.constant 2 : i32
    %49 = arith.muli %c1_i32, %c2_i32_28 : i32
    %50 = arith.index_cast %49 : i32 to index
    %c0_29 = arith.constant 0 : index
    %51 = vector.load %arg5[%50, %c0_29] : memref<32x256xf32, #tpu.memory_space<vmem>>, vector<2x256xf32>
    %c0_30 = arith.constant 0 : index
    %c0_31 = arith.constant 0 : index
    %52 = vector.load %arg6[%c0_30, %c0_31] : memref<2x64xf32, #tpu.memory_space<vmem>>, vector<2x64xf32>
    %53 = arith.truncf %52 : vector<2x64xf32> to vector<2x64xbf16>
    %c0_32 = arith.constant 0 : index
    %c0_33 = arith.constant 0 : index
    %54 = vector.load %arg2[%c0_32, %c0_33] : memref<64x256xbf16, #tpu.memory_space<vmem>>, vector<64x256xbf16>
    %cst_34 = arith.constant dense<0.000000e+00> : vector<2x256xf32>
    %55 = tpu.matmul %53, %54, %cst_34 {dimension_numbers = #tpu.dot_dimension_numbers<[1], [0], [0], [1], [0, 0, 1, 1], [], []>} : vector<2x64xbf16>, vector<64x256xbf16>, vector<2x256xf32> -> vector<2x256xf32>
    %56 = arith.addf %51, %55 : vector<2x256xf32>
    %57 = math.tanh %56 : vector<2x256xf32>
    %58 = arith.negf %56 : vector<2x256xf32>
    %59 = math.exp %58 : vector<2x256xf32>
    %cst_35 = arith.constant 1.000000e+00 : f32
    %60 = vector.broadcast %cst_35 : f32 to vector<2x256xf32>
    %61 = arith.addf %60, %59 : vector<2x256xf32>
    %62 = arith.divf %60, %61 : vector<2x256xf32>
    %63 = arith.select %17, %57, %62 : vector<2x256xi1>, vector<2x256xf32>
    %64 = vector.extract_strided_slice %63 {offsets = [0, 0], sizes = [2, 64], strides = [1, 1]} : vector<2x256xf32> to vector<2x64xf32>
    %65 = vector.extract_strided_slice %63 {offsets = [0, 64], sizes = [2, 64], strides = [1, 1]} : vector<2x256xf32> to vector<2x64xf32>
    %66 = vector.extract_strided_slice %63 {offsets = [0, 128], sizes = [2, 64], strides = [1, 1]} : vector<2x256xf32> to vector<2x64xf32>
    %67 = vector.extract_strided_slice %63 {offsets = [0, 192], sizes = [2, 64], strides = [1, 1]} : vector<2x256xf32> to vector<2x64xf32>
    %c0_36 = arith.constant 0 : index
    %c0_37 = arith.constant 0 : index
    %68 = vector.load %arg7[%c0_36, %c0_37] : memref<2x64xf32, #tpu.memory_space<vmem>>, vector<2x64xf32>
    %69 = arith.mulf %65, %68 : vector<2x64xf32>
    %70 = arith.mulf %64, %66 : vector<2x64xf32>
    %71 = arith.addf %69, %70 : vector<2x64xf32>
    %72 = math.tanh %71 : vector<2x64xf32>
    %73 = arith.mulf %67, %72 : vector<2x64xf32>
    %c0_38 = arith.constant 0 : index
    %c0_39 = arith.constant 0 : index
    %74 = vector.load %arg7[%c0_38, %c0_39] : memref<2x64xf32, #tpu.memory_space<vmem>>, vector<2x64xf32>
    tpu.vector_store %arg7[%c0_38, %c0_39], %71 {strides = array<i32>} : memref<2x64xf32, #tpu.memory_space<vmem>>, vector<2x64xf32>,
    %c0_40 = arith.constant 0 : index
    %c0_41 = arith.constant 0 : index
    %75 = vector.load %arg6[%c0_40, %c0_41] : memref<2x64xf32, #tpu.memory_space<vmem>>, vector<2x64xf32>
    tpu.vector_store %arg6[%c0_40, %c0_41], %73 {strides = array<i32>} : memref<2x64xf32, #tpu.memory_space<vmem>>, vector<2x64xf32>,
    %76 = arith.index_cast %c1_i32 : i32 to index
    %c0_42 = arith.constant 0 : index
    %c0_43 = arith.constant 0 : index
    %77 = vector.load %arg4[%76, %c0_42, %c0_43] : memref<16x2x64xf32, #tpu.memory_space<vmem>>, vector<1x2x64xf32>
    %78 = vector.shape_cast %77 : vector<1x2x64xf32> to vector<2x64xf32>
    %79 = vector.shape_cast %73 : vector<2x64xf32> to vector<1x2x64xf32>
    tpu.vector_store %arg4[%76, %c0_42, %c0_43], %79 {strides = array<i32>} : memref<16x2x64xf32, #tpu.memory_space<vmem>>, vector<1x2x64xf32>,
    %c2_i32_44 = arith.constant 2 : i32
    %c2_i32_45 = arith.constant 2 : i32
    %80 = arith.muli %c2_i32_44, %c2_i32_45 : i32
    %81 = arith.index_cast %80 : i32 to index
    %c0_46 = arith.constant 0 : index
    %82 = vector.load %arg5[%81, %c0_46] : memref<32x256xf32, #tpu.memory_space<vmem>>, vector<2x256xf32>
    %c0_47 = arith.constant 0 : index
    %c0_48 = arith.constant 0 : index
    %83 = vector.load %arg6[%c0_47, %c0_48] : memref<2x64xf32, #tpu.memory_space<vmem>>, vector<2x64xf32>
    %84 = arith.truncf %83 : vector<2x64xf32> to vector<2x64xbf16>
    %c0_49 = arith.constant 0 : index
    %c0_50 = arith.constant 0 : index
    %85 = vector.load %arg2[%c0_49, %c0_50] : memref<64x256xbf16, #tpu.memory_space<vmem>>, vector<64x256xbf16>
    %cst_51 = arith.constant dense<0.000000e+00> : vector<2x256xf32>
    %86 = tpu.matmul %84, %85, %cst_51 {dimension_numbers = #tpu.dot_dimension_numbers<[1], [0], [0], [1], [0, 0, 1, 1], [], []>} : vector<2x64xbf16>, vector<64x256xbf16>, vector<2x256xf32> -> vector<2x256xf32>
    %87 = arith.addf %82, %86 : vector<2x256xf32>
    %88 = math.tanh %87 : vector<2x256xf32>
    %89 = arith.negf %87 : vector<2x256xf32>
    %90 = math.exp %89 : vector<2x256xf32>
    %cst_52 = arith.constant 1.000000e+00 : f32
    %91 = vector.broadcast %cst_52 : f32 to vector<2x256xf32>
    %92 = arith.addf %91, %90 : vector<2x256xf32>
    %93 = arith.divf %91, %92 : vector<2x256xf32>
    %94 = arith.select %17, %88, %93 : vector<2x256xi1>, vector<2x256xf32>
    %95 = vector.extract_strided_slice %94 {offsets = [0, 0], sizes = [2, 64], strides = [1, 1]} : vector<2x256xf32> to vector<2x64xf32>
    %96 = vector.extract_strided_slice %94 {offsets = [0, 64], sizes = [2, 64], strides = [1, 1]} : vector<2x256xf32> to vector<2x64xf32>
    %97 = vector.extract_strided_slice %94 {offsets = [0, 128], sizes = [2, 64], strides = [1, 1]} : vector<2x256xf32> to vector<2x64xf32>
    %98 = vector.extract_strided_slice %94 {offsets = [0, 192], sizes = [2, 64], strides = [1, 1]} : vector<2x256xf32> to vector<2x64xf32>
    %c0_53 = arith.constant 0 : index
    %c0_54 = arith.constant 0 : index
    %99 = vector.load %arg7[%c0_53, %c0_54] : memref<2x64xf32, #tpu.memory_space<vmem>>, vector<2x64xf32>
    %100 = arith.mulf %96, %99 : vector<2x64xf32>
    %101 = arith.mulf %95, %97 : vector<2x64xf32>
    %102 = arith.addf %100, %101 : vector<2x64xf32>
    %103 = math.tanh %102 : vector<2x64xf32>
    %104 = arith.mulf %98, %103 : vector<2x64xf32>
    %c0_55 = arith.constant 0 : index
    %c0_56 = arith.constant 0 : index
    %105 = vector.load %arg7[%c0_55, %c0_56] : memref<2x64xf32, #tpu.memory_space<vmem>>, vector<2x64xf32>
    tpu.vector_store %arg7[%c0_55, %c0_56], %102 {strides = array<i32>} : memref<2x64xf32, #tpu.memory_space<vmem>>, vector<2x64xf32>,
    %c0_57 = arith.constant 0 : index
    %c0_58 = arith.constant 0 : index
    %106 = vector.load %arg6[%c0_57, %c0_58] : memref<2x64xf32, #tpu.memory_space<vmem>>, vector<2x64xf32>
    tpu.vector_store %arg6[%c0_57, %c0_58], %104 {strides = array<i32>} : memref<2x64xf32, #tpu.memory_space<vmem>>, vector<2x64xf32>,
    %107 = arith.index_cast %c2_i32_44 : i32 to index
    %c0_59 = arith.constant 0 : index
    %c0_60 = arith.constant 0 : index
    %108 = vector.load %arg4[%107, %c0_59, %c0_60] : memref<16x2x64xf32, #tpu.memory_space<vmem>>, vector<1x2x64xf32>
    %109 = vector.shape_cast %108 : vector<1x2x64xf32> to vector<2x64xf32>
    %110 = vector.shape_cast %104 : vector<2x64xf32> to vector<1x2x64xf32>
    tpu.vector_store %arg4[%107, %c0_59, %c0_60], %110 {strides = array<i32>} : memref<16x2x64xf32, #tpu.memory_space<vmem>>, vector<1x2x64xf32>,
    %c3_i32 = arith.constant 3 : i32
    %c2_i32_61 = arith.constant 2 : i32
    %111 = arith.muli %c3_i32, %c2_i32_61 : i32
    %112 = arith.index_cast %111 : i32 to index
    %c0_62 = arith.constant 0 : index
    %113 = vector.load %arg5[%112, %c0_62] : memref<32x256xf32, #tpu.memory_space<vmem>>, vector<2x256xf32>
    %c0_63 = arith.constant 0 : index
    %c0_64 = arith.constant 0 : index
    %114 = vector.load %arg6[%c0_63, %c0_64] : memref<2x64xf32, #tpu.memory_space<vmem>>, vector<2x64xf32>
    %115 = arith.truncf %114 : vector<2x64xf32> to vector<2x64xbf16>
    %c0_65 = arith.constant 0 : index
    %c0_66 = arith.constant 0 : index
    %116 = vector.load %arg2[%c0_65, %c0_66] : memref<64x256xbf16, #tpu.memory_space<vmem>>, vector<64x256xbf16>
    %cst_67 = arith.constant dense<0.000000e+00> : vector<2x256xf32>
    %117 = tpu.matmul %115, %116, %cst_67 {dimension_numbers = #tpu.dot_dimension_numbers<[1], [0], [0], [1], [0, 0, 1, 1], [], []>} : vector<2x64xbf16>, vector<64x256xbf16>, vector<2x256xf32> -> vector<2x256xf32>
    %118 = arith.addf %113, %117 : vector<2x256xf32>
    %119 = math.tanh %118 : vector<2x256xf32>
    %120 = arith.negf %118 : vector<2x256xf32>
    %121 = math.exp %120 : vector<2x256xf32>
    %cst_68 = arith.constant 1.000000e+00 : f32
    %122 = vector.broadcast %cst_68 : f32 to vector<2x256xf32>
    %123 = arith.addf %122, %121 : vector<2x256xf32>
    %124 = arith.divf %122, %123 : vector<2x256xf32>
    %125 = arith.select %17, %119, %124 : vector<2x256xi1>, vector<2x256xf32>
    %126 = vector.extract_strided_slice %125 {offsets = [0, 0], sizes = [2, 64], strides = [1, 1]} : vector<2x256xf32> to vector<2x64xf32>
    %127 = vector.extract_strided_slice %125 {offsets = [0, 64], sizes = [2, 64], strides = [1, 1]} : vector<2x256xf32> to vector<2x64xf32>
    %128 = vector.extract_strided_slice %125 {offsets = [0, 128], sizes = [2, 64], strides = [1, 1]} : vector<2x256xf32> to vector<2x64xf32>
    %129 = vector.extract_strided_slice %125 {offsets = [0, 192], sizes = [2, 64], strides = [1, 1]} : vector<2x256xf32> to vector<2x64xf32>
    %c0_69 = arith.constant 0 : index
    %c0_70 = arith.constant 0 : index
    %130 = vector.load %arg7[%c0_69, %c0_70] : memref<2x64xf32, #tpu.memory_space<vmem>>, vector<2x64xf32>
    %131 = arith.mulf %127, %130 : vector<2x64xf32>
    %132 = arith.mulf %126, %128 : vector<2x64xf32>
    %133 = arith.addf %131, %132 : vector<2x64xf32>
    %134 = math.tanh %133 : vector<2x64xf32>
    %135 = arith.mulf %129, %134 : vector<2x64xf32>
    %c0_71 = arith.constant 0 : index
    %c0_72 = arith.constant 0 : index
    %136 = vector.load %arg7[%c0_71, %c0_72] : memref<2x64xf32, #tpu.memory_space<vmem>>, vector<2x64xf32>
    tpu.vector_store %arg7[%c0_71, %c0_72], %133 {strides = array<i32>} : memref<2x64xf32, #tpu.memory_space<vmem>>, vector<2x64xf32>,
    %c0_73 = arith.constant 0 : index
    %c0_74 = arith.constant 0 : index
    %137 = vector.load %arg6[%c0_73, %c0_74] : memref<2x64xf32, #tpu.memory_space<vmem>>, vector<2x64xf32>
    tpu.vector_store %arg6[%c0_73, %c0_74], %135 {strides = array<i32>} : memref<2x64xf32, #tpu.memory_space<vmem>>, vector<2x64xf32>,
    %138 = arith.index_cast %c3_i32 : i32 to index
    %c0_75 = arith.constant 0 : index
    %c0_76 = arith.constant 0 : index
    %139 = vector.load %arg4[%138, %c0_75, %c0_76] : memref<16x2x64xf32, #tpu.memory_space<vmem>>, vector<1x2x64xf32>
    %140 = vector.shape_cast %139 : vector<1x2x64xf32> to vector<2x64xf32>
    %141 = vector.shape_cast %135 : vector<2x64xf32> to vector<1x2x64xf32>
    tpu.vector_store %arg4[%138, %c0_75, %c0_76], %141 {strides = array<i32>} : memref<16x2x64xf32, #tpu.memory_space<vmem>>, vector<1x2x64xf32>,
    %c4_i32 = arith.constant 4 : i32
    %c2_i32_77 = arith.constant 2 : i32
    %142 = arith.muli %c4_i32, %c2_i32_77 : i32
    %143 = arith.index_cast %142 : i32 to index
    %c0_78 = arith.constant 0 : index
    %144 = vector.load %arg5[%143, %c0_78] : memref<32x256xf32, #tpu.memory_space<vmem>>, vector<2x256xf32>
    %c0_79 = arith.constant 0 : index
    %c0_80 = arith.constant 0 : index
    %145 = vector.load %arg6[%c0_79, %c0_80] : memref<2x64xf32, #tpu.memory_space<vmem>>, vector<2x64xf32>
    %146 = arith.truncf %145 : vector<2x64xf32> to vector<2x64xbf16>
    %c0_81 = arith.constant 0 : index
    %c0_82 = arith.constant 0 : index
    %147 = vector.load %arg2[%c0_81, %c0_82] : memref<64x256xbf16, #tpu.memory_space<vmem>>, vector<64x256xbf16>
    %cst_83 = arith.constant dense<0.000000e+00> : vector<2x256xf32>
    %148 = tpu.matmul %146, %147, %cst_83 {dimension_numbers = #tpu.dot_dimension_numbers<[1], [0], [0], [1], [0, 0, 1, 1], [], []>} : vector<2x64xbf16>, vector<64x256xbf16>, vector<2x256xf32> -> vector<2x256xf32>
    %149 = arith.addf %144, %148 : vector<2x256xf32>
    %150 = math.tanh %149 : vector<2x256xf32>
    %151 = arith.negf %149 : vector<2x256xf32>
    %152 = math.exp %151 : vector<2x256xf32>
    %cst_84 = arith.constant 1.000000e+00 : f32
    %153 = vector.broadcast %cst_84 : f32 to vector<2x256xf32>
    %154 = arith.addf %153, %152 : vector<2x256xf32>
    %155 = arith.divf %153, %154 : vector<2x256xf32>
    %156 = arith.select %17, %150, %155 : vector<2x256xi1>, vector<2x256xf32>
    %157 = vector.extract_strided_slice %156 {offsets = [0, 0], sizes = [2, 64], strides = [1, 1]} : vector<2x256xf32> to vector<2x64xf32>
    %158 = vector.extract_strided_slice %156 {offsets = [0, 64], sizes = [2, 64], strides = [1, 1]} : vector<2x256xf32> to vector<2x64xf32>
    %159 = vector.extract_strided_slice %156 {offsets = [0, 128], sizes = [2, 64], strides = [1, 1]} : vector<2x256xf32> to vector<2x64xf32>
    %160 = vector.extract_strided_slice %156 {offsets = [0, 192], sizes = [2, 64], strides = [1, 1]} : vector<2x256xf32> to vector<2x64xf32>
    %c0_85 = arith.constant 0 : index
    %c0_86 = arith.constant 0 : index
    %161 = vector.load %arg7[%c0_85, %c0_86] : memref<2x64xf32, #tpu.memory_space<vmem>>, vector<2x64xf32>
    %162 = arith.mulf %158, %161 : vector<2x64xf32>
    %163 = arith.mulf %157, %159 : vector<2x64xf32>
    %164 = arith.addf %162, %163 : vector<2x64xf32>
    %165 = math.tanh %164 : vector<2x64xf32>
    %166 = arith.mulf %160, %165 : vector<2x64xf32>
    %c0_87 = arith.constant 0 : index
    %c0_88 = arith.constant 0 : index
    %167 = vector.load %arg7[%c0_87, %c0_88] : memref<2x64xf32, #tpu.memory_space<vmem>>, vector<2x64xf32>
    tpu.vector_store %arg7[%c0_87, %c0_88], %164 {strides = array<i32>} : memref<2x64xf32, #tpu.memory_space<vmem>>, vector<2x64xf32>,
    %c0_89 = arith.constant 0 : index
    %c0_90 = arith.constant 0 : index
    %168 = vector.load %arg6[%c0_89, %c0_90] : memref<2x64xf32, #tpu.memory_space<vmem>>, vector<2x64xf32>
    tpu.vector_store %arg6[%c0_89, %c0_90], %166 {strides = array<i32>} : memref<2x64xf32, #tpu.memory_space<vmem>>, vector<2x64xf32>,
    %169 = arith.index_cast %c4_i32 : i32 to index
    %c0_91 = arith.constant 0 : index
    %c0_92 = arith.constant 0 : index
    %170 = vector.load %arg4[%169, %c0_91, %c0_92] : memref<16x2x64xf32, #tpu.memory_space<vmem>>, vector<1x2x64xf32>
    %171 = vector.shape_cast %170 : vector<1x2x64xf32> to vector<2x64xf32>
    %172 = vector.shape_cast %166 : vector<2x64xf32> to vector<1x2x64xf32>
    tpu.vector_store %arg4[%169, %c0_91, %c0_92], %172 {strides = array<i32>} : memref<16x2x64xf32, #tpu.memory_space<vmem>>, vector<1x2x64xf32>,
    %c5_i32 = arith.constant 5 : i32
    %c2_i32_93 = arith.constant 2 : i32
    %173 = arith.muli %c5_i32, %c2_i32_93 : i32
    %174 = arith.index_cast %173 : i32 to index
    %c0_94 = arith.constant 0 : index
    %175 = vector.load %arg5[%174, %c0_94] : memref<32x256xf32, #tpu.memory_space<vmem>>, vector<2x256xf32>
    %c0_95 = arith.constant 0 : index
    %c0_96 = arith.constant 0 : index
    %176 = vector.load %arg6[%c0_95, %c0_96] : memref<2x64xf32, #tpu.memory_space<vmem>>, vector<2x64xf32>
    %177 = arith.truncf %176 : vector<2x64xf32> to vector<2x64xbf16>
    %c0_97 = arith.constant 0 : index
    %c0_98 = arith.constant 0 : index
    %178 = vector.load %arg2[%c0_97, %c0_98] : memref<64x256xbf16, #tpu.memory_space<vmem>>, vector<64x256xbf16>
    %cst_99 = arith.constant dense<0.000000e+00> : vector<2x256xf32>
    %179 = tpu.matmul %177, %178, %cst_99 {dimension_numbers = #tpu.dot_dimension_numbers<[1], [0], [0], [1], [0, 0, 1, 1], [], []>} : vector<2x64xbf16>, vector<64x256xbf16>, vector<2x256xf32> -> vector<2x256xf32>
    %180 = arith.addf %175, %179 : vector<2x256xf32>
    %181 = math.tanh %180 : vector<2x256xf32>
    %182 = arith.negf %180 : vector<2x256xf32>
    %183 = math.exp %182 : vector<2x256xf32>
    %cst_100 = arith.constant 1.000000e+00 : f32
    %184 = vector.broadcast %cst_100 : f32 to vector<2x256xf32>
    %185 = arith.addf %184, %183 : vector<2x256xf32>
    %186 = arith.divf %184, %185 : vector<2x256xf32>
    %187 = arith.select %17, %181, %186 : vector<2x256xi1>, vector<2x256xf32>
    %188 = vector.extract_strided_slice %187 {offsets = [0, 0], sizes = [2, 64], strides = [1, 1]} : vector<2x256xf32> to vector<2x64xf32>
    %189 = vector.extract_strided_slice %187 {offsets = [0, 64], sizes = [2, 64], strides = [1, 1]} : vector<2x256xf32> to vector<2x64xf32>
    %190 = vector.extract_strided_slice %187 {offsets = [0, 128], sizes = [2, 64], strides = [1, 1]} : vector<2x256xf32> to vector<2x64xf32>
    %191 = vector.extract_strided_slice %187 {offsets = [0, 192], sizes = [2, 64], strides = [1, 1]} : vector<2x256xf32> to vector<2x64xf32>
    %c0_101 = arith.constant 0 : index
    %c0_102 = arith.constant 0 : index
    %192 = vector.load %arg7[%c0_101, %c0_102] : memref<2x64xf32, #tpu.memory_space<vmem>>, vector<2x64xf32>
    %193 = arith.mulf %189, %192 : vector<2x64xf32>
    %194 = arith.mulf %188, %190 : vector<2x64xf32>
    %195 = arith.addf %193, %194 : vector<2x64xf32>
    %196 = math.tanh %195 : vector<2x64xf32>
    %197 = arith.mulf %191, %196 : vector<2x64xf32>
    %c0_103 = arith.constant 0 : index
    %c0_104 = arith.constant 0 : index
    %198 = vector.load %arg7[%c0_103, %c0_104] : memref<2x64xf32, #tpu.memory_space<vmem>>, vector<2x64xf32>
    tpu.vector_store %arg7[%c0_103, %c0_104], %195 {strides = array<i32>} : memref<2x64xf32, #tpu.memory_space<vmem>>, vector<2x64xf32>,
    %c0_105 = arith.constant 0 : index
    %c0_106 = arith.constant 0 : index
    %199 = vector.load %arg6[%c0_105, %c0_106] : memref<2x64xf32, #tpu.memory_space<vmem>>, vector<2x64xf32>
    tpu.vector_store %arg6[%c0_105, %c0_106], %197 {strides = array<i32>} : memref<2x64xf32, #tpu.memory_space<vmem>>, vector<2x64xf32>,
    %200 = arith.index_cast %c5_i32 : i32 to index
    %c0_107 = arith.constant 0 : index
    %c0_108 = arith.constant 0 : index
    %201 = vector.load %arg4[%200, %c0_107, %c0_108] : memref<16x2x64xf32, #tpu.memory_space<vmem>>, vector<1x2x64xf32>
    %202 = vector.shape_cast %201 : vector<1x2x64xf32> to vector<2x64xf32>
    %203 = vector.shape_cast %197 : vector<2x64xf32> to vector<1x2x64xf32>
    tpu.vector_store %arg4[%200, %c0_107, %c0_108], %203 {strides = array<i32>} : memref<16x2x64xf32, #tpu.memory_space<vmem>>, vector<1x2x64xf32>,
    %c6_i32 = arith.constant 6 : i32
    %c2_i32_109 = arith.constant 2 : i32
    %204 = arith.muli %c6_i32, %c2_i32_109 : i32
    %205 = arith.index_cast %204 : i32 to index
    %c0_110 = arith.constant 0 : index
    %206 = vector.load %arg5[%205, %c0_110] : memref<32x256xf32, #tpu.memory_space<vmem>>, vector<2x256xf32>
    %c0_111 = arith.constant 0 : index
    %c0_112 = arith.constant 0 : index
    %207 = vector.load %arg6[%c0_111, %c0_112] : memref<2x64xf32, #tpu.memory_space<vmem>>, vector<2x64xf32>
    %208 = arith.truncf %207 : vector<2x64xf32> to vector<2x64xbf16>
    %c0_113 = arith.constant 0 : index
    %c0_114 = arith.constant 0 : index
    %209 = vector.load %arg2[%c0_113, %c0_114] : memref<64x256xbf16, #tpu.memory_space<vmem>>, vector<64x256xbf16>
    %cst_115 = arith.constant dense<0.000000e+00> : vector<2x256xf32>
    %210 = tpu.matmul %208, %209, %cst_115 {dimension_numbers = #tpu.dot_dimension_numbers<[1], [0], [0], [1], [0, 0, 1, 1], [], []>} : vector<2x64xbf16>, vector<64x256xbf16>, vector<2x256xf32> -> vector<2x256xf32>
    %211 = arith.addf %206, %210 : vector<2x256xf32>
    %212 = math.tanh %211 : vector<2x256xf32>
    %213 = arith.negf %211 : vector<2x256xf32>
    %214 = math.exp %213 : vector<2x256xf32>
    %cst_116 = arith.constant 1.000000e+00 : f32
    %215 = vector.broadcast %cst_116 : f32 to vector<2x256xf32>
    %216 = arith.addf %215, %214 : vector<2x256xf32>
    %217 = arith.divf %215, %216 : vector<2x256xf32>
    %218 = arith.select %17, %212, %217 : vector<2x256xi1>, vector<2x256xf32>
    %219 = vector.extract_strided_slice %218 {offsets = [0, 0], sizes = [2, 64], strides = [1, 1]} : vector<2x256xf32> to vector<2x64xf32>
    %220 = vector.extract_strided_slice %218 {offsets = [0, 64], sizes = [2, 64], strides = [1, 1]} : vector<2x256xf32> to vector<2x64xf32>
    %221 = vector.extract_strided_slice %218 {offsets = [0, 128], sizes = [2, 64], strides = [1, 1]} : vector<2x256xf32> to vector<2x64xf32>
    %222 = vector.extract_strided_slice %218 {offsets = [0, 192], sizes = [2, 64], strides = [1, 1]} : vector<2x256xf32> to vector<2x64xf32>
    %c0_117 = arith.constant 0 : index
    %c0_118 = arith.constant 0 : index
    %223 = vector.load %arg7[%c0_117, %c0_118] : memref<2x64xf32, #tpu.memory_space<vmem>>, vector<2x64xf32>
    %224 = arith.mulf %220, %223 : vector<2x64xf32>
    %225 = arith.mulf %219, %221 : vector<2x64xf32>
    %226 = arith.addf %224, %225 : vector<2x64xf32>
    %227 = math.tanh %226 : vector<2x64xf32>
    %228 = arith.mulf %222, %227 : vector<2x64xf32>
    %c0_119 = arith.constant 0 : index
    %c0_120 = arith.constant 0 : index
    %229 = vector.load %arg7[%c0_119, %c0_120] : memref<2x64xf32, #tpu.memory_space<vmem>>, vector<2x64xf32>
    tpu.vector_store %arg7[%c0_119, %c0_120], %226 {strides = array<i32>} : memref<2x64xf32, #tpu.memory_space<vmem>>, vector<2x64xf32>,
    %c0_121 = arith.constant 0 : index
    %c0_122 = arith.constant 0 : index
    %230 = vector.load %arg6[%c0_121, %c0_122] : memref<2x64xf32, #tpu.memory_space<vmem>>, vector<2x64xf32>
    tpu.vector_store %arg6[%c0_121, %c0_122], %228 {strides = array<i32>} : memref<2x64xf32, #tpu.memory_space<vmem>>, vector<2x64xf32>,
    %231 = arith.index_cast %c6_i32 : i32 to index
    %c0_123 = arith.constant 0 : index
    %c0_124 = arith.constant 0 : index
    %232 = vector.load %arg4[%231, %c0_123, %c0_124] : memref<16x2x64xf32, #tpu.memory_space<vmem>>, vector<1x2x64xf32>
    %233 = vector.shape_cast %232 : vector<1x2x64xf32> to vector<2x64xf32>
    %234 = vector.shape_cast %228 : vector<2x64xf32> to vector<1x2x64xf32>
    tpu.vector_store %arg4[%231, %c0_123, %c0_124], %234 {strides = array<i32>} : memref<16x2x64xf32, #tpu.memory_space<vmem>>, vector<1x2x64xf32>,
    %c7_i32 = arith.constant 7 : i32
    %c2_i32_125 = arith.constant 2 : i32
    %235 = arith.muli %c7_i32, %c2_i32_125 : i32
    %236 = arith.index_cast %235 : i32 to index
    %c0_126 = arith.constant 0 : index
    %237 = vector.load %arg5[%236, %c0_126] : memref<32x256xf32, #tpu.memory_space<vmem>>, vector<2x256xf32>
    %c0_127 = arith.constant 0 : index
    %c0_128 = arith.constant 0 : index
    %238 = vector.load %arg6[%c0_127, %c0_128] : memref<2x64xf32, #tpu.memory_space<vmem>>, vector<2x64xf32>
    %239 = arith.truncf %238 : vector<2x64xf32> to vector<2x64xbf16>
    %c0_129 = arith.constant 0 : index
    %c0_130 = arith.constant 0 : index
    %240 = vector.load %arg2[%c0_129, %c0_130] : memref<64x256xbf16, #tpu.memory_space<vmem>>, vector<64x256xbf16>
    %cst_131 = arith.constant dense<0.000000e+00> : vector<2x256xf32>
    %241 = tpu.matmul %239, %240, %cst_131 {dimension_numbers = #tpu.dot_dimension_numbers<[1], [0], [0], [1], [0, 0, 1, 1], [], []>} : vector<2x64xbf16>, vector<64x256xbf16>, vector<2x256xf32> -> vector<2x256xf32>
    %242 = arith.addf %237, %241 : vector<2x256xf32>
    %243 = math.tanh %242 : vector<2x256xf32>
    %244 = arith.negf %242 : vector<2x256xf32>
    %245 = math.exp %244 : vector<2x256xf32>
    %cst_132 = arith.constant 1.000000e+00 : f32
    %246 = vector.broadcast %cst_132 : f32 to vector<2x256xf32>
    %247 = arith.addf %246, %245 : vector<2x256xf32>
    %248 = arith.divf %246, %247 : vector<2x256xf32>
    %249 = arith.select %17, %243, %248 : vector<2x256xi1>, vector<2x256xf32>
    %250 = vector.extract_strided_slice %249 {offsets = [0, 0], sizes = [2, 64], strides = [1, 1]} : vector<2x256xf32> to vector<2x64xf32>
    %251 = vector.extract_strided_slice %249 {offsets = [0, 64], sizes = [2, 64], strides = [1, 1]} : vector<2x256xf32> to vector<2x64xf32>
    %252 = vector.extract_strided_slice %249 {offsets = [0, 128], sizes = [2, 64], strides = [1, 1]} : vector<2x256xf32> to vector<2x64xf32>
    %253 = vector.extract_strided_slice %249 {offsets = [0, 192], sizes = [2, 64], strides = [1, 1]} : vector<2x256xf32> to vector<2x64xf32>
    %c0_133 = arith.constant 0 : index
    %c0_134 = arith.constant 0 : index
    %254 = vector.load %arg7[%c0_133, %c0_134] : memref<2x64xf32, #tpu.memory_space<vmem>>, vector<2x64xf32>
    %255 = arith.mulf %251, %254 : vector<2x64xf32>
    %256 = arith.mulf %250, %252 : vector<2x64xf32>
    %257 = arith.addf %255, %256 : vector<2x64xf32>
    %258 = math.tanh %257 : vector<2x64xf32>
    %259 = arith.mulf %253, %258 : vector<2x64xf32>
    %c0_135 = arith.constant 0 : index
    %c0_136 = arith.constant 0 : index
    %260 = vector.load %arg7[%c0_135, %c0_136] : memref<2x64xf32, #tpu.memory_space<vmem>>, vector<2x64xf32>
    tpu.vector_store %arg7[%c0_135, %c0_136], %257 {strides = array<i32>} : memref<2x64xf32, #tpu.memory_space<vmem>>, vector<2x64xf32>,
    %c0_137 = arith.constant 0 : index
    %c0_138 = arith.constant 0 : index
    %261 = vector.load %arg6[%c0_137, %c0_138] : memref<2x64xf32, #tpu.memory_space<vmem>>, vector<2x64xf32>
    tpu.vector_store %arg6[%c0_137, %c0_138], %259 {strides = array<i32>} : memref<2x64xf32, #tpu.memory_space<vmem>>, vector<2x64xf32>,
    %262 = arith.index_cast %c7_i32 : i32 to index
    %c0_139 = arith.constant 0 : index
    %c0_140 = arith.constant 0 : index
    %263 = vector.load %arg4[%262, %c0_139, %c0_140] : memref<16x2x64xf32, #tpu.memory_space<vmem>>, vector<1x2x64xf32>
    %264 = vector.shape_cast %263 : vector<1x2x64xf32> to vector<2x64xf32>
    %265 = vector.shape_cast %259 : vector<2x64xf32> to vector<1x2x64xf32>
    tpu.vector_store %arg4[%262, %c0_139, %c0_140], %265 {strides = array<i32>} : memref<16x2x64xf32, #tpu.memory_space<vmem>>, vector<1x2x64xf32>,
    %c8_i32 = arith.constant 8 : i32
    %c2_i32_141 = arith.constant 2 : i32
    %266 = arith.muli %c8_i32, %c2_i32_141 : i32
    %267 = arith.index_cast %266 : i32 to index
    %c0_142 = arith.constant 0 : index
    %268 = vector.load %arg5[%267, %c0_142] : memref<32x256xf32, #tpu.memory_space<vmem>>, vector<2x256xf32>
    %c0_143 = arith.constant 0 : index
    %c0_144 = arith.constant 0 : index
    %269 = vector.load %arg6[%c0_143, %c0_144] : memref<2x64xf32, #tpu.memory_space<vmem>>, vector<2x64xf32>
    %270 = arith.truncf %269 : vector<2x64xf32> to vector<2x64xbf16>
    %c0_145 = arith.constant 0 : index
    %c0_146 = arith.constant 0 : index
    %271 = vector.load %arg2[%c0_145, %c0_146] : memref<64x256xbf16, #tpu.memory_space<vmem>>, vector<64x256xbf16>
    %cst_147 = arith.constant dense<0.000000e+00> : vector<2x256xf32>
    %272 = tpu.matmul %270, %271, %cst_147 {dimension_numbers = #tpu.dot_dimension_numbers<[1], [0], [0], [1], [0, 0, 1, 1], [], []>} : vector<2x64xbf16>, vector<64x256xbf16>, vector<2x256xf32> -> vector<2x256xf32>
    %273 = arith.addf %268, %272 : vector<2x256xf32>
    %274 = math.tanh %273 : vector<2x256xf32>
    %275 = arith.negf %273 : vector<2x256xf32>
    %276 = math.exp %275 : vector<2x256xf32>
    %cst_148 = arith.constant 1.000000e+00 : f32
    %277 = vector.broadcast %cst_148 : f32 to vector<2x256xf32>
    %278 = arith.addf %277, %276 : vector<2x256xf32>
    %279 = arith.divf %277, %278 : vector<2x256xf32>
    %280 = arith.select %17, %274, %279 : vector<2x256xi1>, vector<2x256xf32>
    %281 = vector.extract_strided_slice %280 {offsets = [0, 0], sizes = [2, 64], strides = [1, 1]} : vector<2x256xf32> to vector<2x64xf32>
    %282 = vector.extract_strided_slice %280 {offsets = [0, 64], sizes = [2, 64], strides = [1, 1]} : vector<2x256xf32> to vector<2x64xf32>
    %283 = vector.extract_strided_slice %280 {offsets = [0, 128], sizes = [2, 64], strides = [1, 1]} : vector<2x256xf32> to vector<2x64xf32>
    %284 = vector.extract_strided_slice %280 {offsets = [0, 192], sizes = [2, 64], strides = [1, 1]} : vector<2x256xf32> to vector<2x64xf32>
    %c0_149 = arith.constant 0 : index
    %c0_150 = arith.constant 0 : index
    %285 = vector.load %arg7[%c0_149, %c0_150] : memref<2x64xf32, #tpu.memory_space<vmem>>, vector<2x64xf32>
    %286 = arith.mulf %282, %285 : vector<2x64xf32>
    %287 = arith.mulf %281, %283 : vector<2x64xf32>
    %288 = arith.addf %286, %287 : vector<2x64xf32>
    %289 = math.tanh %288 : vector<2x64xf32>
    %290 = arith.mulf %284, %289 : vector<2x64xf32>
    %c0_151 = arith.constant 0 : index
    %c0_152 = arith.constant 0 : index
    %291 = vector.load %arg7[%c0_151, %c0_152] : memref<2x64xf32, #tpu.memory_space<vmem>>, vector<2x64xf32>
    tpu.vector_store %arg7[%c0_151, %c0_152], %288 {strides = array<i32>} : memref<2x64xf32, #tpu.memory_space<vmem>>, vector<2x64xf32>,
    %c0_153 = arith.constant 0 : index
    %c0_154 = arith.constant 0 : index
    %292 = vector.load %arg6[%c0_153, %c0_154] : memref<2x64xf32, #tpu.memory_space<vmem>>, vector<2x64xf32>
    tpu.vector_store %arg6[%c0_153, %c0_154], %290 {strides = array<i32>} : memref<2x64xf32, #tpu.memory_space<vmem>>, vector<2x64xf32>,
    %293 = arith.index_cast %c8_i32 : i32 to index
    %c0_155 = arith.constant 0 : index
    %c0_156 = arith.constant 0 : index
    %294 = vector.load %arg4[%293, %c0_155, %c0_156] : memref<16x2x64xf32, #tpu.memory_space<vmem>>, vector<1x2x64xf32>
    %295 = vector.shape_cast %294 : vector<1x2x64xf32> to vector<2x64xf32>
    %296 = vector.shape_cast %290 : vector<2x64xf32> to vector<1x2x64xf32>
    tpu.vector_store %arg4[%293, %c0_155, %c0_156], %296 {strides = array<i32>} : memref<16x2x64xf32, #tpu.memory_space<vmem>>, vector<1x2x64xf32>,
    %c9_i32 = arith.constant 9 : i32
    %c2_i32_157 = arith.constant 2 : i32
    %297 = arith.muli %c9_i32, %c2_i32_157 : i32
    %298 = arith.index_cast %297 : i32 to index
    %c0_158 = arith.constant 0 : index
    %299 = vector.load %arg5[%298, %c0_158] : memref<32x256xf32, #tpu.memory_space<vmem>>, vector<2x256xf32>
    %c0_159 = arith.constant 0 : index
    %c0_160 = arith.constant 0 : index
    %300 = vector.load %arg6[%c0_159, %c0_160] : memref<2x64xf32, #tpu.memory_space<vmem>>, vector<2x64xf32>
    %301 = arith.truncf %300 : vector<2x64xf32> to vector<2x64xbf16>
    %c0_161 = arith.constant 0 : index
    %c0_162 = arith.constant 0 : index
    %302 = vector.load %arg2[%c0_161, %c0_162] : memref<64x256xbf16, #tpu.memory_space<vmem>>, vector<64x256xbf16>
    %cst_163 = arith.constant dense<0.000000e+00> : vector<2x256xf32>
    %303 = tpu.matmul %301, %302, %cst_163 {dimension_numbers = #tpu.dot_dimension_numbers<[1], [0], [0], [1], [0, 0, 1, 1], [], []>} : vector<2x64xbf16>, vector<64x256xbf16>, vector<2x256xf32> -> vector<2x256xf32>
    %304 = arith.addf %299, %303 : vector<2x256xf32>
    %305 = math.tanh %304 : vector<2x256xf32>
    %306 = arith.negf %304 : vector<2x256xf32>
    %307 = math.exp %306 : vector<2x256xf32>
    %cst_164 = arith.constant 1.000000e+00 : f32
    %308 = vector.broadcast %cst_164 : f32 to vector<2x256xf32>
    %309 = arith.addf %308, %307 : vector<2x256xf32>
    %310 = arith.divf %308, %309 : vector<2x256xf32>
    %311 = arith.select %17, %305, %310 : vector<2x256xi1>, vector<2x256xf32>
    %312 = vector.extract_strided_slice %311 {offsets = [0, 0], sizes = [2, 64], strides = [1, 1]} : vector<2x256xf32> to vector<2x64xf32>
    %313 = vector.extract_strided_slice %311 {offsets = [0, 64], sizes = [2, 64], strides = [1, 1]} : vector<2x256xf32> to vector<2x64xf32>
    %314 = vector.extract_strided_slice %311 {offsets = [0, 128], sizes = [2, 64], strides = [1, 1]} : vector<2x256xf32> to vector<2x64xf32>
    %315 = vector.extract_strided_slice %311 {offsets = [0, 192], sizes = [2, 64], strides = [1, 1]} : vector<2x256xf32> to vector<2x64xf32>
    %c0_165 = arith.constant 0 : index
    %c0_166 = arith.constant 0 : index
    %316 = vector.load %arg7[%c0_165, %c0_166] : memref<2x64xf32, #tpu.memory_space<vmem>>, vector<2x64xf32>
    %317 = arith.mulf %313, %316 : vector<2x64xf32>
    %318 = arith.mulf %312, %314 : vector<2x64xf32>
    %319 = arith.addf %317, %318 : vector<2x64xf32>
    %320 = math.tanh %319 : vector<2x64xf32>
    %321 = arith.mulf %315, %320 : vector<2x64xf32>
    %c0_167 = arith.constant 0 : index
    %c0_168 = arith.constant 0 : index
    %322 = vector.load %arg7[%c0_167, %c0_168] : memref<2x64xf32, #tpu.memory_space<vmem>>, vector<2x64xf32>
    tpu.vector_store %arg7[%c0_167, %c0_168], %319 {strides = array<i32>} : memref<2x64xf32, #tpu.memory_space<vmem>>, vector<2x64xf32>,
    %c0_169 = arith.constant 0 : index
    %c0_170 = arith.constant 0 : index
    %323 = vector.load %arg6[%c0_169, %c0_170] : memref<2x64xf32, #tpu.memory_space<vmem>>, vector<2x64xf32>
    tpu.vector_store %arg6[%c0_169, %c0_170], %321 {strides = array<i32>} : memref<2x64xf32, #tpu.memory_space<vmem>>, vector<2x64xf32>,
    %324 = arith.index_cast %c9_i32 : i32 to index
    %c0_171 = arith.constant 0 : index
    %c0_172 = arith.constant 0 : index
    %325 = vector.load %arg4[%324, %c0_171, %c0_172] : memref<16x2x64xf32, #tpu.memory_space<vmem>>, vector<1x2x64xf32>
    %326 = vector.shape_cast %325 : vector<1x2x64xf32> to vector<2x64xf32>
    %327 = vector.shape_cast %321 : vector<2x64xf32> to vector<1x2x64xf32>
    tpu.vector_store %arg4[%324, %c0_171, %c0_172], %327 {strides = array<i32>} : memref<16x2x64xf32, #tpu.memory_space<vmem>>, vector<1x2x64xf32>,
    %c10_i32 = arith.constant 10 : i32
    %c2_i32_173 = arith.constant 2 : i32
    %328 = arith.muli %c10_i32, %c2_i32_173 : i32
    %329 = arith.index_cast %328 : i32 to index
    %c0_174 = arith.constant 0 : index
    %330 = vector.load %arg5[%329, %c0_174] : memref<32x256xf32, #tpu.memory_space<vmem>>, vector<2x256xf32>
    %c0_175 = arith.constant 0 : index
    %c0_176 = arith.constant 0 : index
    %331 = vector.load %arg6[%c0_175, %c0_176] : memref<2x64xf32, #tpu.memory_space<vmem>>, vector<2x64xf32>
    %332 = arith.truncf %331 : vector<2x64xf32> to vector<2x64xbf16>
    %c0_177 = arith.constant 0 : index
    %c0_178 = arith.constant 0 : index
    %333 = vector.load %arg2[%c0_177, %c0_178] : memref<64x256xbf16, #tpu.memory_space<vmem>>, vector<64x256xbf16>
    %cst_179 = arith.constant dense<0.000000e+00> : vector<2x256xf32>
    %334 = tpu.matmul %332, %333, %cst_179 {dimension_numbers = #tpu.dot_dimension_numbers<[1], [0], [0], [1], [0, 0, 1, 1], [], []>} : vector<2x64xbf16>, vector<64x256xbf16>, vector<2x256xf32> -> vector<2x256xf32>
    %335 = arith.addf %330, %334 : vector<2x256xf32>
    %336 = math.tanh %335 : vector<2x256xf32>
    %337 = arith.negf %335 : vector<2x256xf32>
    %338 = math.exp %337 : vector<2x256xf32>
    %cst_180 = arith.constant 1.000000e+00 : f32
    %339 = vector.broadcast %cst_180 : f32 to vector<2x256xf32>
    %340 = arith.addf %339, %338 : vector<2x256xf32>
    %341 = arith.divf %339, %340 : vector<2x256xf32>
    %342 = arith.select %17, %336, %341 : vector<2x256xi1>, vector<2x256xf32>
    %343 = vector.extract_strided_slice %342 {offsets = [0, 0], sizes = [2, 64], strides = [1, 1]} : vector<2x256xf32> to vector<2x64xf32>
    %344 = vector.extract_strided_slice %342 {offsets = [0, 64], sizes = [2, 64], strides = [1, 1]} : vector<2x256xf32> to vector<2x64xf32>
    %345 = vector.extract_strided_slice %342 {offsets = [0, 128], sizes = [2, 64], strides = [1, 1]} : vector<2x256xf32> to vector<2x64xf32>
    %346 = vector.extract_strided_slice %342 {offsets = [0, 192], sizes = [2, 64], strides = [1, 1]} : vector<2x256xf32> to vector<2x64xf32>
    %c0_181 = arith.constant 0 : index
    %c0_182 = arith.constant 0 : index
    %347 = vector.load %arg7[%c0_181, %c0_182] : memref<2x64xf32, #tpu.memory_space<vmem>>, vector<2x64xf32>
    %348 = arith.mulf %344, %347 : vector<2x64xf32>
    %349 = arith.mulf %343, %345 : vector<2x64xf32>
    %350 = arith.addf %348, %349 : vector<2x64xf32>
    %351 = math.tanh %350 : vector<2x64xf32>
    %352 = arith.mulf %346, %351 : vector<2x64xf32>
    %c0_183 = arith.constant 0 : index
    %c0_184 = arith.constant 0 : index
    %353 = vector.load %arg7[%c0_183, %c0_184] : memref<2x64xf32, #tpu.memory_space<vmem>>, vector<2x64xf32>
    tpu.vector_store %arg7[%c0_183, %c0_184], %350 {strides = array<i32>} : memref<2x64xf32, #tpu.memory_space<vmem>>, vector<2x64xf32>,
    %c0_185 = arith.constant 0 : index
    %c0_186 = arith.constant 0 : index
    %354 = vector.load %arg6[%c0_185, %c0_186] : memref<2x64xf32, #tpu.memory_space<vmem>>, vector<2x64xf32>
    tpu.vector_store %arg6[%c0_185, %c0_186], %352 {strides = array<i32>} : memref<2x64xf32, #tpu.memory_space<vmem>>, vector<2x64xf32>,
    %355 = arith.index_cast %c10_i32 : i32 to index
    %c0_187 = arith.constant 0 : index
    %c0_188 = arith.constant 0 : index
    %356 = vector.load %arg4[%355, %c0_187, %c0_188] : memref<16x2x64xf32, #tpu.memory_space<vmem>>, vector<1x2x64xf32>
    %357 = vector.shape_cast %356 : vector<1x2x64xf32> to vector<2x64xf32>
    %358 = vector.shape_cast %352 : vector<2x64xf32> to vector<1x2x64xf32>
    tpu.vector_store %arg4[%355, %c0_187, %c0_188], %358 {strides = array<i32>} : memref<16x2x64xf32, #tpu.memory_space<vmem>>, vector<1x2x64xf32>,
    %c11_i32 = arith.constant 11 : i32
    %c2_i32_189 = arith.constant 2 : i32
    %359 = arith.muli %c11_i32, %c2_i32_189 : i32
    %360 = arith.index_cast %359 : i32 to index
    %c0_190 = arith.constant 0 : index
    %361 = vector.load %arg5[%360, %c0_190] : memref<32x256xf32, #tpu.memory_space<vmem>>, vector<2x256xf32>
    %c0_191 = arith.constant 0 : index
    %c0_192 = arith.constant 0 : index
    %362 = vector.load %arg6[%c0_191, %c0_192] : memref<2x64xf32, #tpu.memory_space<vmem>>, vector<2x64xf32>
    %363 = arith.truncf %362 : vector<2x64xf32> to vector<2x64xbf16>
    %c0_193 = arith.constant 0 : index
    %c0_194 = arith.constant 0 : index
    %364 = vector.load %arg2[%c0_193, %c0_194] : memref<64x256xbf16, #tpu.memory_space<vmem>>, vector<64x256xbf16>
    %cst_195 = arith.constant dense<0.000000e+00> : vector<2x256xf32>
    %365 = tpu.matmul %363, %364, %cst_195 {dimension_numbers = #tpu.dot_dimension_numbers<[1], [0], [0], [1], [0, 0, 1, 1], [], []>} : vector<2x64xbf16>, vector<64x256xbf16>, vector<2x256xf32> -> vector<2x256xf32>
    %366 = arith.addf %361, %365 : vector<2x256xf32>
    %367 = math.tanh %366 : vector<2x256xf32>
    %368 = arith.negf %366 : vector<2x256xf32>
    %369 = math.exp %368 : vector<2x256xf32>
    %cst_196 = arith.constant 1.000000e+00 : f32
    %370 = vector.broadcast %cst_196 : f32 to vector<2x256xf32>
    %371 = arith.addf %370, %369 : vector<2x256xf32>
    %372 = arith.divf %370, %371 : vector<2x256xf32>
    %373 = arith.select %17, %367, %372 : vector<2x256xi1>, vector<2x256xf32>
    %374 = vector.extract_strided_slice %373 {offsets = [0, 0], sizes = [2, 64], strides = [1, 1]} : vector<2x256xf32> to vector<2x64xf32>
    %375 = vector.extract_strided_slice %373 {offsets = [0, 64], sizes = [2, 64], strides = [1, 1]} : vector<2x256xf32> to vector<2x64xf32>
    %376 = vector.extract_strided_slice %373 {offsets = [0, 128], sizes = [2, 64], strides = [1, 1]} : vector<2x256xf32> to vector<2x64xf32>
    %377 = vector.extract_strided_slice %373 {offsets = [0, 192], sizes = [2, 64], strides = [1, 1]} : vector<2x256xf32> to vector<2x64xf32>
    %c0_197 = arith.constant 0 : index
    %c0_198 = arith.constant 0 : index
    %378 = vector.load %arg7[%c0_197, %c0_198] : memref<2x64xf32, #tpu.memory_space<vmem>>, vector<2x64xf32>
    %379 = arith.mulf %375, %378 : vector<2x64xf32>
    %380 = arith.mulf %374, %376 : vector<2x64xf32>
    %381 = arith.addf %379, %380 : vector<2x64xf32>
    %382 = math.tanh %381 : vector<2x64xf32>
    %383 = arith.mulf %377, %382 : vector<2x64xf32>
    %c0_199 = arith.constant 0 : index
    %c0_200 = arith.constant 0 : index
    %384 = vector.load %arg7[%c0_199, %c0_200] : memref<2x64xf32, #tpu.memory_space<vmem>>, vector<2x64xf32>
    tpu.vector_store %arg7[%c0_199, %c0_200], %381 {strides = array<i32>} : memref<2x64xf32, #tpu.memory_space<vmem>>, vector<2x64xf32>,
    %c0_201 = arith.constant 0 : index
    %c0_202 = arith.constant 0 : index
    %385 = vector.load %arg6[%c0_201, %c0_202] : memref<2x64xf32, #tpu.memory_space<vmem>>, vector<2x64xf32>
    tpu.vector_store %arg6[%c0_201, %c0_202], %383 {strides = array<i32>} : memref<2x64xf32, #tpu.memory_space<vmem>>, vector<2x64xf32>,
    %386 = arith.index_cast %c11_i32 : i32 to index
    %c0_203 = arith.constant 0 : index
    %c0_204 = arith.constant 0 : index
    %387 = vector.load %arg4[%386, %c0_203, %c0_204] : memref<16x2x64xf32, #tpu.memory_space<vmem>>, vector<1x2x64xf32>
    %388 = vector.shape_cast %387 : vector<1x2x64xf32> to vector<2x64xf32>
    %389 = vector.shape_cast %383 : vector<2x64xf32> to vector<1x2x64xf32>
    tpu.vector_store %arg4[%386, %c0_203, %c0_204], %389 {strides = array<i32>} : memref<16x2x64xf32, #tpu.memory_space<vmem>>, vector<1x2x64xf32>,
    %c12_i32 = arith.constant 12 : i32
    %c2_i32_205 = arith.constant 2 : i32
    %390 = arith.muli %c12_i32, %c2_i32_205 : i32
    %391 = arith.index_cast %390 : i32 to index
    %c0_206 = arith.constant 0 : index
    %392 = vector.load %arg5[%391, %c0_206] : memref<32x256xf32, #tpu.memory_space<vmem>>, vector<2x256xf32>
    %c0_207 = arith.constant 0 : index
    %c0_208 = arith.constant 0 : index
    %393 = vector.load %arg6[%c0_207, %c0_208] : memref<2x64xf32, #tpu.memory_space<vmem>>, vector<2x64xf32>
    %394 = arith.truncf %393 : vector<2x64xf32> to vector<2x64xbf16>
    %c0_209 = arith.constant 0 : index
    %c0_210 = arith.constant 0 : index
    %395 = vector.load %arg2[%c0_209, %c0_210] : memref<64x256xbf16, #tpu.memory_space<vmem>>, vector<64x256xbf16>
    %cst_211 = arith.constant dense<0.000000e+00> : vector<2x256xf32>
    %396 = tpu.matmul %394, %395, %cst_211 {dimension_numbers = #tpu.dot_dimension_numbers<[1], [0], [0], [1], [0, 0, 1, 1], [], []>} : vector<2x64xbf16>, vector<64x256xbf16>, vector<2x256xf32> -> vector<2x256xf32>
    %397 = arith.addf %392, %396 : vector<2x256xf32>
    %398 = math.tanh %397 : vector<2x256xf32>
    %399 = arith.negf %397 : vector<2x256xf32>
    %400 = math.exp %399 : vector<2x256xf32>
    %cst_212 = arith.constant 1.000000e+00 : f32
    %401 = vector.broadcast %cst_212 : f32 to vector<2x256xf32>
    %402 = arith.addf %401, %400 : vector<2x256xf32>
    %403 = arith.divf %401, %402 : vector<2x256xf32>
    %404 = arith.select %17, %398, %403 : vector<2x256xi1>, vector<2x256xf32>
    %405 = vector.extract_strided_slice %404 {offsets = [0, 0], sizes = [2, 64], strides = [1, 1]} : vector<2x256xf32> to vector<2x64xf32>
    %406 = vector.extract_strided_slice %404 {offsets = [0, 64], sizes = [2, 64], strides = [1, 1]} : vector<2x256xf32> to vector<2x64xf32>
    %407 = vector.extract_strided_slice %404 {offsets = [0, 128], sizes = [2, 64], strides = [1, 1]} : vector<2x256xf32> to vector<2x64xf32>
    %408 = vector.extract_strided_slice %404 {offsets = [0, 192], sizes = [2, 64], strides = [1, 1]} : vector<2x256xf32> to vector<2x64xf32>
    %c0_213 = arith.constant 0 : index
    %c0_214 = arith.constant 0 : index
    %409 = vector.load %arg7[%c0_213, %c0_214] : memref<2x64xf32, #tpu.memory_space<vmem>>, vector<2x64xf32>
    %410 = arith.mulf %406, %409 : vector<2x64xf32>
    %411 = arith.mulf %405, %407 : vector<2x64xf32>
    %412 = arith.addf %410, %411 : vector<2x64xf32>
    %413 = math.tanh %412 : vector<2x64xf32>
    %414 = arith.mulf %408, %413 : vector<2x64xf32>
    %c0_215 = arith.constant 0 : index
    %c0_216 = arith.constant 0 : index
    %415 = vector.load %arg7[%c0_215, %c0_216] : memref<2x64xf32, #tpu.memory_space<vmem>>, vector<2x64xf32>
    tpu.vector_store %arg7[%c0_215, %c0_216], %412 {strides = array<i32>} : memref<2x64xf32, #tpu.memory_space<vmem>>, vector<2x64xf32>,
    %c0_217 = arith.constant 0 : index
    %c0_218 = arith.constant 0 : index
    %416 = vector.load %arg6[%c0_217, %c0_218] : memref<2x64xf32, #tpu.memory_space<vmem>>, vector<2x64xf32>
    tpu.vector_store %arg6[%c0_217, %c0_218], %414 {strides = array<i32>} : memref<2x64xf32, #tpu.memory_space<vmem>>, vector<2x64xf32>,
    %417 = arith.index_cast %c12_i32 : i32 to index
    %c0_219 = arith.constant 0 : index
    %c0_220 = arith.constant 0 : index
    %418 = vector.load %arg4[%417, %c0_219, %c0_220] : memref<16x2x64xf32, #tpu.memory_space<vmem>>, vector<1x2x64xf32>
    %419 = vector.shape_cast %418 : vector<1x2x64xf32> to vector<2x64xf32>
    %420 = vector.shape_cast %414 : vector<2x64xf32> to vector<1x2x64xf32>
    tpu.vector_store %arg4[%417, %c0_219, %c0_220], %420 {strides = array<i32>} : memref<16x2x64xf32, #tpu.memory_space<vmem>>, vector<1x2x64xf32>,
    %c13_i32 = arith.constant 13 : i32
    %c2_i32_221 = arith.constant 2 : i32
    %421 = arith.muli %c13_i32, %c2_i32_221 : i32
    %422 = arith.index_cast %421 : i32 to index
    %c0_222 = arith.constant 0 : index
    %423 = vector.load %arg5[%422, %c0_222] : memref<32x256xf32, #tpu.memory_space<vmem>>, vector<2x256xf32>
    %c0_223 = arith.constant 0 : index
    %c0_224 = arith.constant 0 : index
    %424 = vector.load %arg6[%c0_223, %c0_224] : memref<2x64xf32, #tpu.memory_space<vmem>>, vector<2x64xf32>
    %425 = arith.truncf %424 : vector<2x64xf32> to vector<2x64xbf16>
    %c0_225 = arith.constant 0 : index
    %c0_226 = arith.constant 0 : index
    %426 = vector.load %arg2[%c0_225, %c0_226] : memref<64x256xbf16, #tpu.memory_space<vmem>>, vector<64x256xbf16>
    %cst_227 = arith.constant dense<0.000000e+00> : vector<2x256xf32>
    %427 = tpu.matmul %425, %426, %cst_227 {dimension_numbers = #tpu.dot_dimension_numbers<[1], [0], [0], [1], [0, 0, 1, 1], [], []>} : vector<2x64xbf16>, vector<64x256xbf16>, vector<2x256xf32> -> vector<2x256xf32>
    %428 = arith.addf %423, %427 : vector<2x256xf32>
    %429 = math.tanh %428 : vector<2x256xf32>
    %430 = arith.negf %428 : vector<2x256xf32>
    %431 = math.exp %430 : vector<2x256xf32>
    %cst_228 = arith.constant 1.000000e+00 : f32
    %432 = vector.broadcast %cst_228 : f32 to vector<2x256xf32>
    %433 = arith.addf %432, %431 : vector<2x256xf32>
    %434 = arith.divf %432, %433 : vector<2x256xf32>
    %435 = arith.select %17, %429, %434 : vector<2x256xi1>, vector<2x256xf32>
    %436 = vector.extract_strided_slice %435 {offsets = [0, 0], sizes = [2, 64], strides = [1, 1]} : vector<2x256xf32> to vector<2x64xf32>
    %437 = vector.extract_strided_slice %435 {offsets = [0, 64], sizes = [2, 64], strides = [1, 1]} : vector<2x256xf32> to vector<2x64xf32>
    %438 = vector.extract_strided_slice %435 {offsets = [0, 128], sizes = [2, 64], strides = [1, 1]} : vector<2x256xf32> to vector<2x64xf32>
    %439 = vector.extract_strided_slice %435 {offsets = [0, 192], sizes = [2, 64], strides = [1, 1]} : vector<2x256xf32> to vector<2x64xf32>
    %c0_229 = arith.constant 0 : index
    %c0_230 = arith.constant 0 : index
    %440 = vector.load %arg7[%c0_229, %c0_230] : memref<2x64xf32, #tpu.memory_space<vmem>>, vector<2x64xf32>
    %441 = arith.mulf %437, %440 : vector<2x64xf32>
    %442 = arith.mulf %436, %438 : vector<2x64xf32>
    %443 = arith.addf %441, %442 : vector<2x64xf32>
    %444 = math.tanh %443 : vector<2x64xf32>
    %445 = arith.mulf %439, %444 : vector<2x64xf32>
    %c0_231 = arith.constant 0 : index
    %c0_232 = arith.constant 0 : index
    %446 = vector.load %arg7[%c0_231, %c0_232] : memref<2x64xf32, #tpu.memory_space<vmem>>, vector<2x64xf32>
    tpu.vector_store %arg7[%c0_231, %c0_232], %443 {strides = array<i32>} : memref<2x64xf32, #tpu.memory_space<vmem>>, vector<2x64xf32>,
    %c0_233 = arith.constant 0 : index
    %c0_234 = arith.constant 0 : index
    %447 = vector.load %arg6[%c0_233, %c0_234] : memref<2x64xf32, #tpu.memory_space<vmem>>, vector<2x64xf32>
    tpu.vector_store %arg6[%c0_233, %c0_234], %445 {strides = array<i32>} : memref<2x64xf32, #tpu.memory_space<vmem>>, vector<2x64xf32>,
    %448 = arith.index_cast %c13_i32 : i32 to index
    %c0_235 = arith.constant 0 : index
    %c0_236 = arith.constant 0 : index
    %449 = vector.load %arg4[%448, %c0_235, %c0_236] : memref<16x2x64xf32, #tpu.memory_space<vmem>>, vector<1x2x64xf32>
    %450 = vector.shape_cast %449 : vector<1x2x64xf32> to vector<2x64xf32>
    %451 = vector.shape_cast %445 : vector<2x64xf32> to vector<1x2x64xf32>
    tpu.vector_store %arg4[%448, %c0_235, %c0_236], %451 {strides = array<i32>} : memref<16x2x64xf32, #tpu.memory_space<vmem>>, vector<1x2x64xf32>,
    %c14_i32 = arith.constant 14 : i32
    %c2_i32_237 = arith.constant 2 : i32
    %452 = arith.muli %c14_i32, %c2_i32_237 : i32
    %453 = arith.index_cast %452 : i32 to index
    %c0_238 = arith.constant 0 : index
    %454 = vector.load %arg5[%453, %c0_238] : memref<32x256xf32, #tpu.memory_space<vmem>>, vector<2x256xf32>
    %c0_239 = arith.constant 0 : index
    %c0_240 = arith.constant 0 : index
    %455 = vector.load %arg6[%c0_239, %c0_240] : memref<2x64xf32, #tpu.memory_space<vmem>>, vector<2x64xf32>
    %456 = arith.truncf %455 : vector<2x64xf32> to vector<2x64xbf16>
    %c0_241 = arith.constant 0 : index
    %c0_242 = arith.constant 0 : index
    %457 = vector.load %arg2[%c0_241, %c0_242] : memref<64x256xbf16, #tpu.memory_space<vmem>>, vector<64x256xbf16>
    %cst_243 = arith.constant dense<0.000000e+00> : vector<2x256xf32>
    %458 = tpu.matmul %456, %457, %cst_243 {dimension_numbers = #tpu.dot_dimension_numbers<[1], [0], [0], [1], [0, 0, 1, 1], [], []>} : vector<2x64xbf16>, vector<64x256xbf16>, vector<2x256xf32> -> vector<2x256xf32>
    %459 = arith.addf %454, %458 : vector<2x256xf32>
    %460 = math.tanh %459 : vector<2x256xf32>
    %461 = arith.negf %459 : vector<2x256xf32>
    %462 = math.exp %461 : vector<2x256xf32>
    %cst_244 = arith.constant 1.000000e+00 : f32
    %463 = vector.broadcast %cst_244 : f32 to vector<2x256xf32>
    %464 = arith.addf %463, %462 : vector<2x256xf32>
    %465 = arith.divf %463, %464 : vector<2x256xf32>
    %466 = arith.select %17, %460, %465 : vector<2x256xi1>, vector<2x256xf32>
    %467 = vector.extract_strided_slice %466 {offsets = [0, 0], sizes = [2, 64], strides = [1, 1]} : vector<2x256xf32> to vector<2x64xf32>
    %468 = vector.extract_strided_slice %466 {offsets = [0, 64], sizes = [2, 64], strides = [1, 1]} : vector<2x256xf32> to vector<2x64xf32>
    %469 = vector.extract_strided_slice %466 {offsets = [0, 128], sizes = [2, 64], strides = [1, 1]} : vector<2x256xf32> to vector<2x64xf32>
    %470 = vector.extract_strided_slice %466 {offsets = [0, 192], sizes = [2, 64], strides = [1, 1]} : vector<2x256xf32> to vector<2x64xf32>
    %c0_245 = arith.constant 0 : index
    %c0_246 = arith.constant 0 : index
    %471 = vector.load %arg7[%c0_245, %c0_246] : memref<2x64xf32, #tpu.memory_space<vmem>>, vector<2x64xf32>
    %472 = arith.mulf %468, %471 : vector<2x64xf32>
    %473 = arith.mulf %467, %469 : vector<2x64xf32>
    %474 = arith.addf %472, %473 : vector<2x64xf32>
    %475 = math.tanh %474 : vector<2x64xf32>
    %476 = arith.mulf %470, %475 : vector<2x64xf32>
    %c0_247 = arith.constant 0 : index
    %c0_248 = arith.constant 0 : index
    %477 = vector.load %arg7[%c0_247, %c0_248] : memref<2x64xf32, #tpu.memory_space<vmem>>, vector<2x64xf32>
    tpu.vector_store %arg7[%c0_247, %c0_248], %474 {strides = array<i32>} : memref<2x64xf32, #tpu.memory_space<vmem>>, vector<2x64xf32>,
    %c0_249 = arith.constant 0 : index
    %c0_250 = arith.constant 0 : index
    %478 = vector.load %arg6[%c0_249, %c0_250] : memref<2x64xf32, #tpu.memory_space<vmem>>, vector<2x64xf32>
    tpu.vector_store %arg6[%c0_249, %c0_250], %476 {strides = array<i32>} : memref<2x64xf32, #tpu.memory_space<vmem>>, vector<2x64xf32>,
    %479 = arith.index_cast %c14_i32 : i32 to index
    %c0_251 = arith.constant 0 : index
    %c0_252 = arith.constant 0 : index
    %480 = vector.load %arg4[%479, %c0_251, %c0_252] : memref<16x2x64xf32, #tpu.memory_space<vmem>>, vector<1x2x64xf32>
    %481 = vector.shape_cast %480 : vector<1x2x64xf32> to vector<2x64xf32>
    %482 = vector.shape_cast %476 : vector<2x64xf32> to vector<1x2x64xf32>
    tpu.vector_store %arg4[%479, %c0_251, %c0_252], %482 {strides = array<i32>} : memref<16x2x64xf32, #tpu.memory_space<vmem>>, vector<1x2x64xf32>,
    %c15_i32 = arith.constant 15 : i32
    %c2_i32_253 = arith.constant 2 : i32
    %483 = arith.muli %c15_i32, %c2_i32_253 : i32
    %484 = arith.index_cast %483 : i32 to index
    %c0_254 = arith.constant 0 : index
    %485 = vector.load %arg5[%484, %c0_254] : memref<32x256xf32, #tpu.memory_space<vmem>>, vector<2x256xf32>
    %c0_255 = arith.constant 0 : index
    %c0_256 = arith.constant 0 : index
    %486 = vector.load %arg6[%c0_255, %c0_256] : memref<2x64xf32, #tpu.memory_space<vmem>>, vector<2x64xf32>
    %487 = arith.truncf %486 : vector<2x64xf32> to vector<2x64xbf16>
    %c0_257 = arith.constant 0 : index
    %c0_258 = arith.constant 0 : index
    %488 = vector.load %arg2[%c0_257, %c0_258] : memref<64x256xbf16, #tpu.memory_space<vmem>>, vector<64x256xbf16>
    %cst_259 = arith.constant dense<0.000000e+00> : vector<2x256xf32>
    %489 = tpu.matmul %487, %488, %cst_259 {dimension_numbers = #tpu.dot_dimension_numbers<[1], [0], [0], [1], [0, 0, 1, 1], [], []>} : vector<2x64xbf16>, vector<64x256xbf16>, vector<2x256xf32> -> vector<2x256xf32>
    %490 = arith.addf %485, %489 : vector<2x256xf32>
    %491 = math.tanh %490 : vector<2x256xf32>
    %492 = arith.negf %490 : vector<2x256xf32>
    %493 = math.exp %492 : vector<2x256xf32>
    %cst_260 = arith.constant 1.000000e+00 : f32
    %494 = vector.broadcast %cst_260 : f32 to vector<2x256xf32>
    %495 = arith.addf %494, %493 : vector<2x256xf32>
    %496 = arith.divf %494, %495 : vector<2x256xf32>
    %497 = arith.select %17, %491, %496 : vector<2x256xi1>, vector<2x256xf32>
    %498 = vector.extract_strided_slice %497 {offsets = [0, 0], sizes = [2, 64], strides = [1, 1]} : vector<2x256xf32> to vector<2x64xf32>
    %499 = vector.extract_strided_slice %497 {offsets = [0, 64], sizes = [2, 64], strides = [1, 1]} : vector<2x256xf32> to vector<2x64xf32>
    %500 = vector.extract_strided_slice %497 {offsets = [0, 128], sizes = [2, 64], strides = [1, 1]} : vector<2x256xf32> to vector<2x64xf32>
    %501 = vector.extract_strided_slice %497 {offsets = [0, 192], sizes = [2, 64], strides = [1, 1]} : vector<2x256xf32> to vector<2x64xf32>
    %c0_261 = arith.constant 0 : index
    %c0_262 = arith.constant 0 : index
    %502 = vector.load %arg7[%c0_261, %c0_262] : memref<2x64xf32, #tpu.memory_space<vmem>>, vector<2x64xf32>
    %503 = arith.mulf %499, %502 : vector<2x64xf32>
    %504 = arith.mulf %498, %500 : vector<2x64xf32>
    %505 = arith.addf %503, %504 : vector<2x64xf32>
    %506 = math.tanh %505 : vector<2x64xf32>
    %507 = arith.mulf %501, %506 : vector<2x64xf32>
    %c0_263 = arith.constant 0 : index
    %c0_264 = arith.constant 0 : index
    %508 = vector.load %arg7[%c0_263, %c0_264] : memref<2x64xf32, #tpu.memory_space<vmem>>, vector<2x64xf32>
    tpu.vector_store %arg7[%c0_263, %c0_264], %505 {strides = array<i32>} : memref<2x64xf32, #tpu.memory_space<vmem>>, vector<2x64xf32>,
    %c0_265 = arith.constant 0 : index
    %c0_266 = arith.constant 0 : index
    %509 = vector.load %arg6[%c0_265, %c0_266] : memref<2x64xf32, #tpu.memory_space<vmem>>, vector<2x64xf32>
    tpu.vector_store %arg6[%c0_265, %c0_266], %507 {strides = array<i32>} : memref<2x64xf32, #tpu.memory_space<vmem>>, vector<2x64xf32>,
    %510 = arith.index_cast %c15_i32 : i32 to index
    %c0_267 = arith.constant 0 : index
    %c0_268 = arith.constant 0 : index
    %511 = vector.load %arg4[%510, %c0_267, %c0_268] : memref<16x2x64xf32, #tpu.memory_space<vmem>>, vector<1x2x64xf32>
    %512 = vector.shape_cast %511 : vector<1x2x64xf32> to vector<2x64xf32>
    %513 = vector.shape_cast %507 : vector<2x64xf32> to vector<1x2x64xf32>
    tpu.vector_store %arg4[%510, %c0_267, %c0_268], %513 {strides = array<i32>} : memref<16x2x64xf32, #tpu.memory_space<vmem>>, vector<1x2x64xf32>,
    %c16_i32 = arith.constant 16 : i32
    return
  }
}

module attributes {stable_mosaic.version = 11 : i64} {
  func.func @_attflow_kernel(%arg0: memref<2x16x64xf32, #tpu.memory_space<vmem>>, %arg1: memref<2x8x64xf32, #tpu.memory_space<vmem>>, %arg2: memref<1x64xf32, #tpu.memory_space<vmem>>, %arg3: memref<1x64xf32, #tpu.memory_space<vmem>>, %arg4: memref<1x64xf32, #tpu.memory_space<vmem>>, %arg5: memref<1x1xf32, #tpu.memory_space<vmem>>, %arg6: memref<2x16x256xf32, #tpu.memory_space<vmem>>) attributes {dimension_semantics = [], scalar_prefetch = 0 : i64, scratch_operands = 0 : i64, tpu.core_type = #tpu.core_type<tc>} {
    %c0 = arith.constant 0 : index
    %c0_0 = arith.constant 0 : index
    %c0_1 = arith.constant 0 : index
    %0 = vector.load %arg0[%c0, %c0_0, %c0_1] : memref<2x16x64xf32, #tpu.memory_space<vmem>>, vector<2x16x64xf32>
    %c0_2 = arith.constant 0 : index
    %c0_3 = arith.constant 0 : index
    %c0_4 = arith.constant 0 : index
    %1 = vector.load %arg1[%c0_2, %c0_3, %c0_4] : memref<2x8x64xf32, #tpu.memory_space<vmem>>, vector<2x8x64xf32>
    %c0_5 = arith.constant 0 : index
    %c0_6 = arith.constant 0 : index
    %2 = vector.load %arg2[%c0_5, %c0_6] : memref<1x64xf32, #tpu.memory_space<vmem>>, vector<1x64xf32>
    %3 = vector.shape_cast %2 : vector<1x64xf32> to vector<1x1x64xf32>
    %4 = vector.broadcast %3 : vector<1x1x64xf32> to vector<2x16x64xf32>
    %5 = arith.mulf %0, %4 : vector<2x16x64xf32>
    %cst = arith.constant dense<0.000000e+00> : vector<2x16xf32>
    %6 = vector.multi_reduction <add>, %5, %cst [2] : vector<2x16x64xf32> to vector<2x16xf32>
    %7 = vector.shape_cast %6 : vector<2x16xf32> to vector<2x16x1xf32>
    %c0_7 = arith.constant 0 : index
    %c0_8 = arith.constant 0 : index
    %8 = vector.load %arg3[%c0_7, %c0_8] : memref<1x64xf32, #tpu.memory_space<vmem>>, vector<1x64xf32>
    %9 = vector.shape_cast %8 : vector<1x64xf32> to vector<1x1x64xf32>
    %10 = vector.broadcast %9 : vector<1x1x64xf32> to vector<2x8x64xf32>
    %11 = arith.mulf %1, %10 : vector<2x8x64xf32>
    %cst_9 = arith.constant dense<0.000000e+00> : vector<2x8xf32>
    %12 = vector.multi_reduction <add>, %11, %cst_9 [2] : vector<2x8x64xf32> to vector<2x8xf32>
    %c0_10 = arith.constant 0 : index
    %c0_11 = arith.constant 0 : index
    %13 = vector.load %arg4[%c0_10, %c0_11] : memref<1x64xf32, #tpu.memory_space<vmem>>, vector<1x64xf32>
    %14 = vector.shape_cast %13 : vector<1x64xf32> to vector<1x1x64xf32>
    %15 = vector.broadcast %14 : vector<1x1x64xf32> to vector<2x16x64xf32>
    %16 = arith.mulf %0, %15 : vector<2x16x64xf32>
    %17 = arith.truncf %16 : vector<2x16x64xf32> to vector<2x16x64xbf16>
    %18 = arith.truncf %1 : vector<2x8x64xf32> to vector<2x8x64xbf16>
    "tpu.trace_start"() <{level = 10 : i32, message = "bid,bjd->bij"}> : () -> ()
    %cst_12 = arith.constant dense<0.000000e+00> : vector<2x16x8xf32>
    %19 = tpu.matmul %17, %18, %cst_12 {dimension_numbers = #tpu.dot_dimension_numbers<[2], [2], [1], [1], [0, 0, 0, 1, 1, 1], [0], [0]>} : vector<2x16x64xbf16>, vector<2x8x64xbf16>, vector<2x16x8xf32> -> vector<2x16x8xf32>
    "tpu.trace_stop"() : () -> ()
    %20 = vector.broadcast %7 : vector<2x16x1xf32> to vector<2x16x8xf32>
    %21 = arith.addf %19, %20 : vector<2x16x8xf32>
    %22 = vector.shape_cast %12 : vector<2x8xf32> to vector<2x1x8xf32>
    %23 = vector.broadcast %22 : vector<2x1x8xf32> to vector<2x16x8xf32>
    %24 = arith.addf %21, %23 : vector<2x16x8xf32>
    %c0_13 = arith.constant 0 : index
    %c0_14 = arith.constant 0 : index
    %25 = vector.load %arg5[%c0_13, %c0_14] : memref<1x1xf32, #tpu.memory_space<vmem>>, vector<1x1xf32>
    %26 = vector.shape_cast %25 : vector<1x1xf32> to vector<1x1x1xf32>
    %27 = vector.broadcast %26 : vector<1x1x1xf32> to vector<2x16x8xf32>
    %28 = arith.addf %24, %27 : vector<2x16x8xf32>
    %cst_15 = arith.constant dense<0xFF800000> : vector<2x16xf32>
    %29 = vector.multi_reduction <maximumf>, %28, %cst_15 [2] : vector<2x16x8xf32> to vector<2x16xf32>
    %cst_16 = arith.constant 0xFF800000 : f32
    %30 = vector.broadcast %cst_16 : f32 to vector<2x16xf32>
    %31 = arith.maximumf %30, %29 : vector<2x16xf32>
    %32 = vector.shape_cast %31 : vector<2x16xf32> to vector<2x16x1xf32>
    %33 = vector.broadcast %32 : vector<2x16x1xf32> to vector<2x16x8xf32>
    %34 = arith.subf %28, %33 : vector<2x16x8xf32>
    %35 = math.exp %34 : vector<2x16x8xf32>
    %cst_17 = arith.constant dense<0.000000e+00> : vector<2x16xf32>
    %36 = vector.multi_reduction <add>, %35, %cst_17 [2] : vector<2x16x8xf32> to vector<2x16xf32>
    %37 = vector.shape_cast %36 : vector<2x16xf32> to vector<2x16x1xf32>
    %38 = vector.broadcast %37 : vector<2x16x1xf32> to vector<2x16x8xf32>
    %39 = arith.divf %35, %38 : vector<2x16x8xf32>
    %40 = arith.truncf %39 : vector<2x16x8xf32> to vector<2x16x8xbf16>
    %41 = arith.truncf %1 : vector<2x8x64xf32> to vector<2x8x64xbf16>
    "tpu.trace_start"() <{level = 10 : i32, message = "bij,bjd->bid"}> : () -> ()
    %cst_18 = arith.constant dense<0.000000e+00> : vector<2x16x64xf32>
    %42 = tpu.matmul %40, %41, %cst_18 {dimension_numbers = #tpu.dot_dimension_numbers<[2], [1], [1], [2], [0, 0, 0, 1, 1, 2], [0], [0]>} : vector<2x16x8xbf16>, vector<2x8x64xbf16>, vector<2x16x64xf32> -> vector<2x16x64xf32>
    "tpu.trace_stop"() : () -> ()
    %cst_19 = arith.constant dense<0xFF800000> : vector<2x16xf32>
    %43 = vector.multi_reduction <maximumf>, %28, %cst_19 [2] : vector<2x16x8xf32> to vector<2x16xf32>
    %44 = vector.shape_cast %43 : vector<2x16xf32> to vector<2x16x1xf32>
    %cst_20 = arith.constant dense<0xFF800000> : vector<2x1xf32>
    %45 = vector.multi_reduction <maximumf>, %44, %cst_20 [1] : vector<2x16x1xf32> to vector<2x1xf32>
    %cst_21 = arith.constant 0xFF800000 : f32
    %46 = vector.broadcast %cst_21 : f32 to vector<2x1xf32>
    %47 = arith.maximumf %46, %45 : vector<2x1xf32>
    %48 = vector.shape_cast %47 : vector<2x1xf32> to vector<2x1x1xf32>
    %49 = vector.broadcast %48 : vector<2x1x1xf32> to vector<2x16x1xf32>
    %50 = arith.subf %44, %49 : vector<2x16x1xf32>
    %51 = math.exp %50 : vector<2x16x1xf32>
    %cst_22 = arith.constant dense<0.000000e+00> : vector<2x1xf32>
    %52 = vector.multi_reduction <add>, %51, %cst_22 [1] : vector<2x16x1xf32> to vector<2x1xf32>
    %53 = vector.shape_cast %52 : vector<2x1xf32> to vector<2x1x1xf32>
    %54 = vector.broadcast %53 : vector<2x1x1xf32> to vector<2x16x1xf32>
    %55 = arith.divf %51, %54 : vector<2x16x1xf32>
    %56 = vector.broadcast %55 : vector<2x16x1xf32> to vector<2x16x64xf32>
    %57 = arith.mulf %56, %0 : vector<2x16x64xf32>
    %cst_23 = arith.constant dense<0.000000e+00> : vector<2x64xf32>
    %58 = vector.multi_reduction <add>, %57, %cst_23 [1] : vector<2x16x64xf32> to vector<2x64xf32>
    %59 = vector.shape_cast %58 : vector<2x64xf32> to vector<2x1x64xf32>
    %60 = arith.mulf %0, %42 : vector<2x16x64xf32>
    %61 = vector.broadcast %59 : vector<2x1x64xf32> to vector<2x16x64xf32>
    %62 = arith.mulf %0, %61 : vector<2x16x64xf32>
    %63 = tpu.concatenate %0, %42, %60, %62 in 2 : vector<2x16x64xf32>, vector<2x16x64xf32>, vector<2x16x64xf32>, vector<2x16x64xf32> -> vector<2x16x256xf32>
    %c0_24 = arith.constant 0 : index
    %c0_25 = arith.constant 0 : index
    %c0_26 = arith.constant 0 : index
    %64 = vector.load %arg6[%c0_24, %c0_25, %c0_26] : memref<2x16x256xf32, #tpu.memory_space<vmem>>, vector<2x16x256xf32>
    tpu.vector_store %arg6[%c0_24, %c0_25, %c0_26], %63 {strides = array<i32>} : memref<2x16x256xf32, #tpu.memory_space<vmem>>, vector<2x16x256xf32>,
    return
  }
}

module attributes {stable_mosaic.version = 11 : i64} {
  func.func @_bilstm_kernel(%arg0: memref<32x512xf32, #tpu.memory_space<vmem>>, %arg1: memref<512x256xbf16, #tpu.memory_space<vmem>>, %arg2: memref<64x256xbf16, #tpu.memory_space<vmem>>, %arg3: memref<1x256xf32, #tpu.memory_space<vmem>>, %arg4: memref<16x2x64xf32, #tpu.memory_space<vmem>>, %arg5: memref<32x256xf32, #tpu.memory_space<vmem>>, %arg6: memref<2x64xf32, #tpu.memory_space<vmem>>, %arg7: memref<2x64xf32, #tpu.memory_space<vmem>>) attributes {dimension_semantics = [], scalar_prefetch = 0 : i64, scratch_operands = 3 : i64, tpu.core_type = #tpu.core_type<tc>} {
    %c0 = arith.constant 0 : index
    %c0_0 = arith.constant 0 : index
    %0 = vector.load %arg0[%c0, %c0_0] : memref<32x512xf32, #tpu.memory_space<vmem>>, vector<32x512xf32>
    %1 = arith.truncf %0 : vector<32x512xf32> to vector<32x512xbf16>
    %c0_1 = arith.constant 0 : index
    %c0_2 = arith.constant 0 : index
    %2 = vector.load %arg1[%c0_1, %c0_2] : memref<512x256xbf16, #tpu.memory_space<vmem>>, vector<512x256xbf16>
    %cst = arith.constant dense<0.000000e+00> : vector<32x256xf32>
    %3 = tpu.matmul %1, %2, %cst {dimension_numbers = #tpu.dot_dimension_numbers<[1], [0], [0], [1], [0, 0, 1, 1], [], []>} : vector<32x512xbf16>, vector<512x256xbf16>, vector<32x256xf32> -> vector<32x256xf32>
    %c0_3 = arith.constant 0 : index
    %c0_4 = arith.constant 0 : index
    %4 = vector.load %arg3[%c0_3, %c0_4] : memref<1x256xf32, #tpu.memory_space<vmem>>, vector<1x256xf32>
    %5 = vector.broadcast %4 : vector<1x256xf32> to vector<32x256xf32>
    %6 = arith.addf %3, %5 : vector<32x256xf32>
    %c0_5 = arith.constant 0 : index
    %c0_6 = arith.constant 0 : index
    %7 = vector.load %arg5[%c0_5, %c0_6] : memref<32x256xf32, #tpu.memory_space<vmem>>, vector<32x256xf32>
    tpu.vector_store %arg5[%c0_5, %c0_6], %6 {strides = array<i32>} : memref<32x256xf32, #tpu.memory_space<vmem>>, vector<32x256xf32>,
    %cst_7 = arith.constant 0.000000e+00 : f32
    %8 = vector.broadcast %cst_7 : f32 to vector<2x64xf32>
    %c0_8 = arith.constant 0 : index
    %c0_9 = arith.constant 0 : index
    %9 = vector.load %arg6[%c0_8, %c0_9] : memref<2x64xf32, #tpu.memory_space<vmem>>, vector<2x64xf32>
    tpu.vector_store %arg6[%c0_8, %c0_9], %8 {strides = array<i32>} : memref<2x64xf32, #tpu.memory_space<vmem>>, vector<2x64xf32>,
    %cst_10 = arith.constant 0.000000e+00 : f32
    %10 = vector.broadcast %cst_10 : f32 to vector<2x64xf32>
    %c0_11 = arith.constant 0 : index
    %c0_12 = arith.constant 0 : index
    %11 = vector.load %arg7[%c0_11, %c0_12] : memref<2x64xf32, #tpu.memory_space<vmem>>, vector<2x64xf32>
    tpu.vector_store %arg7[%c0_11, %c0_12], %10 {strides = array<i32>} : memref<2x64xf32, #tpu.memory_space<vmem>>, vector<2x64xf32>,
    %12 = tpu.iota {dimensions = array<i32: 1>} : vector<2x256xi32>
    %c128_i32 = arith.constant 128 : i32
    %13 = vector.broadcast %c128_i32 : i32 to vector<2x256xi32>
    %14 = arith.cmpi sge, %12, %13 : vector<2x256xi32>
    %c192_i32 = arith.constant 192 : i32
    %15 = vector.broadcast %c192_i32 : i32 to vector<2x256xi32>
    %16 = arith.cmpi slt, %12, %15 : vector<2x256xi32>
    %17 = arith.andi %14, %16 : vector<2x256xi1>
    %c0_i32 = arith.constant 0 : i32
    %c2_i32 = arith.constant 2 : i32
    %18 = arith.muli %c0_i32, %c2_i32 : i32
    %19 = arith.index_cast %18 : i32 to index
    %c0_13 = arith.constant 0 : index
    %20 = vector.load %arg5[%19, %c0_13] : memref<32x256xf32, #tpu.memory_space<vmem>>, vector<2x256xf32>
    %c0_14 = arith.constant 0 : index
    %c0_15 = arith.constant 0 : index
    %21 = vector.load %arg6[%c0_14, %c0_15] : memref<2x64xf32, #tpu.memory_space<vmem>>, vector<2x64xf32>
    %22 = arith.truncf %21 : vector<2x64xf32> to vector<2x64xbf16>
    %c0_16 = arith.constant 0 : index
    %c0_17 = arith.constant 0 : index
    %23 = vector.load %arg2[%c0_16, %c0_17] : memref<64x256xbf16, #tpu.memory_space<vmem>>, vector<64x256xbf16>
    %cst_18 = arith.constant dense<0.000000e+00> : vector<2x256xf32>
    %24 = tpu.matmul %22, %23, %cst_18 {dimension_numbers = #tpu.dot_dimension_numbers<[1], [0], [0], [1], [0, 0, 1, 1], [], []>} : vector<2x64xbf16>, vector<64x256xbf16>, vector<2x256xf32> -> vector<2x256xf32>
    %25 = arith.addf %20, %24 : vector<2x256xf32>
    %26 = math.tanh %25 : vector<2x256xf32>
    %27 = arith.negf %25 : vector<2x256xf32>
    %28 = math.exp %27 : vector<2x256xf32>
    %cst_19 = arith.constant 1.000000e+00 : f32
    %29 = vector.broadcast %cst_19 : f32 to vector<2x256xf32>
    %30 = arith.addf %29, %28 : vector<2x256xf32>
    %31 = arith.divf %29, %30 : vector<2x256xf32>
    %32 = arith.select %17, %26, %31 : vector<2x256xi1>, vector<2x256xf32>
    %33 = vector.extract_strided_slice %32 {offsets = [0, 0], sizes = [2, 64], strides = [1, 1]} : vector<2x256xf32> to vector<2x64xf32>
    %34 = vector.extract_strided_slice %32 {offsets = [0, 64], sizes = [2, 64], strides = [1, 1]} : vector<2x256xf32> to vector<2x64xf32>
    %35 = vector.extract_strided_slice %32 {offsets = [0, 128], sizes = [2, 64], strides = [1, 1]} : vector<2x256xf32> to vector<2x64xf32>
    %36 = vector.extract_strided_slice %32 {offsets = [0, 192], sizes = [2, 64], strides = [1, 1]} : vector<2x256xf32> to vector<2x64xf32>
    %c0_20 = arith.constant 0 : index
    %c0_21 = arith.constant 0 : index
    %37 = vector.load %arg7[%c0_20, %c0_21] : memref<2x64xf32, #tpu.memory_space<vmem>>, vector<2x64xf32>
    %38 = arith.mulf %34, %37 : vector<2x64xf32>
    %39 = arith.mulf %33, %35 : vector<2x64xf32>
    %40 = arith.addf %38, %39 : vector<2x64xf32>
    %41 = math.tanh %40 : vector<2x64xf32>
    %42 = arith.mulf %36, %41 : vector<2x64xf32>
    %c0_22 = arith.constant 0 : index
    %c0_23 = arith.constant 0 : index
    %43 = vector.load %arg7[%c0_22, %c0_23] : memref<2x64xf32, #tpu.memory_space<vmem>>, vector<2x64xf32>
    tpu.vector_store %arg7[%c0_22, %c0_23], %40 {strides = array<i32>} : memref<2x64xf32, #tpu.memory_space<vmem>>, vector<2x64xf32>,
    %c0_24 = arith.constant 0 : index
    %c0_25 = arith.constant 0 : index
    %44 = vector.load %arg6[%c0_24, %c0_25] : memref<2x64xf32, #tpu.memory_space<vmem>>, vector<2x64xf32>
    tpu.vector_store %arg6[%c0_24, %c0_25], %42 {strides = array<i32>} : memref<2x64xf32, #tpu.memory_space<vmem>>, vector<2x64xf32>,
    %45 = arith.index_cast %c0_i32 : i32 to index
    %c0_26 = arith.constant 0 : index
    %c0_27 = arith.constant 0 : index
    %46 = vector.load %arg4[%45, %c0_26, %c0_27] : memref<16x2x64xf32, #tpu.memory_space<vmem>>, vector<1x2x64xf32>
    %47 = vector.shape_cast %46 : vector<1x2x64xf32> to vector<2x64xf32>
    %48 = vector.shape_cast %42 : vector<2x64xf32> to vector<1x2x64xf32>
    tpu.vector_store %arg4[%45, %c0_26, %c0_27], %48 {strides = array<i32>} : memref<16x2x64xf32, #tpu.memory_space<vmem>>, vector<1x2x64xf32>,
    %c1_i32 = arith.constant 1 : i32
    %c2_i32_28 = arith.constant 2 : i32
    %49 = arith.muli %c1_i32, %c2_i32_28 : i32
    %50 = arith.index_cast %49 : i32 to index
    %c0_29 = arith.constant 0 : index
    %51 = vector.load %arg5[%50, %c0_29] : memref<32x256xf32, #tpu.memory_space<vmem>>, vector<2x256xf32>
    %c0_30 = arith.constant 0 : index
    %c0_31 = arith.constant 0 : index
    %52 = vector.load %arg6[%c0_30, %c0_31] : memref<2x64xf32, #tpu.memory_space<vmem>>, vector<2x64xf32>
    %53 = arith.truncf %52 : vector<2x64xf32> to vector<2x64xbf16>
    %c0_32 = arith.constant 0 : index
    %c0_33 = arith.constant 0 : index
    %54 = vector.load %arg2[%c0_32, %c0_33] : memref<64x256xbf16, #tpu.memory_space<vmem>>, vector<64x256xbf16>
    %cst_34 = arith.constant dense<0.000000e+00> : vector<2x256xf32>
    %55 = tpu.matmul %53, %54, %cst_34 {dimension_numbers = #tpu.dot_dimension_numbers<[1], [0], [0], [1], [0, 0, 1, 1], [], []>} : vector<2x64xbf16>, vector<64x256xbf16>, vector<2x256xf32> -> vector<2x256xf32>
    %56 = arith.addf %51, %55 : vector<2x256xf32>
    %57 = math.tanh %56 : vector<2x256xf32>
    %58 = arith.negf %56 : vector<2x256xf32>
    %59 = math.exp %58 : vector<2x256xf32>
    %cst_35 = arith.constant 1.000000e+00 : f32
    %60 = vector.broadcast %cst_35 : f32 to vector<2x256xf32>
    %61 = arith.addf %60, %59 : vector<2x256xf32>
    %62 = arith.divf %60, %61 : vector<2x256xf32>
    %63 = arith.select %17, %57, %62 : vector<2x256xi1>, vector<2x256xf32>
    %64 = vector.extract_strided_slice %63 {offsets = [0, 0], sizes = [2, 64], strides = [1, 1]} : vector<2x256xf32> to vector<2x64xf32>
    %65 = vector.extract_strided_slice %63 {offsets = [0, 64], sizes = [2, 64], strides = [1, 1]} : vector<2x256xf32> to vector<2x64xf32>
    %66 = vector.extract_strided_slice %63 {offsets = [0, 128], sizes = [2, 64], strides = [1, 1]} : vector<2x256xf32> to vector<2x64xf32>
    %67 = vector.extract_strided_slice %63 {offsets = [0, 192], sizes = [2, 64], strides = [1, 1]} : vector<2x256xf32> to vector<2x64xf32>
    %c0_36 = arith.constant 0 : index
    %c0_37 = arith.constant 0 : index
    %68 = vector.load %arg7[%c0_36, %c0_37] : memref<2x64xf32, #tpu.memory_space<vmem>>, vector<2x64xf32>
    %69 = arith.mulf %65, %68 : vector<2x64xf32>
    %70 = arith.mulf %64, %66 : vector<2x64xf32>
    %71 = arith.addf %69, %70 : vector<2x64xf32>
    %72 = math.tanh %71 : vector<2x64xf32>
    %73 = arith.mulf %67, %72 : vector<2x64xf32>
    %c0_38 = arith.constant 0 : index
    %c0_39 = arith.constant 0 : index
    %74 = vector.load %arg7[%c0_38, %c0_39] : memref<2x64xf32, #tpu.memory_space<vmem>>, vector<2x64xf32>
    tpu.vector_store %arg7[%c0_38, %c0_39], %71 {strides = array<i32>} : memref<2x64xf32, #tpu.memory_space<vmem>>, vector<2x64xf32>,
    %c0_40 = arith.constant 0 : index
    %c0_41 = arith.constant 0 : index
    %75 = vector.load %arg6[%c0_40, %c0_41] : memref<2x64xf32, #tpu.memory_space<vmem>>, vector<2x64xf32>
    tpu.vector_store %arg6[%c0_40, %c0_41], %73 {strides = array<i32>} : memref<2x64xf32, #tpu.memory_space<vmem>>, vector<2x64xf32>,
    %76 = arith.index_cast %c1_i32 : i32 to index
    %c0_42 = arith.constant 0 : index
    %c0_43 = arith.constant 0 : index
    %77 = vector.load %arg4[%76, %c0_42, %c0_43] : memref<16x2x64xf32, #tpu.memory_space<vmem>>, vector<1x2x64xf32>
    %78 = vector.shape_cast %77 : vector<1x2x64xf32> to vector<2x64xf32>
    %79 = vector.shape_cast %73 : vector<2x64xf32> to vector<1x2x64xf32>
    tpu.vector_store %arg4[%76, %c0_42, %c0_43], %79 {strides = array<i32>} : memref<16x2x64xf32, #tpu.memory_space<vmem>>, vector<1x2x64xf32>,
    %c2_i32_44 = arith.constant 2 : i32
    %c2_i32_45 = arith.constant 2 : i32
    %80 = arith.muli %c2_i32_44, %c2_i32_45 : i32
    %81 = arith.index_cast %80 : i32 to index
    %c0_46 = arith.constant 0 : index
    %82 = vector.load %arg5[%81, %c0_46] : memref<32x256xf32, #tpu.memory_space<vmem>>, vector<2x256xf32>
    %c0_47 = arith.constant 0 : index
    %c0_48 = arith.constant 0 : index
    %83 = vector.load %arg6[%c0_47, %c0_48] : memref<2x64xf32, #tpu.memory_space<vmem>>, vector<2x64xf32>
    %84 = arith.truncf %83 : vector<2x64xf32> to vector<2x64xbf16>
    %c0_49 = arith.constant 0 : index
    %c0_50 = arith.constant 0 : index
    %85 = vector.load %arg2[%c0_49, %c0_50] : memref<64x256xbf16, #tpu.memory_space<vmem>>, vector<64x256xbf16>
    %cst_51 = arith.constant dense<0.000000e+00> : vector<2x256xf32>
    %86 = tpu.matmul %84, %85, %cst_51 {dimension_numbers = #tpu.dot_dimension_numbers<[1], [0], [0], [1], [0, 0, 1, 1], [], []>} : vector<2x64xbf16>, vector<64x256xbf16>, vector<2x256xf32> -> vector<2x256xf32>
    %87 = arith.addf %82, %86 : vector<2x256xf32>
    %88 = math.tanh %87 : vector<2x256xf32>
    %89 = arith.negf %87 : vector<2x256xf32>
    %90 = math.exp %89 : vector<2x256xf32>
    %cst_52 = arith.constant 1.000000e+00 : f32
    %91 = vector.broadcast %cst_52 : f32 to vector<2x256xf32>
    %92 = arith.addf %91, %90 : vector<2x256xf32>
    %93 = arith.divf %91, %92 : vector<2x256xf32>
    %94 = arith.select %17, %88, %93 : vector<2x256xi1>, vector<2x256xf32>
    %95 = vector.extract_strided_slice %94 {offsets = [0, 0], sizes = [2, 64], strides = [1, 1]} : vector<2x256xf32> to vector<2x64xf32>
    %96 = vector.extract_strided_slice %94 {offsets = [0, 64], sizes = [2, 64], strides = [1, 1]} : vector<2x256xf32> to vector<2x64xf32>
    %97 = vector.extract_strided_slice %94 {offsets = [0, 128], sizes = [2, 64], strides = [1, 1]} : vector<2x256xf32> to vector<2x64xf32>
    %98 = vector.extract_strided_slice %94 {offsets = [0, 192], sizes = [2, 64], strides = [1, 1]} : vector<2x256xf32> to vector<2x64xf32>
    %c0_53 = arith.constant 0 : index
    %c0_54 = arith.constant 0 : index
    %99 = vector.load %arg7[%c0_53, %c0_54] : memref<2x64xf32, #tpu.memory_space<vmem>>, vector<2x64xf32>
    %100 = arith.mulf %96, %99 : vector<2x64xf32>
    %101 = arith.mulf %95, %97 : vector<2x64xf32>
    %102 = arith.addf %100, %101 : vector<2x64xf32>
    %103 = math.tanh %102 : vector<2x64xf32>
    %104 = arith.mulf %98, %103 : vector<2x64xf32>
    %c0_55 = arith.constant 0 : index
    %c0_56 = arith.constant 0 : index
    %105 = vector.load %arg7[%c0_55, %c0_56] : memref<2x64xf32, #tpu.memory_space<vmem>>, vector<2x64xf32>
    tpu.vector_store %arg7[%c0_55, %c0_56], %102 {strides = array<i32>} : memref<2x64xf32, #tpu.memory_space<vmem>>, vector<2x64xf32>,
    %c0_57 = arith.constant 0 : index
    %c0_58 = arith.constant 0 : index
    %106 = vector.load %arg6[%c0_57, %c0_58] : memref<2x64xf32, #tpu.memory_space<vmem>>, vector<2x64xf32>
    tpu.vector_store %arg6[%c0_57, %c0_58], %104 {strides = array<i32>} : memref<2x64xf32, #tpu.memory_space<vmem>>, vector<2x64xf32>,
    %107 = arith.index_cast %c2_i32_44 : i32 to index
    %c0_59 = arith.constant 0 : index
    %c0_60 = arith.constant 0 : index
    %108 = vector.load %arg4[%107, %c0_59, %c0_60] : memref<16x2x64xf32, #tpu.memory_space<vmem>>, vector<1x2x64xf32>
    %109 = vector.shape_cast %108 : vector<1x2x64xf32> to vector<2x64xf32>
    %110 = vector.shape_cast %104 : vector<2x64xf32> to vector<1x2x64xf32>
    tpu.vector_store %arg4[%107, %c0_59, %c0_60], %110 {strides = array<i32>} : memref<16x2x64xf32, #tpu.memory_space<vmem>>, vector<1x2x64xf32>,
    %c3_i32 = arith.constant 3 : i32
    %c2_i32_61 = arith.constant 2 : i32
    %111 = arith.muli %c3_i32, %c2_i32_61 : i32
    %112 = arith.index_cast %111 : i32 to index
    %c0_62 = arith.constant 0 : index
    %113 = vector.load %arg5[%112, %c0_62] : memref<32x256xf32, #tpu.memory_space<vmem>>, vector<2x256xf32>
    %c0_63 = arith.constant 0 : index
    %c0_64 = arith.constant 0 : index
    %114 = vector.load %arg6[%c0_63, %c0_64] : memref<2x64xf32, #tpu.memory_space<vmem>>, vector<2x64xf32>
    %115 = arith.truncf %114 : vector<2x64xf32> to vector<2x64xbf16>
    %c0_65 = arith.constant 0 : index
    %c0_66 = arith.constant 0 : index
    %116 = vector.load %arg2[%c0_65, %c0_66] : memref<64x256xbf16, #tpu.memory_space<vmem>>, vector<64x256xbf16>
    %cst_67 = arith.constant dense<0.000000e+00> : vector<2x256xf32>
    %117 = tpu.matmul %115, %116, %cst_67 {dimension_numbers = #tpu.dot_dimension_numbers<[1], [0], [0], [1], [0, 0, 1, 1], [], []>} : vector<2x64xbf16>, vector<64x256xbf16>, vector<2x256xf32> -> vector<2x256xf32>
    %118 = arith.addf %113, %117 : vector<2x256xf32>
    %119 = math.tanh %118 : vector<2x256xf32>
    %120 = arith.negf %118 : vector<2x256xf32>
    %121 = math.exp %120 : vector<2x256xf32>
    %cst_68 = arith.constant 1.000000e+00 : f32
    %122 = vector.broadcast %cst_68 : f32 to vector<2x256xf32>
    %123 = arith.addf %122, %121 : vector<2x256xf32>
    %124 = arith.divf %122, %123 : vector<2x256xf32>
    %125 = arith.select %17, %119, %124 : vector<2x256xi1>, vector<2x256xf32>
    %126 = vector.extract_strided_slice %125 {offsets = [0, 0], sizes = [2, 64], strides = [1, 1]} : vector<2x256xf32> to vector<2x64xf32>
    %127 = vector.extract_strided_slice %125 {offsets = [0, 64], sizes = [2, 64], strides = [1, 1]} : vector<2x256xf32> to vector<2x64xf32>
    %128 = vector.extract_strided_slice %125 {offsets = [0, 128], sizes = [2, 64], strides = [1, 1]} : vector<2x256xf32> to vector<2x64xf32>
    %129 = vector.extract_strided_slice %125 {offsets = [0, 192], sizes = [2, 64], strides = [1, 1]} : vector<2x256xf32> to vector<2x64xf32>
    %c0_69 = arith.constant 0 : index
    %c0_70 = arith.constant 0 : index
    %130 = vector.load %arg7[%c0_69, %c0_70] : memref<2x64xf32, #tpu.memory_space<vmem>>, vector<2x64xf32>
    %131 = arith.mulf %127, %130 : vector<2x64xf32>
    %132 = arith.mulf %126, %128 : vector<2x64xf32>
    %133 = arith.addf %131, %132 : vector<2x64xf32>
    %134 = math.tanh %133 : vector<2x64xf32>
    %135 = arith.mulf %129, %134 : vector<2x64xf32>
    %c0_71 = arith.constant 0 : index
    %c0_72 = arith.constant 0 : index
    %136 = vector.load %arg7[%c0_71, %c0_72] : memref<2x64xf32, #tpu.memory_space<vmem>>, vector<2x64xf32>
    tpu.vector_store %arg7[%c0_71, %c0_72], %133 {strides = array<i32>} : memref<2x64xf32, #tpu.memory_space<vmem>>, vector<2x64xf32>,
    %c0_73 = arith.constant 0 : index
    %c0_74 = arith.constant 0 : index
    %137 = vector.load %arg6[%c0_73, %c0_74] : memref<2x64xf32, #tpu.memory_space<vmem>>, vector<2x64xf32>
    tpu.vector_store %arg6[%c0_73, %c0_74], %135 {strides = array<i32>} : memref<2x64xf32, #tpu.memory_space<vmem>>, vector<2x64xf32>,
    %138 = arith.index_cast %c3_i32 : i32 to index
    %c0_75 = arith.constant 0 : index
    %c0_76 = arith.constant 0 : index
    %139 = vector.load %arg4[%138, %c0_75, %c0_76] : memref<16x2x64xf32, #tpu.memory_space<vmem>>, vector<1x2x64xf32>
    %140 = vector.shape_cast %139 : vector<1x2x64xf32> to vector<2x64xf32>
    %141 = vector.shape_cast %135 : vector<2x64xf32> to vector<1x2x64xf32>
    tpu.vector_store %arg4[%138, %c0_75, %c0_76], %141 {strides = array<i32>} : memref<16x2x64xf32, #tpu.memory_space<vmem>>, vector<1x2x64xf32>,
    %c4_i32 = arith.constant 4 : i32
    %c2_i32_77 = arith.constant 2 : i32
    %142 = arith.muli %c4_i32, %c2_i32_77 : i32
    %143 = arith.index_cast %142 : i32 to index
    %c0_78 = arith.constant 0 : index
    %144 = vector.load %arg5[%143, %c0_78] : memref<32x256xf32, #tpu.memory_space<vmem>>, vector<2x256xf32>
    %c0_79 = arith.constant 0 : index
    %c0_80 = arith.constant 0 : index
    %145 = vector.load %arg6[%c0_79, %c0_80] : memref<2x64xf32, #tpu.memory_space<vmem>>, vector<2x64xf32>
    %146 = arith.truncf %145 : vector<2x64xf32> to vector<2x64xbf16>
    %c0_81 = arith.constant 0 : index
    %c0_82 = arith.constant 0 : index
    %147 = vector.load %arg2[%c0_81, %c0_82] : memref<64x256xbf16, #tpu.memory_space<vmem>>, vector<64x256xbf16>
    %cst_83 = arith.constant dense<0.000000e+00> : vector<2x256xf32>
    %148 = tpu.matmul %146, %147, %cst_83 {dimension_numbers = #tpu.dot_dimension_numbers<[1], [0], [0], [1], [0, 0, 1, 1], [], []>} : vector<2x64xbf16>, vector<64x256xbf16>, vector<2x256xf32> -> vector<2x256xf32>
    %149 = arith.addf %144, %148 : vector<2x256xf32>
    %150 = math.tanh %149 : vector<2x256xf32>
    %151 = arith.negf %149 : vector<2x256xf32>
    %152 = math.exp %151 : vector<2x256xf32>
    %cst_84 = arith.constant 1.000000e+00 : f32
    %153 = vector.broadcast %cst_84 : f32 to vector<2x256xf32>
    %154 = arith.addf %153, %152 : vector<2x256xf32>
    %155 = arith.divf %153, %154 : vector<2x256xf32>
    %156 = arith.select %17, %150, %155 : vector<2x256xi1>, vector<2x256xf32>
    %157 = vector.extract_strided_slice %156 {offsets = [0, 0], sizes = [2, 64], strides = [1, 1]} : vector<2x256xf32> to vector<2x64xf32>
    %158 = vector.extract_strided_slice %156 {offsets = [0, 64], sizes = [2, 64], strides = [1, 1]} : vector<2x256xf32> to vector<2x64xf32>
    %159 = vector.extract_strided_slice %156 {offsets = [0, 128], sizes = [2, 64], strides = [1, 1]} : vector<2x256xf32> to vector<2x64xf32>
    %160 = vector.extract_strided_slice %156 {offsets = [0, 192], sizes = [2, 64], strides = [1, 1]} : vector<2x256xf32> to vector<2x64xf32>
    %c0_85 = arith.constant 0 : index
    %c0_86 = arith.constant 0 : index
    %161 = vector.load %arg7[%c0_85, %c0_86] : memref<2x64xf32, #tpu.memory_space<vmem>>, vector<2x64xf32>
    %162 = arith.mulf %158, %161 : vector<2x64xf32>
    %163 = arith.mulf %157, %159 : vector<2x64xf32>
    %164 = arith.addf %162, %163 : vector<2x64xf32>
    %165 = math.tanh %164 : vector<2x64xf32>
    %166 = arith.mulf %160, %165 : vector<2x64xf32>
    %c0_87 = arith.constant 0 : index
    %c0_88 = arith.constant 0 : index
    %167 = vector.load %arg7[%c0_87, %c0_88] : memref<2x64xf32, #tpu.memory_space<vmem>>, vector<2x64xf32>
    tpu.vector_store %arg7[%c0_87, %c0_88], %164 {strides = array<i32>} : memref<2x64xf32, #tpu.memory_space<vmem>>, vector<2x64xf32>,
    %c0_89 = arith.constant 0 : index
    %c0_90 = arith.constant 0 : index
    %168 = vector.load %arg6[%c0_89, %c0_90] : memref<2x64xf32, #tpu.memory_space<vmem>>, vector<2x64xf32>
    tpu.vector_store %arg6[%c0_89, %c0_90], %166 {strides = array<i32>} : memref<2x64xf32, #tpu.memory_space<vmem>>, vector<2x64xf32>,
    %169 = arith.index_cast %c4_i32 : i32 to index
    %c0_91 = arith.constant 0 : index
    %c0_92 = arith.constant 0 : index
    %170 = vector.load %arg4[%169, %c0_91, %c0_92] : memref<16x2x64xf32, #tpu.memory_space<vmem>>, vector<1x2x64xf32>
    %171 = vector.shape_cast %170 : vector<1x2x64xf32> to vector<2x64xf32>
    %172 = vector.shape_cast %166 : vector<2x64xf32> to vector<1x2x64xf32>
    tpu.vector_store %arg4[%169, %c0_91, %c0_92], %172 {strides = array<i32>} : memref<16x2x64xf32, #tpu.memory_space<vmem>>, vector<1x2x64xf32>,
    %c5_i32 = arith.constant 5 : i32
    %c2_i32_93 = arith.constant 2 : i32
    %173 = arith.muli %c5_i32, %c2_i32_93 : i32
    %174 = arith.index_cast %173 : i32 to index
    %c0_94 = arith.constant 0 : index
    %175 = vector.load %arg5[%174, %c0_94] : memref<32x256xf32, #tpu.memory_space<vmem>>, vector<2x256xf32>
    %c0_95 = arith.constant 0 : index
    %c0_96 = arith.constant 0 : index
    %176 = vector.load %arg6[%c0_95, %c0_96] : memref<2x64xf32, #tpu.memory_space<vmem>>, vector<2x64xf32>
    %177 = arith.truncf %176 : vector<2x64xf32> to vector<2x64xbf16>
    %c0_97 = arith.constant 0 : index
    %c0_98 = arith.constant 0 : index
    %178 = vector.load %arg2[%c0_97, %c0_98] : memref<64x256xbf16, #tpu.memory_space<vmem>>, vector<64x256xbf16>
    %cst_99 = arith.constant dense<0.000000e+00> : vector<2x256xf32>
    %179 = tpu.matmul %177, %178, %cst_99 {dimension_numbers = #tpu.dot_dimension_numbers<[1], [0], [0], [1], [0, 0, 1, 1], [], []>} : vector<2x64xbf16>, vector<64x256xbf16>, vector<2x256xf32> -> vector<2x256xf32>
    %180 = arith.addf %175, %179 : vector<2x256xf32>
    %181 = math.tanh %180 : vector<2x256xf32>
    %182 = arith.negf %180 : vector<2x256xf32>
    %183 = math.exp %182 : vector<2x256xf32>
    %cst_100 = arith.constant 1.000000e+00 : f32
    %184 = vector.broadcast %cst_100 : f32 to vector<2x256xf32>
    %185 = arith.addf %184, %183 : vector<2x256xf32>
    %186 = arith.divf %184, %185 : vector<2x256xf32>
    %187 = arith.select %17, %181, %186 : vector<2x256xi1>, vector<2x256xf32>
    %188 = vector.extract_strided_slice %187 {offsets = [0, 0], sizes = [2, 64], strides = [1, 1]} : vector<2x256xf32> to vector<2x64xf32>
    %189 = vector.extract_strided_slice %187 {offsets = [0, 64], sizes = [2, 64], strides = [1, 1]} : vector<2x256xf32> to vector<2x64xf32>
    %190 = vector.extract_strided_slice %187 {offsets = [0, 128], sizes = [2, 64], strides = [1, 1]} : vector<2x256xf32> to vector<2x64xf32>
    %191 = vector.extract_strided_slice %187 {offsets = [0, 192], sizes = [2, 64], strides = [1, 1]} : vector<2x256xf32> to vector<2x64xf32>
    %c0_101 = arith.constant 0 : index
    %c0_102 = arith.constant 0 : index
    %192 = vector.load %arg7[%c0_101, %c0_102] : memref<2x64xf32, #tpu.memory_space<vmem>>, vector<2x64xf32>
    %193 = arith.mulf %189, %192 : vector<2x64xf32>
    %194 = arith.mulf %188, %190 : vector<2x64xf32>
    %195 = arith.addf %193, %194 : vector<2x64xf32>
    %196 = math.tanh %195 : vector<2x64xf32>
    %197 = arith.mulf %191, %196 : vector<2x64xf32>
    %c0_103 = arith.constant 0 : index
    %c0_104 = arith.constant 0 : index
    %198 = vector.load %arg7[%c0_103, %c0_104] : memref<2x64xf32, #tpu.memory_space<vmem>>, vector<2x64xf32>
    tpu.vector_store %arg7[%c0_103, %c0_104], %195 {strides = array<i32>} : memref<2x64xf32, #tpu.memory_space<vmem>>, vector<2x64xf32>,
    %c0_105 = arith.constant 0 : index
    %c0_106 = arith.constant 0 : index
    %199 = vector.load %arg6[%c0_105, %c0_106] : memref<2x64xf32, #tpu.memory_space<vmem>>, vector<2x64xf32>
    tpu.vector_store %arg6[%c0_105, %c0_106], %197 {strides = array<i32>} : memref<2x64xf32, #tpu.memory_space<vmem>>, vector<2x64xf32>,
    %200 = arith.index_cast %c5_i32 : i32 to index
    %c0_107 = arith.constant 0 : index
    %c0_108 = arith.constant 0 : index
    %201 = vector.load %arg4[%200, %c0_107, %c0_108] : memref<16x2x64xf32, #tpu.memory_space<vmem>>, vector<1x2x64xf32>
    %202 = vector.shape_cast %201 : vector<1x2x64xf32> to vector<2x64xf32>
    %203 = vector.shape_cast %197 : vector<2x64xf32> to vector<1x2x64xf32>
    tpu.vector_store %arg4[%200, %c0_107, %c0_108], %203 {strides = array<i32>} : memref<16x2x64xf32, #tpu.memory_space<vmem>>, vector<1x2x64xf32>,
    %c6_i32 = arith.constant 6 : i32
    %c2_i32_109 = arith.constant 2 : i32
    %204 = arith.muli %c6_i32, %c2_i32_109 : i32
    %205 = arith.index_cast %204 : i32 to index
    %c0_110 = arith.constant 0 : index
    %206 = vector.load %arg5[%205, %c0_110] : memref<32x256xf32, #tpu.memory_space<vmem>>, vector<2x256xf32>
    %c0_111 = arith.constant 0 : index
    %c0_112 = arith.constant 0 : index
    %207 = vector.load %arg6[%c0_111, %c0_112] : memref<2x64xf32, #tpu.memory_space<vmem>>, vector<2x64xf32>
    %208 = arith.truncf %207 : vector<2x64xf32> to vector<2x64xbf16>
    %c0_113 = arith.constant 0 : index
    %c0_114 = arith.constant 0 : index
    %209 = vector.load %arg2[%c0_113, %c0_114] : memref<64x256xbf16, #tpu.memory_space<vmem>>, vector<64x256xbf16>
    %cst_115 = arith.constant dense<0.000000e+00> : vector<2x256xf32>
    %210 = tpu.matmul %208, %209, %cst_115 {dimension_numbers = #tpu.dot_dimension_numbers<[1], [0], [0], [1], [0, 0, 1, 1], [], []>} : vector<2x64xbf16>, vector<64x256xbf16>, vector<2x256xf32> -> vector<2x256xf32>
    %211 = arith.addf %206, %210 : vector<2x256xf32>
    %212 = math.tanh %211 : vector<2x256xf32>
    %213 = arith.negf %211 : vector<2x256xf32>
    %214 = math.exp %213 : vector<2x256xf32>
    %cst_116 = arith.constant 1.000000e+00 : f32
    %215 = vector.broadcast %cst_116 : f32 to vector<2x256xf32>
    %216 = arith.addf %215, %214 : vector<2x256xf32>
    %217 = arith.divf %215, %216 : vector<2x256xf32>
    %218 = arith.select %17, %212, %217 : vector<2x256xi1>, vector<2x256xf32>
    %219 = vector.extract_strided_slice %218 {offsets = [0, 0], sizes = [2, 64], strides = [1, 1]} : vector<2x256xf32> to vector<2x64xf32>
    %220 = vector.extract_strided_slice %218 {offsets = [0, 64], sizes = [2, 64], strides = [1, 1]} : vector<2x256xf32> to vector<2x64xf32>
    %221 = vector.extract_strided_slice %218 {offsets = [0, 128], sizes = [2, 64], strides = [1, 1]} : vector<2x256xf32> to vector<2x64xf32>
    %222 = vector.extract_strided_slice %218 {offsets = [0, 192], sizes = [2, 64], strides = [1, 1]} : vector<2x256xf32> to vector<2x64xf32>
    %c0_117 = arith.constant 0 : index
    %c0_118 = arith.constant 0 : index
    %223 = vector.load %arg7[%c0_117, %c0_118] : memref<2x64xf32, #tpu.memory_space<vmem>>, vector<2x64xf32>
    %224 = arith.mulf %220, %223 : vector<2x64xf32>
    %225 = arith.mulf %219, %221 : vector<2x64xf32>
    %226 = arith.addf %224, %225 : vector<2x64xf32>
    %227 = math.tanh %226 : vector<2x64xf32>
    %228 = arith.mulf %222, %227 : vector<2x64xf32>
    %c0_119 = arith.constant 0 : index
    %c0_120 = arith.constant 0 : index
    %229 = vector.load %arg7[%c0_119, %c0_120] : memref<2x64xf32, #tpu.memory_space<vmem>>, vector<2x64xf32>
    tpu.vector_store %arg7[%c0_119, %c0_120], %226 {strides = array<i32>} : memref<2x64xf32, #tpu.memory_space<vmem>>, vector<2x64xf32>,
    %c0_121 = arith.constant 0 : index
    %c0_122 = arith.constant 0 : index
    %230 = vector.load %arg6[%c0_121, %c0_122] : memref<2x64xf32, #tpu.memory_space<vmem>>, vector<2x64xf32>
    tpu.vector_store %arg6[%c0_121, %c0_122], %228 {strides = array<i32>} : memref<2x64xf32, #tpu.memory_space<vmem>>, vector<2x64xf32>,
    %231 = arith.index_cast %c6_i32 : i32 to index
    %c0_123 = arith.constant 0 : index
    %c0_124 = arith.constant 0 : index
    %232 = vector.load %arg4[%231, %c0_123, %c0_124] : memref<16x2x64xf32, #tpu.memory_space<vmem>>, vector<1x2x64xf32>
    %233 = vector.shape_cast %232 : vector<1x2x64xf32> to vector<2x64xf32>
    %234 = vector.shape_cast %228 : vector<2x64xf32> to vector<1x2x64xf32>
    tpu.vector_store %arg4[%231, %c0_123, %c0_124], %234 {strides = array<i32>} : memref<16x2x64xf32, #tpu.memory_space<vmem>>, vector<1x2x64xf32>,
    %c7_i32 = arith.constant 7 : i32
    %c2_i32_125 = arith.constant 2 : i32
    %235 = arith.muli %c7_i32, %c2_i32_125 : i32
    %236 = arith.index_cast %235 : i32 to index
    %c0_126 = arith.constant 0 : index
    %237 = vector.load %arg5[%236, %c0_126] : memref<32x256xf32, #tpu.memory_space<vmem>>, vector<2x256xf32>
    %c0_127 = arith.constant 0 : index
    %c0_128 = arith.constant 0 : index
    %238 = vector.load %arg6[%c0_127, %c0_128] : memref<2x64xf32, #tpu.memory_space<vmem>>, vector<2x64xf32>
    %239 = arith.truncf %238 : vector<2x64xf32> to vector<2x64xbf16>
    %c0_129 = arith.constant 0 : index
    %c0_130 = arith.constant 0 : index
    %240 = vector.load %arg2[%c0_129, %c0_130] : memref<64x256xbf16, #tpu.memory_space<vmem>>, vector<64x256xbf16>
    %cst_131 = arith.constant dense<0.000000e+00> : vector<2x256xf32>
    %241 = tpu.matmul %239, %240, %cst_131 {dimension_numbers = #tpu.dot_dimension_numbers<[1], [0], [0], [1], [0, 0, 1, 1], [], []>} : vector<2x64xbf16>, vector<64x256xbf16>, vector<2x256xf32> -> vector<2x256xf32>
    %242 = arith.addf %237, %241 : vector<2x256xf32>
    %243 = math.tanh %242 : vector<2x256xf32>
    %244 = arith.negf %242 : vector<2x256xf32>
    %245 = math.exp %244 : vector<2x256xf32>
    %cst_132 = arith.constant 1.000000e+00 : f32
    %246 = vector.broadcast %cst_132 : f32 to vector<2x256xf32>
    %247 = arith.addf %246, %245 : vector<2x256xf32>
    %248 = arith.divf %246, %247 : vector<2x256xf32>
    %249 = arith.select %17, %243, %248 : vector<2x256xi1>, vector<2x256xf32>
    %250 = vector.extract_strided_slice %249 {offsets = [0, 0], sizes = [2, 64], strides = [1, 1]} : vector<2x256xf32> to vector<2x64xf32>
    %251 = vector.extract_strided_slice %249 {offsets = [0, 64], sizes = [2, 64], strides = [1, 1]} : vector<2x256xf32> to vector<2x64xf32>
    %252 = vector.extract_strided_slice %249 {offsets = [0, 128], sizes = [2, 64], strides = [1, 1]} : vector<2x256xf32> to vector<2x64xf32>
    %253 = vector.extract_strided_slice %249 {offsets = [0, 192], sizes = [2, 64], strides = [1, 1]} : vector<2x256xf32> to vector<2x64xf32>
    %c0_133 = arith.constant 0 : index
    %c0_134 = arith.constant 0 : index
    %254 = vector.load %arg7[%c0_133, %c0_134] : memref<2x64xf32, #tpu.memory_space<vmem>>, vector<2x64xf32>
    %255 = arith.mulf %251, %254 : vector<2x64xf32>
    %256 = arith.mulf %250, %252 : vector<2x64xf32>
    %257 = arith.addf %255, %256 : vector<2x64xf32>
    %258 = math.tanh %257 : vector<2x64xf32>
    %259 = arith.mulf %253, %258 : vector<2x64xf32>
    %c0_135 = arith.constant 0 : index
    %c0_136 = arith.constant 0 : index
    %260 = vector.load %arg7[%c0_135, %c0_136] : memref<2x64xf32, #tpu.memory_space<vmem>>, vector<2x64xf32>
    tpu.vector_store %arg7[%c0_135, %c0_136], %257 {strides = array<i32>} : memref<2x64xf32, #tpu.memory_space<vmem>>, vector<2x64xf32>,
    %c0_137 = arith.constant 0 : index
    %c0_138 = arith.constant 0 : index
    %261 = vector.load %arg6[%c0_137, %c0_138] : memref<2x64xf32, #tpu.memory_space<vmem>>, vector<2x64xf32>
    tpu.vector_store %arg6[%c0_137, %c0_138], %259 {strides = array<i32>} : memref<2x64xf32, #tpu.memory_space<vmem>>, vector<2x64xf32>,
    %262 = arith.index_cast %c7_i32 : i32 to index
    %c0_139 = arith.constant 0 : index
    %c0_140 = arith.constant 0 : index
    %263 = vector.load %arg4[%262, %c0_139, %c0_140] : memref<16x2x64xf32, #tpu.memory_space<vmem>>, vector<1x2x64xf32>
    %264 = vector.shape_cast %263 : vector<1x2x64xf32> to vector<2x64xf32>
    %265 = vector.shape_cast %259 : vector<2x64xf32> to vector<1x2x64xf32>
    tpu.vector_store %arg4[%262, %c0_139, %c0_140], %265 {strides = array<i32>} : memref<16x2x64xf32, #tpu.memory_space<vmem>>, vector<1x2x64xf32>,
    %c8_i32 = arith.constant 8 : i32
    %c2_i32_141 = arith.constant 2 : i32
    %266 = arith.muli %c8_i32, %c2_i32_141 : i32
    %267 = arith.index_cast %266 : i32 to index
    %c0_142 = arith.constant 0 : index
    %268 = vector.load %arg5[%267, %c0_142] : memref<32x256xf32, #tpu.memory_space<vmem>>, vector<2x256xf32>
    %c0_143 = arith.constant 0 : index
    %c0_144 = arith.constant 0 : index
    %269 = vector.load %arg6[%c0_143, %c0_144] : memref<2x64xf32, #tpu.memory_space<vmem>>, vector<2x64xf32>
    %270 = arith.truncf %269 : vector<2x64xf32> to vector<2x64xbf16>
    %c0_145 = arith.constant 0 : index
    %c0_146 = arith.constant 0 : index
    %271 = vector.load %arg2[%c0_145, %c0_146] : memref<64x256xbf16, #tpu.memory_space<vmem>>, vector<64x256xbf16>
    %cst_147 = arith.constant dense<0.000000e+00> : vector<2x256xf32>
    %272 = tpu.matmul %270, %271, %cst_147 {dimension_numbers = #tpu.dot_dimension_numbers<[1], [0], [0], [1], [0, 0, 1, 1], [], []>} : vector<2x64xbf16>, vector<64x256xbf16>, vector<2x256xf32> -> vector<2x256xf32>
    %273 = arith.addf %268, %272 : vector<2x256xf32>
    %274 = math.tanh %273 : vector<2x256xf32>
    %275 = arith.negf %273 : vector<2x256xf32>
    %276 = math.exp %275 : vector<2x256xf32>
    %cst_148 = arith.constant 1.000000e+00 : f32
    %277 = vector.broadcast %cst_148 : f32 to vector<2x256xf32>
    %278 = arith.addf %277, %276 : vector<2x256xf32>
    %279 = arith.divf %277, %278 : vector<2x256xf32>
    %280 = arith.select %17, %274, %279 : vector<2x256xi1>, vector<2x256xf32>
    %281 = vector.extract_strided_slice %280 {offsets = [0, 0], sizes = [2, 64], strides = [1, 1]} : vector<2x256xf32> to vector<2x64xf32>
    %282 = vector.extract_strided_slice %280 {offsets = [0, 64], sizes = [2, 64], strides = [1, 1]} : vector<2x256xf32> to vector<2x64xf32>
    %283 = vector.extract_strided_slice %280 {offsets = [0, 128], sizes = [2, 64], strides = [1, 1]} : vector<2x256xf32> to vector<2x64xf32>
    %284 = vector.extract_strided_slice %280 {offsets = [0, 192], sizes = [2, 64], strides = [1, 1]} : vector<2x256xf32> to vector<2x64xf32>
    %c0_149 = arith.constant 0 : index
    %c0_150 = arith.constant 0 : index
    %285 = vector.load %arg7[%c0_149, %c0_150] : memref<2x64xf32, #tpu.memory_space<vmem>>, vector<2x64xf32>
    %286 = arith.mulf %282, %285 : vector<2x64xf32>
    %287 = arith.mulf %281, %283 : vector<2x64xf32>
    %288 = arith.addf %286, %287 : vector<2x64xf32>
    %289 = math.tanh %288 : vector<2x64xf32>
    %290 = arith.mulf %284, %289 : vector<2x64xf32>
    %c0_151 = arith.constant 0 : index
    %c0_152 = arith.constant 0 : index
    %291 = vector.load %arg7[%c0_151, %c0_152] : memref<2x64xf32, #tpu.memory_space<vmem>>, vector<2x64xf32>
    tpu.vector_store %arg7[%c0_151, %c0_152], %288 {strides = array<i32>} : memref<2x64xf32, #tpu.memory_space<vmem>>, vector<2x64xf32>,
    %c0_153 = arith.constant 0 : index
    %c0_154 = arith.constant 0 : index
    %292 = vector.load %arg6[%c0_153, %c0_154] : memref<2x64xf32, #tpu.memory_space<vmem>>, vector<2x64xf32>
    tpu.vector_store %arg6[%c0_153, %c0_154], %290 {strides = array<i32>} : memref<2x64xf32, #tpu.memory_space<vmem>>, vector<2x64xf32>,
    %293 = arith.index_cast %c8_i32 : i32 to index
    %c0_155 = arith.constant 0 : index
    %c0_156 = arith.constant 0 : index
    %294 = vector.load %arg4[%293, %c0_155, %c0_156] : memref<16x2x64xf32, #tpu.memory_space<vmem>>, vector<1x2x64xf32>
    %295 = vector.shape_cast %294 : vector<1x2x64xf32> to vector<2x64xf32>
    %296 = vector.shape_cast %290 : vector<2x64xf32> to vector<1x2x64xf32>
    tpu.vector_store %arg4[%293, %c0_155, %c0_156], %296 {strides = array<i32>} : memref<16x2x64xf32, #tpu.memory_space<vmem>>, vector<1x2x64xf32>,
    %c9_i32 = arith.constant 9 : i32
    %c2_i32_157 = arith.constant 2 : i32
    %297 = arith.muli %c9_i32, %c2_i32_157 : i32
    %298 = arith.index_cast %297 : i32 to index
    %c0_158 = arith.constant 0 : index
    %299 = vector.load %arg5[%298, %c0_158] : memref<32x256xf32, #tpu.memory_space<vmem>>, vector<2x256xf32>
    %c0_159 = arith.constant 0 : index
    %c0_160 = arith.constant 0 : index
    %300 = vector.load %arg6[%c0_159, %c0_160] : memref<2x64xf32, #tpu.memory_space<vmem>>, vector<2x64xf32>
    %301 = arith.truncf %300 : vector<2x64xf32> to vector<2x64xbf16>
    %c0_161 = arith.constant 0 : index
    %c0_162 = arith.constant 0 : index
    %302 = vector.load %arg2[%c0_161, %c0_162] : memref<64x256xbf16, #tpu.memory_space<vmem>>, vector<64x256xbf16>
    %cst_163 = arith.constant dense<0.000000e+00> : vector<2x256xf32>
    %303 = tpu.matmul %301, %302, %cst_163 {dimension_numbers = #tpu.dot_dimension_numbers<[1], [0], [0], [1], [0, 0, 1, 1], [], []>} : vector<2x64xbf16>, vector<64x256xbf16>, vector<2x256xf32> -> vector<2x256xf32>
    %304 = arith.addf %299, %303 : vector<2x256xf32>
    %305 = math.tanh %304 : vector<2x256xf32>
    %306 = arith.negf %304 : vector<2x256xf32>
    %307 = math.exp %306 : vector<2x256xf32>
    %cst_164 = arith.constant 1.000000e+00 : f32
    %308 = vector.broadcast %cst_164 : f32 to vector<2x256xf32>
    %309 = arith.addf %308, %307 : vector<2x256xf32>
    %310 = arith.divf %308, %309 : vector<2x256xf32>
    %311 = arith.select %17, %305, %310 : vector<2x256xi1>, vector<2x256xf32>
    %312 = vector.extract_strided_slice %311 {offsets = [0, 0], sizes = [2, 64], strides = [1, 1]} : vector<2x256xf32> to vector<2x64xf32>
    %313 = vector.extract_strided_slice %311 {offsets = [0, 64], sizes = [2, 64], strides = [1, 1]} : vector<2x256xf32> to vector<2x64xf32>
    %314 = vector.extract_strided_slice %311 {offsets = [0, 128], sizes = [2, 64], strides = [1, 1]} : vector<2x256xf32> to vector<2x64xf32>
    %315 = vector.extract_strided_slice %311 {offsets = [0, 192], sizes = [2, 64], strides = [1, 1]} : vector<2x256xf32> to vector<2x64xf32>
    %c0_165 = arith.constant 0 : index
    %c0_166 = arith.constant 0 : index
    %316 = vector.load %arg7[%c0_165, %c0_166] : memref<2x64xf32, #tpu.memory_space<vmem>>, vector<2x64xf32>
    %317 = arith.mulf %313, %316 : vector<2x64xf32>
    %318 = arith.mulf %312, %314 : vector<2x64xf32>
    %319 = arith.addf %317, %318 : vector<2x64xf32>
    %320 = math.tanh %319 : vector<2x64xf32>
    %321 = arith.mulf %315, %320 : vector<2x64xf32>
    %c0_167 = arith.constant 0 : index
    %c0_168 = arith.constant 0 : index
    %322 = vector.load %arg7[%c0_167, %c0_168] : memref<2x64xf32, #tpu.memory_space<vmem>>, vector<2x64xf32>
    tpu.vector_store %arg7[%c0_167, %c0_168], %319 {strides = array<i32>} : memref<2x64xf32, #tpu.memory_space<vmem>>, vector<2x64xf32>,
    %c0_169 = arith.constant 0 : index
    %c0_170 = arith.constant 0 : index
    %323 = vector.load %arg6[%c0_169, %c0_170] : memref<2x64xf32, #tpu.memory_space<vmem>>, vector<2x64xf32>
    tpu.vector_store %arg6[%c0_169, %c0_170], %321 {strides = array<i32>} : memref<2x64xf32, #tpu.memory_space<vmem>>, vector<2x64xf32>,
    %324 = arith.index_cast %c9_i32 : i32 to index
    %c0_171 = arith.constant 0 : index
    %c0_172 = arith.constant 0 : index
    %325 = vector.load %arg4[%324, %c0_171, %c0_172] : memref<16x2x64xf32, #tpu.memory_space<vmem>>, vector<1x2x64xf32>
    %326 = vector.shape_cast %325 : vector<1x2x64xf32> to vector<2x64xf32>
    %327 = vector.shape_cast %321 : vector<2x64xf32> to vector<1x2x64xf32>
    tpu.vector_store %arg4[%324, %c0_171, %c0_172], %327 {strides = array<i32>} : memref<16x2x64xf32, #tpu.memory_space<vmem>>, vector<1x2x64xf32>,
    %c10_i32 = arith.constant 10 : i32
    %c2_i32_173 = arith.constant 2 : i32
    %328 = arith.muli %c10_i32, %c2_i32_173 : i32
    %329 = arith.index_cast %328 : i32 to index
    %c0_174 = arith.constant 0 : index
    %330 = vector.load %arg5[%329, %c0_174] : memref<32x256xf32, #tpu.memory_space<vmem>>, vector<2x256xf32>
    %c0_175 = arith.constant 0 : index
    %c0_176 = arith.constant 0 : index
    %331 = vector.load %arg6[%c0_175, %c0_176] : memref<2x64xf32, #tpu.memory_space<vmem>>, vector<2x64xf32>
    %332 = arith.truncf %331 : vector<2x64xf32> to vector<2x64xbf16>
    %c0_177 = arith.constant 0 : index
    %c0_178 = arith.constant 0 : index
    %333 = vector.load %arg2[%c0_177, %c0_178] : memref<64x256xbf16, #tpu.memory_space<vmem>>, vector<64x256xbf16>
    %cst_179 = arith.constant dense<0.000000e+00> : vector<2x256xf32>
    %334 = tpu.matmul %332, %333, %cst_179 {dimension_numbers = #tpu.dot_dimension_numbers<[1], [0], [0], [1], [0, 0, 1, 1], [], []>} : vector<2x64xbf16>, vector<64x256xbf16>, vector<2x256xf32> -> vector<2x256xf32>
    %335 = arith.addf %330, %334 : vector<2x256xf32>
    %336 = math.tanh %335 : vector<2x256xf32>
    %337 = arith.negf %335 : vector<2x256xf32>
    %338 = math.exp %337 : vector<2x256xf32>
    %cst_180 = arith.constant 1.000000e+00 : f32
    %339 = vector.broadcast %cst_180 : f32 to vector<2x256xf32>
    %340 = arith.addf %339, %338 : vector<2x256xf32>
    %341 = arith.divf %339, %340 : vector<2x256xf32>
    %342 = arith.select %17, %336, %341 : vector<2x256xi1>, vector<2x256xf32>
    %343 = vector.extract_strided_slice %342 {offsets = [0, 0], sizes = [2, 64], strides = [1, 1]} : vector<2x256xf32> to vector<2x64xf32>
    %344 = vector.extract_strided_slice %342 {offsets = [0, 64], sizes = [2, 64], strides = [1, 1]} : vector<2x256xf32> to vector<2x64xf32>
    %345 = vector.extract_strided_slice %342 {offsets = [0, 128], sizes = [2, 64], strides = [1, 1]} : vector<2x256xf32> to vector<2x64xf32>
    %346 = vector.extract_strided_slice %342 {offsets = [0, 192], sizes = [2, 64], strides = [1, 1]} : vector<2x256xf32> to vector<2x64xf32>
    %c0_181 = arith.constant 0 : index
    %c0_182 = arith.constant 0 : index
    %347 = vector.load %arg7[%c0_181, %c0_182] : memref<2x64xf32, #tpu.memory_space<vmem>>, vector<2x64xf32>
    %348 = arith.mulf %344, %347 : vector<2x64xf32>
    %349 = arith.mulf %343, %345 : vector<2x64xf32>
    %350 = arith.addf %348, %349 : vector<2x64xf32>
    %351 = math.tanh %350 : vector<2x64xf32>
    %352 = arith.mulf %346, %351 : vector<2x64xf32>
    %c0_183 = arith.constant 0 : index
    %c0_184 = arith.constant 0 : index
    %353 = vector.load %arg7[%c0_183, %c0_184] : memref<2x64xf32, #tpu.memory_space<vmem>>, vector<2x64xf32>
    tpu.vector_store %arg7[%c0_183, %c0_184], %350 {strides = array<i32>} : memref<2x64xf32, #tpu.memory_space<vmem>>, vector<2x64xf32>,
    %c0_185 = arith.constant 0 : index
    %c0_186 = arith.constant 0 : index
    %354 = vector.load %arg6[%c0_185, %c0_186] : memref<2x64xf32, #tpu.memory_space<vmem>>, vector<2x64xf32>
    tpu.vector_store %arg6[%c0_185, %c0_186], %352 {strides = array<i32>} : memref<2x64xf32, #tpu.memory_space<vmem>>, vector<2x64xf32>,
    %355 = arith.index_cast %c10_i32 : i32 to index
    %c0_187 = arith.constant 0 : index
    %c0_188 = arith.constant 0 : index
    %356 = vector.load %arg4[%355, %c0_187, %c0_188] : memref<16x2x64xf32, #tpu.memory_space<vmem>>, vector<1x2x64xf32>
    %357 = vector.shape_cast %356 : vector<1x2x64xf32> to vector<2x64xf32>
    %358 = vector.shape_cast %352 : vector<2x64xf32> to vector<1x2x64xf32>
    tpu.vector_store %arg4[%355, %c0_187, %c0_188], %358 {strides = array<i32>} : memref<16x2x64xf32, #tpu.memory_space<vmem>>, vector<1x2x64xf32>,
    %c11_i32 = arith.constant 11 : i32
    %c2_i32_189 = arith.constant 2 : i32
    %359 = arith.muli %c11_i32, %c2_i32_189 : i32
    %360 = arith.index_cast %359 : i32 to index
    %c0_190 = arith.constant 0 : index
    %361 = vector.load %arg5[%360, %c0_190] : memref<32x256xf32, #tpu.memory_space<vmem>>, vector<2x256xf32>
    %c0_191 = arith.constant 0 : index
    %c0_192 = arith.constant 0 : index
    %362 = vector.load %arg6[%c0_191, %c0_192] : memref<2x64xf32, #tpu.memory_space<vmem>>, vector<2x64xf32>
    %363 = arith.truncf %362 : vector<2x64xf32> to vector<2x64xbf16>
    %c0_193 = arith.constant 0 : index
    %c0_194 = arith.constant 0 : index
    %364 = vector.load %arg2[%c0_193, %c0_194] : memref<64x256xbf16, #tpu.memory_space<vmem>>, vector<64x256xbf16>
    %cst_195 = arith.constant dense<0.000000e+00> : vector<2x256xf32>
    %365 = tpu.matmul %363, %364, %cst_195 {dimension_numbers = #tpu.dot_dimension_numbers<[1], [0], [0], [1], [0, 0, 1, 1], [], []>} : vector<2x64xbf16>, vector<64x256xbf16>, vector<2x256xf32> -> vector<2x256xf32>
    %366 = arith.addf %361, %365 : vector<2x256xf32>
    %367 = math.tanh %366 : vector<2x256xf32>
    %368 = arith.negf %366 : vector<2x256xf32>
    %369 = math.exp %368 : vector<2x256xf32>
    %cst_196 = arith.constant 1.000000e+00 : f32
    %370 = vector.broadcast %cst_196 : f32 to vector<2x256xf32>
    %371 = arith.addf %370, %369 : vector<2x256xf32>
    %372 = arith.divf %370, %371 : vector<2x256xf32>
    %373 = arith.select %17, %367, %372 : vector<2x256xi1>, vector<2x256xf32>
    %374 = vector.extract_strided_slice %373 {offsets = [0, 0], sizes = [2, 64], strides = [1, 1]} : vector<2x256xf32> to vector<2x64xf32>
    %375 = vector.extract_strided_slice %373 {offsets = [0, 64], sizes = [2, 64], strides = [1, 1]} : vector<2x256xf32> to vector<2x64xf32>
    %376 = vector.extract_strided_slice %373 {offsets = [0, 128], sizes = [2, 64], strides = [1, 1]} : vector<2x256xf32> to vector<2x64xf32>
    %377 = vector.extract_strided_slice %373 {offsets = [0, 192], sizes = [2, 64], strides = [1, 1]} : vector<2x256xf32> to vector<2x64xf32>
    %c0_197 = arith.constant 0 : index
    %c0_198 = arith.constant 0 : index
    %378 = vector.load %arg7[%c0_197, %c0_198] : memref<2x64xf32, #tpu.memory_space<vmem>>, vector<2x64xf32>
    %379 = arith.mulf %375, %378 : vector<2x64xf32>
    %380 = arith.mulf %374, %376 : vector<2x64xf32>
    %381 = arith.addf %379, %380 : vector<2x64xf32>
    %382 = math.tanh %381 : vector<2x64xf32>
    %383 = arith.mulf %377, %382 : vector<2x64xf32>
    %c0_199 = arith.constant 0 : index
    %c0_200 = arith.constant 0 : index
    %384 = vector.load %arg7[%c0_199, %c0_200] : memref<2x64xf32, #tpu.memory_space<vmem>>, vector<2x64xf32>
    tpu.vector_store %arg7[%c0_199, %c0_200], %381 {strides = array<i32>} : memref<2x64xf32, #tpu.memory_space<vmem>>, vector<2x64xf32>,
    %c0_201 = arith.constant 0 : index
    %c0_202 = arith.constant 0 : index
    %385 = vector.load %arg6[%c0_201, %c0_202] : memref<2x64xf32, #tpu.memory_space<vmem>>, vector<2x64xf32>
    tpu.vector_store %arg6[%c0_201, %c0_202], %383 {strides = array<i32>} : memref<2x64xf32, #tpu.memory_space<vmem>>, vector<2x64xf32>,
    %386 = arith.index_cast %c11_i32 : i32 to index
    %c0_203 = arith.constant 0 : index
    %c0_204 = arith.constant 0 : index
    %387 = vector.load %arg4[%386, %c0_203, %c0_204] : memref<16x2x64xf32, #tpu.memory_space<vmem>>, vector<1x2x64xf32>
    %388 = vector.shape_cast %387 : vector<1x2x64xf32> to vector<2x64xf32>
    %389 = vector.shape_cast %383 : vector<2x64xf32> to vector<1x2x64xf32>
    tpu.vector_store %arg4[%386, %c0_203, %c0_204], %389 {strides = array<i32>} : memref<16x2x64xf32, #tpu.memory_space<vmem>>, vector<1x2x64xf32>,
    %c12_i32 = arith.constant 12 : i32
    %c2_i32_205 = arith.constant 2 : i32
    %390 = arith.muli %c12_i32, %c2_i32_205 : i32
    %391 = arith.index_cast %390 : i32 to index
    %c0_206 = arith.constant 0 : index
    %392 = vector.load %arg5[%391, %c0_206] : memref<32x256xf32, #tpu.memory_space<vmem>>, vector<2x256xf32>
    %c0_207 = arith.constant 0 : index
    %c0_208 = arith.constant 0 : index
    %393 = vector.load %arg6[%c0_207, %c0_208] : memref<2x64xf32, #tpu.memory_space<vmem>>, vector<2x64xf32>
    %394 = arith.truncf %393 : vector<2x64xf32> to vector<2x64xbf16>
    %c0_209 = arith.constant 0 : index
    %c0_210 = arith.constant 0 : index
    %395 = vector.load %arg2[%c0_209, %c0_210] : memref<64x256xbf16, #tpu.memory_space<vmem>>, vector<64x256xbf16>
    %cst_211 = arith.constant dense<0.000000e+00> : vector<2x256xf32>
    %396 = tpu.matmul %394, %395, %cst_211 {dimension_numbers = #tpu.dot_dimension_numbers<[1], [0], [0], [1], [0, 0, 1, 1], [], []>} : vector<2x64xbf16>, vector<64x256xbf16>, vector<2x256xf32> -> vector<2x256xf32>
    %397 = arith.addf %392, %396 : vector<2x256xf32>
    %398 = math.tanh %397 : vector<2x256xf32>
    %399 = arith.negf %397 : vector<2x256xf32>
    %400 = math.exp %399 : vector<2x256xf32>
    %cst_212 = arith.constant 1.000000e+00 : f32
    %401 = vector.broadcast %cst_212 : f32 to vector<2x256xf32>
    %402 = arith.addf %401, %400 : vector<2x256xf32>
    %403 = arith.divf %401, %402 : vector<2x256xf32>
    %404 = arith.select %17, %398, %403 : vector<2x256xi1>, vector<2x256xf32>
    %405 = vector.extract_strided_slice %404 {offsets = [0, 0], sizes = [2, 64], strides = [1, 1]} : vector<2x256xf32> to vector<2x64xf32>
    %406 = vector.extract_strided_slice %404 {offsets = [0, 64], sizes = [2, 64], strides = [1, 1]} : vector<2x256xf32> to vector<2x64xf32>
    %407 = vector.extract_strided_slice %404 {offsets = [0, 128], sizes = [2, 64], strides = [1, 1]} : vector<2x256xf32> to vector<2x64xf32>
    %408 = vector.extract_strided_slice %404 {offsets = [0, 192], sizes = [2, 64], strides = [1, 1]} : vector<2x256xf32> to vector<2x64xf32>
    %c0_213 = arith.constant 0 : index
    %c0_214 = arith.constant 0 : index
    %409 = vector.load %arg7[%c0_213, %c0_214] : memref<2x64xf32, #tpu.memory_space<vmem>>, vector<2x64xf32>
    %410 = arith.mulf %406, %409 : vector<2x64xf32>
    %411 = arith.mulf %405, %407 : vector<2x64xf32>
    %412 = arith.addf %410, %411 : vector<2x64xf32>
    %413 = math.tanh %412 : vector<2x64xf32>
    %414 = arith.mulf %408, %413 : vector<2x64xf32>
    %c0_215 = arith.constant 0 : index
    %c0_216 = arith.constant 0 : index
    %415 = vector.load %arg7[%c0_215, %c0_216] : memref<2x64xf32, #tpu.memory_space<vmem>>, vector<2x64xf32>
    tpu.vector_store %arg7[%c0_215, %c0_216], %412 {strides = array<i32>} : memref<2x64xf32, #tpu.memory_space<vmem>>, vector<2x64xf32>,
    %c0_217 = arith.constant 0 : index
    %c0_218 = arith.constant 0 : index
    %416 = vector.load %arg6[%c0_217, %c0_218] : memref<2x64xf32, #tpu.memory_space<vmem>>, vector<2x64xf32>
    tpu.vector_store %arg6[%c0_217, %c0_218], %414 {strides = array<i32>} : memref<2x64xf32, #tpu.memory_space<vmem>>, vector<2x64xf32>,
    %417 = arith.index_cast %c12_i32 : i32 to index
    %c0_219 = arith.constant 0 : index
    %c0_220 = arith.constant 0 : index
    %418 = vector.load %arg4[%417, %c0_219, %c0_220] : memref<16x2x64xf32, #tpu.memory_space<vmem>>, vector<1x2x64xf32>
    %419 = vector.shape_cast %418 : vector<1x2x64xf32> to vector<2x64xf32>
    %420 = vector.shape_cast %414 : vector<2x64xf32> to vector<1x2x64xf32>
    tpu.vector_store %arg4[%417, %c0_219, %c0_220], %420 {strides = array<i32>} : memref<16x2x64xf32, #tpu.memory_space<vmem>>, vector<1x2x64xf32>,
    %c13_i32 = arith.constant 13 : i32
    %c2_i32_221 = arith.constant 2 : i32
    %421 = arith.muli %c13_i32, %c2_i32_221 : i32
    %422 = arith.index_cast %421 : i32 to index
    %c0_222 = arith.constant 0 : index
    %423 = vector.load %arg5[%422, %c0_222] : memref<32x256xf32, #tpu.memory_space<vmem>>, vector<2x256xf32>
    %c0_223 = arith.constant 0 : index
    %c0_224 = arith.constant 0 : index
    %424 = vector.load %arg6[%c0_223, %c0_224] : memref<2x64xf32, #tpu.memory_space<vmem>>, vector<2x64xf32>
    %425 = arith.truncf %424 : vector<2x64xf32> to vector<2x64xbf16>
    %c0_225 = arith.constant 0 : index
    %c0_226 = arith.constant 0 : index
    %426 = vector.load %arg2[%c0_225, %c0_226] : memref<64x256xbf16, #tpu.memory_space<vmem>>, vector<64x256xbf16>
    %cst_227 = arith.constant dense<0.000000e+00> : vector<2x256xf32>
    %427 = tpu.matmul %425, %426, %cst_227 {dimension_numbers = #tpu.dot_dimension_numbers<[1], [0], [0], [1], [0, 0, 1, 1], [], []>} : vector<2x64xbf16>, vector<64x256xbf16>, vector<2x256xf32> -> vector<2x256xf32>
    %428 = arith.addf %423, %427 : vector<2x256xf32>
    %429 = math.tanh %428 : vector<2x256xf32>
    %430 = arith.negf %428 : vector<2x256xf32>
    %431 = math.exp %430 : vector<2x256xf32>
    %cst_228 = arith.constant 1.000000e+00 : f32
    %432 = vector.broadcast %cst_228 : f32 to vector<2x256xf32>
    %433 = arith.addf %432, %431 : vector<2x256xf32>
    %434 = arith.divf %432, %433 : vector<2x256xf32>
    %435 = arith.select %17, %429, %434 : vector<2x256xi1>, vector<2x256xf32>
    %436 = vector.extract_strided_slice %435 {offsets = [0, 0], sizes = [2, 64], strides = [1, 1]} : vector<2x256xf32> to vector<2x64xf32>
    %437 = vector.extract_strided_slice %435 {offsets = [0, 64], sizes = [2, 64], strides = [1, 1]} : vector<2x256xf32> to vector<2x64xf32>
    %438 = vector.extract_strided_slice %435 {offsets = [0, 128], sizes = [2, 64], strides = [1, 1]} : vector<2x256xf32> to vector<2x64xf32>
    %439 = vector.extract_strided_slice %435 {offsets = [0, 192], sizes = [2, 64], strides = [1, 1]} : vector<2x256xf32> to vector<2x64xf32>
    %c0_229 = arith.constant 0 : index
    %c0_230 = arith.constant 0 : index
    %440 = vector.load %arg7[%c0_229, %c0_230] : memref<2x64xf32, #tpu.memory_space<vmem>>, vector<2x64xf32>
    %441 = arith.mulf %437, %440 : vector<2x64xf32>
    %442 = arith.mulf %436, %438 : vector<2x64xf32>
    %443 = arith.addf %441, %442 : vector<2x64xf32>
    %444 = math.tanh %443 : vector<2x64xf32>
    %445 = arith.mulf %439, %444 : vector<2x64xf32>
    %c0_231 = arith.constant 0 : index
    %c0_232 = arith.constant 0 : index
    %446 = vector.load %arg7[%c0_231, %c0_232] : memref<2x64xf32, #tpu.memory_space<vmem>>, vector<2x64xf32>
    tpu.vector_store %arg7[%c0_231, %c0_232], %443 {strides = array<i32>} : memref<2x64xf32, #tpu.memory_space<vmem>>, vector<2x64xf32>,
    %c0_233 = arith.constant 0 : index
    %c0_234 = arith.constant 0 : index
    %447 = vector.load %arg6[%c0_233, %c0_234] : memref<2x64xf32, #tpu.memory_space<vmem>>, vector<2x64xf32>
    tpu.vector_store %arg6[%c0_233, %c0_234], %445 {strides = array<i32>} : memref<2x64xf32, #tpu.memory_space<vmem>>, vector<2x64xf32>,
    %448 = arith.index_cast %c13_i32 : i32 to index
    %c0_235 = arith.constant 0 : index
    %c0_236 = arith.constant 0 : index
    %449 = vector.load %arg4[%448, %c0_235, %c0_236] : memref<16x2x64xf32, #tpu.memory_space<vmem>>, vector<1x2x64xf32>
    %450 = vector.shape_cast %449 : vector<1x2x64xf32> to vector<2x64xf32>
    %451 = vector.shape_cast %445 : vector<2x64xf32> to vector<1x2x64xf32>
    tpu.vector_store %arg4[%448, %c0_235, %c0_236], %451 {strides = array<i32>} : memref<16x2x64xf32, #tpu.memory_space<vmem>>, vector<1x2x64xf32>,
    %c14_i32 = arith.constant 14 : i32
    %c2_i32_237 = arith.constant 2 : i32
    %452 = arith.muli %c14_i32, %c2_i32_237 : i32
    %453 = arith.index_cast %452 : i32 to index
    %c0_238 = arith.constant 0 : index
    %454 = vector.load %arg5[%453, %c0_238] : memref<32x256xf32, #tpu.memory_space<vmem>>, vector<2x256xf32>
    %c0_239 = arith.constant 0 : index
    %c0_240 = arith.constant 0 : index
    %455 = vector.load %arg6[%c0_239, %c0_240] : memref<2x64xf32, #tpu.memory_space<vmem>>, vector<2x64xf32>
    %456 = arith.truncf %455 : vector<2x64xf32> to vector<2x64xbf16>
    %c0_241 = arith.constant 0 : index
    %c0_242 = arith.constant 0 : index
    %457 = vector.load %arg2[%c0_241, %c0_242] : memref<64x256xbf16, #tpu.memory_space<vmem>>, vector<64x256xbf16>
    %cst_243 = arith.constant dense<0.000000e+00> : vector<2x256xf32>
    %458 = tpu.matmul %456, %457, %cst_243 {dimension_numbers = #tpu.dot_dimension_numbers<[1], [0], [0], [1], [0, 0, 1, 1], [], []>} : vector<2x64xbf16>, vector<64x256xbf16>, vector<2x256xf32> -> vector<2x256xf32>
    %459 = arith.addf %454, %458 : vector<2x256xf32>
    %460 = math.tanh %459 : vector<2x256xf32>
    %461 = arith.negf %459 : vector<2x256xf32>
    %462 = math.exp %461 : vector<2x256xf32>
    %cst_244 = arith.constant 1.000000e+00 : f32
    %463 = vector.broadcast %cst_244 : f32 to vector<2x256xf32>
    %464 = arith.addf %463, %462 : vector<2x256xf32>
    %465 = arith.divf %463, %464 : vector<2x256xf32>
    %466 = arith.select %17, %460, %465 : vector<2x256xi1>, vector<2x256xf32>
    %467 = vector.extract_strided_slice %466 {offsets = [0, 0], sizes = [2, 64], strides = [1, 1]} : vector<2x256xf32> to vector<2x64xf32>
    %468 = vector.extract_strided_slice %466 {offsets = [0, 64], sizes = [2, 64], strides = [1, 1]} : vector<2x256xf32> to vector<2x64xf32>
    %469 = vector.extract_strided_slice %466 {offsets = [0, 128], sizes = [2, 64], strides = [1, 1]} : vector<2x256xf32> to vector<2x64xf32>
    %470 = vector.extract_strided_slice %466 {offsets = [0, 192], sizes = [2, 64], strides = [1, 1]} : vector<2x256xf32> to vector<2x64xf32>
    %c0_245 = arith.constant 0 : index
    %c0_246 = arith.constant 0 : index
    %471 = vector.load %arg7[%c0_245, %c0_246] : memref<2x64xf32, #tpu.memory_space<vmem>>, vector<2x64xf32>
    %472 = arith.mulf %468, %471 : vector<2x64xf32>
    %473 = arith.mulf %467, %469 : vector<2x64xf32>
    %474 = arith.addf %472, %473 : vector<2x64xf32>
    %475 = math.tanh %474 : vector<2x64xf32>
    %476 = arith.mulf %470, %475 : vector<2x64xf32>
    %c0_247 = arith.constant 0 : index
    %c0_248 = arith.constant 0 : index
    %477 = vector.load %arg7[%c0_247, %c0_248] : memref<2x64xf32, #tpu.memory_space<vmem>>, vector<2x64xf32>
    tpu.vector_store %arg7[%c0_247, %c0_248], %474 {strides = array<i32>} : memref<2x64xf32, #tpu.memory_space<vmem>>, vector<2x64xf32>,
    %c0_249 = arith.constant 0 : index
    %c0_250 = arith.constant 0 : index
    %478 = vector.load %arg6[%c0_249, %c0_250] : memref<2x64xf32, #tpu.memory_space<vmem>>, vector<2x64xf32>
    tpu.vector_store %arg6[%c0_249, %c0_250], %476 {strides = array<i32>} : memref<2x64xf32, #tpu.memory_space<vmem>>, vector<2x64xf32>,
    %479 = arith.index_cast %c14_i32 : i32 to index
    %c0_251 = arith.constant 0 : index
    %c0_252 = arith.constant 0 : index
    %480 = vector.load %arg4[%479, %c0_251, %c0_252] : memref<16x2x64xf32, #tpu.memory_space<vmem>>, vector<1x2x64xf32>
    %481 = vector.shape_cast %480 : vector<1x2x64xf32> to vector<2x64xf32>
    %482 = vector.shape_cast %476 : vector<2x64xf32> to vector<1x2x64xf32>
    tpu.vector_store %arg4[%479, %c0_251, %c0_252], %482 {strides = array<i32>} : memref<16x2x64xf32, #tpu.memory_space<vmem>>, vector<1x2x64xf32>,
    %c15_i32 = arith.constant 15 : i32
    %c2_i32_253 = arith.constant 2 : i32
    %483 = arith.muli %c15_i32, %c2_i32_253 : i32
    %484 = arith.index_cast %483 : i32 to index
    %c0_254 = arith.constant 0 : index
    %485 = vector.load %arg5[%484, %c0_254] : memref<32x256xf32, #tpu.memory_space<vmem>>, vector<2x256xf32>
    %c0_255 = arith.constant 0 : index
    %c0_256 = arith.constant 0 : index
    %486 = vector.load %arg6[%c0_255, %c0_256] : memref<2x64xf32, #tpu.memory_space<vmem>>, vector<2x64xf32>
    %487 = arith.truncf %486 : vector<2x64xf32> to vector<2x64xbf16>
    %c0_257 = arith.constant 0 : index
    %c0_258 = arith.constant 0 : index
    %488 = vector.load %arg2[%c0_257, %c0_258] : memref<64x256xbf16, #tpu.memory_space<vmem>>, vector<64x256xbf16>
    %cst_259 = arith.constant dense<0.000000e+00> : vector<2x256xf32>
    %489 = tpu.matmul %487, %488, %cst_259 {dimension_numbers = #tpu.dot_dimension_numbers<[1], [0], [0], [1], [0, 0, 1, 1], [], []>} : vector<2x64xbf16>, vector<64x256xbf16>, vector<2x256xf32> -> vector<2x256xf32>
    %490 = arith.addf %485, %489 : vector<2x256xf32>
    %491 = math.tanh %490 : vector<2x256xf32>
    %492 = arith.negf %490 : vector<2x256xf32>
    %493 = math.exp %492 : vector<2x256xf32>
    %cst_260 = arith.constant 1.000000e+00 : f32
    %494 = vector.broadcast %cst_260 : f32 to vector<2x256xf32>
    %495 = arith.addf %494, %493 : vector<2x256xf32>
    %496 = arith.divf %494, %495 : vector<2x256xf32>
    %497 = arith.select %17, %491, %496 : vector<2x256xi1>, vector<2x256xf32>
    %498 = vector.extract_strided_slice %497 {offsets = [0, 0], sizes = [2, 64], strides = [1, 1]} : vector<2x256xf32> to vector<2x64xf32>
    %499 = vector.extract_strided_slice %497 {offsets = [0, 64], sizes = [2, 64], strides = [1, 1]} : vector<2x256xf32> to vector<2x64xf32>
    %500 = vector.extract_strided_slice %497 {offsets = [0, 128], sizes = [2, 64], strides = [1, 1]} : vector<2x256xf32> to vector<2x64xf32>
    %501 = vector.extract_strided_slice %497 {offsets = [0, 192], sizes = [2, 64], strides = [1, 1]} : vector<2x256xf32> to vector<2x64xf32>
    %c0_261 = arith.constant 0 : index
    %c0_262 = arith.constant 0 : index
    %502 = vector.load %arg7[%c0_261, %c0_262] : memref<2x64xf32, #tpu.memory_space<vmem>>, vector<2x64xf32>
    %503 = arith.mulf %499, %502 : vector<2x64xf32>
    %504 = arith.mulf %498, %500 : vector<2x64xf32>
    %505 = arith.addf %503, %504 : vector<2x64xf32>
    %506 = math.tanh %505 : vector<2x64xf32>
    %507 = arith.mulf %501, %506 : vector<2x64xf32>
    %c0_263 = arith.constant 0 : index
    %c0_264 = arith.constant 0 : index
    %508 = vector.load %arg7[%c0_263, %c0_264] : memref<2x64xf32, #tpu.memory_space<vmem>>, vector<2x64xf32>
    tpu.vector_store %arg7[%c0_263, %c0_264], %505 {strides = array<i32>} : memref<2x64xf32, #tpu.memory_space<vmem>>, vector<2x64xf32>,
    %c0_265 = arith.constant 0 : index
    %c0_266 = arith.constant 0 : index
    %509 = vector.load %arg6[%c0_265, %c0_266] : memref<2x64xf32, #tpu.memory_space<vmem>>, vector<2x64xf32>
    tpu.vector_store %arg6[%c0_265, %c0_266], %507 {strides = array<i32>} : memref<2x64xf32, #tpu.memory_space<vmem>>, vector<2x64xf32>,
    %510 = arith.index_cast %c15_i32 : i32 to index
    %c0_267 = arith.constant 0 : index
    %c0_268 = arith.constant 0 : index
    %511 = vector.load %arg4[%510, %c0_267, %c0_268] : memref<16x2x64xf32, #tpu.memory_space<vmem>>, vector<1x2x64xf32>
    %512 = vector.shape_cast %511 : vector<1x2x64xf32> to vector<2x64xf32>
    %513 = vector.shape_cast %507 : vector<2x64xf32> to vector<1x2x64xf32>
    tpu.vector_store %arg4[%510, %c0_267, %c0_268], %513 {strides = array<i32>} : memref<16x2x64xf32, #tpu.memory_space<vmem>>, vector<1x2x64xf32>,
    %c16_i32 = arith.constant 16 : i32
    return
  }
}

module attributes {stable_mosaic.version = 11 : i64} {
  func.func @_outproj_kernel(%arg0: memref<32x256xf32, #tpu.memory_space<vmem>>, %arg1: memref<32x64xf32, #tpu.memory_space<vmem>>, %arg2: memref<32x64xf32, #tpu.memory_space<vmem>>, %arg3: memref<256x2xbf16, #tpu.memory_space<vmem>>, %arg4: memref<64x2xbf16, #tpu.memory_space<vmem>>, %arg5: memref<64x2xbf16, #tpu.memory_space<vmem>>, %arg6: memref<1x2xf32, #tpu.memory_space<vmem>>, %arg7: memref<32x2xf32, #tpu.memory_space<vmem>>) attributes {dimension_semantics = [], scalar_prefetch = 0 : i64, scratch_operands = 0 : i64, tpu.core_type = #tpu.core_type<tc>} {
    %c0 = arith.constant 0 : index
    %c0_0 = arith.constant 0 : index
    %0 = vector.load %arg0[%c0, %c0_0] : memref<32x256xf32, #tpu.memory_space<vmem>>, vector<32x256xf32>
    %1 = arith.truncf %0 : vector<32x256xf32> to vector<32x256xbf16>
    %c0_1 = arith.constant 0 : index
    %c0_2 = arith.constant 0 : index
    %2 = vector.load %arg3[%c0_1, %c0_2] : memref<256x2xbf16, #tpu.memory_space<vmem>>, vector<256x2xbf16>
    %cst = arith.constant dense<0.000000e+00> : vector<32x2xf32>
    %3 = tpu.matmul %1, %2, %cst {dimension_numbers = #tpu.dot_dimension_numbers<[1], [0], [0], [1], [0, 0, 1, 1], [], []>} : vector<32x256xbf16>, vector<256x2xbf16>, vector<32x2xf32> -> vector<32x2xf32>
    %c0_3 = arith.constant 0 : index
    %c0_4 = arith.constant 0 : index
    %4 = vector.load %arg1[%c0_3, %c0_4] : memref<32x64xf32, #tpu.memory_space<vmem>>, vector<32x64xf32>
    %5 = arith.truncf %4 : vector<32x64xf32> to vector<32x64xbf16>
    %c0_5 = arith.constant 0 : index
    %c0_6 = arith.constant 0 : index
    %6 = vector.load %arg4[%c0_5, %c0_6] : memref<64x2xbf16, #tpu.memory_space<vmem>>, vector<64x2xbf16>
    %cst_7 = arith.constant dense<0.000000e+00> : vector<32x2xf32>
    %7 = tpu.matmul %5, %6, %cst_7 {dimension_numbers = #tpu.dot_dimension_numbers<[1], [0], [0], [1], [0, 0, 1, 1], [], []>} : vector<32x64xbf16>, vector<64x2xbf16>, vector<32x2xf32> -> vector<32x2xf32>
    %8 = arith.addf %3, %7 : vector<32x2xf32>
    %c0_8 = arith.constant 0 : index
    %c0_9 = arith.constant 0 : index
    %9 = vector.load %arg2[%c0_8, %c0_9] : memref<32x64xf32, #tpu.memory_space<vmem>>, vector<32x64xf32>
    %10 = arith.truncf %9 : vector<32x64xf32> to vector<32x64xbf16>
    %c0_10 = arith.constant 0 : index
    %c0_11 = arith.constant 0 : index
    %11 = vector.load %arg5[%c0_10, %c0_11] : memref<64x2xbf16, #tpu.memory_space<vmem>>, vector<64x2xbf16>
    %cst_12 = arith.constant dense<0.000000e+00> : vector<32x2xf32>
    %12 = tpu.matmul %10, %11, %cst_12 {dimension_numbers = #tpu.dot_dimension_numbers<[1], [0], [0], [1], [0, 0, 1, 1], [], []>} : vector<32x64xbf16>, vector<64x2xbf16>, vector<32x2xf32> -> vector<32x2xf32>
    %13 = arith.addf %8, %12 : vector<32x2xf32>
    %c0_13 = arith.constant 0 : index
    %c0_14 = arith.constant 0 : index
    %14 = vector.load %arg6[%c0_13, %c0_14] : memref<1x2xf32, #tpu.memory_space<vmem>>, vector<1x2xf32>
    %15 = vector.broadcast %14 : vector<1x2xf32> to vector<32x2xf32>
    %16 = arith.addf %13, %15 : vector<32x2xf32>
    %c0_15 = arith.constant 0 : index
    %c0_16 = arith.constant 0 : index
    %17 = vector.load %arg7[%c0_15, %c0_16] : memref<32x2xf32, #tpu.memory_space<vmem>>, vector<32x2xf32>
    tpu.vector_store %arg7[%c0_15, %c0_16], %16 {strides = array<i32>} : memref<32x2xf32, #tpu.memory_space<vmem>>, vector<32x2xf32>,
    return
  }
}

</mosaic_0001>

<llo_original>
// kernel: bidaf_forward.9
$region0: #{bidaf_forward.9}
  #allocation0 [shape = 'u32[]', space=smem, size = 0x4, offset = 0x4, fixed_abs, tag = 'smem constant byte address 0x4 - core index']
  #allocation1 [shape = 'u32[72,128]{1,0:T(1,128)}', space=vmem, size = 0x9000, scoped, tag = 'internal scratch']
  %s0 = inlined_call_operand.vmem [shape: f32[288,24], index: 0, kind: input, shape index: {}]
  %s1 = inlined_call_operand.vmem [shape: bf16[24,32], index: 1, kind: input, shape index: {}]
  %s2 = inlined_call_operand.vmem [shape: f32[1,32], index: 2, kind: input, shape index: {}]
  %s3 = inlined_call_operand.vmem [shape: f32[48,32], index: 3, kind: output, shape index: {}]
  %s4 = sld [smem:[#allocation0]]
  $region22: #{bidaf_forward.9} parent=0
    _
  %s6 = ssub.s32 1, %s4
  %s7 = scalar_select 0, %s6, %s4
  // Predicated region
  $region2: #{bidaf_forward.9} parent=0 // pred_check
    _
  $region3: #{bidaf_forward.9} parent=0 // pred_check_branch
    %9 = sbr.rel (0) target = $region5
  $region4: #{bidaf_forward.9} parent=0 // pred_region
    _
  $region5: #{bidaf_forward.9} parent=0 // pred_fallthru
    _
  // Predicated region
  $region6: #{bidaf_forward.9} parent=0 // pred_check
    _
  $region7: #{bidaf_forward.9} parent=0 // pred_check_branch
    %11 = sbr.rel (0) target = $region9
  $region8: #{bidaf_forward.9} parent=0 // pred_region
    _
  $region9: #{bidaf_forward.9} parent=0 // pred_fallthru
    _
  // Predicated region
  $region10: #{bidaf_forward.9} parent=0 // pred_check
    _
  $region11: #{bidaf_forward.9} parent=0 // pred_check_branch
    %13 = sbr.rel (0) target = $region13
  $region12: #{bidaf_forward.9} parent=0 // pred_region
    _
  $region13: #{bidaf_forward.9} parent=0 // pred_fallthru
    _
  %v15 = vld [vmem:[%s0] sm:$0xff]
  %v16 = vld [vmem:[%s0 + $0x8] sm:$0xff]
  %v17 = vld [vmem:[%s0 + $0x10] sm:$0xff]
  %v18 = vld [vmem:[%s0 + $0x18] sm:$0xff]
  %v19 = vld [vmem:[%s0 + $0x20] sm:$0xff]
  %v20 = vld [vmem:[%s0 + $0x28] sm:$0xff]
  %v21 = vld [vmem:[%s0 + $0x30] sm:$0xff]
  %v22 = vld [vmem:[%s0 + $0x38] sm:$0xff]
  %v23 = vld [vmem:[%s0 + $0x40] sm:$0xff]
  %v24 = vld [vmem:[%s0 + $0x48] sm:$0xff]
  %v25 = vld [vmem:[%s0 + $0x50] sm:$0xff]
  %v26 = vld [vmem:[%s0 + $0x58] sm:$0xff]
  %v27 = vld [vmem:[%s0 + $0x60] sm:$0xff]
  %v28 = vld [vmem:[%s0 + $0x68] sm:$0xff]
  %v29 = vld [vmem:[%s0 + $0x70] sm:$0xff]
  %v30 = vld [vmem:[%s0 + $0x78] sm:$0xff]
  %v31 = vld [vmem:[%s0 + $0x80] sm:$0xff]
  %v32 = vld [vmem:[%s0 + $0x88] sm:$0xff]
  %v33 = vld [vmem:[%s0 + $0x90] sm:$0xff]
  %v34 = vld [vmem:[%s0 + $0x98] sm:$0xff]
  %v35 = vld [vmem:[%s0 + $0xa0] sm:$0xff]
  %v36 = vld [vmem:[%s0 + $0xa8] sm:$0xff]
  %v37 = vld [vmem:[%s0 + $0xb0] sm:$0xff]
  %v38 = vld [vmem:[%s0 + $0xb8] sm:$0xff]
  %v39 = vld [vmem:[%s0 + $0xc0] sm:$0xff]
  %v40 = vld [vmem:[%s0 + $0xc8] sm:$0xff]
  %v41 = vld [vmem:[%s0 + $0xd0] sm:$0xff]
  %v42 = vld [vmem:[%s0 + $0xd8] sm:$0xff]
  %v43 = vld [vmem:[%s0 + $0xe0] sm:$0xff]
  %v44 = vld [vmem:[%s0 + $0xe8] sm:$0xff]
  %v45 = vld [vmem:[%s0 + $0xf0] sm:$0xff]
  %v46 = vld [vmem:[%s0 + $0xf8] sm:$0xff]
  %v47 = vld [vmem:[%s0 + $0x100] sm:$0xff]
  %v48 = vld [vmem:[%s0 + $0x108] sm:$0xff]
  %v49 = vld [vmem:[%s0 + $0x110] sm:$0xff]
  %v50 = vld [vmem:[%s0 + $0x118] sm:$0xff]
  %v51 = vpack.c.bf16 %v16, %v15
  %v52 = vpack.c.bf16 %v18, %v17
  %v53 = vpack.c.bf16 %v20, %v19
  %v54 = vpack.c.bf16 %v22, %v21
  %v55 = vpack.c.bf16 %v24, %v23
  %v56 = vpack.c.bf16 %v26, %v25
  %v57 = vpack.c.bf16 %v28, %v27
  %v58 = vpack.c.bf16 %v30, %v29
  %v59 = vpack.c.bf16 %v32, %v31
  %v60 = vpack.c.bf16 %v34, %v33
  %v61 = vpack.c.bf16 %v36, %v35
  %v62 = vpack.c.bf16 %v38, %v37
  %v63 = vpack.c.bf16 %v40, %v39
  %v64 = vpack.c.bf16 %v42, %v41
  %v65 = vpack.c.bf16 %v44, %v43
  %v66 = vpack.c.bf16 %v46, %v45
  %v67 = vpack.c.bf16 %v48, %v47
  %v68 = vpack.c.bf16 %v50, %v49
  %v69 = vld [vmem:[%s1] sm:$0xf]
  %v70 = vld [vmem:[%s1 + $0x4] sm:$0xf]
  %v71 = vld [vmem:[%s1 + $0x8] sm:$0xf]
  %v72 = vld [vmem:[%s2] sm:$0x1]
  %v74 = vperm.slane %v72, 0
  %v79 = vunpack.c.l.b16 %v69
  %v80 = vunpack.c.l.b16 %v70
  %v81 = vunpack.c.l.b16 %v71
  %v82 = vpack.c.b16 %v80, %v79
  %v83 = vpack.c.b16 %v81, %v81
  %vm85 = vcmask 195584
  %v87 = vsel %vm85, %v51, 0
  %v90 = vsel %vm85, %v52, 0
  %v93 = vsel %vm85, %v53, 0
  %v96 = vsel %vm85, %v54, 0
  %v99 = vsel %vm85, %v55, 0
  %v102 = vsel %vm85, %v56, 0
  %v105 = vsel %vm85, %v57, 0
  %v108 = vsel %vm85, %v58, 0
  %v111 = vsel %vm85, %v59, 0
  %v114 = vsel %vm85, %v60, 0
  %v117 = vsel %vm85, %v61, 0
  %v120 = vsel %vm85, %v62, 0
  %v123 = vsel %vm85, %v63, 0
  %v126 = vsel %vm85, %v64, 0
  %v129 = vsel %vm85, %v65, 0
  %v132 = vsel %vm85, %v66, 0
  %v135 = vsel %vm85, %v67, 0
  %v138 = vsel %vm85, %v68, 0
  %vm140 = vcmask 1043456
  %v142 = vsel %vm140, %v83, 0
  %144 = vmatpush.bf16.msra.mxu0 0
  %145 = vmatpush.bf16.msra.mxu0 0
  %146 = vmatpush.bf16.msra.mxu0 0
  %147 = vmatpush.bf16.msra.mxu0 0
  %148 = vmatpush.bf16.msra.mxu0 0
  %149 = vmatpush.bf16.msra.mxu0 0
  %150 = vmatpush.bf16.msra.mxu0 %v142
  %151 = vmatpush.bf16.msra.mxu0 %v82
  %152 = vmatmul.bf16.gmra.mxu0 %v87
  %v153 = vpop.f32.mrf.mxu0
  %v154 = vadd.f32 %v74, %v153
  %v155 = vpop.f32.mrf.mxu0
  %v156 = vadd.f32 %v74, %v155
  %157 = vmatmul.bf16.gmra.mxu0 %v90
  %v158 = vpop.f32.mrf.mxu0
  %v159 = vadd.f32 %v74, %v158
  %v160 = vpop.f32.mrf.mxu0
  %v161 = vadd.f32 %v74, %v160
  %162 = vmatmul.bf16.gmra.mxu0 %v93
  %v163 = vpop.f32.mrf.mxu0
  %v164 = vadd.f32 %v74, %v163
  %v165 = vpop.f32.mrf.mxu0
  %v166 = vadd.f32 %v74, %v165
  %167 = vmatmul.bf16.gmra.mxu0 %v96
  %v168 = vpop.f32.mrf.mxu0
  %v169 = vadd.f32 %v74, %v168
  %v170 = vpop.f32.mrf.mxu0
  %v171 = vadd.f32 %v74, %v170
  %172 = vmatmul.bf16.gmra.mxu0 %v99
  %v173 = vpop.f32.mrf.mxu0
  %v174 = vadd.f32 %v74, %v173
  %v175 = vpop.f32.mrf.mxu0
  %v176 = vadd.f32 %v74, %v175
  %177 = vmatmul.bf16.gmra.mxu0 %v102
  %v178 = vpop.f32.mrf.mxu0
  %v179 = vadd.f32 %v74, %v178
  %v180 = vpop.f32.mrf.mxu0
  %v181 = vadd.f32 %v74, %v180
  %182 = vmatmul.bf16.gmra.mxu0 %v105
  %v183 = vpop.f32.mrf.mxu0
  %v184 = vadd.f32 %v74, %v183
  %v185 = vpop.f32.mrf.mxu0
  %v186 = vadd.f32 %v74, %v185
  %187 = vmatmul.bf16.gmra.mxu0 %v108
  %v188 = vpop.f32.mrf.mxu0
  %v189 = vadd.f32 %v74, %v188
  %v190 = vpop.f32.mrf.mxu0
  %v191 = vadd.f32 %v74, %v190
  %192 = vmatmul.bf16.gmra.mxu0 %v111
  %v193 = vpop.f32.mrf.mxu0
  %v194 = vadd.f32 %v74, %v193
  %v195 = vpop.f32.mrf.mxu0
  %v196 = vadd.f32 %v74, %v195
  %197 = vmatmul.bf16.gmra.mxu0 %v114
  %v198 = vpop.f32.mrf.mxu0
  %v199 = vadd.f32 %v74, %v198
  %v200 = vpop.f32.mrf.mxu0
  %v201 = vadd.f32 %v74, %v200
  %202 = vmatmul.bf16.gmra.mxu0 %v117
  %v203 = vpop.f32.mrf.mxu0
  %v204 = vadd.f32 %v74, %v203
  %v205 = vpop.f32.mrf.mxu0
  %v206 = vadd.f32 %v74, %v205
  %207 = vmatmul.bf16.gmra.mxu0 %v120
  %v208 = vpop.f32.mrf.mxu0
  %v209 = vadd.f32 %v74, %v208
  %v210 = vpop.f32.mrf.mxu0
  %v211 = vadd.f32 %v74, %v210
  %212 = vmatmul.bf16.gmra.mxu0 %v123
  %v213 = vpop.f32.mrf.mxu0
  %v214 = vadd.f32 %v74, %v213
  %v215 = vpop.f32.mrf.mxu0
  %v216 = vadd.f32 %v74, %v215
  %217 = vmatmul.bf16.gmra.mxu0 %v126
  %v218 = vpop.f32.mrf.mxu0
  %v219 = vadd.f32 %v74, %v218
  %v220 = vpop.f32.mrf.mxu0
  %v221 = vadd.f32 %v74, %v220
  %222 = vmatmul.bf16.gmra.mxu0 %v129
  %v223 = vpop.f32.mrf.mxu0
  %v224 = vadd.f32 %v74, %v223
  %v225 = vpop.f32.mrf.mxu0
  %v226 = vadd.f32 %v74, %v225
  %227 = vmatmul.bf16.gmra.mxu0 %v132
  %v228 = vpop.f32.mrf.mxu0
  %v229 = vadd.f32 %v74, %v228
  %v230 = vpop.f32.mrf.mxu0
  %v231 = vadd.f32 %v74, %v230
  %232 = vmatmul.bf16.gmra.mxu0 %v135
  %v233 = vpop.f32.mrf.mxu0
  %v234 = vadd.f32 %v74, %v233
  %v235 = vpop.f32.mrf.mxu0
  %v236 = vadd.f32 %v74, %v235
  %237 = vmatmul.bf16.gmra.mxu0 %v138
  %v238 = vpop.f32.mrf.mxu0
  %v239 = vadd.f32 %v74, %v238
  %v240 = vpop.f32.mrf.mxu0
  %v241 = vadd.f32 %v74, %v240
  %242 = vdwg.mxu0
  %v243 = vmax.f32 %v154, 0.0
  %v244 = vmax.f32 %v156, 0.0
  %v245 = vmax.f32 %v159, 0.0
  %v246 = vmax.f32 %v161, 0.0
  %v247 = vmax.f32 %v164, 0.0
  %v248 = vmax.f32 %v166, 0.0
  %v249 = vmax.f32 %v169, 0.0
  %v250 = vmax.f32 %v171, 0.0
  %v251 = vmax.f32 %v174, 0.0
  %v252 = vmax.f32 %v176, 0.0
  %v253 = vmax.f32 %v179, 0.0
  %v254 = vmax.f32 %v181, 0.0
  %v255 = vmax.f32 %v184, 0.0
  %v256 = vmax.f32 %v186, 0.0
  %v257 = vmax.f32 %v189, 0.0
  %v258 = vmax.f32 %v191, 0.0
  %v259 = vmax.f32 %v194, 0.0
  %v260 = vmax.f32 %v196, 0.0
  %v261 = vmax.f32 %v199, 0.0
  %v262 = vmax.f32 %v201, 0.0
  %v263 = vmax.f32 %v204, 0.0
  %v264 = vmax.f32 %v206, 0.0
  %v265 = vmax.f32 %v209, 0.0
  %v266 = vmax.f32 %v211, 0.0
  %v267 = vmax.f32 %v214, 0.0
  %v268 = vmax.f32 %v216, 0.0
  %v269 = vmax.f32 %v219, 0.0
  %v270 = vmax.f32 %v221, 0.0
  %v271 = vmax.f32 %v224, 0.0
  %v272 = vmax.f32 %v226, 0.0
  %v273 = vmax.f32 %v229, 0.0
  %v274 = vmax.f32 %v231, 0.0
  %v275 = vmax.f32 %v234, 0.0
  %v276 = vmax.f32 %v236, 0.0
  %v277 = vmax.f32 %v239, 0.0
  %v278 = vmax.f32 %v241, 0.0
  %v279 = vmax.f32 %v243, %v249
  %v280 = vmax.f32 %v244, %v250
  %v281 = vmax.f32 %v245, %v251
  %v282 = vmax.f32 %v246, %v252
  %v283 = vmax.f32 %v247, %v253
  %v284 = vmax.f32 %v248, %v254
  %v285 = vmax.f32 %v279, %v255
  %v286 = vmax.f32 %v280, %v256
  %v287 = vmax.f32 %v281, %v257
  %v288 = vmax.f32 %v282, %v258
  %v289 = vmax.f32 %v283, %v259
  %v290 = vmax.f32 %v284, %v260
  %v291 = vmax.f32 %v285, %v261
  %v292 = vmax.f32 %v286, %v262
  %v293 = vmax.f32 %v287, %v263
  %v294 = vmax.f32 %v288, %v264
  %v295 = vmax.f32 %v289, %v265
  %v296 = vmax.f32 %v290, %v266
  %v297 = vmax.f32 %v291, %v267
  %v298 = vmax.f32 %v292, %v268
  %v299 = vmax.f32 %v293, %v269
  %v300 = vmax.f32 %v294, %v270
  %v301 = vmax.f32 %v295, %v271
  %v302 = vmax.f32 %v296, %v272
  %v303 = vmax.f32 %v297, %v273
  %v304 = vmax.f32 %v298, %v274
  %v305 = vmax.f32 %v299, %v275
  %v306 = vmax.f32 %v300, %v276
  %v307 = vmax.f32 %v301, %v277
  %v308 = vmax.f32 %v302, %v278
  %vm309 = vcmask 261120
  %310 = vst.msk [vmem:[%s3] sm:$0xff] %vm309, %v303
  %311 = vst.msk [vmem:[%s3 + $0x8] sm:$0xff] %vm309, %v304
  %312 = vst.msk [vmem:[%s3 + $0x10] sm:$0xff] %vm309, %v305
  %313 = vst.msk [vmem:[%s3 + $0x18] sm:$0xff] %vm309, %v306
  %314 = vst.msk [vmem:[%s3 + $0x20] sm:$0xff] %vm309, %v307
  %315 = vst.msk [vmem:[%s3 + $0x28] sm:$0xff] %vm309, %v308
  // Predicated region
  $region14: #{bidaf_forward.9} parent=0 // pred_check
    _
  $region15: #{bidaf_forward.9} parent=0 // pred_check_branch
    %317 = sbr.rel (0) target = $region17
  $region16: #{bidaf_forward.9} parent=0 // pred_region
    _
  $region17: #{bidaf_forward.9} parent=0 // pred_fallthru
    _
  // Predicated region
  $region18: #{bidaf_forward.9} parent=0 // pred_check
    _
  $region19: #{bidaf_forward.9} parent=0 // pred_check_branch
    %319 = sbr.rel (0) target = $region21
  $region20: #{bidaf_forward.9} parent=0 // pred_region
    _
  $region21: #{bidaf_forward.9} parent=0 // pred_fallthru
    _

// kernel: bidaf_forward.10
$region0: #{bidaf_forward.10}
  #allocation0 [shape = 'u32[]', space=smem, size = 0x4, offset = 0x4, fixed_abs, tag = 'smem constant byte address 0x4 - core index']
  #allocation1 [shape = 'u32[72,128]{1,0:T(1,128)}', space=vmem, size = 0x9000, scoped, tag = 'internal scratch']
  %s0 = inlined_call_operand.vmem [shape: f32[48,64], index: 0, kind: input, shape index: {}]
  %s1 = inlined_call_operand.vmem [shape: bf16[64,64], index: 1, kind: input, shape index: {}]
  %s2 = inlined_call_operand.vmem [shape: f32[1,64], index: 2, kind: input, shape index: {}]
  %s3 = inlined_call_operand.vmem [shape: bf16[64,64], index: 3, kind: input, shape index: {}]
  %s4 = inlined_call_operand.vmem [shape: f32[1,64], index: 4, kind: input, shape index: {}]
  %s5 = inlined_call_operand.vmem [shape: bf16[64,64], index: 5, kind: input, shape index: {}]
  %s6 = inlined_call_operand.vmem [shape: f32[1,64], index: 6, kind: input, shape index: {}]
  %s7 = inlined_call_operand.vmem [shape: bf16[64,64], index: 7, kind: input, shape index: {}]
  %s8 = inlined_call_operand.vmem [shape: f32[1,64], index: 8, kind: input, shape index: {}]
  %s9 = inlined_call_operand.vmem [shape: f32[48,64], index: 9, kind: output, shape index: {}]
  %s10 = sld [smem:[#allocation0]]
  $region46: #{bidaf_forward.10} parent=0
    _
  %s12 = ssub.s32 1, %s10
  %s13 = scalar_select 0, %s12, %s10
  // Predicated region
  $region2: #{bidaf_forward.10} parent=0 // pred_check
    _
  $region3: #{bidaf_forward.10} parent=0 // pred_check_branch
    %15 = sbr.rel (0) target = $region5
  $region4: #{bidaf_forward.10} parent=0 // pred_region
    _
  $region5: #{bidaf_forward.10} parent=0 // pred_fallthru
    _
  // Predicated region
  $region6: #{bidaf_forward.10} parent=0 // pred_check
    _
  $region7: #{bidaf_forward.10} parent=0 // pred_check_branch
    %17 = sbr.rel (0) target = $region9
  $region8: #{bidaf_forward.10} parent=0 // pred_region
    _
  $region9: #{bidaf_forward.10} parent=0 // pred_fallthru
    _
  // Predicated region
  $region10: #{bidaf_forward.10} parent=0 // pred_check
    _
  $region11: #{bidaf_forward.10} parent=0 // pred_check_branch
    %19 = sbr.rel (0) target = $region13
  $region12: #{bidaf_forward.10} parent=0 // pred_region
    _
  $region13: #{bidaf_forward.10} parent=0 // pred_fallthru
    _
  // Predicated region
  $region14: #{bidaf_forward.10} parent=0 // pred_check
    _
  $region15: #{bidaf_forward.10} parent=0 // pred_check_branch
    %21 = sbr.rel (0) target = $region17
  $region16: #{bidaf_forward.10} parent=0 // pred_region
    _
  $region17: #{bidaf_forward.10} parent=0 // pred_fallthru
    _
  // Predicated region
  $region18: #{bidaf_forward.10} parent=0 // pred_check
    _
  $region19: #{bidaf_forward.10} parent=0 // pred_check_branch
    %23 = sbr.rel (0) target = $region21
  $region20: #{bidaf_forward.10} parent=0 // pred_region
    _
  $region21: #{bidaf_forward.10} parent=0 // pred_fallthru
    _
  // Predicated region
  $region22: #{bidaf_forward.10} parent=0 // pred_check
    _
  $region23: #{bidaf_forward.10} parent=0 // pred_check_branch
    %25 = sbr.rel (0) target = $region25
  $region24: #{bidaf_forward.10} parent=0 // pred_region
    _
  $region25: #{bidaf_forward.10} parent=0 // pred_fallthru
    _
  // Predicated region
  $region26: #{bidaf_forward.10} parent=0 // pred_check
    _
  $region27: #{bidaf_forward.10} parent=0 // pred_check_branch
    %27 = sbr.rel (0) target = $region29
  $region28: #{bidaf_forward.10} parent=0 // pred_region
    _
  $region29: #{bidaf_forward.10} parent=0 // pred_fallthru
    _
  // Predicated region
  $region30: #{bidaf_forward.10} parent=0 // pred_check
    _
  $region31: #{bidaf_forward.10} parent=0 // pred_check_branch
    %29 = sbr.rel (0) target = $region33
  $region32: #{bidaf_forward.10} parent=0 // pred_region
    _
  $region33: #{bidaf_forward.10} parent=0 // pred_fallthru
    _
  // Predicated region
  $region34: #{bidaf_forward.10} parent=0 // pred_check
    _
  $region35: #{bidaf_forward.10} parent=0 // pred_check_branch
    %31 = sbr.rel (0) target = $region37
  $region36: #{bidaf_forward.10} parent=0 // pred_region
    _
  $region37: #{bidaf_forward.10} parent=0 // pred_fallthru
    _
  %v33 = vld [vmem:[%s0] sm:$0xff]
  %v34 = vld [vmem:[%s0 + $0x8] sm:$0xff]
  %v35 = vld [vmem:[%s0 + $0x10] sm:$0xff]
  %v36 = vld [vmem:[%s0 + $0x18] sm:$0xff]
  %v37 = vld [vmem:[%s0 + $0x20] sm:$0xff]
  %v38 = vld [vmem:[%s0 + $0x28] sm:$0xff]
  %v39 = vpack.c.bf16 %v34, %v33
  %v40 = vpack.c.bf16 %v36, %v35
  %v41 = vpack.c.bf16 %v38, %v37
  %v42 = vld [vmem:[%s1] sm:$0xf]
  %v43 = vld [vmem:[%s1 + $0x4] sm:$0xf]
  %v44 = vld [vmem:[%s1 + $0x8] sm:$0xf]
  %v45 = vld [vmem:[%s1 + $0xc] sm:$0xf]
  %v46 = vld [vmem:[%s1 + $0x10] sm:$0xf]
  %v47 = vld [vmem:[%s1 + $0x14] sm:$0xf]
  %v48 = vld [vmem:[%s1 + $0x18] sm:$0xf]
  %v49 = vld [vmem:[%s1 + $0x1c] sm:$0xf]
  %v50 = vld [vmem:[%s2] sm:$0x1]
  %v52 = vperm.slane %v50, 0
  %v62 = vunpack.c.l.b16 %v42
  %v63 = vunpack.c.l.b16 %v43
  %v64 = vunpack.c.l.b16 %v44
  %v65 = vunpack.c.l.b16 %v45
  %v66 = vunpack.c.l.b16 %v46
  %v67 = vunpack.c.l.b16 %v47
  %v68 = vunpack.c.l.b16 %v48
  %v69 = vunpack.c.l.b16 %v49
  %v70 = vpack.c.b16 %v63, %v62
  %v71 = vpack.c.b16 %v65, %v64
  %v72 = vpack.c.b16 %v67, %v66
  %v73 = vpack.c.b16 %v69, %v68
  %vm78 = vcmask 523264
  %v80 = vsel %vm78, %v39, 0
  %v83 = vsel %vm78, %v40, 0
  %v86 = vsel %vm78, %v41, 0
  %88 = vmatpush.bf16.msra.mxu0 0
  %89 = vmatpush.bf16.msra.mxu0 0
  %90 = vmatpush.bf16.msra.mxu0 0
  %91 = vmatpush.bf16.msra.mxu0 0
  %92 = vmatpush.bf16.msra.mxu0 %v73
  %93 = vmatpush.bf16.msra.mxu0 %v72
  %94 = vmatpush.bf16.msra.mxu0 %v71
  %95 = vmatpush.bf16.msra.mxu0 %v70
  %96 = vmatmul.bf16.gmra.mxu0 %v80
  %v97 = vpop.f32.mrf.mxu0
  %v98 = vadd.f32 %v52, %v97
  %v99 = vpop.f32.mrf.mxu0
  %v100 = vadd.f32 %v52, %v99
  %101 = vmatmul.bf16.gmra.mxu0 %v83
  %v102 = vpop.f32.mrf.mxu0
  %v103 = vadd.f32 %v52, %v102
  %v104 = vpop.f32.mrf.mxu0
  %v105 = vadd.f32 %v52, %v104
  %106 = vmatmul.bf16.gmra.mxu0 %v86
  %v107 = vpop.f32.mrf.mxu0
  %v108 = vadd.f32 %v52, %v107
  %v109 = vpop.f32.mrf.mxu0
  %v110 = vadd.f32 %v52, %v109
  %111 = vdwg.mxu0
  %v112 = vmax.f32 %v98, 0.0
  %v113 = vmax.f32 %v100, 0.0
  %v114 = vmax.f32 %v103, 0.0
  %v115 = vmax.f32 %v105, 0.0
  %v116 = vmax.f32 %v108, 0.0
  %v117 = vmax.f32 %v110, 0.0
  %v118 = vld [vmem:[%s3] sm:$0xf]
  %v119 = vld [vmem:[%s3 + $0x4] sm:$0xf]
  %v120 = vld [vmem:[%s3 + $0x8] sm:$0xf]
  %v121 = vld [vmem:[%s3 + $0xc] sm:$0xf]
  %v122 = vld [vmem:[%s3 + $0x10] sm:$0xf]
  %v123 = vld [vmem:[%s3 + $0x14] sm:$0xf]
  %v124 = vld [vmem:[%s3 + $0x18] sm:$0xf]
  %v125 = vld [vmem:[%s3 + $0x1c] sm:$0xf]
  %v126 = vld [vmem:[%s4] sm:$0x1]
  %v128 = vperm.slane %v126, 0
  %v138 = vunpack.c.l.b16 %v118
  %v139 = vunpack.c.l.b16 %v119
  %v140 = vunpack.c.l.b16 %v120
  %v141 = vunpack.c.l.b16 %v121
  %v142 = vunpack.c.l.b16 %v122
  %v143 = vunpack.c.l.b16 %v123
  %v144 = vunpack.c.l.b16 %v124
  %v145 = vunpack.c.l.b16 %v125
  %v146 = vpack.c.b16 %v139, %v138
  %v147 = vpack.c.b16 %v141, %v140
  %v148 = vpack.c.b16 %v143, %v142
  %v149 = vpack.c.b16 %v145, %v144
  %154 = vmatpush.bf16.msra.mxu0 0
  %155 = vmatpush.bf16.msra.mxu0 0
  %156 = vmatpush.bf16.msra.mxu0 0
  %157 = vmatpush.bf16.msra.mxu0 0
  %158 = vmatpush.bf16.msra.mxu0 %v149
  %159 = vmatpush.bf16.msra.mxu0 %v148
  %160 = vmatpush.bf16.msra.mxu0 %v147
  %161 = vmatpush.bf16.msra.mxu0 %v146
  %162 = vmatmul.bf16.gmra.mxu0 %v80
  %v163 = vpop.f32.mrf.mxu0
  %v164 = vadd.f32 %v128, %v163
  %v165 = vpop.f32.mrf.mxu0
  %v166 = vadd.f32 %v128, %v165
  %167 = vmatmul.bf16.gmra.mxu0 %v83
  %v168 = vpop.f32.mrf.mxu0
  %v169 = vadd.f32 %v128, %v168
  %v170 = vpop.f32.mrf.mxu0
  %v171 = vadd.f32 %v128, %v170
  %172 = vmatmul.bf16.gmra.mxu0 %v86
  %v173 = vpop.f32.mrf.mxu0
  %v174 = vadd.f32 %v128, %v173
  %v175 = vpop.f32.mrf.mxu0
  %v176 = vadd.f32 %v128, %v175
  %177 = vdwg.mxu0
  %v178 = vxor.u32 %v164, 2147483648
  %v179 = vxor.u32 %v166, 2147483648
  %v180 = vxor.u32 %v169, 2147483648
  %v181 = vxor.u32 %v171, 2147483648
  %v182 = vxor.u32 %v174, 2147483648
  %v183 = vxor.u32 %v176, 2147483648
  %v184 = vmul.f32 %v178, 1.442695
  %v185 = vpow.pop %v184
  %v186 = vmul.f32 %v179, 1.442695
  %v187 = vpow.pop %v186
  %v188 = vmul.f32 %v180, 1.442695
  %v189 = vpow.pop %v188
  %v190 = vmul.f32 %v181, 1.442695
  %v191 = vpow.pop %v190
  %v192 = vmul.f32 %v182, 1.442695
  %v193 = vpow.pop %v192
  %v194 = vmul.f32 %v183, 1.442695
  %v195 = vpow.pop %v194
  %v196 = vadd.f32 %v185, 1.0
  %v197 = vadd.f32 %v187, 1.0
  %v198 = vadd.f32 %v189, 1.0
  %v199 = vadd.f32 %v191, 1.0
  %v200 = vadd.f32 %v193, 1.0
  %v201 = vadd.f32 %v195, 1.0
  %v202 = vrcp.pop %v196
  %v203 = vmul.f32 %v196, %v202
  %v204 = vsub.f32 1.0, %v203
  %v205 = vmul.f32 %v202, %v204
  %v206 = vadd.f32 %v202, %v205
  %vm207 = vweird.f32 %v196
  %vm208 = vweird.f32 %v202
  %vm209 = vmor %vm207, %vm208
  %v210 = vsel %vm209, %v202, %v206
  %v211 = vand.u32 2147483647, %v196
  %vm212 = vcmp.eq.f32.partialorder %v211, 8.507059e+37
  %v213 = vand.u32 %v196, 2147483648
  %v214 = vor.u32 1.1754944e-38, %v213
  %v215 = vsel %vm212, %v214, %v210
  %v216 = vmul.f32 1.0, %v215
  %v217 = vrcp.pop %v197
  %v218 = vmul.f32 %v197, %v217
  %v219 = vsub.f32 1.0, %v218
  %v220 = vmul.f32 %v217, %v219
  %v221 = vadd.f32 %v217, %v220
  %vm222 = vweird.f32 %v197
  %vm223 = vweird.f32 %v217
  %vm224 = vmor %vm222, %vm223
  %v225 = vsel %vm224, %v217, %v221
  %v226 = vand.u32 2147483647, %v197
  %vm227 = vcmp.eq.f32.partialorder %v226, 8.507059e+37
  %v228 = vand.u32 %v197, 2147483648
  %v229 = vor.u32 1.1754944e-38, %v228
  %v230 = vsel %vm227, %v229, %v225
  %v231 = vmul.f32 1.0, %v230
  %v232 = vrcp.pop %v198
  %v233 = vmul.f32 %v198, %v232
  %v234 = vsub.f32 1.0, %v233
  %v235 = vmul.f32 %v232, %v234
  %v236 = vadd.f32 %v232, %v235
  %vm237 = vweird.f32 %v198
  %vm238 = vweird.f32 %v232
  %vm239 = vmor %vm237, %vm238
  %v240 = vsel %vm239, %v232, %v236
  %v241 = vand.u32 2147483647, %v198
  %vm242 = vcmp.eq.f32.partialorder %v241, 8.507059e+37
  %v243 = vand.u32 %v198, 2147483648
  %v244 = vor.u32 1.1754944e-38, %v243
  %v245 = vsel %vm242, %v244, %v240
  %v246 = vmul.f32 1.0, %v245
  %v247 = vrcp.pop %v199
  %v248 = vmul.f32 %v199, %v247
  %v249 = vsub.f32 1.0, %v248
  %v250 = vmul.f32 %v247, %v249
  %v251 = vadd.f32 %v247, %v250
  %vm252 = vweird.f32 %v199
  %vm253 = vweird.f32 %v247
  %vm254 = vmor %vm252, %vm253
  %v255 = vsel %vm254, %v247, %v251
  %v256 = vand.u32 2147483647, %v199
  %vm257 = vcmp.eq.f32.partialorder %v256, 8.507059e+37
  %v258 = vand.u32 %v199, 2147483648
  %v259 = vor.u32 1.1754944e-38, %v258
  %v260 = vsel %vm257, %v259, %v255
  %v261 = vmul.f32 1.0, %v260
  %v262 = vrcp.pop %v200
  %v263 = vmul.f32 %v200, %v262
  %v264 = vsub.f32 1.0, %v263
  %v265 = vmul.f32 %v262, %v264
  %v266 = vadd.f32 %v262, %v265
  %vm267 = vweird.f32 %v200
  %vm268 = vweird.f32 %v262
  %vm269 = vmor %vm267, %vm268
  %v270 = vsel %vm269, %v262, %v266
  %v271 = vand.u32 2147483647, %v200
  %vm272 = vcmp.eq.f32.partialorder %v271, 8.507059e+37
  %v273 = vand.u32 %v200, 2147483648
  %v274 = vor.u32 1.1754944e-38, %v273
  %v275 = vsel %vm272, %v274, %v270
  %v276 = vmul.f32 1.0, %v275
  %v277 = vrcp.pop %v201
  %v278 = vmul.f32 %v201, %v277
  %v279 = vsub.f32 1.0, %v278
  %v280 = vmul.f32 %v277, %v279
  %v281 = vadd.f32 %v277, %v280
  %vm282 = vweird.f32 %v201
  %vm283 = vweird.f32 %v277
  %vm284 = vmor %vm282, %vm283
  %v285 = vsel %vm284, %v277, %v281
  %v286 = vand.u32 2147483647, %v201
  %vm287 = vcmp.eq.f32.partialorder %v286, 8.507059e+37
  %v288 = vand.u32 %v201, 2147483648
  %v289 = vor.u32 1.1754944e-38, %v288
  %v290 = vsel %vm287, %v289, %v285
  %v291 = vmul.f32 1.0, %v290
  %v292 = vmul.f32 %v216, %v112
  %v293 = vmul.f32 %v231, %v113
  %v294 = vmul.f32 %v246, %v114
  %v295 = vmul.f32 %v261, %v115
  %v296 = vmul.f32 %v276, %v116
  %v297 = vmul.f32 %v291, %v117
  %v298 = vsub.f32 1.0, %v216
  %v299 = vsub.f32 1.0, %v231
  %v300 = vsub.f32 1.0, %v246
  %v301 = vsub.f32 1.0, %v261
  %v302 = vsub.f32 1.0, %v276
  %v303 = vsub.f32 1.0, %v291
  %v304 = vmul.f32 %v298, %v33
  %v305 = vmul.f32 %v299, %v34
  %v306 = vmul.f32 %v300, %v35
  %v307 = vmul.f32 %v301, %v36
  %v308 = vmul.f32 %v302, %v37
  %v309 = vmul.f32 %v303, %v38
  %v310 = vadd.f32 %v292, %v304
  %v311 = vadd.f32 %v293, %v305
  %v312 = vadd.f32 %v294, %v306
  %v313 = vadd.f32 %v295, %v307
  %v314 = vadd.f32 %v296, %v308
  %v315 = vadd.f32 %v297, %v309
  %v316 = vpack.c.bf16 %v311, %v310
  %v317 = vpack.c.bf16 %v313, %v312
  %v318 = vpack.c.bf16 %v315, %v314
  %v319 = vld [vmem:[%s5] sm:$0xf]
  %v320 = vld [vmem:[%s5 + $0x4] sm:$0xf]
  %v321 = vld [vmem:[%s5 + $0x8] sm:$0xf]
  %v322 = vld [vmem:[%s5 + $0xc] sm:$0xf]
  %v323 = vld [vmem:[%s5 + $0x10] sm:$0xf]
  %v324 = vld [vmem:[%s5 + $0x14] sm:$0xf]
  %v325 = vld [vmem:[%s5 + $0x18] sm:$0xf]
  %v326 = vld [vmem:[%s5 + $0x1c] sm:$0xf]
  %v327 = vld [vmem:[%s6] sm:$0x1]
  %v329 = vperm.slane %v327, 0
  %v339 = vunpack.c.l.b16 %v319
  %v340 = vunpack.c.l.b16 %v320
  %v341 = vunpack.c.l.b16 %v321
  %v342 = vunpack.c.l.b16 %v322
  %v343 = vunpack.c.l.b16 %v323
  %v344 = vunpack.c.l.b16 %v324
  %v345 = vunpack.c.l.b16 %v325
  %v346 = vunpack.c.l.b16 %v326
  %v347 = vpack.c.b16 %v340, %v339
  %v348 = vpack.c.b16 %v342, %v341
  %v349 = vpack.c.b16 %v344, %v343
  %v350 = vpack.c.b16 %v346, %v345
  %v356 = vsel %vm78, %v316, 0
  %v359 = vsel %vm78, %v317, 0
  %v362 = vsel %vm78, %v318, 0
  %364 = vmatpush.bf16.msra.mxu0 0
  %365 = vmatpush.bf16.msra.mxu0 0
  %366 = vmatpush.bf16.msra.mxu0 0
  %367 = vmatpush.bf16.msra.mxu0 0
  %368 = vmatpush.bf16.msra.mxu0 %v350
  %369 = vmatpush.bf16.msra.mxu0 %v349
  %370 = vmatpush.bf16.msra.mxu0 %v348
  %371 = vmatpush.bf16.msra.mxu0 %v347
  %372 = vmatmul.bf16.gmra.mxu0 %v356
  %v373 = vpop.f32.mrf.mxu0
  %v374 = vadd.f32 %v329, %v373
  %v375 = vpop.f32.mrf.mxu0
  %v376 = vadd.f32 %v329, %v375
  %377 = vmatmul.bf16.gmra.mxu0 %v359
  %v378 = vpop.f32.mrf.mxu0
  %v379 = vadd.f32 %v329, %v378
  %v380 = vpop.f32.mrf.mxu0
  %v381 = vadd.f32 %v329, %v380
  %382 = vmatmul.bf16.gmra.mxu0 %v362
  %v383 = vpop.f32.mrf.mxu0
  %v384 = vadd.f32 %v329, %v383
  %v385 = vpop.f32.mrf.mxu0
  %v386 = vadd.f32 %v329, %v385
  %387 = vdwg.mxu0
  %v388 = vmax.f32 %v374, 0.0
  %v389 = vmax.f32 %v376, 0.0
  %v390 = vmax.f32 %v379, 0.0
  %v391 = vmax.f32 %v381, 0.0
  %v392 = vmax.f32 %v384, 0.0
  %v393 = vmax.f32 %v386, 0.0
  %v394 = vld [vmem:[%s7] sm:$0xf]
  %v395 = vld [vmem:[%s7 + $0x4] sm:$0xf]
  %v396 = vld [vmem:[%s7 + $0x8] sm:$0xf]
  %v397 = vld [vmem:[%s7 + $0xc] sm:$0xf]
  %v398 = vld [vmem:[%s7 + $0x10] sm:$0xf]
  %v399 = vld [vmem:[%s7 + $0x14] sm:$0xf]
  %v400 = vld [vmem:[%s7 + $0x18] sm:$0xf]
  %v401 = vld [vmem:[%s7 + $0x1c] sm:$0xf]
  %v402 = vld [vmem:[%s8] sm:$0x1]
  %v404 = vperm.slane %v402, 0
  %v414 = vunpack.c.l.b16 %v394
  %v415 = vunpack.c.l.b16 %v395
  %v416 = vunpack.c.l.b16 %v396
  %v417 = vunpack.c.l.b16 %v397
  %v418 = vunpack.c.l.b16 %v398
  %v419 = vunpack.c.l.b16 %v399
  %v420 = vunpack.c.l.b16 %v400
  %v421 = vunpack.c.l.b16 %v401
  %v422 = vpack.c.b16 %v415, %v414
  %v423 = vpack.c.b16 %v417, %v416
  %v424 = vpack.c.b16 %v419, %v418
  %v425 = vpack.c.b16 %v421, %v420
  %430 = vmatpush.bf16.msra.mxu0 0
  %431 = vmatpush.bf16.msra.mxu0 0
  %432 = vmatpush.bf16.msra.mxu0 0
  %433 = vmatpush.bf16.msra.mxu0 0
  %434 = vmatpush.bf16.msra.mxu0 %v425
  %435 = vmatpush.bf16.msra.mxu0 %v424
  %436 = vmatpush.bf16.msra.mxu0 %v423
  %437 = vmatpush.bf16.msra.mxu0 %v422
  %438 = vmatmul.bf16.gmra.mxu0 %v356
  %v439 = vpop.f32.mrf.mxu0
  %v440 = vadd.f32 %v404, %v439
  %v441 = vpop.f32.mrf.mxu0
  %v442 = vadd.f32 %v404, %v441
  %443 = vmatmul.bf16.gmra.mxu0 %v359
  %v444 = vpop.f32.mrf.mxu0
  %v445 = vadd.f32 %v404, %v444
  %v446 = vpop.f32.mrf.mxu0
  %v447 = vadd.f32 %v404, %v446
  %448 = vmatmul.bf16.gmra.mxu0 %v362
  %v449 = vpop.f32.mrf.mxu0
  %v450 = vadd.f32 %v404, %v449
  %v451 = vpop.f32.mrf.mxu0
  %v452 = vadd.f32 %v404, %v451
  %453 = vdwg.mxu0
  %v454 = vxor.u32 %v440, 2147483648
  %v455 = vxor.u32 %v442, 2147483648
  %v456 = vxor.u32 %v445, 2147483648
  %v457 = vxor.u32 %v447, 2147483648
  %v458 = vxor.u32 %v450, 2147483648
  %v459 = vxor.u32 %v452, 2147483648
  %v460 = vmul.f32 %v454, 1.442695
  %v461 = vpow.pop %v460
  %v462 = vmul.f32 %v455, 1.442695
  %v463 = vpow.pop %v462
  %v464 = vmul.f32 %v456, 1.442695
  %v465 = vpow.pop %v464
  %v466 = vmul.f32 %v457, 1.442695
  %v467 = vpow.pop %v466
  %v468 = vmul.f32 %v458, 1.442695
  %v469 = vpow.pop %v468
  %v470 = vmul.f32 %v459, 1.442695
  %v471 = vpow.pop %v470
  %v472 = vadd.f32 %v461, 1.0
  %v473 = vadd.f32 %v463, 1.0
  %v474 = vadd.f32 %v465, 1.0
  %v475 = vadd.f32 %v467, 1.0
  %v476 = vadd.f32 %v469, 1.0
  %v477 = vadd.f32 %v471, 1.0
  %v478 = vrcp.pop %v472
  %v479 = vmul.f32 %v472, %v478
  %v480 = vsub.f32 1.0, %v479
  %v481 = vmul.f32 %v478, %v480
  %v482 = vadd.f32 %v478, %v481
  %vm483 = vweird.f32 %v472
  %vm484 = vweird.f32 %v478
  %vm485 = vmor %vm483, %vm484
  %v486 = vsel %vm485, %v478, %v482
  %v487 = vand.u32 2147483647, %v472
  %vm488 = vcmp.eq.f32.partialorder %v487, 8.507059e+37
  %v489 = vand.u32 %v472, 2147483648
  %v490 = vor.u32 1.1754944e-38, %v489
  %v491 = vsel %vm488, %v490, %v486
  %v492 = vmul.f32 1.0, %v491
  %v493 = vrcp.pop %v473
  %v494 = vmul.f32 %v473, %v493
  %v495 = vsub.f32 1.0, %v494
  %v496 = vmul.f32 %v493, %v495
  %v497 = vadd.f32 %v493, %v496
  %vm498 = vweird.f32 %v473
  %vm499 = vweird.f32 %v493
  %vm500 = vmor %vm498, %vm499
  %v501 = vsel %vm500, %v493, %v497
  %v502 = vand.u32 2147483647, %v473
  %vm503 = vcmp.eq.f32.partialorder %v502, 8.507059e+37
  %v504 = vand.u32 %v473, 2147483648
  %v505 = vor.u32 1.1754944e-38, %v504
  %v506 = vsel %vm503, %v505, %v501
  %v507 = vmul.f32 1.0, %v506
  %v508 = vrcp.pop %v474
  %v509 = vmul.f32 %v474, %v508
  %v510 = vsub.f32 1.0, %v509
  %v511 = vmul.f32 %v508, %v510
  %v512 = vadd.f32 %v508, %v511
  %vm513 = vweird.f32 %v474
  %vm514 = vweird.f32 %v508
  %vm515 = vmor %vm513, %vm514
  %v516 = vsel %vm515, %v508, %v512
  %v517 = vand.u32 2147483647, %v474
  %vm518 = vcmp.eq.f32.partialorder %v517, 8.507059e+37
  %v519 = vand.u32 %v474, 2147483648
  %v520 = vor.u32 1.1754944e-38, %v519
  %v521 = vsel %vm518, %v520, %v516
  %v522 = vmul.f32 1.0, %v521
  %v523 = vrcp.pop %v475
  %v524 = vmul.f32 %v475, %v523
  %v525 = vsub.f32 1.0, %v524
  %v526 = vmul.f32 %v523, %v525
  %v527 = vadd.f32 %v523, %v526
  %vm528 = vweird.f32 %v475
  %vm529 = vweird.f32 %v523
  %vm530 = vmor %vm528, %vm529
  %v531 = vsel %vm530, %v523, %v527
  %v532 = vand.u32 2147483647, %v475
  %vm533 = vcmp.eq.f32.partialorder %v532, 8.507059e+37
  %v534 = vand.u32 %v475, 2147483648
  %v535 = vor.u32 1.1754944e-38, %v534
  %v536 = vsel %vm533, %v535, %v531
  %v537 = vmul.f32 1.0, %v536
  %v538 = vrcp.pop %v476
  %v539 = vmul.f32 %v476, %v538
  %v540 = vsub.f32 1.0, %v539
  %v541 = vmul.f32 %v538, %v540
  %v542 = vadd.f32 %v538, %v541
  %vm543 = vweird.f32 %v476
  %vm544 = vweird.f32 %v538
  %vm545 = vmor %vm543, %vm544
  %v546 = vsel %vm545, %v538, %v542
  %v547 = vand.u32 2147483647, %v476
  %vm548 = vcmp.eq.f32.partialorder %v547, 8.507059e+37
  %v549 = vand.u32 %v476, 2147483648
  %v550 = vor.u32 1.1754944e-38, %v549
  %v551 = vsel %vm548, %v550, %v546
  %v552 = vmul.f32 1.0, %v551
  %v553 = vrcp.pop %v477
  %v554 = vmul.f32 %v477, %v553
  %v555 = vsub.f32 1.0, %v554
  %v556 = vmul.f32 %v553, %v555
  %v557 = vadd.f32 %v553, %v556
  %vm558 = vweird.f32 %v477
  %vm559 = vweird.f32 %v553
  %vm560 = vmor %vm558, %vm559
  %v561 = vsel %vm560, %v553, %v557
  %v562 = vand.u32 2147483647, %v477
  %vm563 = vcmp.eq.f32.partialorder %v562, 8.507059e+37
  %v564 = vand.u32 %v477, 2147483648
  %v565 = vor.u32 1.1754944e-38, %v564
  %v566 = vsel %vm563, %v565, %v561
  %v567 = vmul.f32 1.0, %v566
  %v568 = vmul.f32 %v492, %v388
  %v569 = vmul.f32 %v507, %v389
  %v570 = vmul.f32 %v522, %v390
  %v571 = vmul.f32 %v537, %v391
  %v572 = vmul.f32 %v552, %v392
  %v573 = vmul.f32 %v567, %v393
  %v574 = vsub.f32 1.0, %v492
  %v575 = vsub.f32 1.0, %v507
  %v576 = vsub.f32 1.0, %v522
  %v577 = vsub.f32 1.0, %v537
  %v578 = vsub.f32 1.0, %v552
  %v579 = vsub.f32 1.0, %v567
  %v580 = vmul.f32 %v574, %v310
  %v581 = vmul.f32 %v575, %v311
  %v582 = vmul.f32 %v576, %v312
  %v583 = vmul.f32 %v577, %v313
  %v584 = vmul.f32 %v578, %v314
  %v585 = vmul.f32 %v579, %v315
  %v586 = vadd.f32 %v568, %v580
  %v587 = vadd.f32 %v569, %v581
  %v588 = vadd.f32 %v570, %v582
  %v589 = vadd.f32 %v571, %v583
  %v590 = vadd.f32 %v572, %v584
  %v591 = vadd.f32 %v573, %v585
  %592 = vst.msk [vmem:[%s9] sm:$0xff] %vm78, %v586
  %593 = vst.msk [vmem:[%s9 + $0x8] sm:$0xff] %vm78, %v587
  %594 = vst.msk [vmem:[%s9 + $0x10] sm:$0xff] %vm78, %v588
  %595 = vst.msk [vmem:[%s9 + $0x18] sm:$0xff] %vm78, %v589
  %596 = vst.msk [vmem:[%s9 + $0x20] sm:$0xff] %vm78, %v590
  %597 = vst.msk [vmem:[%s9 + $0x28] sm:$0xff] %vm78, %v591
  // Predicated region
  $region38: #{bidaf_forward.10} parent=0 // pred_check
    _
  $region39: #{bidaf_forward.10} parent=0 // pred_check_branch
    %599 = sbr.rel (0) target = $region41
  $region40: #{bidaf_forward.10} parent=0 // pred_region
    _
  $region41: #{bidaf_forward.10} parent=0 // pred_fallthru
    _
  // Predicated region
  $region42: #{bidaf_forward.10} parent=0 // pred_check
    _
  $region43: #{bidaf_forward.10} parent=0 // pred_check_branch
    %601 = sbr.rel (0) target = $region45
  $region44: #{bidaf_forward.10} parent=0 // pred_region
    _
  $region45: #{bidaf_forward.10} parent=0 // pred_fallthru
    _

// kernel: bidaf_forward.12
$region0: #{bidaf_forward.12}
  #allocation0 [shape = 'u32[]', space=smem, size = 0x4, offset = 0x4, fixed_abs, tag = 'smem constant byte address 0x4 - core index']
  #allocation1 [shape = 'u32[72,128]{1,0:T(1,128)}', space=vmem, size = 0x9000, scoped, tag = 'internal scratch']
  #allocation2 [shape = 'f32[16,256]{1,0:T(8,128)}', space=vmem, size = 0x4000, scoped, tag = 'scratch operand']
  #allocation3 [shape = 'f32[2,64]{1,0:T(2,128)}', space=vmem, size = 0x400, scoped, tag = 'scratch operand']
  #allocation4 [shape = 'f32[2,64]{1,0:T(2,128)}', space=vmem, size = 0x400, scoped, tag = 'scratch operand']
  %s0 = inlined_call_operand.vmem [shape: f32[16,128], index: 0, kind: input, shape index: {}]
  %s1 = inlined_call_operand.vmem [shape: bf16[128,256], index: 1, kind: input, shape index: {}]
  %s2 = inlined_call_operand.vmem [shape: bf16[64,256], index: 2, kind: input, shape index: {}]
  %s3 = inlined_call_operand.vmem [shape: f32[1,256], index: 3, kind: input, shape index: {}]
  %s4 = inlined_call_operand.vmem [shape: f32[8,2,64], index: 4, kind: output, shape index: {}]
  %s5 = sld [smem:[#allocation0]]
  $region26: #{bidaf_forward.12} parent=0
    _
  %s7 = ssub.s32 1, %s5
  %s8 = scalar_select 0, %s7, %s5
  // Predicated region
  $region2: #{bidaf_forward.12} parent=0 // pred_check
    _
  $region3: #{bidaf_forward.12} parent=0 // pred_check_branch
    %10 = sbr.rel (0) target = $region5
  $region4: #{bidaf_forward.12} parent=0 // pred_region
    _
  $region5: #{bidaf_forward.12} parent=0 // pred_fallthru
    _
  // Predicated region
  $region6: #{bidaf_forward.12} parent=0 // pred_check
    _
  $region7: #{bidaf_forward.12} parent=0 // pred_check_branch
    %12 = sbr.rel (0) target = $region9
  $region8: #{bidaf_forward.12} parent=0 // pred_region
    _
  $region9: #{bidaf_forward.12} parent=0 // pred_fallthru
    _
  // Predicated region
  $region10: #{bidaf_forward.12} parent=0 // pred_check
    _
  $region11: #{bidaf_forward.12} parent=0 // pred_check_branch
    %14 = sbr.rel (0) target = $region13
  $region12: #{bidaf_forward.12} parent=0 // pred_region
    _
  $region13: #{bidaf_forward.12} parent=0 // pred_fallthru
    _
  // Predicated region
  $region14: #{bidaf_forward.12} parent=0 // pred_check
    _
  $region15: #{bidaf_forward.12} parent=0 // pred_check_branch
    %16 = sbr.rel (0) target = $region17
  $region16: #{bidaf_forward.12} parent=0 // pred_region
    _
  $region17: #{bidaf_forward.12} parent=0 // pred_fallthru
    _
  %v18 = vld [vmem:[%s0] sm:$0xff]
  %v19 = vld [vmem:[%s0 + $0x8] sm:$0xff]
  %v20 = vpack.c.bf16 %v19, %v18
  %v21 = vld [vmem:[%s1] sm:$0xff]
  %v22 = vld [vmem:[%s1 + $0x8] sm:$0xff]
  %v23 = vld [vmem:[%s1 + $0x10] sm:$0xff]
  %v24 = vld [vmem:[%s1 + $0x18] sm:$0xff]
  %v25 = vld [vmem:[%s1 + $0x20] sm:$0xff]
  %v26 = vld [vmem:[%s1 + $0x28] sm:$0xff]
  %v27 = vld [vmem:[%s1 + $0x30] sm:$0xff]
  %v28 = vld [vmem:[%s1 + $0x38] sm:$0xff]
  %v29 = vld [vmem:[%s1 + $0x40] sm:$0xff]
  %v30 = vld [vmem:[%s1 + $0x48] sm:$0xff]
  %v31 = vld [vmem:[%s1 + $0x50] sm:$0xff]
  %v32 = vld [vmem:[%s1 + $0x58] sm:$0xff]
  %v33 = vld [vmem:[%s1 + $0x60] sm:$0xff]
  %v34 = vld [vmem:[%s1 + $0x68] sm:$0xff]
  %v35 = vld [vmem:[%s1 + $0x70] sm:$0xff]
  %v36 = vld [vmem:[%s1 + $0x78] sm:$0xff]
  %v37 = vld [vmem:[%s3] sm:$0x3]
  %v39 = vperm.slane %v37, 0
  %v40 = vperm.slane %v37, 1
  %v59 = vunpack.c.l.b16 %v21
  %v60 = vunpack.c.h.b16 %v21
  %v61 = vunpack.c.l.b16 %v22
  %v62 = vunpack.c.h.b16 %v22
  %v63 = vunpack.c.l.b16 %v23
  %v64 = vunpack.c.h.b16 %v23
  %v65 = vunpack.c.l.b16 %v24
  %v66 = vunpack.c.h.b16 %v24
  %v67 = vunpack.c.l.b16 %v25
  %v68 = vunpack.c.h.b16 %v25
  %v69 = vunpack.c.l.b16 %v26
  %v70 = vunpack.c.h.b16 %v26
  %v71 = vunpack.c.l.b16 %v27
  %v72 = vunpack.c.h.b16 %v27
  %v73 = vunpack.c.l.b16 %v28
  %v74 = vunpack.c.h.b16 %v28
  %v75 = vunpack.c.l.b16 %v29
  %v76 = vunpack.c.h.b16 %v29
  %v77 = vunpack.c.l.b16 %v30
  %v78 = vunpack.c.h.b16 %v30
  %v79 = vunpack.c.l.b16 %v31
  %v80 = vunpack.c.h.b16 %v31
  %v81 = vunpack.c.l.b16 %v32
  %v82 = vunpack.c.h.b16 %v32
  %v83 = vunpack.c.l.b16 %v33
  %v84 = vunpack.c.h.b16 %v33
  %v85 = vunpack.c.l.b16 %v34
  %v86 = vunpack.c.h.b16 %v34
  %v87 = vunpack.c.l.b16 %v35
  %v88 = vunpack.c.h.b16 %v35
  %v89 = vunpack.c.l.b16 %v36
  %v90 = vunpack.c.h.b16 %v36
  %v91 = vpack.c.b16 %v61, %v59
  %v92 = vpack.c.b16 %v62, %v60
  %v93 = vpack.c.b16 %v65, %v63
  %v94 = vpack.c.b16 %v66, %v64
  %v95 = vpack.c.b16 %v69, %v67
  %v96 = vpack.c.b16 %v70, %v68
  %v97 = vpack.c.b16 %v73, %v71
  %v98 = vpack.c.b16 %v74, %v72
  %v99 = vpack.c.b16 %v77, %v75
  %v100 = vpack.c.b16 %v78, %v76
  %v101 = vpack.c.b16 %v81, %v79
  %v102 = vpack.c.b16 %v82, %v80
  %v103 = vpack.c.b16 %v85, %v83
  %v104 = vpack.c.b16 %v86, %v84
  %v105 = vpack.c.b16 %v89, %v87
  %v106 = vpack.c.b16 %v90, %v88
  %123 = vmatpush.bf16.msra.mxu0 %v105
  %124 = vmatpush.bf16.msra.mxu0 %v103
  %125 = vmatpush.bf16.msra.mxu0 %v101
  %126 = vmatpush.bf16.msra.mxu0 %v99
  %127 = vmatpush.bf16.msra.mxu0 %v97
  %128 = vmatpush.bf16.msra.mxu0 %v95
  %129 = vmatpush.bf16.msra.mxu0 %v93
  %130 = vmatpush.bf16.msra.mxu0 %v91
  %131 = vmatmul.bf16.gmra.mxu0 %v20
  %v132 = vpop.f32.mrf.mxu0
  %v133 = vadd.f32 %v39, %v132
  %v134 = vpop.f32.mrf.mxu0
  %v135 = vadd.f32 %v39, %v134
  %136 = vdwg.mxu0
  %137 = vmatpush.bf16.msra.mxu0 %v106
  %138 = vmatpush.bf16.msra.mxu0 %v104
  %139 = vmatpush.bf16.msra.mxu0 %v102
  %140 = vmatpush.bf16.msra.mxu0 %v100
  %141 = vmatpush.bf16.msra.mxu0 %v98
  %142 = vmatpush.bf16.msra.mxu0 %v96
  %143 = vmatpush.bf16.msra.mxu0 %v94
  %144 = vmatpush.bf16.msra.mxu0 %v92
  %145 = vmatmul.bf16.gmra.mxu0 %v20
  %v146 = vpop.f32.mrf.mxu0
  %v147 = vadd.f32 %v40, %v146
  %v148 = vpop.f32.mrf.mxu0
  %v149 = vadd.f32 %v40, %v148
  %150 = vdwg.mxu0
  %151 = vst [vmem:[#allocation2] sm:$0xff] %v133
  %152 = vst [vmem:[#allocation2 + $0x8] sm:$0xff] %v147
  %153 = vst [vmem:[#allocation2 + $0x10] sm:$0xff] %v135
  %154 = vst [vmem:[#allocation2 + $0x18] sm:$0xff] %v149
  %vm155 = vcmask 517120
  %156 = vst.msk [vmem:[#allocation3] sm:$0x3] %vm155, 0.0
  %157 = vst.msk [vmem:[#allocation4] sm:$0x3] %vm155, 0.0
  %v158 = vlaneseq
  %v159 = vand.u32 %v158, 127
  %v160 = vadd.s32 %v159, 128
  %vm161 = vcmp.ge.s32.totalorder %v159, 128
  %vm162 = vcmp.ge.s32.totalorder %v160, 128
  %vm163 = vcmp.lt.s32.totalorder %v159, 192
  %vm164 = vcmp.lt.s32.totalorder %v160, 192
  %vm165 = vmand %vm161, %vm163
  %vm166 = vmand %vm162, %vm164
  %v167 = vld [vmem:[#allocation2] sm:$0x3]
  %v168 = vld [vmem:[#allocation2 + $0x8] sm:$0x3]
  %v169 = vld [vmem:[#allocation3] sm:$0x3]
  %v170 = vpack.c.bf16 %v169, %v169
  %v171 = vld [vmem:[%s2] sm:$0xff]
  %v172 = vld [vmem:[%s2 + $0x8] sm:$0xff]
  %v173 = vld [vmem:[%s2 + $0x10] sm:$0xff]
  %v174 = vld [vmem:[%s2 + $0x18] sm:$0xff]
  %v175 = vld [vmem:[%s2 + $0x20] sm:$0xff]
  %v176 = vld [vmem:[%s2 + $0x28] sm:$0xff]
  %v177 = vld [vmem:[%s2 + $0x30] sm:$0xff]
  %v178 = vld [vmem:[%s2 + $0x38] sm:$0xff]
  %v187 = vunpack.c.l.b16 %v171
  %v188 = vunpack.c.h.b16 %v171
  %v189 = vunpack.c.l.b16 %v172
  %v190 = vunpack.c.h.b16 %v172
  %v191 = vunpack.c.l.b16 %v173
  %v192 = vunpack.c.h.b16 %v173
  %v193 = vunpack.c.l.b16 %v174
  %v194 = vunpack.c.h.b16 %v174
  %v195 = vunpack.c.l.b16 %v175
  %v196 = vunpack.c.h.b16 %v175
  %v197 = vunpack.c.l.b16 %v176
  %v198 = vunpack.c.h.b16 %v176
  %v199 = vunpack.c.l.b16 %v177
  %v200 = vunpack.c.h.b16 %v177
  %v201 = vunpack.c.l.b16 %v178
  %v202 = vunpack.c.h.b16 %v178
  %v203 = vpack.c.b16 %v189, %v187
  %v204 = vpack.c.b16 %v190, %v188
  %v205 = vpack.c.b16 %v193, %v191
  %v206 = vpack.c.b16 %v194, %v192
  %v207 = vpack.c.b16 %v197, %v195
  %v208 = vpack.c.b16 %v198, %v196
  %v209 = vpack.c.b16 %v201, %v199
  %v210 = vpack.c.b16 %v202, %v200
  %vm219 = vcmask 523264
  %v221 = vsel %vm219, %v170, 0
  %223 = vmatpush.bf16.msra.mxu0 0
  %224 = vmatpush.bf16.msra.mxu0 0
  %225 = vmatpush.bf16.msra.mxu0 0
  %226 = vmatpush.bf16.msra.mxu0 0
  %227 = vmatpush.bf16.msra.mxu0 %v209
  %228 = vmatpush.bf16.msra.mxu0 %v207
  %229 = vmatpush.bf16.msra.mxu0 %v205
  %230 = vmatpush.bf16.msra.mxu0 %v203
  %231 = vmatmul.bf16.gmra.mxu0 %v221
  %v232 = vpop.f32.mrf.mxu0
  %v233 = vadd.f32 0.0, %v232
  %v234 = vpop.f32.mrf.mxu0
  %235 = vdwg.mxu0
  %236 = vmatpush.bf16.msra.mxu0 0
  %237 = vmatpush.bf16.msra.mxu0 0
  %238 = vmatpush.bf16.msra.mxu0 0
  %239 = vmatpush.bf16.msra.mxu0 0
  %240 = vmatpush.bf16.msra.mxu0 %v210
  %241 = vmatpush.bf16.msra.mxu0 %v208
  %242 = vmatpush.bf16.msra.mxu0 %v206
  %243 = vmatpush.bf16.msra.mxu0 %v204
  %244 = vmatmul.bf16.gmra.mxu0 %v221
  %v245 = vpop.f32.mrf.mxu0
  %v246 = vadd.f32 0.0, %v245
  %v247 = vpop.f32.mrf.mxu0
  %248 = vdwg.mxu0
  %v249 = vadd.f32 %v167, %v233
  %v250 = vadd.f32 %v168, %v246
  %v251 = vtanh.pop %v249
  %v252 = vtanh.pop %v250
  %v253 = vxor.u32 %v249, 2147483648
  %v254 = vxor.u32 %v250, 2147483648
  %v255 = vmul.f32 %v253, 1.442695
  %v256 = vpow.pop %v255
  %v257 = vmul.f32 %v254, 1.442695
  %v258 = vpow.pop %v257
  %v259 = vadd.f32 %v256, 1.0
  %v260 = vadd.f32 %v258, 1.0
  %v261 = vrcp.pop %v259
  %v262 = vmul.f32 %v259, %v261
  %v263 = vsub.f32 1.0, %v262
  %v264 = vmul.f32 %v261, %v263
  %v265 = vadd.f32 %v261, %v264
  %vm266 = vweird.f32 %v259
  %vm267 = vweird.f32 %v261
  %vm268 = vmor %vm266, %vm267
  %v269 = vsel %vm268, %v261, %v265
  %v270 = vand.u32 2147483647, %v259
  %vm271 = vcmp.eq.f32.partialorder %v270, 8.507059e+37
  %v272 = vand.u32 %v259, 2147483648
  %v273 = vor.u32 1.1754944e-38, %v272
  %v274 = vsel %vm271, %v273, %v269
  %v275 = vmul.f32 1.0, %v274
  %v276 = vrcp.pop %v260
  %v277 = vmul.f32 %v260, %v276
  %v278 = vsub.f32 1.0, %v277
  %v279 = vmul.f32 %v276, %v278
  %v280 = vadd.f32 %v276, %v279
  %vm281 = vweird.f32 %v260
  %vm282 = vweird.f32 %v276
  %vm283 = vmor %vm281, %vm282
  %v284 = vsel %vm283, %v276, %v280
  %v285 = vand.u32 2147483647, %v260
  %vm286 = vcmp.eq.f32.partialorder %v285, 8.507059e+37
  %v287 = vand.u32 %v260, 2147483648
  %v288 = vor.u32 1.1754944e-38, %v287
  %v289 = vsel %vm286, %v288, %v284
  %v290 = vmul.f32 1.0, %v289
  %v291 = vsel %vm165, %v251, %v275
  %v292 = vsel %vm166, %v252, %v290
  %v293 = vld [vmem:[#allocation4] sm:$0x3]
  %295 = vrot.lane.b32.xlu0 %v293, 64
  %v296 = vpop.permute.xlu0 %295
  %v298 = vmul.f32 %v291, %v296
  %v299 = vmul.f32 %v291, %v292
  %301 = vrot.lane.b32.xlu0 %v299, 64
  %v302 = vpop.permute.xlu0 %301
  %v304 = vadd.f32 %v298, %v302
  %v305 = vtanh.pop %v304
  %v306 = vmul.f32 %v292, %v305
  %308 = vrot.lane.b32.xlu0 %v304, 64
  %v309 = vpop.permute.xlu0 %308
  %311 = vst.msk [vmem:[#allocation4] sm:$0x3] %vm155, %v309
  %313 = vrot.lane.b32.xlu0 %v306, 64
  %v314 = vpop.permute.xlu0 %313
  %316 = vst.msk [vmem:[#allocation3] sm:$0x3] %vm155, %v314
  %317 = vst.msk [vmem:[%s4] sm:$0x3] %vm155, %v314
  %v318 = vld [vmem:[#allocation2] sm:$0xc]
  %v319 = vld [vmem:[#allocation2 + $0x8] sm:$0xc]
  %v320 = vld [vmem:[#allocation3] sm:$0x3]
  %v321 = vpack.c.bf16 %v320, %v320
  %v322 = vld [vmem:[%s2] sm:$0xff]
  %v323 = vld [vmem:[%s2 + $0x8] sm:$0xff]
  %v324 = vld [vmem:[%s2 + $0x10] sm:$0xff]
  %v325 = vld [vmem:[%s2 + $0x18] sm:$0xff]
  %v326 = vld [vmem:[%s2 + $0x20] sm:$0xff]
  %v327 = vld [vmem:[%s2 + $0x28] sm:$0xff]
  %v328 = vld [vmem:[%s2 + $0x30] sm:$0xff]
  %v329 = vld [vmem:[%s2 + $0x38] sm:$0xff]
  %v338 = vunpack.c.l.b16 %v322
  %v339 = vunpack.c.h.b16 %v322
  %v340 = vunpack.c.l.b16 %v323
  %v341 = vunpack.c.h.b16 %v323
  %v342 = vunpack.c.l.b16 %v324
  %v343 = vunpack.c.h.b16 %v324
  %v344 = vunpack.c.l.b16 %v325
  %v345 = vunpack.c.h.b16 %v325
  %v346 = vunpack.c.l.b16 %v326
  %v347 = vunpack.c.h.b16 %v326
  %v348 = vunpack.c.l.b16 %v327
  %v349 = vunpack.c.h.b16 %v327
  %v350 = vunpack.c.l.b16 %v328
  %v351 = vunpack.c.h.b16 %v328
  %v352 = vunpack.c.l.b16 %v329
  %v353 = vunpack.c.h.b16 %v329
  %v354 = vpack.c.b16 %v340, %v338
  %v355 = vpack.c.b16 %v341, %v339
  %v356 = vpack.c.b16 %v344, %v342
  %v357 = vpack.c.b16 %v345, %v343
  %v358 = vpack.c.b16 %v348, %v346
  %v359 = vpack.c.b16 %v349, %v347
  %v360 = vpack.c.b16 %v352, %v350
  %v361 = vpack.c.b16 %v353, %v351
  %v371 = vsel %vm219, %v321, 0
  %373 = vmatpush.bf16.msra.mxu0 0
  %374 = vmatpush.bf16.msra.mxu0 0
  %375 = vmatpush.bf16.msra.mxu0 0
  %376 = vmatpush.bf16.msra.mxu0 0
  %377 = vmatpush.bf16.msra.mxu0 %v360
  %378 = vmatpush.bf16.msra.mxu0 %v358
  %379 = vmatpush.bf16.msra.mxu0 %v356
  %380 = vmatpush.bf16.msra.mxu0 %v354
  %381 = vmatmul.bf16.gmra.mxu0 %v371
  %v382 = vpop.f32.mrf.mxu0
  %v383 = vadd.f32 0.0, %v382
  %v384 = vpop.f32.mrf.mxu0
  %385 = vdwg.mxu0
  %386 = vmatpush.bf16.msra.mxu0 0
  %387 = vmatpush.bf16.msra.mxu0 0
  %388 = vmatpush.bf16.msra.mxu0 0
  %389 = vmatpush.bf16.msra.mxu0 0
  %390 = vmatpush.bf16.msra.mxu0 %v361
  %391 = vmatpush.bf16.msra.mxu0 %v359
  %392 = vmatpush.bf16.msra.mxu0 %v357
  %393 = vmatpush.bf16.msra.mxu0 %v355
  %394 = vmatmul.bf16.gmra.mxu0 %v371
  %v395 = vpop.f32.mrf.mxu0
  %v396 = vadd.f32 0.0, %v395
  %v397 = vpop.f32.mrf.mxu0
  %398 = vdwg.mxu0
  %v401 = vrot.slane %v383, 6
  %v402 = vrot.slane %v396, 6
  %v405 = vadd.f32 %v318, %v401
  %v406 = vadd.f32 %v319, %v402
  %v407 = vtanh.pop %v405
  %v408 = vtanh.pop %v406
  %v409 = vxor.u32 %v405, 2147483648
  %v410 = vxor.u32 %v406, 2147483648
  %v411 = vmul.f32 %v409, 1.442695
  %v412 = vpow.pop %v411
  %v413 = vmul.f32 %v410, 1.442695
  %v414 = vpow.pop %v413
  %v415 = vadd.f32 %v412, 1.0
  %v416 = vadd.f32 %v414, 1.0
  %v417 = vrcp.pop %v415
  %v418 = vmul.f32 %v415, %v417
  %v419 = vsub.f32 1.0, %v418
  %v420 = vmul.f32 %v417, %v419
  %v421 = vadd.f32 %v417, %v420
  %vm422 = vweird.f32 %v415
  %vm423 = vweird.f32 %v417
  %vm424 = vmor %vm422, %vm423
  %v425 = vsel %vm424, %v417, %v421
  %v426 = vand.u32 2147483647, %v415
  %vm427 = vcmp.eq.f32.partialorder %v426, 8.507059e+37
  %v428 = vand.u32 %v415, 2147483648
  %v429 = vor.u32 1.1754944e-38, %v428
  %v430 = vsel %vm427, %v429, %v425
  %v431 = vmul.f32 1.0, %v430
  %v432 = vrcp.pop %v416
  %v433 = vmul.f32 %v416, %v432
  %v434 = vsub.f32 1.0, %v433
  %v435 = vmul.f32 %v432, %v434
  %v436 = vadd.f32 %v432, %v435
  %vm437 = vweird.f32 %v416
  %vm438 = vweird.f32 %v432
  %vm439 = vmor %vm437, %vm438
  %v440 = vsel %vm439, %v432, %v436
  %v441 = vand.u32 2147483647, %v416
  %vm442 = vcmp.eq.f32.partialorder %v441, 8.507059e+37
  %v443 = vand.u32 %v416, 2147483648
  %v444 = vor.u32 1.1754944e-38, %v443
  %v445 = vsel %vm442, %v444, %v440
  %v446 = vmul.f32 1.0, %v445
  %v447 = vsel %vm165, %v407, %v431
  %v448 = vsel %vm166, %v408, %v446
  %v449 = vld [vmem:[#allocation4] sm:$0x3]
  %v451 = vrot.slane %v449, 6
  %452 = vrot.lane.b32.xlu0 %v451, 64
  %v453 = vpop.permute.xlu0 %452
  %v455 = vmul.f32 %v447, %v453
  %v456 = vmul.f32 %v447, %v448
  %458 = vrot.lane.b32.xlu0 %v456, 64
  %v459 = vpop.permute.xlu0 %458
  %v461 = vadd.f32 %v455, %v459
  %v462 = vtanh.pop %v461
  %v463 = vmul.f32 %v448, %v462
  %465 = vrot.lane.b32.xlu0 %v461, 64
  %v466 = vpop.permute.xlu0 %465
  %vm468 = vcmask 519170
  %469 = vst.msk [vmem:[#allocation4 - $0x2] sm:$0xc] %vm468, %v466
  %471 = vrot.lane.b32.xlu0 %v463, 64
  %v472 = vpop.permute.xlu0 %471
  %474 = vst.msk [vmem:[#allocation3 - $0x2] sm:$0xc] %vm468, %v472
  %s475 = scalar_lea.vmem %s4, 2
  %476 = vst.msk [vmem:[%s475 - $0x2] sm:$0xc] %vm468, %v472
  %v477 = vld [vmem:[#allocation2] sm:$0x30]
  %v478 = vld [vmem:[#allocation2 + $0x8] sm:$0x30]
  %v479 = vld [vmem:[#allocation3] sm:$0x3]
  %v480 = vpack.c.bf16 %v479, %v479
  %v481 = vld [vmem:[%s2] sm:$0xff]
  %v482 = vld [vmem:[%s2 + $0x8] sm:$0xff]
  %v483 = vld [vmem:[%s2 + $0x10] sm:$0xff]
  %v484 = vld [vmem:[%s2 + $0x18] sm:$0xff]
  %v485 = vld [vmem:[%s2 + $0x20] sm:$0xff]
  %v486 = vld [vmem:[%s2 + $0x28] sm:$0xff]
  %v487 = vld [vmem:[%s2 + $0x30] sm:$0xff]
  %v488 = vld [vmem:[%s2 + $0x38] sm:$0xff]
  %v497 = vunpack.c.l.b16 %v481
  %v498 = vunpack.c.h.b16 %v481
  %v499 = vunpack.c.l.b16 %v482
  %v500 = vunpack.c.h.b16 %v482
  %v501 = vunpack.c.l.b16 %v483
  %v502 = vunpack.c.h.b16 %v483
  %v503 = vunpack.c.l.b16 %v484
  %v504 = vunpack.c.h.b16 %v484
  %v505 = vunpack.c.l.b16 %v485
  %v506 = vunpack.c.h.b16 %v485
  %v507 = vunpack.c.l.b16 %v486
  %v508 = vunpack.c.h.b16 %v486
  %v509 = vunpack.c.l.b16 %v487
  %v510 = vunpack.c.h.b16 %v487
  %v511 = vunpack.c.l.b16 %v488
  %v512 = vunpack.c.h.b16 %v488
  %v513 = vpack.c.b16 %v499, %v497
  %v514 = vpack.c.b16 %v500, %v498
  %v515 = vpack.c.b16 %v503, %v501
  %v516 = vpack.c.b16 %v504, %v502
  %v517 = vpack.c.b16 %v507, %v505
  %v518 = vpack.c.b16 %v508, %v506
  %v519 = vpack.c.b16 %v511, %v509
  %v520 = vpack.c.b16 %v512, %v510
  %v530 = vsel %vm219, %v480, 0
  %532 = vmatpush.bf16.msra.mxu0 0
  %533 = vmatpush.bf16.msra.mxu0 0
  %534 = vmatpush.bf16.msra.mxu0 0
  %535 = vmatpush.bf16.msra.mxu0 0
  %536 = vmatpush.bf16.msra.mxu0 %v519
  %537 = vmatpush.bf16.msra.mxu0 %v517
  %538 = vmatpush.bf16.msra.mxu0 %v515
  %539 = vmatpush.bf16.msra.mxu0 %v513
  %540 = vmatmul.bf16.gmra.mxu0 %v530
  %v541 = vpop.f32.mrf.mxu0
  %v542 = vadd.f32 0.0, %v541
  %v543 = vpop.f32.mrf.mxu0
  %544 = vdwg.mxu0
  %545 = vmatpush.bf16.msra.mxu0 0
  %546 = vmatpush.bf16.msra.mxu0 0
  %547 = vmatpush.bf16.msra.mxu0 0
  %548 = vmatpush.bf16.msra.mxu0 0
  %549 = vmatpush.bf16.msra.mxu0 %v520
  %550 = vmatpush.bf16.msra.mxu0 %v518
  %551 = vmatpush.bf16.msra.mxu0 %v516
  %552 = vmatpush.bf16.msra.mxu0 %v514
  %553 = vmatmul.bf16.gmra.mxu0 %v530
  %v554 = vpop.f32.mrf.mxu0
  %v555 = vadd.f32 0.0, %v554
  %v556 = vpop.f32.mrf.mxu0
  %557 = vdwg.mxu0
  %v560 = vrot.slane %v542, 4
  %v561 = vrot.slane %v555, 4
  %v564 = vadd.f32 %v477, %v560
  %v565 = vadd.f32 %v478, %v561
  %v566 = vtanh.pop %v564
  %v567 = vtanh.pop %v565
  %v568 = vxor.u32 %v564, 2147483648
  %v569 = vxor.u32 %v565, 2147483648
  %v570 = vmul.f32 %v568, 1.442695
  %v571 = vpow.pop %v570
  %v572 = vmul.f32 %v569, 1.442695
  %v573 = vpow.pop %v572
  %v574 = vadd.f32 %v571, 1.0
  %v575 = vadd.f32 %v573, 1.0
  %v576 = vrcp.pop %v574
  %v577 = vmul.f32 %v574, %v576
  %v578 = vsub.f32 1.0, %v577
  %v579 = vmul.f32 %v576, %v578
  %v580 = vadd.f32 %v576, %v579
  %vm581 = vweird.f32 %v574
  %vm582 = vweird.f32 %v576
  %vm583 = vmor %vm581, %vm582
  %v584 = vsel %vm583, %v576, %v580
  %v585 = vand.u32 2147483647, %v574
  %vm586 = vcmp.eq.f32.partialorder %v585, 8.507059e+37
  %v587 = vand.u32 %v574, 2147483648
  %v588 = vor.u32 1.1754944e-38, %v587
  %v589 = vsel %vm586, %v588, %v584
  %v590 = vmul.f32 1.0, %v589
  %v591 = vrcp.pop %v575
  %v592 = vmul.f32 %v575, %v591
  %v593 = vsub.f32 1.0, %v592
  %v594 = vmul.f32 %v591, %v593
  %v595 = vadd.f32 %v591, %v594
  %vm596 = vweird.f32 %v575
  %vm597 = vweird.f32 %v591
  %vm598 = vmor %vm596, %vm597
  %v599 = vsel %vm598, %v591, %v595
  %v600 = vand.u32 2147483647, %v575
  %vm601 = vcmp.eq.f32.partialorder %v600, 8.507059e+37
  %v602 = vand.u32 %v575, 2147483648
  %v603 = vor.u32 1.1754944e-38, %v602
  %v604 = vsel %vm601, %v603, %v599
  %v605 = vmul.f32 1.0, %v604
  %v606 = vsel %vm165, %v566, %v590
  %v607 = vsel %vm166, %v567, %v605
  %v608 = vld [vmem:[#allocation4] sm:$0x3]
  %v610 = vrot.slane %v608, 4
  %611 = vrot.lane.b32.xlu0 %v610, 64
  %v612 = vpop.permute.xlu0 %611
  %v614 = vmul.f32 %v606, %v612
  %v615 = vmul.f32 %v606, %v607
  %617 = vrot.lane.b32.xlu0 %v615, 64
  %v618 = vpop.permute.xlu0 %617
  %v620 = vadd.f32 %v614, %v618
  %v621 = vtanh.pop %v620
  %v622 = vmul.f32 %v607, %v621
  %624 = vrot.lane.b32.xlu0 %v620, 64
  %v625 = vpop.permute.xlu0 %624
  %vm627 = vcmask 521220
  %628 = vst.msk [vmem:[#allocation4 - $0x4] sm:$0x30] %vm627, %v625
  %630 = vrot.lane.b32.xlu0 %v622, 64
  %v631 = vpop.permute.xlu0 %630
  %633 = vst.msk [vmem:[#allocation3 - $0x4] sm:$0x30] %vm627, %v631
  %s634 = scalar_lea.vmem %s4, 4
  %635 = vst.msk [vmem:[%s634 - $0x4] sm:$0x30] %vm627, %v631
  %v636 = vld [vmem:[#allocation2] sm:$0xc0]
  %v637 = vld [vmem:[#allocation2 + $0x8] sm:$0xc0]
  %v638 = vld [vmem:[#allocation3] sm:$0x3]
  %v639 = vpack.c.bf16 %v638, %v638
  %v640 = vld [vmem:[%s2] sm:$0xff]
  %v641 = vld [vmem:[%s2 + $0x8] sm:$0xff]
  %v642 = vld [vmem:[%s2 + $0x10] sm:$0xff]
  %v643 = vld [vmem:[%s2 + $0x18] sm:$0xff]
  %v644 = vld [vmem:[%s2 + $0x20] sm:$0xff]
  %v645 = vld [vmem:[%s2 + $0x28] sm:$0xff]
  %v646 = vld [vmem:[%s2 + $0x30] sm:$0xff]
  %v647 = vld [vmem:[%s2 + $0x38] sm:$0xff]
  %v656 = vunpack.c.l.b16 %v640
  %v657 = vunpack.c.h.b16 %v640
  %v658 = vunpack.c.l.b16 %v641
  %v659 = vunpack.c.h.b16 %v641
  %v660 = vunpack.c.l.b16 %v642
  %v661 = vunpack.c.h.b16 %v642
  %v662 = vunpack.c.l.b16 %v643
  %v663 = vunpack.c.h.b16 %v643
  %v664 = vunpack.c.l.b16 %v644
  %v665 = vunpack.c.h.b16 %v644
  %v666 = vunpack.c.l.b16 %v645
  %v667 = vunpack.c.h.b16 %v645
  %v668 = vunpack.c.l.b16 %v646
  %v669 = vunpack.c.h.b16 %v646
  %v670 = vunpack.c.l.b16 %v647
  %v671 = vunpack.c.h.b16 %v647
  %v672 = vpack.c.b16 %v658, %v656
  %v673 = vpack.c.b16 %v659, %v657
  %v674 = vpack.c.b16 %v662, %v660
  %v675 = vpack.c.b16 %v663, %v661
  %v676 = vpack.c.b16 %v666, %v664
  %v677 = vpack.c.b16 %v667, %v665
  %v678 = vpack.c.b16 %v670, %v668
  %v679 = vpack.c.b16 %v671, %v669
  %v689 = vsel %vm219, %v639, 0
  %691 = vmatpush.bf16.msra.mxu0 0
  %692 = vmatpush.bf16.msra.mxu0 0
  %693 = vmatpush.bf16.msra.mxu0 0
  %694 = vmatpush.bf16.msra.mxu0 0
  %695 = vmatpush.bf16.msra.mxu0 %v678
  %696 = vmatpush.bf16.msra.mxu0 %v676
  %697 = vmatpush.bf16.msra.mxu0 %v674
  %698 = vmatpush.bf16.msra.mxu0 %v672
  %699 = vmatmul.bf16.gmra.mxu0 %v689
  %v700 = vpop.f32.mrf.mxu0
  %v701 = vadd.f32 0.0, %v700
  %v702 = vpop.f32.mrf.mxu0
  %703 = vdwg.mxu0
  %704 = vmatpush.bf16.msra.mxu0 0
  %705 = vmatpush.bf16.msra.mxu0 0
  %706 = vmatpush.bf16.msra.mxu0 0
  %707 = vmatpush.bf16.msra.mxu0 0
  %708 = vmatpush.bf16.msra.mxu0 %v679
  %709 = vmatpush.bf16.msra.mxu0 %v677
  %710 = vmatpush.bf16.msra.mxu0 %v675
  %711 = vmatpush.bf16.msra.mxu0 %v673
  %712 = vmatmul.bf16.gmra.mxu0 %v689
  %v713 = vpop.f32.mrf.mxu0
  %v714 = vadd.f32 0.0, %v713
  %v715 = vpop.f32.mrf.mxu0
  %716 = vdwg.mxu0
  %v719 = vrot.slane %v701, 2
  %v720 = vrot.slane %v714, 2
  %v723 = vadd.f32 %v636, %v719
  %v724 = vadd.f32 %v637, %v720
  %v725 = vtanh.pop %v723
  %v726 = vtanh.pop %v724
  %v727 = vxor.u32 %v723, 2147483648
  %v728 = vxor.u32 %v724, 2147483648
  %v729 = vmul.f32 %v727, 1.442695
  %v730 = vpow.pop %v729
  %v731 = vmul.f32 %v728, 1.442695
  %v732 = vpow.pop %v731
  %v733 = vadd.f32 %v730, 1.0
  %v734 = vadd.f32 %v732, 1.0
  %v735 = vrcp.pop %v733
  %v736 = vmul.f32 %v733, %v735
  %v737 = vsub.f32 1.0, %v736
  %v738 = vmul.f32 %v735, %v737
  %v739 = vadd.f32 %v735, %v738
  %vm740 = vweird.f32 %v733
  %vm741 = vweird.f32 %v735
  %vm742 = vmor %vm740, %vm741
  %v743 = vsel %vm742, %v735, %v739
  %v744 = vand.u32 2147483647, %v733
  %vm745 = vcmp.eq.f32.partialorder %v744, 8.507059e+37
  %v746 = vand.u32 %v733, 2147483648
  %v747 = vor.u32 1.1754944e-38, %v746
  %v748 = vsel %vm745, %v747, %v743
  %v749 = vmul.f32 1.0, %v748
  %v750 = vrcp.pop %v734
  %v751 = vmul.f32 %v734, %v750
  %v752 = vsub.f32 1.0, %v751
  %v753 = vmul.f32 %v750, %v752
  %v754 = vadd.f32 %v750, %v753
  %vm755 = vweird.f32 %v734
  %vm756 = vweird.f32 %v750
  %vm757 = vmor %vm755, %vm756
  %v758 = vsel %vm757, %v750, %v754
  %v759 = vand.u32 2147483647, %v734
  %vm760 = vcmp.eq.f32.partialorder %v759, 8.507059e+37
  %v761 = vand.u32 %v734, 2147483648
  %v762 = vor.u32 1.1754944e-38, %v761
  %v763 = vsel %vm760, %v762, %v758
  %v764 = vmul.f32 1.0, %v763
  %v765 = vsel %vm165, %v725, %v749
  %v766 = vsel %vm166, %v726, %v764
  %v767 = vld [vmem:[#allocation4] sm:$0x3]
  %v769 = vrot.slane %v767, 2
  %770 = vrot.lane.b32.xlu0 %v769, 64
  %v771 = vpop.permute.xlu0 %770
  %v773 = vmul.f32 %v765, %v771
  %v774 = vmul.f32 %v765, %v766
  %776 = vrot.lane.b32.xlu0 %v774, 64
  %v777 = vpop.permute.xlu0 %776
  %v779 = vadd.f32 %v773, %v777
  %v780 = vtanh.pop %v779
  %v781 = vmul.f32 %v766, %v780
  %783 = vrot.lane.b32.xlu0 %v779, 64
  %v784 = vpop.permute.xlu0 %783
  %vm786 = vcmask 523270
  %787 = vst.msk [vmem:[#allocation4 - $0x6] sm:$0xc0] %vm786, %v784
  %789 = vrot.lane.b32.xlu0 %v781, 64
  %v790 = vpop.permute.xlu0 %789
  %792 = vst.msk [vmem:[#allocation3 - $0x6] sm:$0xc0] %vm786, %v790
  %s793 = scalar_lea.vmem %s4, 6
  %794 = vst.msk [vmem:[%s793 - $0x6] sm:$0xc0] %vm786, %v790
  %v795 = vld [vmem:[#allocation2 + $0x10] sm:$0x3]
  %v796 = vld [vmem:[#allocation2 + $0x18] sm:$0x3]
  %v797 = vld [vmem:[#allocation3] sm:$0x3]
  %v798 = vpack.c.bf16 %v797, %v797
  %v799 = vld [vmem:[%s2] sm:$0xff]
  %v800 = vld [vmem:[%s2 + $0x8] sm:$0xff]
  %v801 = vld [vmem:[%s2 + $0x10] sm:$0xff]
  %v802 = vld [vmem:[%s2 + $0x18] sm:$0xff]
  %v803 = vld [vmem:[%s2 + $0x20] sm:$0xff]
  %v804 = vld [vmem:[%s2 + $0x28] sm:$0xff]
  %v805 = vld [vmem:[%s2 + $0x30] sm:$0xff]
  %v806 = vld [vmem:[%s2 + $0x38] sm:$0xff]
  %v815 = vunpack.c.l.b16 %v799
  %v816 = vunpack.c.h.b16 %v799
  %v817 = vunpack.c.l.b16 %v800
  %v818 = vunpack.c.h.b16 %v800
  %v819 = vunpack.c.l.b16 %v801
  %v820 = vunpack.c.h.b16 %v801
  %v821 = vunpack.c.l.b16 %v802
  %v822 = vunpack.c.h.b16 %v802
  %v823 = vunpack.c.l.b16 %v803
  %v824 = vunpack.c.h.b16 %v803
  %v825 = vunpack.c.l.b16 %v804
  %v826 = vunpack.c.h.b16 %v804
  %v827 = vunpack.c.l.b16 %v805
  %v828 = vunpack.c.h.b16 %v805
  %v829 = vunpack.c.l.b16 %v806
  %v830 = vunpack.c.h.b16 %v806
  %v831 = vpack.c.b16 %v817, %v815
  %v832 = vpack.c.b16 %v818, %v816
  %v833 = vpack.c.b16 %v821, %v819
  %v834 = vpack.c.b16 %v822, %v820
  %v835 = vpack.c.b16 %v825, %v823
  %v836 = vpack.c.b16 %v826, %v824
  %v837 = vpack.c.b16 %v829, %v827
  %v838 = vpack.c.b16 %v830, %v828
  %v848 = vsel %vm219, %v798, 0
  %850 = vmatpush.bf16.msra.mxu0 0
  %851 = vmatpush.bf16.msra.mxu0 0
  %852 = vmatpush.bf16.msra.mxu0 0
  %853 = vmatpush.bf16.msra.mxu0 0
  %854 = vmatpush.bf16.msra.mxu0 %v837
  %855 = vmatpush.bf16.msra.mxu0 %v835
  %856 = vmatpush.bf16.msra.mxu0 %v833
  %857 = vmatpush.bf16.msra.mxu0 %v831
  %858 = vmatmul.bf16.gmra.mxu0 %v848
  %v859 = vpop.f32.mrf.mxu0
  %v860 = vadd.f32 0.0, %v859
  %v861 = vpop.f32.mrf.mxu0
  %862 = vdwg.mxu0
  %863 = vmatpush.bf16.msra.mxu0 0
  %864 = vmatpush.bf16.msra.mxu0 0
  %865 = vmatpush.bf16.msra.mxu0 0
  %866 = vmatpush.bf16.msra.mxu0 0
  %867 = vmatpush.bf16.msra.mxu0 %v838
  %868 = vmatpush.bf16.msra.mxu0 %v836
  %869 = vmatpush.bf16.msra.mxu0 %v834
  %870 = vmatpush.bf16.msra.mxu0 %v832
  %871 = vmatmul.bf16.gmra.mxu0 %v848
  %v872 = vpop.f32.mrf.mxu0
  %v873 = vadd.f32 0.0, %v872
  %v874 = vpop.f32.mrf.mxu0
  %875 = vdwg.mxu0
  %v876 = vadd.f32 %v795, %v860
  %v877 = vadd.f32 %v796, %v873
  %v878 = vtanh.pop %v876
  %v879 = vtanh.pop %v877
  %v880 = vxor.u32 %v876, 2147483648
  %v881 = vxor.u32 %v877, 2147483648
  %v882 = vmul.f32 %v880, 1.442695
  %v883 = vpow.pop %v882
  %v884 = vmul.f32 %v881, 1.442695
  %v885 = vpow.pop %v884
  %v886 = vadd.f32 %v883, 1.0
  %v887 = vadd.f32 %v885, 1.0
  %v888 = vrcp.pop %v886
  %v889 = vmul.f32 %v886, %v888
  %v890 = vsub.f32 1.0, %v889
  %v891 = vmul.f32 %v888, %v890
  %v892 = vadd.f32 %v888, %v891
  %vm893 = vweird.f32 %v886
  %vm894 = vweird.f32 %v888
  %vm895 = vmor %vm893, %vm894
  %v896 = vsel %vm895, %v888, %v892
  %v897 = vand.u32 2147483647, %v886
  %vm898 = vcmp.eq.f32.partialorder %v897, 8.507059e+37
  %v899 = vand.u32 %v886, 2147483648
  %v900 = vor.u32 1.1754944e-38, %v899
  %v901 = vsel %vm898, %v900, %v896
  %v902 = vmul.f32 1.0, %v901
  %v903 = vrcp.pop %v887
  %v904 = vmul.f32 %v887, %v903
  %v905 = vsub.f32 1.0, %v904
  %v906 = vmul.f32 %v903, %v905
  %v907 = vadd.f32 %v903, %v906
  %vm908 = vweird.f32 %v887
  %vm909 = vweird.f32 %v903
  %vm910 = vmor %vm908, %vm909
  %v911 = vsel %vm910, %v903, %v907
  %v912 = vand.u32 2147483647, %v887
  %vm913 = vcmp.eq.f32.partialorder %v912, 8.507059e+37
  %v914 = vand.u32 %v887, 2147483648
  %v915 = vor.u32 1.1754944e-38, %v914
  %v916 = vsel %vm913, %v915, %v911
  %v917 = vmul.f32 1.0, %v916
  %v918 = vsel %vm165, %v878, %v902
  %v919 = vsel %vm166, %v879, %v917
  %v920 = vld [vmem:[#allocation4] sm:$0x3]
  %922 = vrot.lane.b32.xlu0 %v920, 64
  %v923 = vpop.permute.xlu0 %922
  %v925 = vmul.f32 %v918, %v923
  %v926 = vmul.f32 %v918, %v919
  %928 = vrot.lane.b32.xlu0 %v926, 64
  %v929 = vpop.permute.xlu0 %928
  %v931 = vadd.f32 %v925, %v929
  %v932 = vtanh.pop %v931
  %v933 = vmul.f32 %v919, %v932
  %935 = vrot.lane.b32.xlu0 %v931, 64
  %v936 = vpop.permute.xlu0 %935
  %938 = vst.msk [vmem:[#allocation4] sm:$0x3] %vm155, %v936
  %940 = vrot.lane.b32.xlu0 %v933, 64
  %v941 = vpop.permute.xlu0 %940
  %943 = vst.msk [vmem:[#allocation3] sm:$0x3] %vm155, %v941
  %s944 = scalar_lea.vmem %s4, 8
  %945 = vst.msk [vmem:[%s944] sm:$0x3] %vm155, %v941
  %v946 = vld [vmem:[#allocation2 + $0x10] sm:$0xc]
  %v947 = vld [vmem:[#allocation2 + $0x18] sm:$0xc]
  %v948 = vld [vmem:[#allocation3] sm:$0x3]
  %v949 = vpack.c.bf16 %v948, %v948
  %v950 = vld [vmem:[%s2] sm:$0xff]
  %v951 = vld [vmem:[%s2 + $0x8] sm:$0xff]
  %v952 = vld [vmem:[%s2 + $0x10] sm:$0xff]
  %v953 = vld [vmem:[%s2 + $0x18] sm:$0xff]
  %v954 = vld [vmem:[%s2 + $0x20] sm:$0xff]
  %v955 = vld [vmem:[%s2 + $0x28] sm:$0xff]
  %v956 = vld [vmem:[%s2 + $0x30] sm:$0xff]
  %v957 = vld [vmem:[%s2 + $0x38] sm:$0xff]
  %v966 = vunpack.c.l.b16 %v950
  %v967 = vunpack.c.h.b16 %v950
  %v968 = vunpack.c.l.b16 %v951
  %v969 = vunpack.c.h.b16 %v951
  %v970 = vunpack.c.l.b16 %v952
  %v971 = vunpack.c.h.b16 %v952
  %v972 = vunpack.c.l.b16 %v953
  %v973 = vunpack.c.h.b16 %v953
  %v974 = vunpack.c.l.b16 %v954
  %v975 = vunpack.c.h.b16 %v954
  %v976 = vunpack.c.l.b16 %v955
  %v977 = vunpack.c.h.b16 %v955
  %v978 = vunpack.c.l.b16 %v956
  %v979 = vunpack.c.h.b16 %v956
  %v980 = vunpack.c.l.b16 %v957
  %v981 = vunpack.c.h.b16 %v957
  %v982 = vpack.c.b16 %v968, %v966
  %v983 = vpack.c.b16 %v969, %v967
  %v984 = vpack.c.b16 %v972, %v970
  %v985 = vpack.c.b16 %v973, %v971
  %v986 = vpack.c.b16 %v976, %v974
  %v987 = vpack.c.b16 %v977, %v975
  %v988 = vpack.c.b16 %v980, %v978
  %v989 = vpack.c.b16 %v981, %v979
  %v999 = vsel %vm219, %v949, 0
  %1001 = vmatpush.bf16.msra.mxu0 0
  %1002 = vmatpush.bf16.msra.mxu0 0
  %1003 = vmatpush.bf16.msra.mxu0 0
  %1004 = vmatpush.bf16.msra.mxu0 0
  %1005 = vmatpush.bf16.msra.mxu0 %v988
  %1006 = vmatpush.bf16.msra.mxu0 %v986
  %1007 = vmatpush.bf16.msra.mxu0 %v984
  %1008 = vmatpush.bf16.msra.mxu0 %v982
  %1009 = vmatmul.bf16.gmra.mxu0 %v999
  %v1010 = vpop.f32.mrf.mxu0
  %v1011 = vadd.f32 0.0, %v1010
  %v1012 = vpop.f32.mrf.mxu0
  %1013 = vdwg.mxu0
  %1014 = vmatpush.bf16.msra.mxu0 0
  %1015 = vmatpush.bf16.msra.mxu0 0
  %1016 = vmatpush.bf16.msra.mxu0 0
  %1017 = vmatpush.bf16.msra.mxu0 0
  %1018 = vmatpush.bf16.msra.mxu0 %v989
  %1019 = vmatpush.bf16.msra.mxu0 %v987
  %1020 = vmatpush.bf16.msra.mxu0 %v985
  %1021 = vmatpush.bf16.msra.mxu0 %v983
  %1022 = vmatmul.bf16.gmra.mxu0 %v999
  %v1023 = vpop.f32.mrf.mxu0
  %v1024 = vadd.f32 0.0, %v1023
  %v1025 = vpop.f32.mrf.mxu0
  %1026 = vdwg.mxu0
  %v1029 = vrot.slane %v1011, 6
  %v1030 = vrot.slane %v1024, 6
  %v1033 = vadd.f32 %v946, %v1029
  %v1034 = vadd.f32 %v947, %v1030
  %v1035 = vtanh.pop %v1033
  %v1036 = vtanh.pop %v1034
  %v1037 = vxor.u32 %v1033, 2147483648
  %v1038 = vxor.u32 %v1034, 2147483648
  %v1039 = vmul.f32 %v1037, 1.442695
  %v1040 = vpow.pop %v1039
  %v1041 = vmul.f32 %v1038, 1.442695
  %v1042 = vpow.pop %v1041
  %v1043 = vadd.f32 %v1040, 1.0
  %v1044 = vadd.f32 %v1042, 1.0
  %v1045 = vrcp.pop %v1043
  %v1046 = vmul.f32 %v1043, %v1045
  %v1047 = vsub.f32 1.0, %v1046
  %v1048 = vmul.f32 %v1045, %v1047
  %v1049 = vadd.f32 %v1045, %v1048
  %vm1050 = vweird.f32 %v1043
  %vm1051 = vweird.f32 %v1045
  %vm1052 = vmor %vm1050, %vm1051
  %v1053 = vsel %vm1052, %v1045, %v1049
  %v1054 = vand.u32 2147483647, %v1043
  %vm1055 = vcmp.eq.f32.partialorder %v1054, 8.507059e+37
  %v1056 = vand.u32 %v1043, 2147483648
  %v1057 = vor.u32 1.1754944e-38, %v1056
  %v1058 = vsel %vm1055, %v1057, %v1053
  %v1059 = vmul.f32 1.0, %v1058
  %v1060 = vrcp.pop %v1044
  %v1061 = vmul.f32 %v1044, %v1060
  %v1062 = vsub.f32 1.0, %v1061
  %v1063 = vmul.f32 %v1060, %v1062
  %v1064 = vadd.f32 %v1060, %v1063
  %vm1065 = vweird.f32 %v1044
  %vm1066 = vweird.f32 %v1060
  %vm1067 = vmor %vm1065, %vm1066
  %v1068 = vsel %vm1067, %v1060, %v1064
  %v1069 = vand.u32 2147483647, %v1044
  %vm1070 = vcmp.eq.f32.partialorder %v1069, 8.507059e+37
  %v1071 = vand.u32 %v1044, 2147483648
  %v1072 = vor.u32 1.1754944e-38, %v1071
  %v1073 = vsel %vm1070, %v1072, %v1068
  %v1074 = vmul.f32 1.0, %v1073
  %v1075 = vsel %vm165, %v1035, %v1059
  %v1076 = vsel %vm166, %v1036, %v1074
  %v1077 = vld [vmem:[#allocation4] sm:$0x3]
  %v1079 = vrot.slane %v1077, 6
  %1080 = vrot.lane.b32.xlu0 %v1079, 64
  %v1081 = vpop.permute.xlu0 %1080
  %v1083 = vmul.f32 %v1075, %v1081
  %v1084 = vmul.f32 %v1075, %v1076
  %1086 = vrot.lane.b32.xlu0 %v1084, 64
  %v1087 = vpop.permute.xlu0 %1086
  %v1089 = vadd.f32 %v1083, %v1087
  %v1090 = vtanh.pop %v1089
  %v1091 = vmul.f32 %v1076, %v1090
  %1093 = vrot.lane.b32.xlu0 %v1089, 64
  %v1094 = vpop.permute.xlu0 %1093
  %1096 = vst.msk [vmem:[#allocation4 - $0x2] sm:$0xc] %vm468, %v1094
  %1098 = vrot.lane.b32.xlu0 %v1091, 64
  %v1099 = vpop.permute.xlu0 %1098
  %1101 = vst.msk [vmem:[#allocation3 - $0x2] sm:$0xc] %vm468, %v1099
  %s1102 = scalar_lea.vmem %s4, 10
  %1103 = vst.msk [vmem:[%s1102 - $0x2] sm:$0xc] %vm468, %v1099
  %v1104 = vld [vmem:[#allocation2 + $0x10] sm:$0x30]
  %v1105 = vld [vmem:[#allocation2 + $0x18] sm:$0x30]
  %v1106 = vld [vmem:[#allocation3] sm:$0x3]
  %v1107 = vpack.c.bf16 %v1106, %v1106
  %v1108 = vld [vmem:[%s2] sm:$0xff]
  %v1109 = vld [vmem:[%s2 + $0x8] sm:$0xff]
  %v1110 = vld [vmem:[%s2 + $0x10] sm:$0xff]
  %v1111 = vld [vmem:[%s2 + $0x18] sm:$0xff]
  %v1112 = vld [vmem:[%s2 + $0x20] sm:$0xff]
  %v1113 = vld [vmem:[%s2 + $0x28] sm:$0xff]
  %v1114 = vld [vmem:[%s2 + $0x30] sm:$0xff]
  %v1115 = vld [vmem:[%s2 + $0x38] sm:$0xff]
  %v1124 = vunpack.c.l.b16 %v1108
  %v1125 = vunpack.c.h.b16 %v1108
  %v1126 = vunpack.c.l.b16 %v1109
  %v1127 = vunpack.c.h.b16 %v1109
  %v1128 = vunpack.c.l.b16 %v1110
  %v1129 = vunpack.c.h.b16 %v1110
  %v1130 = vunpack.c.l.b16 %v1111
  %v1131 = vunpack.c.h.b16 %v1111
  %v1132 = vunpack.c.l.b16 %v1112
  %v1133 = vunpack.c.h.b16 %v1112
  %v1134 = vunpack.c.l.b16 %v1113
  %v1135 = vunpack.c.h.b16 %v1113
  %v1136 = vunpack.c.l.b16 %v1114
  %v1137 = vunpack.c.h.b16 %v1114
  %v1138 = vunpack.c.l.b16 %v1115
  %v1139 = vunpack.c.h.b16 %v1115
  %v1140 = vpack.c.b16 %v1126, %v1124
  %v1141 = vpack.c.b16 %v1127, %v1125
  %v1142 = vpack.c.b16 %v1130, %v1128
  %v1143 = vpack.c.b16 %v1131, %v1129
  %v1144 = vpack.c.b16 %v1134, %v1132
  %v1145 = vpack.c.b16 %v1135, %v1133
  %v1146 = vpack.c.b16 %v1138, %v1136
  %v1147 = vpack.c.b16 %v1139, %v1137
  %v1157 = vsel %vm219, %v1107, 0
  %1159 = vmatpush.bf16.msra.mxu0 0
  %1160 = vmatpush.bf16.msra.mxu0 0
  %1161 = vmatpush.bf16.msra.mxu0 0
  %1162 = vmatpush.bf16.msra.mxu0 0
  %1163 = vmatpush.bf16.msra.mxu0 %v1146
  %1164 = vmatpush.bf16.msra.mxu0 %v1144
  %1165 = vmatpush.bf16.msra.mxu0 %v1142
  %1166 = vmatpush.bf16.msra.mxu0 %v1140
  %1167 = vmatmul.bf16.gmra.mxu0 %v1157
  %v1168 = vpop.f32.mrf.mxu0
  %v1169 = vadd.f32 0.0, %v1168
  %v1170 = vpop.f32.mrf.mxu0
  %1171 = vdwg.mxu0
  %1172 = vmatpush.bf16.msra.mxu0 0
  %1173 = vmatpush.bf16.msra.mxu0 0
  %1174 = vmatpush.bf16.msra.mxu0 0
  %1175 = vmatpush.bf16.msra.mxu0 0
  %1176 = vmatpush.bf16.msra.mxu0 %v1147
  %1177 = vmatpush.bf16.msra.mxu0 %v1145
  %1178 = vmatpush.bf16.msra.mxu0 %v1143
  %1179 = vmatpush.bf16.msra.mxu0 %v1141
  %1180 = vmatmul.bf16.gmra.mxu0 %v1157
  %v1181 = vpop.f32.mrf.mxu0
  %v1182 = vadd.f32 0.0, %v1181
  %v1183 = vpop.f32.mrf.mxu0
  %1184 = vdwg.mxu0
  %v1187 = vrot.slane %v1169, 4
  %v1188 = vrot.slane %v1182, 4
  %v1191 = vadd.f32 %v1104, %v1187
  %v1192 = vadd.f32 %v1105, %v1188
  %v1193 = vtanh.pop %v1191
  %v1194 = vtanh.pop %v1192
  %v1195 = vxor.u32 %v1191, 2147483648
  %v1196 = vxor.u32 %v1192, 2147483648
  %v1197 = vmul.f32 %v1195, 1.442695
  %v1198 = vpow.pop %v1197
  %v1199 = vmul.f32 %v1196, 1.442695
  %v1200 = vpow.pop %v1199
  %v1201 = vadd.f32 %v1198, 1.0
  %v1202 = vadd.f32 %v1200, 1.0
  %v1203 = vrcp.pop %v1201
  %v1204 = vmul.f32 %v1201, %v1203
  %v1205 = vsub.f32 1.0, %v1204
  %v1206 = vmul.f32 %v1203, %v1205
  %v1207 = vadd.f32 %v1203, %v1206
  %vm1208 = vweird.f32 %v1201
  %vm1209 = vweird.f32 %v1203
  %vm1210 = vmor %vm1208, %vm1209
  %v1211 = vsel %vm1210, %v1203, %v1207
  %v1212 = vand.u32 2147483647, %v1201
  %vm1213 = vcmp.eq.f32.partialorder %v1212, 8.507059e+37
  %v1214 = vand.u32 %v1201, 2147483648
  %v1215 = vor.u32 1.1754944e-38, %v1214
  %v1216 = vsel %vm1213, %v1215, %v1211
  %v1217 = vmul.f32 1.0, %v1216
  %v1218 = vrcp.pop %v1202
  %v1219 = vmul.f32 %v1202, %v1218
  %v1220 = vsub.f32 1.0, %v1219
  %v1221 = vmul.f32 %v1218, %v1220
  %v1222 = vadd.f32 %v1218, %v1221
  %vm1223 = vweird.f32 %v1202
  %vm1224 = vweird.f32 %v1218
  %vm1225 = vmor %vm1223, %vm1224
  %v1226 = vsel %vm1225, %v1218, %v1222
  %v1227 = vand.u32 2147483647, %v1202
  %vm1228 = vcmp.eq.f32.partialorder %v1227, 8.507059e+37
  %v1229 = vand.u32 %v1202, 2147483648
  %v1230 = vor.u32 1.1754944e-38, %v1229
  %v1231 = vsel %vm1228, %v1230, %v1226
  %v1232 = vmul.f32 1.0, %v1231
  %v1233 = vsel %vm165, %v1193, %v1217
  %v1234 = vsel %vm166, %v1194, %v1232
  %v1235 = vld [vmem:[#allocation4] sm:$0x3]
  %v1237 = vrot.slane %v1235, 4
  %1238 = vrot.lane.b32.xlu0 %v1237, 64
  %v1239 = vpop.permute.xlu0 %1238
  %v1241 = vmul.f32 %v1233, %v1239
  %v1242 = vmul.f32 %v1233, %v1234
  %1244 = vrot.lane.b32.xlu0 %v1242, 64
  %v1245 = vpop.permute.xlu0 %1244
  %v1247 = vadd.f32 %v1241, %v1245
  %v1248 = vtanh.pop %v1247
  %v1249 = vmul.f32 %v1234, %v1248
  %1251 = vrot.lane.b32.xlu0 %v1247, 64
  %v1252 = vpop.permute.xlu0 %1251
  %1254 = vst.msk [vmem:[#allocation4 - $0x4] sm:$0x30] %vm627, %v1252
  %1256 = vrot.lane.b32.xlu0 %v1249, 64
  %v1257 = vpop.permute.xlu0 %1256
  %1259 = vst.msk [vmem:[#allocation3 - $0x4] sm:$0x30] %vm627, %v1257
  %s1260 = scalar_lea.vmem %s4, 12
  %1261 = vst.msk [vmem:[%s1260 - $0x4] sm:$0x30] %vm627, %v1257
  %v1262 = vld [vmem:[#allocation2 + $0x10] sm:$0xc0]
  %v1263 = vld [vmem:[#allocation2 + $0x18] sm:$0xc0]
  %v1264 = vld [vmem:[#allocation3] sm:$0x3]
  %v1265 = vpack.c.bf16 %v1264, %v1264
  %v1266 = vld [vmem:[%s2] sm:$0xff]
  %v1267 = vld [vmem:[%s2 + $0x8] sm:$0xff]
  %v1268 = vld [vmem:[%s2 + $0x10] sm:$0xff]
  %v1269 = vld [vmem:[%s2 + $0x18] sm:$0xff]
  %v1270 = vld [vmem:[%s2 + $0x20] sm:$0xff]
  %v1271 = vld [vmem:[%s2 + $0x28] sm:$0xff]
  %v1272 = vld [vmem:[%s2 + $0x30] sm:$0xff]
  %v1273 = vld [vmem:[%s2 + $0x38] sm:$0xff]
  %v1282 = vunpack.c.l.b16 %v1266
  %v1283 = vunpack.c.h.b16 %v1266
  %v1284 = vunpack.c.l.b16 %v1267
  %v1285 = vunpack.c.h.b16 %v1267
  %v1286 = vunpack.c.l.b16 %v1268
  %v1287 = vunpack.c.h.b16 %v1268
  %v1288 = vunpack.c.l.b16 %v1269
  %v1289 = vunpack.c.h.b16 %v1269
  %v1290 = vunpack.c.l.b16 %v1270
  %v1291 = vunpack.c.h.b16 %v1270
  %v1292 = vunpack.c.l.b16 %v1271
  %v1293 = vunpack.c.h.b16 %v1271
  %v1294 = vunpack.c.l.b16 %v1272
  %v1295 = vunpack.c.h.b16 %v1272
  %v1296 = vunpack.c.l.b16 %v1273
  %v1297 = vunpack.c.h.b16 %v1273
  %v1298 = vpack.c.b16 %v1284, %v1282
  %v1299 = vpack.c.b16 %v1285, %v1283
  %v1300 = vpack.c.b16 %v1288, %v1286
  %v1301 = vpack.c.b16 %v1289, %v1287
  %v1302 = vpack.c.b16 %v1292, %v1290
  %v1303 = vpack.c.b16 %v1293, %v1291
  %v1304 = vpack.c.b16 %v1296, %v1294
  %v1305 = vpack.c.b16 %v1297, %v1295
  %v1315 = vsel %vm219, %v1265, 0
  %1317 = vmatpush.bf16.msra.mxu0 0
  %1318 = vmatpush.bf16.msra.mxu0 0
  %1319 = vmatpush.bf16.msra.mxu0 0
  %1320 = vmatpush.bf16.msra.mxu0 0
  %1321 = vmatpush.bf16.msra.mxu0 %v1304
  %1322 = vmatpush.bf16.msra.mxu0 %v1302
  %1323 = vmatpush.bf16.msra.mxu0 %v1300
  %1324 = vmatpush.bf16.msra.mxu0 %v1298
  %1325 = vmatmul.bf16.gmra.mxu0 %v1315
  %v1326 = vpop.f32.mrf.mxu0
  %v1327 = vadd.f32 0.0, %v1326
  %v1328 = vpop.f32.mrf.mxu0
  %1329 = vdwg.mxu0
  %1330 = vmatpush.bf16.msra.mxu0 0
  %1331 = vmatpush.bf16.msra.mxu0 0
  %1332 = vmatpush.bf16.msra.mxu0 0
  %1333 = vmatpush.bf16.msra.mxu0 0
  %1334 = vmatpush.bf16.msra.mxu0 %v1305
  %1335 = vmatpush.bf16.msra.mxu0 %v1303
  %1336 = vmatpush.bf16.msra.mxu0 %v1301
  %1337 = vmatpush.bf16.msra.mxu0 %v1299
  %1338 = vmatmul.bf16.gmra.mxu0 %v1315
  %v1339 = vpop.f32.mrf.mxu0
  %v1340 = vadd.f32 0.0, %v1339
  %v1341 = vpop.f32.mrf.mxu0
  %1342 = vdwg.mxu0
  %v1345 = vrot.slane %v1327, 2
  %v1346 = vrot.slane %v1340, 2
  %v1349 = vadd.f32 %v1262, %v1345
  %v1350 = vadd.f32 %v1263, %v1346
  %v1351 = vtanh.pop %v1349
  %v1352 = vtanh.pop %v1350
  %v1353 = vxor.u32 %v1349, 2147483648
  %v1354 = vxor.u32 %v1350, 2147483648
  %v1355 = vmul.f32 %v1353, 1.442695
  %v1356 = vpow.pop %v1355
  %v1357 = vmul.f32 %v1354, 1.442695
  %v1358 = vpow.pop %v1357
  %v1359 = vadd.f32 %v1356, 1.0
  %v1360 = vadd.f32 %v1358, 1.0
  %v1361 = vrcp.pop %v1359
  %v1362 = vmul.f32 %v1359, %v1361
  %v1363 = vsub.f32 1.0, %v1362
  %v1364 = vmul.f32 %v1361, %v1363
  %v1365 = vadd.f32 %v1361, %v1364
  %vm1366 = vweird.f32 %v1359
  %vm1367 = vweird.f32 %v1361
  %vm1368 = vmor %vm1366, %vm1367
  %v1369 = vsel %vm1368, %v1361, %v1365
  %v1370 = vand.u32 2147483647, %v1359
  %vm1371 = vcmp.eq.f32.partialorder %v1370, 8.507059e+37
  %v1372 = vand.u32 %v1359, 2147483648
  %v1373 = vor.u32 1.1754944e-38, %v1372
  %v1374 = vsel %vm1371, %v1373, %v1369
  %v1375 = vmul.f32 1.0, %v1374
  %v1376 = vrcp.pop %v1360
  %v1377 = vmul.f32 %v1360, %v1376
  %v1378 = vsub.f32 1.0, %v1377
  %v1379 = vmul.f32 %v1376, %v1378
  %v1380 = vadd.f32 %v1376, %v1379
  %vm1381 = vweird.f32 %v1360
  %vm1382 = vweird.f32 %v1376
  %vm1383 = vmor %vm1381, %vm1382
  %v1384 = vsel %vm1383, %v1376, %v1380
  %v1385 = vand.u32 2147483647, %v1360
  %vm1386 = vcmp.eq.f32.partialorder %v1385, 8.507059e+37
  %v1387 = vand.u32 %v1360, 2147483648
  %v1388 = vor.u32 1.1754944e-38, %v1387
  %v1389 = vsel %vm1386, %v1388, %v1384
  %v1390 = vmul.f32 1.0, %v1389
  %v1391 = vsel %vm165, %v1351, %v1375
  %v1392 = vsel %vm166, %v1352, %v1390
  %v1393 = vld [vmem:[#allocation4] sm:$0x3]
  %v1395 = vrot.slane %v1393, 2
  %1396 = vrot.lane.b32.xlu0 %v1395, 64
  %v1397 = vpop.permute.xlu0 %1396
  %v1399 = vmul.f32 %v1391, %v1397
  %v1400 = vmul.f32 %v1391, %v1392
  %1402 = vrot.lane.b32.xlu0 %v1400, 64
  %v1403 = vpop.permute.xlu0 %1402
  %v1405 = vadd.f32 %v1399, %v1403
  %v1406 = vtanh.pop %v1405
  %v1407 = vmul.f32 %v1392, %v1406
  %1409 = vrot.lane.b32.xlu0 %v1405, 64
  %v1410 = vpop.permute.xlu0 %1409
  %1412 = vst.msk [vmem:[#allocation4 - $0x6] sm:$0xc0] %vm786, %v1410
  %1414 = vrot.lane.b32.xlu0 %v1407, 64
  %v1415 = vpop.permute.xlu0 %1414
  %1417 = vst.msk [vmem:[#allocation3 - $0x6] sm:$0xc0] %vm786, %v1415
  %s1418 = scalar_lea.vmem %s4, 14
  %1419 = vst.msk [vmem:[%s1418 - $0x6] sm:$0xc0] %vm786, %v1415
  // Predicated region
  $region18: #{bidaf_forward.12} parent=0 // pred_check
    _
  $region19: #{bidaf_forward.12} parent=0 // pred_check_branch
    %1421 = sbr.rel (0) target = $region21
  $region20: #{bidaf_forward.12} parent=0 // pred_region
    _
  $region21: #{bidaf_forward.12} parent=0 // pred_fallthru
    _
  // Predicated region
  $region22: #{bidaf_forward.12} parent=0 // pred_check
    _
  $region23: #{bidaf_forward.12} parent=0 // pred_check_branch
    %1423 = sbr.rel (0) target = $region25
  $region24: #{bidaf_forward.12} parent=0 // pred_region
    _
  $region25: #{bidaf_forward.12} parent=0 // pred_fallthru
    _

// kernel: bidaf_forward.13
$region0: #{bidaf_forward.13}
  #allocation0 [shape = 'u32[]', space=smem, size = 0x4, offset = 0x4, fixed_abs, tag = 'smem constant byte address 0x4 - core index']
  #allocation1 [shape = 'u32[72,128]{1,0:T(1,128)}', space=vmem, size = 0x9000, scoped, tag = 'internal scratch']
  #allocation2 [shape = 'f32[1,1]{1,0:T(1,128)S(1)}', space=vmem, size = 0x200, scoped, tag = 'scoped memory for bidaf_forward.13']
  %s0 = inlined_call_operand.vmem [shape: f32[2,16,64], index: 0, kind: input, shape index: {}]
  %s1 = inlined_call_operand.vmem [shape: f32[2,8,64], index: 1, kind: input, shape index: {}]
  %s2 = inlined_call_operand.vmem [shape: f32[1,64], index: 2, kind: input, shape index: {}]
  %s3 = inlined_call_operand.vmem [shape: f32[1,64], index: 3, kind: input, shape index: {}]
  %s4 = inlined_call_operand.vmem [shape: f32[1,64], index: 4, kind: input, shape index: {}]
  %s5 = inlined_call_operand.<no memory space> [shape: f32[1,1], index: 5, kind: input, shape index: {}]
  %s6 = inlined_call_operand.vmem [shape: f32[2,16,256], index: 6, kind: output, shape index: {}]
  %s7 = sld [smem:[#allocation0]]
  $region34: #{bidaf_forward.13} parent=0
    _
  %s9 = ssub.s32 1, %s7
  %s10 = scalar_select 0, %s9, %s7
  %v11 = vstv %s5
  %12 = vst [vmem:[#allocation2] sm:$0x1] %v11
  // Predicated region
  $region2: #{bidaf_forward.13} parent=0 // pred_check
    _
  $region3: #{bidaf_forward.13} parent=0 // pred_check_branch
    %14 = sbr.rel (0) target = $region5
  $region4: #{bidaf_forward.13} parent=0 // pred_region
    _
  $region5: #{bidaf_forward.13} parent=0 // pred_fallthru
    _
  // Predicated region
  $region6: #{bidaf_forward.13} parent=0 // pred_check
    _
  $region7: #{bidaf_forward.13} parent=0 // pred_check_branch
    %16 = sbr.rel (0) target = $region9
  $region8: #{bidaf_forward.13} parent=0 // pred_region
    _
  $region9: #{bidaf_forward.13} parent=0 // pred_fallthru
    _
  // Predicated region
  $region10: #{bidaf_forward.13} parent=0 // pred_check
    _
  $region11: #{bidaf_forward.13} parent=0 // pred_check_branch
    %18 = sbr.rel (0) target = $region13
  $region12: #{bidaf_forward.13} parent=0 // pred_region
    _
  $region13: #{bidaf_forward.13} parent=0 // pred_fallthru
    _
  // Predicated region
  $region14: #{bidaf_forward.13} parent=0 // pred_check
    _
  $region15: #{bidaf_forward.13} parent=0 // pred_check_branch
    %20 = sbr.rel (0) target = $region17
  $region16: #{bidaf_forward.13} parent=0 // pred_region
    _
  $region17: #{bidaf_forward.13} parent=0 // pred_fallthru
    _
  // Predicated region
  $region18: #{bidaf_forward.13} parent=0 // pred_check
    _
  $region19: #{bidaf_forward.13} parent=0 // pred_check_branch
    %22 = sbr.rel (0) target = $region21
  $region20: #{bidaf_forward.13} parent=0 // pred_region
    _
  $region21: #{bidaf_forward.13} parent=0 // pred_fallthru
    _
  // Predicated region
  $region22: #{bidaf_forward.13} parent=0 // pred_check
    _
  $region23: #{bidaf_forward.13} parent=0 // pred_check_branch
    %24 = sbr.rel (0) target = $region25
  $region24: #{bidaf_forward.13} parent=0 // pred_region
    _
  $region25: #{bidaf_forward.13} parent=0 // pred_fallthru
    _
  %v26 = vld [vmem:[%s0] sm:$0xff]
  %v27 = vld [vmem:[%s0 + $0x8] sm:$0xff]
  %v28 = vld [vmem:[%s0 + $0x10] sm:$0xff]
  %v29 = vld [vmem:[%s0 + $0x18] sm:$0xff]
  %v30 = vld [vmem:[%s1] sm:$0xff]
  %v31 = vld [vmem:[%s1 + $0x8] sm:$0xff]
  %v32 = vld [vmem:[%s2] sm:$0x1]
  %v34 = vperm.slane %v32, 0
  %v36 = vmul.f32 %v26, %v34
  %v37 = vmul.f32 %v27, %v34
  %v38 = vmul.f32 %v28, %v34
  %v39 = vmul.f32 %v29, %v34
  %vm40 = vcmask 523264
  %v41 = vsel %vm40, %v36, 0.0
  %42 = vadd.xlane.f32.xlu0 %v41
  %v43 = vpop.xlane.xlu0 %42
  %v44 = vsel %vm40, %v37, 0.0
  %45 = vadd.xlane.f32.xlu0 %v44
  %v46 = vpop.xlane.xlu0 %45
  %v47 = vsel %vm40, %v38, 0.0
  %48 = vadd.xlane.f32.xlu0 %v47
  %v49 = vpop.xlane.xlu0 %48
  %v50 = vsel %vm40, %v39, 0.0
  %51 = vadd.xlane.f32.xlu0 %v50
  %v52 = vpop.xlane.xlu0 %51
  %v53 = vld [vmem:[%s3] sm:$0x1]
  %v55 = vperm.slane %v53, 0
  %v57 = vmul.f32 %v30, %v55
  %v58 = vmul.f32 %v31, %v55
  %v59 = vsel %vm40, %v57, 0.0
  %60 = vadd.xlane.f32.xlu0 %v59
  %v61 = vpop.xlane.xlu0 %60
  %v62 = vsel %vm40, %v58, 0.0
  %63 = vadd.xlane.f32.xlu0 %v62
  %v64 = vpop.xlane.xlu0 %63
  %v65 = vld [vmem:[%s4] sm:$0x1]
  %v67 = vperm.slane %v65, 0
  %v69 = vmul.f32 %v26, %v67
  %v70 = vmul.f32 %v27, %v67
  %v71 = vmul.f32 %v28, %v67
  %v72 = vmul.f32 %v29, %v67
  %v73 = vpack.c.bf16 %v69, %v69
  %v74 = vpack.c.bf16 %v70, %v70
  %v75 = vpack.c.bf16 %v71, %v71
  %v76 = vpack.c.bf16 %v72, %v72
  %v77 = vpack.c.bf16 %v30, %v30
  %v78 = vpack.c.bf16 %v31, %v31
  %v81 = vunpack.c.l.b16 %v73
  %v82 = vunpack.c.l.b16 %v74
  %v83 = vpack.c.b16 %v82, %v81
  %v85 = vsel %vm40, %v83, 0
  %v88 = vsel %vm40, %v77, 0
  %90 = vmatpush.bf16.xpose.msra.mxu0 0
  %91 = vmatpush.bf16.xpose.msra.mxu0 0
  %92 = vmatpush.bf16.xpose.msra.mxu0 0
  %93 = vmatpush.bf16.xpose.msra.mxu0 0
  %94 = vmatpush.bf16.xpose.msra.mxu0 0
  %95 = vmatpush.bf16.xpose.msra.mxu0 0
  %96 = vmatpush.bf16.xpose.msra.mxu0 0
  %97 = vmatpush.bf16.xpose.msra.mxu0 %v88
  %98 = vmatmul.bf16.gmra.mxu0 %v85
  %v99 = vpop.f32.mrf.mxu0
  %v100 = vadd.f32 %v43, %v99
  %v101 = vpop.f32.mrf.mxu0
  %v102 = vadd.f32 %v46, %v101
  %103 = vdwg.mxu0
  %v106 = vunpack.c.l.b16 %v75
  %v107 = vunpack.c.l.b16 %v76
  %v108 = vpack.c.b16 %v107, %v106
  %v110 = vsel %vm40, %v108, 0
  %v113 = vsel %vm40, %v78, 0
  %115 = vmatpush.bf16.xpose.msra.mxu0 0
  %116 = vmatpush.bf16.xpose.msra.mxu0 0
  %117 = vmatpush.bf16.xpose.msra.mxu0 0
  %118 = vmatpush.bf16.xpose.msra.mxu0 0
  %119 = vmatpush.bf16.xpose.msra.mxu0 0
  %120 = vmatpush.bf16.xpose.msra.mxu0 0
  %121 = vmatpush.bf16.xpose.msra.mxu0 0
  %122 = vmatpush.bf16.xpose.msra.mxu0 %v113
  %123 = vmatmul.bf16.gmra.mxu0 %v110
  %v124 = vpop.f32.mrf.mxu0
  %v125 = vadd.f32 %v49, %v124
  %v126 = vpop.f32.mrf.mxu0
  %v127 = vadd.f32 %v52, %v126
  %128 = vdwg.mxu0
  %v131 = vlaneseq
  %v132 = vand.u32 %v131, 127
  %v133 = vperm.slane %v61, %v132
  %v134 = vperm.slane %v64, %v132
  %vm135 = vcmask 1042434
  %v136 = vsel %vm135, %v133, %v133
  %vm137 = vcmask 1043459
  %v138 = vsel %vm137, %v133, %v136
  %vm139 = vcmask 1044484
  %v140 = vsel %vm139, %v133, %v138
  %vm141 = vcmask 1045509
  %v142 = vsel %vm141, %v133, %v140
  %vm143 = vcmask 1046534
  %v144 = vsel %vm143, %v133, %v142
  %vm145 = vcmask 1047559
  %v146 = vsel %vm145, %v133, %v144
  %v147 = vsel %vm135, %v134, %v134
  %v148 = vsel %vm137, %v134, %v147
  %v149 = vsel %vm139, %v134, %v148
  %v150 = vsel %vm141, %v134, %v149
  %v151 = vsel %vm143, %v134, %v150
  %v152 = vsel %vm145, %v134, %v151
  %v155 = vadd.f32 %v100, %v146
  %v156 = vadd.f32 %v102, %v146
  %v157 = vadd.f32 %v125, %v152
  %v158 = vadd.f32 %v127, %v152
  %v159 = vld [vmem:[#allocation2] sm:$0x1]
  %v161 = vperm.slane %v159, 0
  %162 = vset.pattern.permute.xlu0 0
  %163 = vperm.xlu0 %162, %v161
  %v164 = vpop.permute.xlu0 %163
  %v166 = vadd.f32 %v155, %v164
  %v167 = vadd.f32 %v156, %v164
  %v168 = vadd.f32 %v157, %v164
  %v169 = vadd.f32 %v158, %v164
  %vm170 = vcmask 64512
  %v171 = vsel %vm170, %v166, -inf
  %172 = vmax.xlane.f32.xlu0 %v171
  %v173 = vpop.xlane.xlu0 %172
  %v174 = vsel %vm170, %v167, -inf
  %175 = vmax.xlane.f32.xlu0 %v174
  %v176 = vpop.xlane.xlu0 %175
  %v177 = vsel %vm170, %v168, -inf
  %178 = vmax.xlane.f32.xlu0 %v177
  %v179 = vpop.xlane.xlu0 %178
  %v180 = vsel %vm170, %v169, -inf
  %181 = vmax.xlane.f32.xlu0 %v180
  %v182 = vpop.xlane.xlu0 %181
  %v183 = vsub.f32 %v166, %v173
  %v184 = vsub.f32 %v167, %v176
  %v185 = vsub.f32 %v168, %v179
  %v186 = vsub.f32 %v169, %v182
  %v187 = vmul.f32 %v183, 1.442695
  %v188 = vpow.pop %v187
  %v189 = vmul.f32 %v184, 1.442695
  %v190 = vpow.pop %v189
  %v191 = vmul.f32 %v185, 1.442695
  %v192 = vpow.pop %v191
  %v193 = vmul.f32 %v186, 1.442695
  %v194 = vpow.pop %v193
  %v195 = vsel %vm170, %v188, 0.0
  %196 = vadd.xlane.f32.xlu0 %v195
  %v197 = vpop.xlane.xlu0 %196
  %v198 = vsel %vm170, %v190, 0.0
  %199 = vadd.xlane.f32.xlu0 %v198
  %v200 = vpop.xlane.xlu0 %199
  %v201 = vsel %vm170, %v192, 0.0
  %202 = vadd.xlane.f32.xlu0 %v201
  %v203 = vpop.xlane.xlu0 %202
  %v204 = vsel %vm170, %v194, 0.0
  %205 = vadd.xlane.f32.xlu0 %v204
  %v206 = vpop.xlane.xlu0 %205
  %v207 = vrcp.pop %v197
  %v208 = vmul.f32 %v197, %v207
  %v209 = vsub.f32 1.0, %v208
  %v210 = vmul.f32 %v207, %v209
  %v211 = vadd.f32 %v207, %v210
  %vm212 = vweird.f32 %v197
  %vm213 = vweird.f32 %v207
  %vm214 = vmor %vm212, %vm213
  %v215 = vsel %vm214, %v207, %v211
  %v216 = vand.u32 2147483647, %v197
  %vm217 = vcmp.eq.f32.partialorder %v216, 8.507059e+37
  %v218 = vand.u32 %v197, 2147483648
  %v219 = vor.u32 1.1754944e-38, %v218
  %v220 = vsel %vm217, %v219, %v215
  %v221 = vmul.f32 %v188, %v220
  %v222 = vrcp.pop %v200
  %v223 = vmul.f32 %v200, %v222
  %v224 = vsub.f32 1.0, %v223
  %v225 = vmul.f32 %v222, %v224
  %v226 = vadd.f32 %v222, %v225
  %vm227 = vweird.f32 %v200
  %vm228 = vweird.f32 %v222
  %vm229 = vmor %vm227, %vm228
  %v230 = vsel %vm229, %v222, %v226
  %v231 = vand.u32 2147483647, %v200
  %vm232 = vcmp.eq.f32.partialorder %v231, 8.507059e+37
  %v233 = vand.u32 %v200, 2147483648
  %v234 = vor.u32 1.1754944e-38, %v233
  %v235 = vsel %vm232, %v234, %v230
  %v236 = vmul.f32 %v190, %v235
  %v237 = vrcp.pop %v203
  %v238 = vmul.f32 %v203, %v237
  %v239 = vsub.f32 1.0, %v238
  %v240 = vmul.f32 %v237, %v239
  %v241 = vadd.f32 %v237, %v240
  %vm242 = vweird.f32 %v203
  %vm243 = vweird.f32 %v237
  %vm244 = vmor %vm242, %vm243
  %v245 = vsel %vm244, %v237, %v241
  %v246 = vand.u32 2147483647, %v203
  %vm247 = vcmp.eq.f32.partialorder %v246, 8.507059e+37
  %v248 = vand.u32 %v203, 2147483648
  %v249 = vor.u32 1.1754944e-38, %v248
  %v250 = vsel %vm247, %v249, %v245
  %v251 = vmul.f32 %v192, %v250
  %v252 = vrcp.pop %v206
  %v253 = vmul.f32 %v206, %v252
  %v254 = vsub.f32 1.0, %v253
  %v255 = vmul.f32 %v252, %v254
  %v256 = vadd.f32 %v252, %v255
  %vm257 = vweird.f32 %v206
  %vm258 = vweird.f32 %v252
  %vm259 = vmor %vm257, %vm258
  %v260 = vsel %vm259, %v252, %v256
  %v261 = vand.u32 2147483647, %v206
  %vm262 = vcmp.eq.f32.partialorder %v261, 8.507059e+37
  %v263 = vand.u32 %v206, 2147483648
  %v264 = vor.u32 1.1754944e-38, %v263
  %v265 = vsel %vm262, %v264, %v260
  %v266 = vmul.f32 %v194, %v265
  %v267 = vpack.c.bf16 %v221, %v221
  %v268 = vpack.c.bf16 %v236, %v236
  %v269 = vpack.c.bf16 %v251, %v251
  %v270 = vpack.c.bf16 %v266, %v266
  %v273 = vunpack.c.l.b16 %v267
  %v274 = vunpack.c.l.b16 %v268
  %v275 = vpack.c.b16 %v274, %v273
  %v277 = vsel %vm170, %v275, 0
  %vm279 = vcmask 1043456
  %v280 = vsel %vm279, %v77, 0
  %282 = vmatpush.bf16.msra.mxu0 0
  %283 = vmatpush.bf16.msra.mxu0 0
  %284 = vmatpush.bf16.msra.mxu0 0
  %285 = vmatpush.bf16.msra.mxu0 0
  %286 = vmatpush.bf16.msra.mxu0 0
  %287 = vmatpush.bf16.msra.mxu0 0
  %288 = vmatpush.bf16.msra.mxu0 0
  %289 = vmatpush.bf16.msra.mxu0 %v280
  %290 = vmatmul.bf16.gmra.mxu0 %v277
  %v291 = vpop.f32.mrf.mxu0
  %v292 = vadd.f32 0.0, %v291
  %v293 = vpop.f32.mrf.mxu0
  %v294 = vadd.f32 0.0, %v293
  %295 = vdwg.mxu0
  %v298 = vunpack.c.l.b16 %v269
  %v299 = vunpack.c.l.b16 %v270
  %v300 = vpack.c.b16 %v299, %v298
  %v302 = vsel %vm170, %v300, 0
  %v304 = vsel %vm279, %v78, 0
  %306 = vmatpush.bf16.msra.mxu0 0
  %307 = vmatpush.bf16.msra.mxu0 0
  %308 = vmatpush.bf16.msra.mxu0 0
  %309 = vmatpush.bf16.msra.mxu0 0
  %310 = vmatpush.bf16.msra.mxu0 0
  %311 = vmatpush.bf16.msra.mxu0 0
  %312 = vmatpush.bf16.msra.mxu0 0
  %313 = vmatpush.bf16.msra.mxu0 %v304
  %314 = vmatmul.bf16.gmra.mxu0 %v302
  %v315 = vpop.f32.mrf.mxu0
  %v316 = vadd.f32 0.0, %v315
  %v317 = vpop.f32.mrf.mxu0
  %v318 = vadd.f32 0.0, %v317
  %319 = vdwg.mxu0
  %v320 = vmax.f32 %v173, %v176
  %v321 = vrot.slane %v320, 4
  %v322 = vmax.f32 %v320, %v321
  %v323 = vrot.slane %v322, 2
  %v324 = vmax.f32 %v322, %v323
  %v325 = vrot.slane %v324, 1
  %v326 = vmax.f32 %v324, %v325
  %v327 = vmax.f32 %v179, %v182
  %v328 = vrot.slane %v327, 4
  %v329 = vmax.f32 %v327, %v328
  %v330 = vrot.slane %v329, 2
  %v331 = vmax.f32 %v329, %v330
  %v332 = vrot.slane %v331, 1
  %v333 = vmax.f32 %v331, %v332
  %v334 = vsub.f32 %v173, %v326
  %v335 = vsub.f32 %v176, %v326
  %v336 = vsub.f32 %v179, %v333
  %v337 = vsub.f32 %v182, %v333
  %v338 = vmul.f32 %v334, 1.442695
  %v339 = vpow.pop %v338
  %v340 = vmul.f32 %v335, 1.442695
  %v341 = vpow.pop %v340
  %v342 = vmul.f32 %v336, 1.442695
  %v343 = vpow.pop %v342
  %v344 = vmul.f32 %v337, 1.442695
  %v345 = vpow.pop %v344
  %v346 = vadd.f32 %v339, %v341
  %v347 = vrot.slane %v346, 4
  %v348 = vadd.f32 %v346, %v347
  %v349 = vrot.slane %v348, 2
  %v350 = vadd.f32 %v348, %v349
  %v351 = vrot.slane %v350, 1
  %v352 = vadd.f32 %v350, %v351
  %v353 = vadd.f32 %v343, %v345
  %v354 = vrot.slane %v353, 4
  %v355 = vadd.f32 %v353, %v354
  %v356 = vrot.slane %v355, 2
  %v357 = vadd.f32 %v355, %v356
  %v358 = vrot.slane %v357, 1
  %v359 = vadd.f32 %v357, %v358
  %v360 = vrcp.pop %v352
  %v361 = vmul.f32 %v352, %v360
  %v362 = vsub.f32 1.0, %v361
  %v363 = vmul.f32 %v360, %v362
  %v364 = vadd.f32 %v360, %v363
  %vm365 = vweird.f32 %v352
  %vm366 = vweird.f32 %v360
  %vm367 = vmor %vm365, %vm366
  %v368 = vsel %vm367, %v360, %v364
  %v369 = vand.u32 2147483647, %v352
  %vm370 = vcmp.eq.f32.partialorder %v369, 8.507059e+37
  %v371 = vand.u32 %v352, 2147483648
  %v372 = vor.u32 1.1754944e-38, %v371
  %v373 = vsel %vm370, %v372, %v368
  %v374 = vmul.f32 %v339, %v373
  %v375 = vmul.f32 %v341, %v373
  %v376 = vrcp.pop %v359
  %v377 = vmul.f32 %v359, %v376
  %v378 = vsub.f32 1.0, %v377
  %v379 = vmul.f32 %v376, %v378
  %v380 = vadd.f32 %v376, %v379
  %vm381 = vweird.f32 %v359
  %vm382 = vweird.f32 %v376
  %vm383 = vmor %vm381, %vm382
  %v384 = vsel %vm383, %v376, %v380
  %v385 = vand.u32 2147483647, %v359
  %vm386 = vcmp.eq.f32.partialorder %v385, 8.507059e+37
  %v387 = vand.u32 %v359, 2147483648
  %v388 = vor.u32 1.1754944e-38, %v387
  %v389 = vsel %vm386, %v388, %v384
  %v390 = vmul.f32 %v343, %v389
  %v391 = vmul.f32 %v345, %v389
  %v392 = vmul.f32 %v374, %v26
  %v393 = vmul.f32 %v375, %v27
  %v394 = vmul.f32 %v390, %v28
  %v395 = vmul.f32 %v391, %v29
  %v396 = vsel %vm40, %v392, 0.0
  %v397 = vsel %vm40, %v393, 0.0
  %v398 = vadd.f32 %v396, %v397
  %v399 = vrot.slane %v398, 4
  %v400 = vadd.f32 %v398, %v399
  %v401 = vrot.slane %v400, 2
  %v402 = vadd.f32 %v400, %v401
  %v403 = vrot.slane %v402, 1
  %v404 = vadd.f32 %v402, %v403
  %v405 = vsel %vm40, %v394, 0.0
  %v406 = vsel %vm40, %v395, 0.0
  %v407 = vadd.f32 %v405, %v406
  %v408 = vrot.slane %v407, 4
  %v409 = vadd.f32 %v407, %v408
  %v410 = vrot.slane %v409, 2
  %v411 = vadd.f32 %v409, %v410
  %v412 = vrot.slane %v411, 1
  %v413 = vadd.f32 %v411, %v412
  %v414 = vmul.f32 %v26, %v292
  %v415 = vmul.f32 %v27, %v294
  %v416 = vmul.f32 %v28, %v316
  %v417 = vmul.f32 %v29, %v318
  %v418 = vmul.f32 %v26, %v404
  %v419 = vmul.f32 %v27, %v404
  %v420 = vmul.f32 %v28, %v413
  %v421 = vmul.f32 %v29, %v413
  %426 = vrot.lane.b32.xlu0 %v292, 64
  %v427 = vpop.permute.xlu0 %426
  %428 = vrot.lane.b32.xlu0 %v294, 64
  %v429 = vpop.permute.xlu0 %428
  %430 = vrot.lane.b32.xlu0 %v316, 64
  %v431 = vpop.permute.xlu0 %430
  %432 = vrot.lane.b32.xlu0 %v318, 64
  %v433 = vpop.permute.xlu0 %432
  %442 = vrot.lane.b32.xlu0 %v418, 64
  %v443 = vpop.permute.xlu0 %442
  %444 = vrot.lane.b32.xlu0 %v419, 64
  %v445 = vpop.permute.xlu0 %444
  %446 = vrot.lane.b32.xlu0 %v420, 64
  %v447 = vpop.permute.xlu0 %446
  %448 = vrot.lane.b32.xlu0 %v421, 64
  %v449 = vpop.permute.xlu0 %448
  %v454 = vsel %vm40, %v26, %v427
  %v455 = vsel %vm40, %v27, %v429
  %v456 = vsel %vm40, %v28, %v431
  %v457 = vsel %vm40, %v29, %v433
  %v458 = vsel %vm40, %v414, %v443
  %v459 = vsel %vm40, %v415, %v445
  %v460 = vsel %vm40, %v416, %v447
  %v461 = vsel %vm40, %v417, %v449
  %462 = vst [vmem:[%s6] sm:$0xff] %v454
  %463 = vst [vmem:[%s6 + $0x8] sm:$0xff] %v458
  %464 = vst [vmem:[%s6 + $0x10] sm:$0xff] %v455
  %465 = vst [vmem:[%s6 + $0x18] sm:$0xff] %v459
  %466 = vst [vmem:[%s6 + $0x20] sm:$0xff] %v456
  %467 = vst [vmem:[%s6 + $0x28] sm:$0xff] %v460
  %468 = vst [vmem:[%s6 + $0x30] sm:$0xff] %v457
  %469 = vst [vmem:[%s6 + $0x38] sm:$0xff] %v461
  // Predicated region
  $region26: #{bidaf_forward.13} parent=0 // pred_check
    _
  $region27: #{bidaf_forward.13} parent=0 // pred_check_branch
    %471 = sbr.rel (0) target = $region29
  $region28: #{bidaf_forward.13} parent=0 // pred_region
    _
  $region29: #{bidaf_forward.13} parent=0 // pred_fallthru
    _
  // Predicated region
  $region30: #{bidaf_forward.13} parent=0 // pred_check
    _
  $region31: #{bidaf_forward.13} parent=0 // pred_check_branch
    %473 = sbr.rel (0) target = $region33
  $region32: #{bidaf_forward.13} parent=0 // pred_region
    _
  $region33: #{bidaf_forward.13} parent=0 // pred_fallthru
    _

// kernel: bidaf_forward.11
$region0: #{bidaf_forward.11}
  #allocation0 [shape = 'u32[]', space=smem, size = 0x4, offset = 0x4, fixed_abs, tag = 'smem constant byte address 0x4 - core index']
  #allocation1 [shape = 'u32[72,128]{1,0:T(1,128)}', space=vmem, size = 0x9000, scoped, tag = 'internal scratch']
  #allocation2 [shape = 'f32[32,256]{1,0:T(8,128)}', space=vmem, size = 0x8000, scoped, tag = 'scratch operand']
  #allocation3 [shape = 'f32[2,64]{1,0:T(2,128)}', space=vmem, size = 0x400, scoped, tag = 'scratch operand']
  #allocation4 [shape = 'f32[2,64]{1,0:T(2,128)}', space=vmem, size = 0x400, scoped, tag = 'scratch operand']
  %s0 = inlined_call_operand.vmem [shape: f32[32,128], index: 0, kind: input, shape index: {}]
  %s1 = inlined_call_operand.vmem [shape: bf16[128,256], index: 1, kind: input, shape index: {}]
  %s2 = inlined_call_operand.vmem [shape: bf16[64,256], index: 2, kind: input, shape index: {}]
  %s3 = inlined_call_operand.vmem [shape: f32[1,256], index: 3, kind: input, shape index: {}]
  %s4 = inlined_call_operand.vmem [shape: f32[16,2,64], index: 4, kind: output, shape index: {}]
  %s5 = sld [smem:[#allocation0]]
  $region26: #{bidaf_forward.11} parent=0
    _
  %s7 = ssub.s32 1, %s5
  %s8 = scalar_select 0, %s7, %s5
  // Predicated region
  $region2: #{bidaf_forward.11} parent=0 // pred_check
    _
  $region3: #{bidaf_forward.11} parent=0 // pred_check_branch
    %10 = sbr.rel (0) target = $region5
  $region4: #{bidaf_forward.11} parent=0 // pred_region
    _
  $region5: #{bidaf_forward.11} parent=0 // pred_fallthru
    _
  // Predicated region
  $region6: #{bidaf_forward.11} parent=0 // pred_check
    _
  $region7: #{bidaf_forward.11} parent=0 // pred_check_branch
    %12 = sbr.rel (0) target = $region9
  $region8: #{bidaf_forward.11} parent=0 // pred_region
    _
  $region9: #{bidaf_forward.11} parent=0 // pred_fallthru
    _
  // Predicated region
  $region10: #{bidaf_forward.11} parent=0 // pred_check
    _
  $region11: #{bidaf_forward.11} parent=0 // pred_check_branch
    %14 = sbr.rel (0) target = $region13
  $region12: #{bidaf_forward.11} parent=0 // pred_region
    _
  $region13: #{bidaf_forward.11} parent=0 // pred_fallthru
    _
  // Predicated region
  $region14: #{bidaf_forward.11} parent=0 // pred_check
    _
  $region15: #{bidaf_forward.11} parent=0 // pred_check_branch
    %16 = sbr.rel (0) target = $region17
  $region16: #{bidaf_forward.11} parent=0 // pred_region
    _
  $region17: #{bidaf_forward.11} parent=0 // pred_fallthru
    _
  %v18 = vld [vmem:[%s0] sm:$0xff]
  %v19 = vld [vmem:[%s0 + $0x8] sm:$0xff]
  %v20 = vld [vmem:[%s0 + $0x10] sm:$0xff]
  %v21 = vld [vmem:[%s0 + $0x18] sm:$0xff]
  %v22 = vpack.c.bf16 %v19, %v18
  %v23 = vpack.c.bf16 %v21, %v20
  %v24 = vld [vmem:[%s1] sm:$0xff]
  %v25 = vld [vmem:[%s1 + $0x8] sm:$0xff]
  %v26 = vld [vmem:[%s1 + $0x10] sm:$0xff]
  %v27 = vld [vmem:[%s1 + $0x18] sm:$0xff]
  %v28 = vld [vmem:[%s1 + $0x20] sm:$0xff]
  %v29 = vld [vmem:[%s1 + $0x28] sm:$0xff]
  %v30 = vld [vmem:[%s1 + $0x30] sm:$0xff]
  %v31 = vld [vmem:[%s1 + $0x38] sm:$0xff]
  %v32 = vld [vmem:[%s1 + $0x40] sm:$0xff]
  %v33 = vld [vmem:[%s1 + $0x48] sm:$0xff]
  %v34 = vld [vmem:[%s1 + $0x50] sm:$0xff]
  %v35 = vld [vmem:[%s1 + $0x58] sm:$0xff]
  %v36 = vld [vmem:[%s1 + $0x60] sm:$0xff]
  %v37 = vld [vmem:[%s1 + $0x68] sm:$0xff]
  %v38 = vld [vmem:[%s1 + $0x70] sm:$0xff]
  %v39 = vld [vmem:[%s1 + $0x78] sm:$0xff]
  %v40 = vld [vmem:[%s3] sm:$0x3]
  %v42 = vperm.slane %v40, 0
  %v43 = vperm.slane %v40, 1
  %v62 = vunpack.c.l.b16 %v24
  %v63 = vunpack.c.h.b16 %v24
  %v64 = vunpack.c.l.b16 %v25
  %v65 = vunpack.c.h.b16 %v25
  %v66 = vunpack.c.l.b16 %v26
  %v67 = vunpack.c.h.b16 %v26
  %v68 = vunpack.c.l.b16 %v27
  %v69 = vunpack.c.h.b16 %v27
  %v70 = vunpack.c.l.b16 %v28
  %v71 = vunpack.c.h.b16 %v28
  %v72 = vunpack.c.l.b16 %v29
  %v73 = vunpack.c.h.b16 %v29
  %v74 = vunpack.c.l.b16 %v30
  %v75 = vunpack.c.h.b16 %v30
  %v76 = vunpack.c.l.b16 %v31
  %v77 = vunpack.c.h.b16 %v31
  %v78 = vunpack.c.l.b16 %v32
  %v79 = vunpack.c.h.b16 %v32
  %v80 = vunpack.c.l.b16 %v33
  %v81 = vunpack.c.h.b16 %v33
  %v82 = vunpack.c.l.b16 %v34
  %v83 = vunpack.c.h.b16 %v34
  %v84 = vunpack.c.l.b16 %v35
  %v85 = vunpack.c.h.b16 %v35
  %v86 = vunpack.c.l.b16 %v36
  %v87 = vunpack.c.h.b16 %v36
  %v88 = vunpack.c.l.b16 %v37
  %v89 = vunpack.c.h.b16 %v37
  %v90 = vunpack.c.l.b16 %v38
  %v91 = vunpack.c.h.b16 %v38
  %v92 = vunpack.c.l.b16 %v39
  %v93 = vunpack.c.h.b16 %v39
  %v94 = vpack.c.b16 %v64, %v62
  %v95 = vpack.c.b16 %v65, %v63
  %v96 = vpack.c.b16 %v68, %v66
  %v97 = vpack.c.b16 %v69, %v67
  %v98 = vpack.c.b16 %v72, %v70
  %v99 = vpack.c.b16 %v73, %v71
  %v100 = vpack.c.b16 %v76, %v74
  %v101 = vpack.c.b16 %v77, %v75
  %v102 = vpack.c.b16 %v80, %v78
  %v103 = vpack.c.b16 %v81, %v79
  %v104 = vpack.c.b16 %v84, %v82
  %v105 = vpack.c.b16 %v85, %v83
  %v106 = vpack.c.b16 %v88, %v86
  %v107 = vpack.c.b16 %v89, %v87
  %v108 = vpack.c.b16 %v92, %v90
  %v109 = vpack.c.b16 %v93, %v91
  %126 = vmatpush.bf16.msra.mxu0 %v108
  %127 = vmatpush.bf16.msra.mxu0 %v106
  %128 = vmatpush.bf16.msra.mxu0 %v104
  %129 = vmatpush.bf16.msra.mxu0 %v102
  %130 = vmatpush.bf16.msra.mxu0 %v100
  %131 = vmatpush.bf16.msra.mxu0 %v98
  %132 = vmatpush.bf16.msra.mxu0 %v96
  %133 = vmatpush.bf16.msra.mxu0 %v94
  %134 = vmatmul.bf16.gmra.mxu0 %v22
  %v135 = vpop.f32.mrf.mxu0
  %v136 = vadd.f32 %v42, %v135
  %v137 = vpop.f32.mrf.mxu0
  %v138 = vadd.f32 %v42, %v137
  %139 = vmatmul.bf16.gmra.mxu0 %v23
  %v140 = vpop.f32.mrf.mxu0
  %v141 = vadd.f32 %v42, %v140
  %v142 = vpop.f32.mrf.mxu0
  %v143 = vadd.f32 %v42, %v142
  %144 = vdwg.mxu0
  %145 = vmatpush.bf16.msra.mxu0 %v109
  %146 = vmatpush.bf16.msra.mxu0 %v107
  %147 = vmatpush.bf16.msra.mxu0 %v105
  %148 = vmatpush.bf16.msra.mxu0 %v103
  %149 = vmatpush.bf16.msra.mxu0 %v101
  %150 = vmatpush.bf16.msra.mxu0 %v99
  %151 = vmatpush.bf16.msra.mxu0 %v97
  %152 = vmatpush.bf16.msra.mxu0 %v95
  %153 = vmatmul.bf16.gmra.mxu0 %v22
  %v154 = vpop.f32.mrf.mxu0
  %v155 = vadd.f32 %v43, %v154
  %v156 = vpop.f32.mrf.mxu0
  %v157 = vadd.f32 %v43, %v156
  %158 = vmatmul.bf16.gmra.mxu0 %v23
  %v159 = vpop.f32.mrf.mxu0
  %v160 = vadd.f32 %v43, %v159
  %v161 = vpop.f32.mrf.mxu0
  %v162 = vadd.f32 %v43, %v161
  %163 = vdwg.mxu0
  %164 = vst [vmem:[#allocation2] sm:$0xff] %v136
  %165 = vst [vmem:[#allocation2 + $0x8] sm:$0xff] %v155
  %166 = vst [vmem:[#allocation2 + $0x10] sm:$0xff] %v138
  %167 = vst [vmem:[#allocation2 + $0x18] sm:$0xff] %v157
  %168 = vst [vmem:[#allocation2 + $0x20] sm:$0xff] %v141
  %169 = vst [vmem:[#allocation2 + $0x28] sm:$0xff] %v160
  %170 = vst [vmem:[#allocation2 + $0x30] sm:$0xff] %v143
  %171 = vst [vmem:[#allocation2 + $0x38] sm:$0xff] %v162
  %vm172 = vcmask 517120
  %173 = vst.msk [vmem:[#allocation3] sm:$0x3] %vm172, 0.0
  %174 = vst.msk [vmem:[#allocation4] sm:$0x3] %vm172, 0.0
  %v175 = vlaneseq
  %v176 = vand.u32 %v175, 127
  %v177 = vadd.s32 %v176, 128
  %vm178 = vcmp.ge.s32.totalorder %v176, 128
  %vm179 = vcmp.ge.s32.totalorder %v177, 128
  %vm180 = vcmp.lt.s32.totalorder %v176, 192
  %vm181 = vcmp.lt.s32.totalorder %v177, 192
  %vm182 = vmand %vm178, %vm180
  %vm183 = vmand %vm179, %vm181
  %v184 = vld [vmem:[#allocation2] sm:$0x3]
  %v185 = vld [vmem:[#allocation2 + $0x8] sm:$0x3]
  %v186 = vld [vmem:[#allocation3] sm:$0x3]
  %v187 = vpack.c.bf16 %v186, %v186
  %v188 = vld [vmem:[%s2] sm:$0xff]
  %v189 = vld [vmem:[%s2 + $0x8] sm:$0xff]
  %v190 = vld [vmem:[%s2 + $0x10] sm:$0xff]
  %v191 = vld [vmem:[%s2 + $0x18] sm:$0xff]
  %v192 = vld [vmem:[%s2 + $0x20] sm:$0xff]
  %v193 = vld [vmem:[%s2 + $0x28] sm:$0xff]
  %v194 = vld [vmem:[%s2 + $0x30] sm:$0xff]
  %v195 = vld [vmem:[%s2 + $0x38] sm:$0xff]
  %v204 = vunpack.c.l.b16 %v188
  %v205 = vunpack.c.h.b16 %v188
  %v206 = vunpack.c.l.b16 %v189
  %v207 = vunpack.c.h.b16 %v189
  %v208 = vunpack.c.l.b16 %v190
  %v209 = vunpack.c.h.b16 %v190
  %v210 = vunpack.c.l.b16 %v191
  %v211 = vunpack.c.h.b16 %v191
  %v212 = vunpack.c.l.b16 %v192
  %v213 = vunpack.c.h.b16 %v192
  %v214 = vunpack.c.l.b16 %v193
  %v215 = vunpack.c.h.b16 %v193
  %v216 = vunpack.c.l.b16 %v194
  %v217 = vunpack.c.h.b16 %v194
  %v218 = vunpack.c.l.b16 %v195
  %v219 = vunpack.c.h.b16 %v195
  %v220 = vpack.c.b16 %v206, %v204
  %v221 = vpack.c.b16 %v207, %v205
  %v222 = vpack.c.b16 %v210, %v208
  %v223 = vpack.c.b16 %v211, %v209
  %v224 = vpack.c.b16 %v214, %v212
  %v225 = vpack.c.b16 %v215, %v213
  %v226 = vpack.c.b16 %v218, %v216
  %v227 = vpack.c.b16 %v219, %v217
  %vm236 = vcmask 523264
  %v238 = vsel %vm236, %v187, 0
  %240 = vmatpush.bf16.msra.mxu0 0
  %241 = vmatpush.bf16.msra.mxu0 0
  %242 = vmatpush.bf16.msra.mxu0 0
  %243 = vmatpush.bf16.msra.mxu0 0
  %244 = vmatpush.bf16.msra.mxu0 %v226
  %245 = vmatpush.bf16.msra.mxu0 %v224
  %246 = vmatpush.bf16.msra.mxu0 %v222
  %247 = vmatpush.bf16.msra.mxu0 %v220
  %248 = vmatmul.bf16.gmra.mxu0 %v238
  %v249 = vpop.f32.mrf.mxu0
  %v250 = vadd.f32 0.0, %v249
  %v251 = vpop.f32.mrf.mxu0
  %252 = vdwg.mxu0
  %253 = vmatpush.bf16.msra.mxu0 0
  %254 = vmatpush.bf16.msra.mxu0 0
  %255 = vmatpush.bf16.msra.mxu0 0
  %256 = vmatpush.bf16.msra.mxu0 0
  %257 = vmatpush.bf16.msra.mxu0 %v227
  %258 = vmatpush.bf16.msra.mxu0 %v225
  %259 = vmatpush.bf16.msra.mxu0 %v223
  %260 = vmatpush.bf16.msra.mxu0 %v221
  %261 = vmatmul.bf16.gmra.mxu0 %v238
  %v262 = vpop.f32.mrf.mxu0
  %v263 = vadd.f32 0.0, %v262
  %v264 = vpop.f32.mrf.mxu0
  %265 = vdwg.mxu0
  %v266 = vadd.f32 %v184, %v250
  %v267 = vadd.f32 %v185, %v263
  %v268 = vtanh.pop %v266
  %v269 = vtanh.pop %v267
  %v270 = vxor.u32 %v266, 2147483648
  %v271 = vxor.u32 %v267, 2147483648
  %v272 = vmul.f32 %v270, 1.442695
  %v273 = vpow.pop %v272
  %v274 = vmul.f32 %v271, 1.442695
  %v275 = vpow.pop %v274
  %v276 = vadd.f32 %v273, 1.0
  %v277 = vadd.f32 %v275, 1.0
  %v278 = vrcp.pop %v276
  %v279 = vmul.f32 %v276, %v278
  %v280 = vsub.f32 1.0, %v279
  %v281 = vmul.f32 %v278, %v280
  %v282 = vadd.f32 %v278, %v281
  %vm283 = vweird.f32 %v276
  %vm284 = vweird.f32 %v278
  %vm285 = vmor %vm283, %vm284
  %v286 = vsel %vm285, %v278, %v282
  %v287 = vand.u32 2147483647, %v276
  %vm288 = vcmp.eq.f32.partialorder %v287, 8.507059e+37
  %v289 = vand.u32 %v276, 2147483648
  %v290 = vor.u32 1.1754944e-38, %v289
  %v291 = vsel %vm288, %v290, %v286
  %v292 = vmul.f32 1.0, %v291
  %v293 = vrcp.pop %v277
  %v294 = vmul.f32 %v277, %v293
  %v295 = vsub.f32 1.0, %v294
  %v296 = vmul.f32 %v293, %v295
  %v297 = vadd.f32 %v293, %v296
  %vm298 = vweird.f32 %v277
  %vm299 = vweird.f32 %v293
  %vm300 = vmor %vm298, %vm299
  %v301 = vsel %vm300, %v293, %v297
  %v302 = vand.u32 2147483647, %v277
  %vm303 = vcmp.eq.f32.partialorder %v302, 8.507059e+37
  %v304 = vand.u32 %v277, 2147483648
  %v305 = vor.u32 1.1754944e-38, %v304
  %v306 = vsel %vm303, %v305, %v301
  %v307 = vmul.f32 1.0, %v306
  %v308 = vsel %vm182, %v268, %v292
  %v309 = vsel %vm183, %v269, %v307
  %v310 = vld [vmem:[#allocation4] sm:$0x3]
  %312 = vrot.lane.b32.xlu0 %v310, 64
  %v313 = vpop.permute.xlu0 %312
  %v315 = vmul.f32 %v308, %v313
  %v316 = vmul.f32 %v308, %v309
  %318 = vrot.lane.b32.xlu0 %v316, 64
  %v319 = vpop.permute.xlu0 %318
  %v321 = vadd.f32 %v315, %v319
  %v322 = vtanh.pop %v321
  %v323 = vmul.f32 %v309, %v322
  %325 = vrot.lane.b32.xlu0 %v321, 64
  %v326 = vpop.permute.xlu0 %325
  %328 = vst.msk [vmem:[#allocation4] sm:$0x3] %vm172, %v326
  %330 = vrot.lane.b32.xlu0 %v323, 64
  %v331 = vpop.permute.xlu0 %330
  %333 = vst.msk [vmem:[#allocation3] sm:$0x3] %vm172, %v331
  %334 = vst.msk [vmem:[%s4] sm:$0x3] %vm172, %v331
  %v335 = vld [vmem:[#allocation2] sm:$0xc]
  %v336 = vld [vmem:[#allocation2 + $0x8] sm:$0xc]
  %v337 = vld [vmem:[#allocation3] sm:$0x3]
  %v338 = vpack.c.bf16 %v337, %v337
  %v339 = vld [vmem:[%s2] sm:$0xff]
  %v340 = vld [vmem:[%s2 + $0x8] sm:$0xff]
  %v341 = vld [vmem:[%s2 + $0x10] sm:$0xff]
  %v342 = vld [vmem:[%s2 + $0x18] sm:$0xff]
  %v343 = vld [vmem:[%s2 + $0x20] sm:$0xff]
  %v344 = vld [vmem:[%s2 + $0x28] sm:$0xff]
  %v345 = vld [vmem:[%s2 + $0x30] sm:$0xff]
  %v346 = vld [vmem:[%s2 + $0x38] sm:$0xff]
  %v355 = vunpack.c.l.b16 %v339
  %v356 = vunpack.c.h.b16 %v339
  %v357 = vunpack.c.l.b16 %v340
  %v358 = vunpack.c.h.b16 %v340
  %v359 = vunpack.c.l.b16 %v341
  %v360 = vunpack.c.h.b16 %v341
  %v361 = vunpack.c.l.b16 %v342
  %v362 = vunpack.c.h.b16 %v342
  %v363 = vunpack.c.l.b16 %v343
  %v364 = vunpack.c.h.b16 %v343
  %v365 = vunpack.c.l.b16 %v344
  %v366 = vunpack.c.h.b16 %v344
  %v367 = vunpack.c.l.b16 %v345
  %v368 = vunpack.c.h.b16 %v345
  %v369 = vunpack.c.l.b16 %v346
  %v370 = vunpack.c.h.b16 %v346
  %v371 = vpack.c.b16 %v357, %v355
  %v372 = vpack.c.b16 %v358, %v356
  %v373 = vpack.c.b16 %v361, %v359
  %v374 = vpack.c.b16 %v362, %v360
  %v375 = vpack.c.b16 %v365, %v363
  %v376 = vpack.c.b16 %v366, %v364
  %v377 = vpack.c.b16 %v369, %v367
  %v378 = vpack.c.b16 %v370, %v368
  %v388 = vsel %vm236, %v338, 0
  %390 = vmatpush.bf16.msra.mxu0 0
  %391 = vmatpush.bf16.msra.mxu0 0
  %392 = vmatpush.bf16.msra.mxu0 0
  %393 = vmatpush.bf16.msra.mxu0 0
  %394 = vmatpush.bf16.msra.mxu0 %v377
  %395 = vmatpush.bf16.msra.mxu0 %v375
  %396 = vmatpush.bf16.msra.mxu0 %v373
  %397 = vmatpush.bf16.msra.mxu0 %v371
  %398 = vmatmul.bf16.gmra.mxu0 %v388
  %v399 = vpop.f32.mrf.mxu0
  %v400 = vadd.f32 0.0, %v399
  %v401 = vpop.f32.mrf.mxu0
  %402 = vdwg.mxu0
  %403 = vmatpush.bf16.msra.mxu0 0
  %404 = vmatpush.bf16.msra.mxu0 0
  %405 = vmatpush.bf16.msra.mxu0 0
  %406 = vmatpush.bf16.msra.mxu0 0
  %407 = vmatpush.bf16.msra.mxu0 %v378
  %408 = vmatpush.bf16.msra.mxu0 %v376
  %409 = vmatpush.bf16.msra.mxu0 %v374
  %410 = vmatpush.bf16.msra.mxu0 %v372
  %411 = vmatmul.bf16.gmra.mxu0 %v388
  %v412 = vpop.f32.mrf.mxu0
  %v413 = vadd.f32 0.0, %v412
  %v414 = vpop.f32.mrf.mxu0
  %415 = vdwg.mxu0
  %v418 = vrot.slane %v400, 6
  %v419 = vrot.slane %v413, 6
  %v422 = vadd.f32 %v335, %v418
  %v423 = vadd.f32 %v336, %v419
  %v424 = vtanh.pop %v422
  %v425 = vtanh.pop %v423
  %v426 = vxor.u32 %v422, 2147483648
  %v427 = vxor.u32 %v423, 2147483648
  %v428 = vmul.f32 %v426, 1.442695
  %v429 = vpow.pop %v428
  %v430 = vmul.f32 %v427, 1.442695
  %v431 = vpow.pop %v430
  %v432 = vadd.f32 %v429, 1.0
  %v433 = vadd.f32 %v431, 1.0
  %v434 = vrcp.pop %v432
  %v435 = vmul.f32 %v432, %v434
  %v436 = vsub.f32 1.0, %v435
  %v437 = vmul.f32 %v434, %v436
  %v438 = vadd.f32 %v434, %v437
  %vm439 = vweird.f32 %v432
  %vm440 = vweird.f32 %v434
  %vm441 = vmor %vm439, %vm440
  %v442 = vsel %vm441, %v434, %v438
  %v443 = vand.u32 2147483647, %v432
  %vm444 = vcmp.eq.f32.partialorder %v443, 8.507059e+37
  %v445 = vand.u32 %v432, 2147483648
  %v446 = vor.u32 1.1754944e-38, %v445
  %v447 = vsel %vm444, %v446, %v442
  %v448 = vmul.f32 1.0, %v447
  %v449 = vrcp.pop %v433
  %v450 = vmul.f32 %v433, %v449
  %v451 = vsub.f32 1.0, %v450
  %v452 = vmul.f32 %v449, %v451
  %v453 = vadd.f32 %v449, %v452
  %vm454 = vweird.f32 %v433
  %vm455 = vweird.f32 %v449
  %vm456 = vmor %vm454, %vm455
  %v457 = vsel %vm456, %v449, %v453
  %v458 = vand.u32 2147483647, %v433
  %vm459 = vcmp.eq.f32.partialorder %v458, 8.507059e+37
  %v460 = vand.u32 %v433, 2147483648
  %v461 = vor.u32 1.1754944e-38, %v460
  %v462 = vsel %vm459, %v461, %v457
  %v463 = vmul.f32 1.0, %v462
  %v464 = vsel %vm182, %v424, %v448
  %v465 = vsel %vm183, %v425, %v463
  %v466 = vld [vmem:[#allocation4] sm:$0x3]
  %v468 = vrot.slane %v466, 6
  %469 = vrot.lane.b32.xlu0 %v468, 64
  %v470 = vpop.permute.xlu0 %469
  %v472 = vmul.f32 %v464, %v470
  %v473 = vmul.f32 %v464, %v465
  %475 = vrot.lane.b32.xlu0 %v473, 64
  %v476 = vpop.permute.xlu0 %475
  %v478 = vadd.f32 %v472, %v476
  %v479 = vtanh.pop %v478
  %v480 = vmul.f32 %v465, %v479
  %482 = vrot.lane.b32.xlu0 %v478, 64
  %v483 = vpop.permute.xlu0 %482
  %vm485 = vcmask 519170
  %486 = vst.msk [vmem:[#allocation4 - $0x2] sm:$0xc] %vm485, %v483
  %488 = vrot.lane.b32.xlu0 %v480, 64
  %v489 = vpop.permute.xlu0 %488
  %491 = vst.msk [vmem:[#allocation3 - $0x2] sm:$0xc] %vm485, %v489
  %s492 = scalar_lea.vmem %s4, 2
  %493 = vst.msk [vmem:[%s492 - $0x2] sm:$0xc] %vm485, %v489
  %v494 = vld [vmem:[#allocation2] sm:$0x30]
  %v495 = vld [vmem:[#allocation2 + $0x8] sm:$0x30]
  %v496 = vld [vmem:[#allocation3] sm:$0x3]
  %v497 = vpack.c.bf16 %v496, %v496
  %v498 = vld [vmem:[%s2] sm:$0xff]
  %v499 = vld [vmem:[%s2 + $0x8] sm:$0xff]
  %v500 = vld [vmem:[%s2 + $0x10] sm:$0xff]
  %v501 = vld [vmem:[%s2 + $0x18] sm:$0xff]
  %v502 = vld [vmem:[%s2 + $0x20] sm:$0xff]
  %v503 = vld [vmem:[%s2 + $0x28] sm:$0xff]
  %v504 = vld [vmem:[%s2 + $0x30] sm:$0xff]
  %v505 = vld [vmem:[%s2 + $0x38] sm:$0xff]
  %v514 = vunpack.c.l.b16 %v498
  %v515 = vunpack.c.h.b16 %v498
  %v516 = vunpack.c.l.b16 %v499
  %v517 = vunpack.c.h.b16 %v499
  %v518 = vunpack.c.l.b16 %v500
  %v519 = vunpack.c.h.b16 %v500
  %v520 = vunpack.c.l.b16 %v501
  %v521 = vunpack.c.h.b16 %v501
  %v522 = vunpack.c.l.b16 %v502
  %v523 = vunpack.c.h.b16 %v502
  %v524 = vunpack.c.l.b16 %v503
  %v525 = vunpack.c.h.b16 %v503
  %v526 = vunpack.c.l.b16 %v504
  %v527 = vunpack.c.h.b16 %v504
  %v528 = vunpack.c.l.b16 %v505
  %v529 = vunpack.c.h.b16 %v505
  %v530 = vpack.c.b16 %v516, %v514
  %v531 = vpack.c.b16 %v517, %v515
  %v532 = vpack.c.b16 %v520, %v518
  %v533 = vpack.c.b16 %v521, %v519
  %v534 = vpack.c.b16 %v524, %v522
  %v535 = vpack.c.b16 %v525, %v523
  %v536 = vpack.c.b16 %v528, %v526
  %v537 = vpack.c.b16 %v529, %v527
  %v547 = vsel %vm236, %v497, 0
  %549 = vmatpush.bf16.msra.mxu0 0
  %550 = vmatpush.bf16.msra.mxu0 0
  %551 = vmatpush.bf16.msra.mxu0 0
  %552 = vmatpush.bf16.msra.mxu0 0
  %553 = vmatpush.bf16.msra.mxu0 %v536
  %554 = vmatpush.bf16.msra.mxu0 %v534
  %555 = vmatpush.bf16.msra.mxu0 %v532
  %556 = vmatpush.bf16.msra.mxu0 %v530
  %557 = vmatmul.bf16.gmra.mxu0 %v547
  %v558 = vpop.f32.mrf.mxu0
  %v559 = vadd.f32 0.0, %v558
  %v560 = vpop.f32.mrf.mxu0
  %561 = vdwg.mxu0
  %562 = vmatpush.bf16.msra.mxu0 0
  %563 = vmatpush.bf16.msra.mxu0 0
  %564 = vmatpush.bf16.msra.mxu0 0
  %565 = vmatpush.bf16.msra.mxu0 0
  %566 = vmatpush.bf16.msra.mxu0 %v537
  %567 = vmatpush.bf16.msra.mxu0 %v535
  %568 = vmatpush.bf16.msra.mxu0 %v533
  %569 = vmatpush.bf16.msra.mxu0 %v531
  %570 = vmatmul.bf16.gmra.mxu0 %v547
  %v571 = vpop.f32.mrf.mxu0
  %v572 = vadd.f32 0.0, %v571
  %v573 = vpop.f32.mrf.mxu0
  %574 = vdwg.mxu0
  %v577 = vrot.slane %v559, 4
  %v578 = vrot.slane %v572, 4
  %v581 = vadd.f32 %v494, %v577
  %v582 = vadd.f32 %v495, %v578
  %v583 = vtanh.pop %v581
  %v584 = vtanh.pop %v582
  %v585 = vxor.u32 %v581, 2147483648
  %v586 = vxor.u32 %v582, 2147483648
  %v587 = vmul.f32 %v585, 1.442695
  %v588 = vpow.pop %v587
  %v589 = vmul.f32 %v586, 1.442695
  %v590 = vpow.pop %v589
  %v591 = vadd.f32 %v588, 1.0
  %v592 = vadd.f32 %v590, 1.0
  %v593 = vrcp.pop %v591
  %v594 = vmul.f32 %v591, %v593
  %v595 = vsub.f32 1.0, %v594
  %v596 = vmul.f32 %v593, %v595
  %v597 = vadd.f32 %v593, %v596
  %vm598 = vweird.f32 %v591
  %vm599 = vweird.f32 %v593
  %vm600 = vmor %vm598, %vm599
  %v601 = vsel %vm600, %v593, %v597
  %v602 = vand.u32 2147483647, %v591
  %vm603 = vcmp.eq.f32.partialorder %v602, 8.507059e+37
  %v604 = vand.u32 %v591, 2147483648
  %v605 = vor.u32 1.1754944e-38, %v604
  %v606 = vsel %vm603, %v605, %v601
  %v607 = vmul.f32 1.0, %v606
  %v608 = vrcp.pop %v592
  %v609 = vmul.f32 %v592, %v608
  %v610 = vsub.f32 1.0, %v609
  %v611 = vmul.f32 %v608, %v610
  %v612 = vadd.f32 %v608, %v611
  %vm613 = vweird.f32 %v592
  %vm614 = vweird.f32 %v608
  %vm615 = vmor %vm613, %vm614
  %v616 = vsel %vm615, %v608, %v612
  %v617 = vand.u32 2147483647, %v592
  %vm618 = vcmp.eq.f32.partialorder %v617, 8.507059e+37
  %v619 = vand.u32 %v592, 2147483648
  %v620 = vor.u32 1.1754944e-38, %v619
  %v621 = vsel %vm618, %v620, %v616
  %v622 = vmul.f32 1.0, %v621
  %v623 = vsel %vm182, %v583, %v607
  %v624 = vsel %vm183, %v584, %v622
  %v625 = vld [vmem:[#allocation4] sm:$0x3]
  %v627 = vrot.slane %v625, 4
  %628 = vrot.lane.b32.xlu0 %v627, 64
  %v629 = vpop.permute.xlu0 %628
  %v631 = vmul.f32 %v623, %v629
  %v632 = vmul.f32 %v623, %v624
  %634 = vrot.lane.b32.xlu0 %v632, 64
  %v635 = vpop.permute.xlu0 %634
  %v637 = vadd.f32 %v631, %v635
  %v638 = vtanh.pop %v637
  %v639 = vmul.f32 %v624, %v638
  %641 = vrot.lane.b32.xlu0 %v637, 64
  %v642 = vpop.permute.xlu0 %641
  %vm644 = vcmask 521220
  %645 = vst.msk [vmem:[#allocation4 - $0x4] sm:$0x30] %vm644, %v642
  %647 = vrot.lane.b32.xlu0 %v639, 64
  %v648 = vpop.permute.xlu0 %647
  %650 = vst.msk [vmem:[#allocation3 - $0x4] sm:$0x30] %vm644, %v648
  %s651 = scalar_lea.vmem %s4, 4
  %652 = vst.msk [vmem:[%s651 - $0x4] sm:$0x30] %vm644, %v648
  %v653 = vld [vmem:[#allocation2] sm:$0xc0]
  %v654 = vld [vmem:[#allocation2 + $0x8] sm:$0xc0]
  %v655 = vld [vmem:[#allocation3] sm:$0x3]
  %v656 = vpack.c.bf16 %v655, %v655
  %v657 = vld [vmem:[%s2] sm:$0xff]
  %v658 = vld [vmem:[%s2 + $0x8] sm:$0xff]
  %v659 = vld [vmem:[%s2 + $0x10] sm:$0xff]
  %v660 = vld [vmem:[%s2 + $0x18] sm:$0xff]
  %v661 = vld [vmem:[%s2 + $0x20] sm:$0xff]
  %v662 = vld [vmem:[%s2 + $0x28] sm:$0xff]
  %v663 = vld [vmem:[%s2 + $0x30] sm:$0xff]
  %v664 = vld [vmem:[%s2 + $0x38] sm:$0xff]
  %v673 = vunpack.c.l.b16 %v657
  %v674 = vunpack.c.h.b16 %v657
  %v675 = vunpack.c.l.b16 %v658
  %v676 = vunpack.c.h.b16 %v658
  %v677 = vunpack.c.l.b16 %v659
  %v678 = vunpack.c.h.b16 %v659
  %v679 = vunpack.c.l.b16 %v660
  %v680 = vunpack.c.h.b16 %v660
  %v681 = vunpack.c.l.b16 %v661
  %v682 = vunpack.c.h.b16 %v661
  %v683 = vunpack.c.l.b16 %v662
  %v684 = vunpack.c.h.b16 %v662
  %v685 = vunpack.c.l.b16 %v663
  %v686 = vunpack.c.h.b16 %v663
  %v687 = vunpack.c.l.b16 %v664
  %v688 = vunpack.c.h.b16 %v664
  %v689 = vpack.c.b16 %v675, %v673
  %v690 = vpack.c.b16 %v676, %v674
  %v691 = vpack.c.b16 %v679, %v677
  %v692 = vpack.c.b16 %v680, %v678
  %v693 = vpack.c.b16 %v683, %v681
  %v694 = vpack.c.b16 %v684, %v682
  %v695 = vpack.c.b16 %v687, %v685
  %v696 = vpack.c.b16 %v688, %v686
  %v706 = vsel %vm236, %v656, 0
  %708 = vmatpush.bf16.msra.mxu0 0
  %709 = vmatpush.bf16.msra.mxu0 0
  %710 = vmatpush.bf16.msra.mxu0 0
  %711 = vmatpush.bf16.msra.mxu0 0
  %712 = vmatpush.bf16.msra.mxu0 %v695
  %713 = vmatpush.bf16.msra.mxu0 %v693
  %714 = vmatpush.bf16.msra.mxu0 %v691
  %715 = vmatpush.bf16.msra.mxu0 %v689
  %716 = vmatmul.bf16.gmra.mxu0 %v706
  %v717 = vpop.f32.mrf.mxu0
  %v718 = vadd.f32 0.0, %v717
  %v719 = vpop.f32.mrf.mxu0
  %720 = vdwg.mxu0
  %721 = vmatpush.bf16.msra.mxu0 0
  %722 = vmatpush.bf16.msra.mxu0 0
  %723 = vmatpush.bf16.msra.mxu0 0
  %724 = vmatpush.bf16.msra.mxu0 0
  %725 = vmatpush.bf16.msra.mxu0 %v696
  %726 = vmatpush.bf16.msra.mxu0 %v694
  %727 = vmatpush.bf16.msra.mxu0 %v692
  %728 = vmatpush.bf16.msra.mxu0 %v690
  %729 = vmatmul.bf16.gmra.mxu0 %v706
  %v730 = vpop.f32.mrf.mxu0
  %v731 = vadd.f32 0.0, %v730
  %v732 = vpop.f32.mrf.mxu0
  %733 = vdwg.mxu0
  %v736 = vrot.slane %v718, 2
  %v737 = vrot.slane %v731, 2
  %v740 = vadd.f32 %v653, %v736
  %v741 = vadd.f32 %v654, %v737
  %v742 = vtanh.pop %v740
  %v743 = vtanh.pop %v741
  %v744 = vxor.u32 %v740, 2147483648
  %v745 = vxor.u32 %v741, 2147483648
  %v746 = vmul.f32 %v744, 1.442695
  %v747 = vpow.pop %v746
  %v748 = vmul.f32 %v745, 1.442695
  %v749 = vpow.pop %v748
  %v750 = vadd.f32 %v747, 1.0
  %v751 = vadd.f32 %v749, 1.0
  %v752 = vrcp.pop %v750
  %v753 = vmul.f32 %v750, %v752
  %v754 = vsub.f32 1.0, %v753
  %v755 = vmul.f32 %v752, %v754
  %v756 = vadd.f32 %v752, %v755
  %vm757 = vweird.f32 %v750
  %vm758 = vweird.f32 %v752
  %vm759 = vmor %vm757, %vm758
  %v760 = vsel %vm759, %v752, %v756
  %v761 = vand.u32 2147483647, %v750
  %vm762 = vcmp.eq.f32.partialorder %v761, 8.507059e+37
  %v763 = vand.u32 %v750, 2147483648
  %v764 = vor.u32 1.1754944e-38, %v763
  %v765 = vsel %vm762, %v764, %v760
  %v766 = vmul.f32 1.0, %v765
  %v767 = vrcp.pop %v751
  %v768 = vmul.f32 %v751, %v767
  %v769 = vsub.f32 1.0, %v768
  %v770 = vmul.f32 %v767, %v769
  %v771 = vadd.f32 %v767, %v770
  %vm772 = vweird.f32 %v751
  %vm773 = vweird.f32 %v767
  %vm774 = vmor %vm772, %vm773
  %v775 = vsel %vm774, %v767, %v771
  %v776 = vand.u32 2147483647, %v751
  %vm777 = vcmp.eq.f32.partialorder %v776, 8.507059e+37
  %v778 = vand.u32 %v751, 2147483648
  %v779 = vor.u32 1.1754944e-38, %v778
  %v780 = vsel %vm777, %v779, %v775
  %v781 = vmul.f32 1.0, %v780
  %v782 = vsel %vm182, %v742, %v766
  %v783 = vsel %vm183, %v743, %v781
  %v784 = vld [vmem:[#allocation4] sm:$0x3]
  %v786 = vrot.slane %v784, 2
  %787 = vrot.lane.b32.xlu0 %v786, 64
  %v788 = vpop.permute.xlu0 %787
  %v790 = vmul.f32 %v782, %v788
  %v791 = vmul.f32 %v782, %v783
  %793 = vrot.lane.b32.xlu0 %v791, 64
  %v794 = vpop.permute.xlu0 %793
  %v796 = vadd.f32 %v790, %v794
  %v797 = vtanh.pop %v796
  %v798 = vmul.f32 %v783, %v797
  %800 = vrot.lane.b32.xlu0 %v796, 64
  %v801 = vpop.permute.xlu0 %800
  %vm803 = vcmask 523270
  %804 = vst.msk [vmem:[#allocation4 - $0x6] sm:$0xc0] %vm803, %v801
  %806 = vrot.lane.b32.xlu0 %v798, 64
  %v807 = vpop.permute.xlu0 %806
  %809 = vst.msk [vmem:[#allocation3 - $0x6] sm:$0xc0] %vm803, %v807
  %s810 = scalar_lea.vmem %s4, 6
  %811 = vst.msk [vmem:[%s810 - $0x6] sm:$0xc0] %vm803, %v807
  %v812 = vld [vmem:[#allocation2 + $0x10] sm:$0x3]
  %v813 = vld [vmem:[#allocation2 + $0x18] sm:$0x3]
  %v814 = vld [vmem:[#allocation3] sm:$0x3]
  %v815 = vpack.c.bf16 %v814, %v814
  %v816 = vld [vmem:[%s2] sm:$0xff]
  %v817 = vld [vmem:[%s2 + $0x8] sm:$0xff]
  %v818 = vld [vmem:[%s2 + $0x10] sm:$0xff]
  %v819 = vld [vmem:[%s2 + $0x18] sm:$0xff]
  %v820 = vld [vmem:[%s2 + $0x20] sm:$0xff]
  %v821 = vld [vmem:[%s2 + $0x28] sm:$0xff]
  %v822 = vld [vmem:[%s2 + $0x30] sm:$0xff]
  %v823 = vld [vmem:[%s2 + $0x38] sm:$0xff]
  %v832 = vunpack.c.l.b16 %v816
  %v833 = vunpack.c.h.b16 %v816
  %v834 = vunpack.c.l.b16 %v817
  %v835 = vunpack.c.h.b16 %v817
  %v836 = vunpack.c.l.b16 %v818
  %v837 = vunpack.c.h.b16 %v818
  %v838 = vunpack.c.l.b16 %v819
  %v839 = vunpack.c.h.b16 %v819
  %v840 = vunpack.c.l.b16 %v820
  %v841 = vunpack.c.h.b16 %v820
  %v842 = vunpack.c.l.b16 %v821
  %v843 = vunpack.c.h.b16 %v821
  %v844 = vunpack.c.l.b16 %v822
  %v845 = vunpack.c.h.b16 %v822
  %v846 = vunpack.c.l.b16 %v823
  %v847 = vunpack.c.h.b16 %v823
  %v848 = vpack.c.b16 %v834, %v832
  %v849 = vpack.c.b16 %v835, %v833
  %v850 = vpack.c.b16 %v838, %v836
  %v851 = vpack.c.b16 %v839, %v837
  %v852 = vpack.c.b16 %v842, %v840
  %v853 = vpack.c.b16 %v843, %v841
  %v854 = vpack.c.b16 %v846, %v844
  %v855 = vpack.c.b16 %v847, %v845
  %v865 = vsel %vm236, %v815, 0
  %867 = vmatpush.bf16.msra.mxu0 0
  %868 = vmatpush.bf16.msra.mxu0 0
  %869 = vmatpush.bf16.msra.mxu0 0
  %870 = vmatpush.bf16.msra.mxu0 0
  %871 = vmatpush.bf16.msra.mxu0 %v854
  %872 = vmatpush.bf16.msra.mxu0 %v852
  %873 = vmatpush.bf16.msra.mxu0 %v850
  %874 = vmatpush.bf16.msra.mxu0 %v848
  %875 = vmatmul.bf16.gmra.mxu0 %v865
  %v876 = vpop.f32.mrf.mxu0
  %v877 = vadd.f32 0.0, %v876
  %v878 = vpop.f32.mrf.mxu0
  %879 = vdwg.mxu0
  %880 = vmatpush.bf16.msra.mxu0 0
  %881 = vmatpush.bf16.msra.mxu0 0
  %882 = vmatpush.bf16.msra.mxu0 0
  %883 = vmatpush.bf16.msra.mxu0 0
  %884 = vmatpush.bf16.msra.mxu0 %v855
  %885 = vmatpush.bf16.msra.mxu0 %v853
  %886 = vmatpush.bf16.msra.mxu0 %v851
  %887 = vmatpush.bf16.msra.mxu0 %v849
  %888 = vmatmul.bf16.gmra.mxu0 %v865
  %v889 = vpop.f32.mrf.mxu0
  %v890 = vadd.f32 0.0, %v889
  %v891 = vpop.f32.mrf.mxu0
  %892 = vdwg.mxu0
  %v893 = vadd.f32 %v812, %v877
  %v894 = vadd.f32 %v813, %v890
  %v895 = vtanh.pop %v893
  %v896 = vtanh.pop %v894
  %v897 = vxor.u32 %v893, 2147483648
  %v898 = vxor.u32 %v894, 2147483648
  %v899 = vmul.f32 %v897, 1.442695
  %v900 = vpow.pop %v899
  %v901 = vmul.f32 %v898, 1.442695
  %v902 = vpow.pop %v901
  %v903 = vadd.f32 %v900, 1.0
  %v904 = vadd.f32 %v902, 1.0
  %v905 = vrcp.pop %v903
  %v906 = vmul.f32 %v903, %v905
  %v907 = vsub.f32 1.0, %v906
  %v908 = vmul.f32 %v905, %v907
  %v909 = vadd.f32 %v905, %v908
  %vm910 = vweird.f32 %v903
  %vm911 = vweird.f32 %v905
  %vm912 = vmor %vm910, %vm911
  %v913 = vsel %vm912, %v905, %v909
  %v914 = vand.u32 2147483647, %v903
  %vm915 = vcmp.eq.f32.partialorder %v914, 8.507059e+37
  %v916 = vand.u32 %v903, 2147483648
  %v917 = vor.u32 1.1754944e-38, %v916
  %v918 = vsel %vm915, %v917, %v913
  %v919 = vmul.f32 1.0, %v918
  %v920 = vrcp.pop %v904
  %v921 = vmul.f32 %v904, %v920
  %v922 = vsub.f32 1.0, %v921
  %v923 = vmul.f32 %v920, %v922
  %v924 = vadd.f32 %v920, %v923
  %vm925 = vweird.f32 %v904
  %vm926 = vweird.f32 %v920
  %vm927 = vmor %vm925, %vm926
  %v928 = vsel %vm927, %v920, %v924
  %v929 = vand.u32 2147483647, %v904
  %vm930 = vcmp.eq.f32.partialorder %v929, 8.507059e+37
  %v931 = vand.u32 %v904, 2147483648
  %v932 = vor.u32 1.1754944e-38, %v931
  %v933 = vsel %vm930, %v932, %v928
  %v934 = vmul.f32 1.0, %v933
  %v935 = vsel %vm182, %v895, %v919
  %v936 = vsel %vm183, %v896, %v934
  %v937 = vld [vmem:[#allocation4] sm:$0x3]
  %939 = vrot.lane.b32.xlu0 %v937, 64
  %v940 = vpop.permute.xlu0 %939
  %v942 = vmul.f32 %v935, %v940
  %v943 = vmul.f32 %v935, %v936
  %945 = vrot.lane.b32.xlu0 %v943, 64
  %v946 = vpop.permute.xlu0 %945
  %v948 = vadd.f32 %v942, %v946
  %v949 = vtanh.pop %v948
  %v950 = vmul.f32 %v936, %v949
  %952 = vrot.lane.b32.xlu0 %v948, 64
  %v953 = vpop.permute.xlu0 %952
  %955 = vst.msk [vmem:[#allocation4] sm:$0x3] %vm172, %v953
  %957 = vrot.lane.b32.xlu0 %v950, 64
  %v958 = vpop.permute.xlu0 %957
  %960 = vst.msk [vmem:[#allocation3] sm:$0x3] %vm172, %v958
  %s961 = scalar_lea.vmem %s4, 8
  %962 = vst.msk [vmem:[%s961] sm:$0x3] %vm172, %v958
  %v963 = vld [vmem:[#allocation2 + $0x10] sm:$0xc]
  %v964 = vld [vmem:[#allocation2 + $0x18] sm:$0xc]
  %v965 = vld [vmem:[#allocation3] sm:$0x3]
  %v966 = vpack.c.bf16 %v965, %v965
  %v967 = vld [vmem:[%s2] sm:$0xff]
  %v968 = vld [vmem:[%s2 + $0x8] sm:$0xff]
  %v969 = vld [vmem:[%s2 + $0x10] sm:$0xff]
  %v970 = vld [vmem:[%s2 + $0x18] sm:$0xff]
  %v971 = vld [vmem:[%s2 + $0x20] sm:$0xff]
  %v972 = vld [vmem:[%s2 + $0x28] sm:$0xff]
  %v973 = vld [vmem:[%s2 + $0x30] sm:$0xff]
  %v974 = vld [vmem:[%s2 + $0x38] sm:$0xff]
  %v983 = vunpack.c.l.b16 %v967
  %v984 = vunpack.c.h.b16 %v967
  %v985 = vunpack.c.l.b16 %v968
  %v986 = vunpack.c.h.b16 %v968
  %v987 = vunpack.c.l.b16 %v969
  %v988 = vunpack.c.h.b16 %v969
  %v989 = vunpack.c.l.b16 %v970
  %v990 = vunpack.c.h.b16 %v970
  %v991 = vunpack.c.l.b16 %v971
  %v992 = vunpack.c.h.b16 %v971
  %v993 = vunpack.c.l.b16 %v972
  %v994 = vunpack.c.h.b16 %v972
  %v995 = vunpack.c.l.b16 %v973
  %v996 = vunpack.c.h.b16 %v973
  %v997 = vunpack.c.l.b16 %v974
  %v998 = vunpack.c.h.b16 %v974
  %v999 = vpack.c.b16 %v985, %v983
  %v1000 = vpack.c.b16 %v986, %v984
  %v1001 = vpack.c.b16 %v989, %v987
  %v1002 = vpack.c.b16 %v990, %v988
  %v1003 = vpack.c.b16 %v993, %v991
  %v1004 = vpack.c.b16 %v994, %v992
  %v1005 = vpack.c.b16 %v997, %v995
  %v1006 = vpack.c.b16 %v998, %v996
  %v1016 = vsel %vm236, %v966, 0
  %1018 = vmatpush.bf16.msra.mxu0 0
  %1019 = vmatpush.bf16.msra.mxu0 0
  %1020 = vmatpush.bf16.msra.mxu0 0
  %1021 = vmatpush.bf16.msra.mxu0 0
  %1022 = vmatpush.bf16.msra.mxu0 %v1005
  %1023 = vmatpush.bf16.msra.mxu0 %v1003
  %1024 = vmatpush.bf16.msra.mxu0 %v1001
  %1025 = vmatpush.bf16.msra.mxu0 %v999
  %1026 = vmatmul.bf16.gmra.mxu0 %v1016
  %v1027 = vpop.f32.mrf.mxu0
  %v1028 = vadd.f32 0.0, %v1027
  %v1029 = vpop.f32.mrf.mxu0
  %1030 = vdwg.mxu0
  %1031 = vmatpush.bf16.msra.mxu0 0
  %1032 = vmatpush.bf16.msra.mxu0 0
  %1033 = vmatpush.bf16.msra.mxu0 0
  %1034 = vmatpush.bf16.msra.mxu0 0
  %1035 = vmatpush.bf16.msra.mxu0 %v1006
  %1036 = vmatpush.bf16.msra.mxu0 %v1004
  %1037 = vmatpush.bf16.msra.mxu0 %v1002
  %1038 = vmatpush.bf16.msra.mxu0 %v1000
  %1039 = vmatmul.bf16.gmra.mxu0 %v1016
  %v1040 = vpop.f32.mrf.mxu0
  %v1041 = vadd.f32 0.0, %v1040
  %v1042 = vpop.f32.mrf.mxu0
  %1043 = vdwg.mxu0
  %v1046 = vrot.slane %v1028, 6
  %v1047 = vrot.slane %v1041, 6
  %v1050 = vadd.f32 %v963, %v1046
  %v1051 = vadd.f32 %v964, %v1047
  %v1052 = vtanh.pop %v1050
  %v1053 = vtanh.pop %v1051
  %v1054 = vxor.u32 %v1050, 2147483648
  %v1055 = vxor.u32 %v1051, 2147483648
  %v1056 = vmul.f32 %v1054, 1.442695
  %v1057 = vpow.pop %v1056
  %v1058 = vmul.f32 %v1055, 1.442695
  %v1059 = vpow.pop %v1058
  %v1060 = vadd.f32 %v1057, 1.0
  %v1061 = vadd.f32 %v1059, 1.0
  %v1062 = vrcp.pop %v1060
  %v1063 = vmul.f32 %v1060, %v1062
  %v1064 = vsub.f32 1.0, %v1063
  %v1065 = vmul.f32 %v1062, %v1064
  %v1066 = vadd.f32 %v1062, %v1065
  %vm1067 = vweird.f32 %v1060
  %vm1068 = vweird.f32 %v1062
  %vm1069 = vmor %vm1067, %vm1068
  %v1070 = vsel %vm1069, %v1062, %v1066
  %v1071 = vand.u32 2147483647, %v1060
  %vm1072 = vcmp.eq.f32.partialorder %v1071, 8.507059e+37
  %v1073 = vand.u32 %v1060, 2147483648
  %v1074 = vor.u32 1.1754944e-38, %v1073
  %v1075 = vsel %vm1072, %v1074, %v1070
  %v1076 = vmul.f32 1.0, %v1075
  %v1077 = vrcp.pop %v1061
  %v1078 = vmul.f32 %v1061, %v1077
  %v1079 = vsub.f32 1.0, %v1078
  %v1080 = vmul.f32 %v1077, %v1079
  %v1081 = vadd.f32 %v1077, %v1080
  %vm1082 = vweird.f32 %v1061
  %vm1083 = vweird.f32 %v1077
  %vm1084 = vmor %vm1082, %vm1083
  %v1085 = vsel %vm1084, %v1077, %v1081
  %v1086 = vand.u32 2147483647, %v1061
  %vm1087 = vcmp.eq.f32.partialorder %v1086, 8.507059e+37
  %v1088 = vand.u32 %v1061, 2147483648
  %v1089 = vor.u32 1.1754944e-38, %v1088
  %v1090 = vsel %vm1087, %v1089, %v1085
  %v1091 = vmul.f32 1.0, %v1090
  %v1092 = vsel %vm182, %v1052, %v1076
  %v1093 = vsel %vm183, %v1053, %v1091
  %v1094 = vld [vmem:[#allocation4] sm:$0x3]
  %v1096 = vrot.slane %v1094, 6
  %1097 = vrot.lane.b32.xlu0 %v1096, 64
  %v1098 = vpop.permute.xlu0 %1097
  %v1100 = vmul.f32 %v1092, %v1098
  %v1101 = vmul.f32 %v1092, %v1093
  %1103 = vrot.lane.b32.xlu0 %v1101, 64
  %v1104 = vpop.permute.xlu0 %1103
  %v1106 = vadd.f32 %v1100, %v1104
  %v1107 = vtanh.pop %v1106
  %v1108 = vmul.f32 %v1093, %v1107
  %1110 = vrot.lane.b32.xlu0 %v1106, 64
  %v1111 = vpop.permute.xlu0 %1110
  %1113 = vst.msk [vmem:[#allocation4 - $0x2] sm:$0xc] %vm485, %v1111
  %1115 = vrot.lane.b32.xlu0 %v1108, 64
  %v1116 = vpop.permute.xlu0 %1115
  %1118 = vst.msk [vmem:[#allocation3 - $0x2] sm:$0xc] %vm485, %v1116
  %s1119 = scalar_lea.vmem %s4, 10
  %1120 = vst.msk [vmem:[%s1119 - $0x2] sm:$0xc] %vm485, %v1116
  %v1121 = vld [vmem:[#allocation2 + $0x10] sm:$0x30]
  %v1122 = vld [vmem:[#allocation2 + $0x18] sm:$0x30]
  %v1123 = vld [vmem:[#allocation3] sm:$0x3]
  %v1124 = vpack.c.bf16 %v1123, %v1123
  %v1125 = vld [vmem:[%s2] sm:$0xff]
  %v1126 = vld [vmem:[%s2 + $0x8] sm:$0xff]
  %v1127 = vld [vmem:[%s2 + $0x10] sm:$0xff]
  %v1128 = vld [vmem:[%s2 + $0x18] sm:$0xff]
  %v1129 = vld [vmem:[%s2 + $0x20] sm:$0xff]
  %v1130 = vld [vmem:[%s2 + $0x28] sm:$0xff]
  %v1131 = vld [vmem:[%s2 + $0x30] sm:$0xff]
  %v1132 = vld [vmem:[%s2 + $0x38] sm:$0xff]
  %v1141 = vunpack.c.l.b16 %v1125
  %v1142 = vunpack.c.h.b16 %v1125
  %v1143 = vunpack.c.l.b16 %v1126
  %v1144 = vunpack.c.h.b16 %v1126
  %v1145 = vunpack.c.l.b16 %v1127
  %v1146 = vunpack.c.h.b16 %v1127
  %v1147 = vunpack.c.l.b16 %v1128
  %v1148 = vunpack.c.h.b16 %v1128
  %v1149 = vunpack.c.l.b16 %v1129
  %v1150 = vunpack.c.h.b16 %v1129
  %v1151 = vunpack.c.l.b16 %v1130
  %v1152 = vunpack.c.h.b16 %v1130
  %v1153 = vunpack.c.l.b16 %v1131
  %v1154 = vunpack.c.h.b16 %v1131
  %v1155 = vunpack.c.l.b16 %v1132
  %v1156 = vunpack.c.h.b16 %v1132
  %v1157 = vpack.c.b16 %v1143, %v1141
  %v1158 = vpack.c.b16 %v1144, %v1142
  %v1159 = vpack.c.b16 %v1147, %v1145
  %v1160 = vpack.c.b16 %v1148, %v1146
  %v1161 = vpack.c.b16 %v1151, %v1149
  %v1162 = vpack.c.b16 %v1152, %v1150
  %v1163 = vpack.c.b16 %v1155, %v1153
  %v1164 = vpack.c.b16 %v1156, %v1154
  %v1174 = vsel %vm236, %v1124, 0
  %1176 = vmatpush.bf16.msra.mxu0 0
  %1177 = vmatpush.bf16.msra.mxu0 0
  %1178 = vmatpush.bf16.msra.mxu0 0
  %1179 = vmatpush.bf16.msra.mxu0 0
  %1180 = vmatpush.bf16.msra.mxu0 %v1163
  %1181 = vmatpush.bf16.msra.mxu0 %v1161
  %1182 = vmatpush.bf16.msra.mxu0 %v1159
  %1183 = vmatpush.bf16.msra.mxu0 %v1157
  %1184 = vmatmul.bf16.gmra.mxu0 %v1174
  %v1185 = vpop.f32.mrf.mxu0
  %v1186 = vadd.f32 0.0, %v1185
  %v1187 = vpop.f32.mrf.mxu0
  %1188 = vdwg.mxu0
  %1189 = vmatpush.bf16.msra.mxu0 0
  %1190 = vmatpush.bf16.msra.mxu0 0
  %1191 = vmatpush.bf16.msra.mxu0 0
  %1192 = vmatpush.bf16.msra.mxu0 0
  %1193 = vmatpush.bf16.msra.mxu0 %v1164
  %1194 = vmatpush.bf16.msra.mxu0 %v1162
  %1195 = vmatpush.bf16.msra.mxu0 %v1160
  %1196 = vmatpush.bf16.msra.mxu0 %v1158
  %1197 = vmatmul.bf16.gmra.mxu0 %v1174
  %v1198 = vpop.f32.mrf.mxu0
  %v1199 = vadd.f32 0.0, %v1198
  %v1200 = vpop.f32.mrf.mxu0
  %1201 = vdwg.mxu0
  %v1204 = vrot.slane %v1186, 4
  %v1205 = vrot.slane %v1199, 4
  %v1208 = vadd.f32 %v1121, %v1204
  %v1209 = vadd.f32 %v1122, %v1205
  %v1210 = vtanh.pop %v1208
  %v1211 = vtanh.pop %v1209
  %v1212 = vxor.u32 %v1208, 2147483648
  %v1213 = vxor.u32 %v1209, 2147483648
  %v1214 = vmul.f32 %v1212, 1.442695
  %v1215 = vpow.pop %v1214
  %v1216 = vmul.f32 %v1213, 1.442695
  %v1217 = vpow.pop %v1216
  %v1218 = vadd.f32 %v1215, 1.0
  %v1219 = vadd.f32 %v1217, 1.0
  %v1220 = vrcp.pop %v1218
  %v1221 = vmul.f32 %v1218, %v1220
  %v1222 = vsub.f32 1.0, %v1221
  %v1223 = vmul.f32 %v1220, %v1222
  %v1224 = vadd.f32 %v1220, %v1223
  %vm1225 = vweird.f32 %v1218
  %vm1226 = vweird.f32 %v1220
  %vm1227 = vmor %vm1225, %vm1226
  %v1228 = vsel %vm1227, %v1220, %v1224
  %v1229 = vand.u32 2147483647, %v1218
  %vm1230 = vcmp.eq.f32.partialorder %v1229, 8.507059e+37
  %v1231 = vand.u32 %v1218, 2147483648
  %v1232 = vor.u32 1.1754944e-38, %v1231
  %v1233 = vsel %vm1230, %v1232, %v1228
  %v1234 = vmul.f32 1.0, %v1233
  %v1235 = vrcp.pop %v1219
  %v1236 = vmul.f32 %v1219, %v1235
  %v1237 = vsub.f32 1.0, %v1236
  %v1238 = vmul.f32 %v1235, %v1237
  %v1239 = vadd.f32 %v1235, %v1238
  %vm1240 = vweird.f32 %v1219
  %vm1241 = vweird.f32 %v1235
  %vm1242 = vmor %vm1240, %vm1241
  %v1243 = vsel %vm1242, %v1235, %v1239
  %v1244 = vand.u32 2147483647, %v1219
  %vm1245 = vcmp.eq.f32.partialorder %v1244, 8.507059e+37
  %v1246 = vand.u32 %v1219, 2147483648
  %v1247 = vor.u32 1.1754944e-38, %v1246
  %v1248 = vsel %vm1245, %v1247, %v1243
  %v1249 = vmul.f32 1.0, %v1248
  %v1250 = vsel %vm182, %v1210, %v1234
  %v1251 = vsel %vm183, %v1211, %v1249
  %v1252 = vld [vmem:[#allocation4] sm:$0x3]
  %v1254 = vrot.slane %v1252, 4
  %1255 = vrot.lane.b32.xlu0 %v1254, 64
  %v1256 = vpop.permute.xlu0 %1255
  %v1258 = vmul.f32 %v1250, %v1256
  %v1259 = vmul.f32 %v1250, %v1251
  %1261 = vrot.lane.b32.xlu0 %v1259, 64
  %v1262 = vpop.permute.xlu0 %1261
  %v1264 = vadd.f32 %v1258, %v1262
  %v1265 = vtanh.pop %v1264
  %v1266 = vmul.f32 %v1251, %v1265
  %1268 = vrot.lane.b32.xlu0 %v1264, 64
  %v1269 = vpop.permute.xlu0 %1268
  %1271 = vst.msk [vmem:[#allocation4 - $0x4] sm:$0x30] %vm644, %v1269
  %1273 = vrot.lane.b32.xlu0 %v1266, 64
  %v1274 = vpop.permute.xlu0 %1273
  %1276 = vst.msk [vmem:[#allocation3 - $0x4] sm:$0x30] %vm644, %v1274
  %s1277 = scalar_lea.vmem %s4, 12
  %1278 = vst.msk [vmem:[%s1277 - $0x4] sm:$0x30] %vm644, %v1274
  %v1279 = vld [vmem:[#allocation2 + $0x10] sm:$0xc0]
  %v1280 = vld [vmem:[#allocation2 + $0x18] sm:$0xc0]
  %v1281 = vld [vmem:[#allocation3] sm:$0x3]
  %v1282 = vpack.c.bf16 %v1281, %v1281
  %v1283 = vld [vmem:[%s2] sm:$0xff]
  %v1284 = vld [vmem:[%s2 + $0x8] sm:$0xff]
  %v1285 = vld [vmem:[%s2 + $0x10] sm:$0xff]
  %v1286 = vld [vmem:[%s2 + $0x18] sm:$0xff]
  %v1287 = vld [vmem:[%s2 + $0x20] sm:$0xff]
  %v1288 = vld [vmem:[%s2 + $0x28] sm:$0xff]
  %v1289 = vld [vmem:[%s2 + $0x30] sm:$0xff]
  %v1290 = vld [vmem:[%s2 + $0x38] sm:$0xff]
  %v1299 = vunpack.c.l.b16 %v1283
  %v1300 = vunpack.c.h.b16 %v1283
  %v1301 = vunpack.c.l.b16 %v1284
  %v1302 = vunpack.c.h.b16 %v1284
  %v1303 = vunpack.c.l.b16 %v1285
  %v1304 = vunpack.c.h.b16 %v1285
  %v1305 = vunpack.c.l.b16 %v1286
  %v1306 = vunpack.c.h.b16 %v1286
  %v1307 = vunpack.c.l.b16 %v1287
  %v1308 = vunpack.c.h.b16 %v1287
  %v1309 = vunpack.c.l.b16 %v1288
  %v1310 = vunpack.c.h.b16 %v1288
  %v1311 = vunpack.c.l.b16 %v1289
  %v1312 = vunpack.c.h.b16 %v1289
  %v1313 = vunpack.c.l.b16 %v1290
  %v1314 = vunpack.c.h.b16 %v1290
  %v1315 = vpack.c.b16 %v1301, %v1299
  %v1316 = vpack.c.b16 %v1302, %v1300
  %v1317 = vpack.c.b16 %v1305, %v1303
  %v1318 = vpack.c.b16 %v1306, %v1304
  %v1319 = vpack.c.b16 %v1309, %v1307
  %v1320 = vpack.c.b16 %v1310, %v1308
  %v1321 = vpack.c.b16 %v1313, %v1311
  %v1322 = vpack.c.b16 %v1314, %v1312
  %v1332 = vsel %vm236, %v1282, 0
  %1334 = vmatpush.bf16.msra.mxu0 0
  %1335 = vmatpush.bf16.msra.mxu0 0
  %1336 = vmatpush.bf16.msra.mxu0 0
  %1337 = vmatpush.bf16.msra.mxu0 0
  %1338 = vmatpush.bf16.msra.mxu0 %v1321
  %1339 = vmatpush.bf16.msra.mxu0 %v1319
  %1340 = vmatpush.bf16.msra.mxu0 %v1317
  %1341 = vmatpush.bf16.msra.mxu0 %v1315
  %1342 = vmatmul.bf16.gmra.mxu0 %v1332
  %v1343 = vpop.f32.mrf.mxu0
  %v1344 = vadd.f32 0.0, %v1343
  %v1345 = vpop.f32.mrf.mxu0
  %1346 = vdwg.mxu0
  %1347 = vmatpush.bf16.msra.mxu0 0
  %1348 = vmatpush.bf16.msra.mxu0 0
  %1349 = vmatpush.bf16.msra.mxu0 0
  %1350 = vmatpush.bf16.msra.mxu0 0
  %1351 = vmatpush.bf16.msra.mxu0 %v1322
  %1352 = vmatpush.bf16.msra.mxu0 %v1320
  %1353 = vmatpush.bf16.msra.mxu0 %v1318
  %1354 = vmatpush.bf16.msra.mxu0 %v1316
  %1355 = vmatmul.bf16.gmra.mxu0 %v1332
  %v1356 = vpop.f32.mrf.mxu0
  %v1357 = vadd.f32 0.0, %v1356
  %v1358 = vpop.f32.mrf.mxu0
  %1359 = vdwg.mxu0
  %v1362 = vrot.slane %v1344, 2
  %v1363 = vrot.slane %v1357, 2
  %v1366 = vadd.f32 %v1279, %v1362
  %v1367 = vadd.f32 %v1280, %v1363
  %v1368 = vtanh.pop %v1366
  %v1369 = vtanh.pop %v1367
  %v1370 = vxor.u32 %v1366, 2147483648
  %v1371 = vxor.u32 %v1367, 2147483648
  %v1372 = vmul.f32 %v1370, 1.442695
  %v1373 = vpow.pop %v1372
  %v1374 = vmul.f32 %v1371, 1.442695
  %v1375 = vpow.pop %v1374
  %v1376 = vadd.f32 %v1373, 1.0
  %v1377 = vadd.f32 %v1375, 1.0
  %v1378 = vrcp.pop %v1376
  %v1379 = vmul.f32 %v1376, %v1378
  %v1380 = vsub.f32 1.0, %v1379
  %v1381 = vmul.f32 %v1378, %v1380
  %v1382 = vadd.f32 %v1378, %v1381
  %vm1383 = vweird.f32 %v1376
  %vm1384 = vweird.f32 %v1378
  %vm1385 = vmor %vm1383, %vm1384
  %v1386 = vsel %vm1385, %v1378, %v1382
  %v1387 = vand.u32 2147483647, %v1376
  %vm1388 = vcmp.eq.f32.partialorder %v1387, 8.507059e+37
  %v1389 = vand.u32 %v1376, 2147483648
  %v1390 = vor.u32 1.1754944e-38, %v1389
  %v1391 = vsel %vm1388, %v1390, %v1386
  %v1392 = vmul.f32 1.0, %v1391
  %v1393 = vrcp.pop %v1377
  %v1394 = vmul.f32 %v1377, %v1393
  %v1395 = vsub.f32 1.0, %v1394
  %v1396 = vmul.f32 %v1393, %v1395
  %v1397 = vadd.f32 %v1393, %v1396
  %vm1398 = vweird.f32 %v1377
  %vm1399 = vweird.f32 %v1393
  %vm1400 = vmor %vm1398, %vm1399
  %v1401 = vsel %vm1400, %v1393, %v1397
  %v1402 = vand.u32 2147483647, %v1377
  %vm1403 = vcmp.eq.f32.partialorder %v1402, 8.507059e+37
  %v1404 = vand.u32 %v1377, 2147483648
  %v1405 = vor.u32 1.1754944e-38, %v1404
  %v1406 = vsel %vm1403, %v1405, %v1401
  %v1407 = vmul.f32 1.0, %v1406
  %v1408 = vsel %vm182, %v1368, %v1392
  %v1409 = vsel %vm183, %v1369, %v1407
  %v1410 = vld [vmem:[#allocation4] sm:$0x3]
  %v1412 = vrot.slane %v1410, 2
  %1413 = vrot.lane.b32.xlu0 %v1412, 64
  %v1414 = vpop.permute.xlu0 %1413
  %v1416 = vmul.f32 %v1408, %v1414
  %v1417 = vmul.f32 %v1408, %v1409
  %1419 = vrot.lane.b32.xlu0 %v1417, 64
  %v1420 = vpop.permute.xlu0 %1419
  %v1422 = vadd.f32 %v1416, %v1420
  %v1423 = vtanh.pop %v1422
  %v1424 = vmul.f32 %v1409, %v1423
  %1426 = vrot.lane.b32.xlu0 %v1422, 64
  %v1427 = vpop.permute.xlu0 %1426
  %1429 = vst.msk [vmem:[#allocation4 - $0x6] sm:$0xc0] %vm803, %v1427
  %1431 = vrot.lane.b32.xlu0 %v1424, 64
  %v1432 = vpop.permute.xlu0 %1431
  %1434 = vst.msk [vmem:[#allocation3 - $0x6] sm:$0xc0] %vm803, %v1432
  %s1435 = scalar_lea.vmem %s4, 14
  %1436 = vst.msk [vmem:[%s1435 - $0x6] sm:$0xc0] %vm803, %v1432
  %v1437 = vld [vmem:[#allocation2 + $0x20] sm:$0x3]
  %v1438 = vld [vmem:[#allocation2 + $0x28] sm:$0x3]
  %v1439 = vld [vmem:[#allocation3] sm:$0x3]
  %v1440 = vpack.c.bf16 %v1439, %v1439
  %v1441 = vld [vmem:[%s2] sm:$0xff]
  %v1442 = vld [vmem:[%s2 + $0x8] sm:$0xff]
  %v1443 = vld [vmem:[%s2 + $0x10] sm:$0xff]
  %v1444 = vld [vmem:[%s2 + $0x18] sm:$0xff]
  %v1445 = vld [vmem:[%s2 + $0x20] sm:$0xff]
  %v1446 = vld [vmem:[%s2 + $0x28] sm:$0xff]
  %v1447 = vld [vmem:[%s2 + $0x30] sm:$0xff]
  %v1448 = vld [vmem:[%s2 + $0x38] sm:$0xff]
  %v1457 = vunpack.c.l.b16 %v1441
  %v1458 = vunpack.c.h.b16 %v1441
  %v1459 = vunpack.c.l.b16 %v1442
  %v1460 = vunpack.c.h.b16 %v1442
  %v1461 = vunpack.c.l.b16 %v1443
  %v1462 = vunpack.c.h.b16 %v1443
  %v1463 = vunpack.c.l.b16 %v1444
  %v1464 = vunpack.c.h.b16 %v1444
  %v1465 = vunpack.c.l.b16 %v1445
  %v1466 = vunpack.c.h.b16 %v1445
  %v1467 = vunpack.c.l.b16 %v1446
  %v1468 = vunpack.c.h.b16 %v1446
  %v1469 = vunpack.c.l.b16 %v1447
  %v1470 = vunpack.c.h.b16 %v1447
  %v1471 = vunpack.c.l.b16 %v1448
  %v1472 = vunpack.c.h.b16 %v1448
  %v1473 = vpack.c.b16 %v1459, %v1457
  %v1474 = vpack.c.b16 %v1460, %v1458
  %v1475 = vpack.c.b16 %v1463, %v1461
  %v1476 = vpack.c.b16 %v1464, %v1462
  %v1477 = vpack.c.b16 %v1467, %v1465
  %v1478 = vpack.c.b16 %v1468, %v1466
  %v1479 = vpack.c.b16 %v1471, %v1469
  %v1480 = vpack.c.b16 %v1472, %v1470
  %v1490 = vsel %vm236, %v1440, 0
  %1492 = vmatpush.bf16.msra.mxu0 0
  %1493 = vmatpush.bf16.msra.mxu0 0
  %1494 = vmatpush.bf16.msra.mxu0 0
  %1495 = vmatpush.bf16.msra.mxu0 0
  %1496 = vmatpush.bf16.msra.mxu0 %v1479
  %1497 = vmatpush.bf16.msra.mxu0 %v1477
  %1498 = vmatpush.bf16.msra.mxu0 %v1475
  %1499 = vmatpush.bf16.msra.mxu0 %v1473
  %1500 = vmatmul.bf16.gmra.mxu0 %v1490
  %v1501 = vpop.f32.mrf.mxu0
  %v1502 = vadd.f32 0.0, %v1501
  %v1503 = vpop.f32.mrf.mxu0
  %1504 = vdwg.mxu0
  %1505 = vmatpush.bf16.msra.mxu0 0
  %1506 = vmatpush.bf16.msra.mxu0 0
  %1507 = vmatpush.bf16.msra.mxu0 0
  %1508 = vmatpush.bf16.msra.mxu0 0
  %1509 = vmatpush.bf16.msra.mxu0 %v1480
  %1510 = vmatpush.bf16.msra.mxu0 %v1478
  %1511 = vmatpush.bf16.msra.mxu0 %v1476
  %1512 = vmatpush.bf16.msra.mxu0 %v1474
  %1513 = vmatmul.bf16.gmra.mxu0 %v1490
  %v1514 = vpop.f32.mrf.mxu0
  %v1515 = vadd.f32 0.0, %v1514
  %v1516 = vpop.f32.mrf.mxu0
  %1517 = vdwg.mxu0
  %v1518 = vadd.f32 %v1437, %v1502
  %v1519 = vadd.f32 %v1438, %v1515
  %v1520 = vtanh.pop %v1518
  %v1521 = vtanh.pop %v1519
  %v1522 = vxor.u32 %v1518, 2147483648
  %v1523 = vxor.u32 %v1519, 2147483648
  %v1524 = vmul.f32 %v1522, 1.442695
  %v1525 = vpow.pop %v1524
  %v1526 = vmul.f32 %v1523, 1.442695
  %v1527 = vpow.pop %v1526
  %v1528 = vadd.f32 %v1525, 1.0
  %v1529 = vadd.f32 %v1527, 1.0
  %v1530 = vrcp.pop %v1528
  %v1531 = vmul.f32 %v1528, %v1530
  %v1532 = vsub.f32 1.0, %v1531
  %v1533 = vmul.f32 %v1530, %v1532
  %v1534 = vadd.f32 %v1530, %v1533
  %vm1535 = vweird.f32 %v1528
  %vm1536 = vweird.f32 %v1530
  %vm1537 = vmor %vm1535, %vm1536
  %v1538 = vsel %vm1537, %v1530, %v1534
  %v1539 = vand.u32 2147483647, %v1528
  %vm1540 = vcmp.eq.f32.partialorder %v1539, 8.507059e+37
  %v1541 = vand.u32 %v1528, 2147483648
  %v1542 = vor.u32 1.1754944e-38, %v1541
  %v1543 = vsel %vm1540, %v1542, %v1538
  %v1544 = vmul.f32 1.0, %v1543
  %v1545 = vrcp.pop %v1529
  %v1546 = vmul.f32 %v1529, %v1545
  %v1547 = vsub.f32 1.0, %v1546
  %v1548 = vmul.f32 %v1545, %v1547
  %v1549 = vadd.f32 %v1545, %v1548
  %vm1550 = vweird.f32 %v1529
  %vm1551 = vweird.f32 %v1545
  %vm1552 = vmor %vm1550, %vm1551
  %v1553 = vsel %vm1552, %v1545, %v1549
  %v1554 = vand.u32 2147483647, %v1529
  %vm1555 = vcmp.eq.f32.partialorder %v1554, 8.507059e+37
  %v1556 = vand.u32 %v1529, 2147483648
  %v1557 = vor.u32 1.1754944e-38, %v1556
  %v1558 = vsel %vm1555, %v1557, %v1553
  %v1559 = vmul.f32 1.0, %v1558
  %v1560 = vsel %vm182, %v1520, %v1544
  %v1561 = vsel %vm183, %v1521, %v1559
  %v1562 = vld [vmem:[#allocation4] sm:$0x3]
  %1564 = vrot.lane.b32.xlu0 %v1562, 64
  %v1565 = vpop.permute.xlu0 %1564
  %v1567 = vmul.f32 %v1560, %v1565
  %v1568 = vmul.f32 %v1560, %v1561
  %1570 = vrot.lane.b32.xlu0 %v1568, 64
  %v1571 = vpop.permute.xlu0 %1570
  %v1573 = vadd.f32 %v1567, %v1571
  %v1574 = vtanh.pop %v1573
  %v1575 = vmul.f32 %v1561, %v1574
  %1577 = vrot.lane.b32.xlu0 %v1573, 64
  %v1578 = vpop.permute.xlu0 %1577
  %1580 = vst.msk [vmem:[#allocation4] sm:$0x3] %vm172, %v1578
  %1582 = vrot.lane.b32.xlu0 %v1575, 64
  %v1583 = vpop.permute.xlu0 %1582
  %1585 = vst.msk [vmem:[#allocation3] sm:$0x3] %vm172, %v1583
  %s1586 = scalar_lea.vmem %s4, 16
  %1587 = vst.msk [vmem:[%s1586] sm:$0x3] %vm172, %v1583
  %v1588 = vld [vmem:[#allocation2 + $0x20] sm:$0xc]
  %v1589 = vld [vmem:[#allocation2 + $0x28] sm:$0xc]
  %v1590 = vld [vmem:[#allocation3] sm:$0x3]
  %v1591 = vpack.c.bf16 %v1590, %v1590
  %v1592 = vld [vmem:[%s2] sm:$0xff]
  %v1593 = vld [vmem:[%s2 + $0x8] sm:$0xff]
  %v1594 = vld [vmem:[%s2 + $0x10] sm:$0xff]
  %v1595 = vld [vmem:[%s2 + $0x18] sm:$0xff]
  %v1596 = vld [vmem:[%s2 + $0x20] sm:$0xff]
  %v1597 = vld [vmem:[%s2 + $0x28] sm:$0xff]
  %v1598 = vld [vmem:[%s2 + $0x30] sm:$0xff]
  %v1599 = vld [vmem:[%s2 + $0x38] sm:$0xff]
  %v1608 = vunpack.c.l.b16 %v1592
  %v1609 = vunpack.c.h.b16 %v1592
  %v1610 = vunpack.c.l.b16 %v1593
  %v1611 = vunpack.c.h.b16 %v1593
  %v1612 = vunpack.c.l.b16 %v1594
  %v1613 = vunpack.c.h.b16 %v1594
  %v1614 = vunpack.c.l.b16 %v1595
  %v1615 = vunpack.c.h.b16 %v1595
  %v1616 = vunpack.c.l.b16 %v1596
  %v1617 = vunpack.c.h.b16 %v1596
  %v1618 = vunpack.c.l.b16 %v1597
  %v1619 = vunpack.c.h.b16 %v1597
  %v1620 = vunpack.c.l.b16 %v1598
  %v1621 = vunpack.c.h.b16 %v1598
  %v1622 = vunpack.c.l.b16 %v1599
  %v1623 = vunpack.c.h.b16 %v1599
  %v1624 = vpack.c.b16 %v1610, %v1608
  %v1625 = vpack.c.b16 %v1611, %v1609
  %v1626 = vpack.c.b16 %v1614, %v1612
  %v1627 = vpack.c.b16 %v1615, %v1613
  %v1628 = vpack.c.b16 %v1618, %v1616
  %v1629 = vpack.c.b16 %v1619, %v1617
  %v1630 = vpack.c.b16 %v1622, %v1620
  %v1631 = vpack.c.b16 %v1623, %v1621
  %v1641 = vsel %vm236, %v1591, 0
  %1643 = vmatpush.bf16.msra.mxu0 0
  %1644 = vmatpush.bf16.msra.mxu0 0
  %1645 = vmatpush.bf16.msra.mxu0 0
  %1646 = vmatpush.bf16.msra.mxu0 0
  %1647 = vmatpush.bf16.msra.mxu0 %v1630
  %1648 = vmatpush.bf16.msra.mxu0 %v1628
  %1649 = vmatpush.bf16.msra.mxu0 %v1626
  %1650 = vmatpush.bf16.msra.mxu0 %v1624
  %1651 = vmatmul.bf16.gmra.mxu0 %v1641
  %v1652 = vpop.f32.mrf.mxu0
  %v1653 = vadd.f32 0.0, %v1652
  %v1654 = vpop.f32.mrf.mxu0
  %1655 = vdwg.mxu0
  %1656 = vmatpush.bf16.msra.mxu0 0
  %1657 = vmatpush.bf16.msra.mxu0 0
  %1658 = vmatpush.bf16.msra.mxu0 0
  %1659 = vmatpush.bf16.msra.mxu0 0
  %1660 = vmatpush.bf16.msra.mxu0 %v1631
  %1661 = vmatpush.bf16.msra.mxu0 %v1629
  %1662 = vmatpush.bf16.msra.mxu0 %v1627
  %1663 = vmatpush.bf16.msra.mxu0 %v1625
  %1664 = vmatmul.bf16.gmra.mxu0 %v1641
  %v1665 = vpop.f32.mrf.mxu0
  %v1666 = vadd.f32 0.0, %v1665
  %v1667 = vpop.f32.mrf.mxu0
  %1668 = vdwg.mxu0
  %v1671 = vrot.slane %v1653, 6
  %v1672 = vrot.slane %v1666, 6
  %v1675 = vadd.f32 %v1588, %v1671
  %v1676 = vadd.f32 %v1589, %v1672
  %v1677 = vtanh.pop %v1675
  %v1678 = vtanh.pop %v1676
  %v1679 = vxor.u32 %v1675, 2147483648
  %v1680 = vxor.u32 %v1676, 2147483648
  %v1681 = vmul.f32 %v1679, 1.442695
  %v1682 = vpow.pop %v1681
  %v1683 = vmul.f32 %v1680, 1.442695
  %v1684 = vpow.pop %v1683
  %v1685 = vadd.f32 %v1682, 1.0
  %v1686 = vadd.f32 %v1684, 1.0
  %v1687 = vrcp.pop %v1685
  %v1688 = vmul.f32 %v1685, %v1687
  %v1689 = vsub.f32 1.0, %v1688
  %v1690 = vmul.f32 %v1687, %v1689
  %v1691 = vadd.f32 %v1687, %v1690
  %vm1692 = vweird.f32 %v1685
  %vm1693 = vweird.f32 %v1687
  %vm1694 = vmor %vm1692, %vm1693
  %v1695 = vsel %vm1694, %v1687, %v1691
  %v1696 = vand.u32 2147483647, %v1685
  %vm1697 = vcmp.eq.f32.partialorder %v1696, 8.507059e+37
  %v1698 = vand.u32 %v1685, 2147483648
  %v1699 = vor.u32 1.1754944e-38, %v1698
  %v1700 = vsel %vm1697, %v1699, %v1695
  %v1701 = vmul.f32 1.0, %v1700
  %v1702 = vrcp.pop %v1686
  %v1703 = vmul.f32 %v1686, %v1702
  %v1704 = vsub.f32 1.0, %v1703
  %v1705 = vmul.f32 %v1702, %v1704
  %v1706 = vadd.f32 %v1702, %v1705
  %vm1707 = vweird.f32 %v1686
  %vm1708 = vweird.f32 %v1702
  %vm1709 = vmor %vm1707, %vm1708
  %v1710 = vsel %vm1709, %v1702, %v1706
  %v1711 = vand.u32 2147483647, %v1686
  %vm1712 = vcmp.eq.f32.partialorder %v1711, 8.507059e+37
  %v1713 = vand.u32 %v1686, 2147483648
  %v1714 = vor.u32 1.1754944e-38, %v1713
  %v1715 = vsel %vm1712, %v1714, %v1710
  %v1716 = vmul.f32 1.0, %v1715
  %v1717 = vsel %vm182, %v1677, %v1701
  %v1718 = vsel %vm183, %v1678, %v1716
  %v1719 = vld [vmem:[#allocation4] sm:$0x3]
  %v1721 = vrot.slane %v1719, 6
  %1722 = vrot.lane.b32.xlu0 %v1721, 64
  %v1723 = vpop.permute.xlu0 %1722
  %v1725 = vmul.f32 %v1717, %v1723
  %v1726 = vmul.f32 %v1717, %v1718
  %1728 = vrot.lane.b32.xlu0 %v1726, 64
  %v1729 = vpop.permute.xlu0 %1728
  %v1731 = vadd.f32 %v1725, %v1729
  %v1732 = vtanh.pop %v1731
  %v1733 = vmul.f32 %v1718, %v1732
  %1735 = vrot.lane.b32.xlu0 %v1731, 64
  %v1736 = vpop.permute.xlu0 %1735
  %1738 = vst.msk [vmem:[#allocation4 - $0x2] sm:$0xc] %vm485, %v1736
  %1740 = vrot.lane.b32.xlu0 %v1733, 64
  %v1741 = vpop.permute.xlu0 %1740
  %1743 = vst.msk [vmem:[#allocation3 - $0x2] sm:$0xc] %vm485, %v1741
  %s1744 = scalar_lea.vmem %s4, 18
  %1745 = vst.msk [vmem:[%s1744 - $0x2] sm:$0xc] %vm485, %v1741
  %v1746 = vld [vmem:[#allocation2 + $0x20] sm:$0x30]
  %v1747 = vld [vmem:[#allocation2 + $0x28] sm:$0x30]
  %v1748 = vld [vmem:[#allocation3] sm:$0x3]
  %v1749 = vpack.c.bf16 %v1748, %v1748
  %v1750 = vld [vmem:[%s2] sm:$0xff]
  %v1751 = vld [vmem:[%s2 + $0x8] sm:$0xff]
  %v1752 = vld [vmem:[%s2 + $0x10] sm:$0xff]
  %v1753 = vld [vmem:[%s2 + $0x18] sm:$0xff]
  %v1754 = vld [vmem:[%s2 + $0x20] sm:$0xff]
  %v1755 = vld [vmem:[%s2 + $0x28] sm:$0xff]
  %v1756 = vld [vmem:[%s2 + $0x30] sm:$0xff]
  %v1757 = vld [vmem:[%s2 + $0x38] sm:$0xff]
  %v1766 = vunpack.c.l.b16 %v1750
  %v1767 = vunpack.c.h.b16 %v1750
  %v1768 = vunpack.c.l.b16 %v1751
  %v1769 = vunpack.c.h.b16 %v1751
  %v1770 = vunpack.c.l.b16 %v1752
  %v1771 = vunpack.c.h.b16 %v1752
  %v1772 = vunpack.c.l.b16 %v1753
  %v1773 = vunpack.c.h.b16 %v1753
  %v1774 = vunpack.c.l.b16 %v1754
  %v1775 = vunpack.c.h.b16 %v1754
  %v1776 = vunpack.c.l.b16 %v1755
  %v1777 = vunpack.c.h.b16 %v1755
  %v1778 = vunpack.c.l.b16 %v1756
  %v1779 = vunpack.c.h.b16 %v1756
  %v1780 = vunpack.c.l.b16 %v1757
  %v1781 = vunpack.c.h.b16 %v1757
  %v1782 = vpack.c.b16 %v1768, %v1766
  %v1783 = vpack.c.b16 %v1769, %v1767
  %v1784 = vpack.c.b16 %v1772, %v1770
  %v1785 = vpack.c.b16 %v1773, %v1771
  %v1786 = vpack.c.b16 %v1776, %v1774
  %v1787 = vpack.c.b16 %v1777, %v1775
  %v1788 = vpack.c.b16 %v1780, %v1778
  %v1789 = vpack.c.b16 %v1781, %v1779
  %v1799 = vsel %vm236, %v1749, 0
  %1801 = vmatpush.bf16.msra.mxu0 0
  %1802 = vmatpush.bf16.msra.mxu0 0
  %1803 = vmatpush.bf16.msra.mxu0 0
  %1804 = vmatpush.bf16.msra.mxu0 0
  %1805 = vmatpush.bf16.msra.mxu0 %v1788
  %1806 = vmatpush.bf16.msra.mxu0 %v1786
  %1807 = vmatpush.bf16.msra.mxu0 %v1784
  %1808 = vmatpush.bf16.msra.mxu0 %v1782
  %1809 = vmatmul.bf16.gmra.mxu0 %v1799
  %v1810 = vpop.f32.mrf.mxu0
  %v1811 = vadd.f32 0.0, %v1810
  %v1812 = vpop.f32.mrf.mxu0
  %1813 = vdwg.mxu0
  %1814 = vmatpush.bf16.msra.mxu0 0
  %1815 = vmatpush.bf16.msra.mxu0 0
  %1816 = vmatpush.bf16.msra.mxu0 0
  %1817 = vmatpush.bf16.msra.mxu0 0
  %1818 = vmatpush.bf16.msra.mxu0 %v1789
  %1819 = vmatpush.bf16.msra.mxu0 %v1787
  %1820 = vmatpush.bf16.msra.mxu0 %v1785
  %1821 = vmatpush.bf16.msra.mxu0 %v1783
  %1822 = vmatmul.bf16.gmra.mxu0 %v1799
  %v1823 = vpop.f32.mrf.mxu0
  %v1824 = vadd.f32 0.0, %v1823
  %v1825 = vpop.f32.mrf.mxu0
  %1826 = vdwg.mxu0
  %v1829 = vrot.slane %v1811, 4
  %v1830 = vrot.slane %v1824, 4
  %v1833 = vadd.f32 %v1746, %v1829
  %v1834 = vadd.f32 %v1747, %v1830
  %v1835 = vtanh.pop %v1833
  %v1836 = vtanh.pop %v1834
  %v1837 = vxor.u32 %v1833, 2147483648
  %v1838 = vxor.u32 %v1834, 2147483648
  %v1839 = vmul.f32 %v1837, 1.442695
  %v1840 = vpow.pop %v1839
  %v1841 = vmul.f32 %v1838, 1.442695
  %v1842 = vpow.pop %v1841
  %v1843 = vadd.f32 %v1840, 1.0
  %v1844 = vadd.f32 %v1842, 1.0
  %v1845 = vrcp.pop %v1843
  %v1846 = vmul.f32 %v1843, %v1845
  %v1847 = vsub.f32 1.0, %v1846
  %v1848 = vmul.f32 %v1845, %v1847
  %v1849 = vadd.f32 %v1845, %v1848
  %vm1850 = vweird.f32 %v1843
  %vm1851 = vweird.f32 %v1845
  %vm1852 = vmor %vm1850, %vm1851
  %v1853 = vsel %vm1852, %v1845, %v1849
  %v1854 = vand.u32 2147483647, %v1843
  %vm1855 = vcmp.eq.f32.partialorder %v1854, 8.507059e+37
  %v1856 = vand.u32 %v1843, 2147483648
  %v1857 = vor.u32 1.1754944e-38, %v1856
  %v1858 = vsel %vm1855, %v1857, %v1853
  %v1859 = vmul.f32 1.0, %v1858
  %v1860 = vrcp.pop %v1844
  %v1861 = vmul.f32 %v1844, %v1860
  %v1862 = vsub.f32 1.0, %v1861
  %v1863 = vmul.f32 %v1860, %v1862
  %v1864 = vadd.f32 %v1860, %v1863
  %vm1865 = vweird.f32 %v1844
  %vm1866 = vweird.f32 %v1860
  %vm1867 = vmor %vm1865, %vm1866
  %v1868 = vsel %vm1867, %v1860, %v1864
  %v1869 = vand.u32 2147483647, %v1844
  %vm1870 = vcmp.eq.f32.partialorder %v1869, 8.507059e+37
  %v1871 = vand.u32 %v1844, 2147483648
  %v1872 = vor.u32 1.1754944e-38, %v1871
  %v1873 = vsel %vm1870, %v1872, %v1868
  %v1874 = vmul.f32 1.0, %v1873
  %v1875 = vsel %vm182, %v1835, %v1859
  %v1876 = vsel %vm183, %v1836, %v1874
  %v1877 = vld [vmem:[#allocation4] sm:$0x3]
  %v1879 = vrot.slane %v1877, 4
  %1880 = vrot.lane.b32.xlu0 %v1879, 64
  %v1881 = vpop.permute.xlu0 %1880
  %v1883 = vmul.f32 %v1875, %v1881
  %v1884 = vmul.f32 %v1875, %v1876
  %1886 = vrot.lane.b32.xlu0 %v1884, 64
  %v1887 = vpop.permute.xlu0 %1886
  %v1889 = vadd.f32 %v1883, %v1887
  %v1890 = vtanh.pop %v1889
  %v1891 = vmul.f32 %v1876, %v1890
  %1893 = vrot.lane.b32.xlu0 %v1889, 64
  %v1894 = vpop.permute.xlu0 %1893
  %1896 = vst.msk [vmem:[#allocation4 - $0x4] sm:$0x30] %vm644, %v1894
  %1898 = vrot.lane.b32.xlu0 %v1891, 64
  %v1899 = vpop.permute.xlu0 %1898
  %1901 = vst.msk [vmem:[#allocation3 - $0x4] sm:$0x30] %vm644, %v1899
  %s1902 = scalar_lea.vmem %s4, 20
  %1903 = vst.msk [vmem:[%s1902 - $0x4] sm:$0x30] %vm644, %v1899
  %v1904 = vld [vmem:[#allocation2 + $0x20] sm:$0xc0]
  %v1905 = vld [vmem:[#allocation2 + $0x28] sm:$0xc0]
  %v1906 = vld [vmem:[#allocation3] sm:$0x3]
  %v1907 = vpack.c.bf16 %v1906, %v1906
  %v1908 = vld [vmem:[%s2] sm:$0xff]
  %v1909 = vld [vmem:[%s2 + $0x8] sm:$0xff]
  %v1910 = vld [vmem:[%s2 + $0x10] sm:$0xff]
  %v1911 = vld [vmem:[%s2 + $0x18] sm:$0xff]
  %v1912 = vld [vmem:[%s2 + $0x20] sm:$0xff]
  %v1913 = vld [vmem:[%s2 + $0x28] sm:$0xff]
  %v1914 = vld [vmem:[%s2 + $0x30] sm:$0xff]
  %v1915 = vld [vmem:[%s2 + $0x38] sm:$0xff]
  %v1924 = vunpack.c.l.b16 %v1908
  %v1925 = vunpack.c.h.b16 %v1908
  %v1926 = vunpack.c.l.b16 %v1909
  %v1927 = vunpack.c.h.b16 %v1909
  %v1928 = vunpack.c.l.b16 %v1910
  %v1929 = vunpack.c.h.b16 %v1910
  %v1930 = vunpack.c.l.b16 %v1911
  %v1931 = vunpack.c.h.b16 %v1911
  %v1932 = vunpack.c.l.b16 %v1912
  %v1933 = vunpack.c.h.b16 %v1912
  %v1934 = vunpack.c.l.b16 %v1913
  %v1935 = vunpack.c.h.b16 %v1913
  %v1936 = vunpack.c.l.b16 %v1914
  %v1937 = vunpack.c.h.b16 %v1914
  %v1938 = vunpack.c.l.b16 %v1915
  %v1939 = vunpack.c.h.b16 %v1915
  %v1940 = vpack.c.b16 %v1926, %v1924
  %v1941 = vpack.c.b16 %v1927, %v1925
  %v1942 = vpack.c.b16 %v1930, %v1928
  %v1943 = vpack.c.b16 %v1931, %v1929
  %v1944 = vpack.c.b16 %v1934, %v1932
  %v1945 = vpack.c.b16 %v1935, %v1933
  %v1946 = vpack.c.b16 %v1938, %v1936
  %v1947 = vpack.c.b16 %v1939, %v1937
  %v1957 = vsel %vm236, %v1907, 0
  %1959 = vmatpush.bf16.msra.mxu0 0
  %1960 = vmatpush.bf16.msra.mxu0 0
  %1961 = vmatpush.bf16.msra.mxu0 0
  %1962 = vmatpush.bf16.msra.mxu0 0
  %1963 = vmatpush.bf16.msra.mxu0 %v1946
  %1964 = vmatpush.bf16.msra.mxu0 %v1944
  %1965 = vmatpush.bf16.msra.mxu0 %v1942
  %1966 = vmatpush.bf16.msra.mxu0 %v1940
  %1967 = vmatmul.bf16.gmra.mxu0 %v1957
  %v1968 = vpop.f32.mrf.mxu0
  %v1969 = vadd.f32 0.0, %v1968
  %v1970 = vpop.f32.mrf.mxu0
  %1971 = vdwg.mxu0
  %1972 = vmatpush.bf16.msra.mxu0 0
  %1973 = vmatpush.bf16.msra.mxu0 0
  %1974 = vmatpush.bf16.msra.mxu0 0
  %1975 = vmatpush.bf16.msra.mxu0 0
  %1976 = vmatpush.bf16.msra.mxu0 %v1947
  %1977 = vmatpush.bf16.msra.mxu0 %v1945
  %1978 = vmatpush.bf16.msra.mxu0 %v1943
  %1979 = vmatpush.bf16.msra.mxu0 %v1941
  %1980 = vmatmul.bf16.gmra.mxu0 %v1957
  %v1981 = vpop.f32.mrf.mxu0
  %v1982 = vadd.f32 0.0, %v1981
  %v1983 = vpop.f32.mrf.mxu0
  %1984 = vdwg.mxu0
  %v1987 = vrot.slane %v1969, 2
  %v1988 = vrot.slane %v1982, 2
  %v1991 = vadd.f32 %v1904, %v1987
  %v1992 = vadd.f32 %v1905, %v1988
  %v1993 = vtanh.pop %v1991
  %v1994 = vtanh.pop %v1992
  %v1995 = vxor.u32 %v1991, 2147483648
  %v1996 = vxor.u32 %v1992, 2147483648
  %v1997 = vmul.f32 %v1995, 1.442695
  %v1998 = vpow.pop %v1997
  %v1999 = vmul.f32 %v1996, 1.442695
  %v2000 = vpow.pop %v1999
  %v2001 = vadd.f32 %v1998, 1.0
  %v2002 = vadd.f32 %v2000, 1.0
  %v2003 = vrcp.pop %v2001
  %v2004 = vmul.f32 %v2001, %v2003
  %v2005 = vsub.f32 1.0, %v2004
  %v2006 = vmul.f32 %v2003, %v2005
  %v2007 = vadd.f32 %v2003, %v2006
  %vm2008 = vweird.f32 %v2001
  %vm2009 = vweird.f32 %v2003
  %vm2010 = vmor %vm2008, %vm2009
  %v2011 = vsel %vm2010, %v2003, %v2007
  %v2012 = vand.u32 2147483647, %v2001
  %vm2013 = vcmp.eq.f32.partialorder %v2012, 8.507059e+37
  %v2014 = vand.u32 %v2001, 2147483648
  %v2015 = vor.u32 1.1754944e-38, %v2014
  %v2016 = vsel %vm2013, %v2015, %v2011
  %v2017 = vmul.f32 1.0, %v2016
  %v2018 = vrcp.pop %v2002
  %v2019 = vmul.f32 %v2002, %v2018
  %v2020 = vsub.f32 1.0, %v2019
  %v2021 = vmul.f32 %v2018, %v2020
  %v2022 = vadd.f32 %v2018, %v2021
  %vm2023 = vweird.f32 %v2002
  %vm2024 = vweird.f32 %v2018
  %vm2025 = vmor %vm2023, %vm2024
  %v2026 = vsel %vm2025, %v2018, %v2022
  %v2027 = vand.u32 2147483647, %v2002
  %vm2028 = vcmp.eq.f32.partialorder %v2027, 8.507059e+37
  %v2029 = vand.u32 %v2002, 2147483648
  %v2030 = vor.u32 1.1754944e-38, %v2029
  %v2031 = vsel %vm2028, %v2030, %v2026
  %v2032 = vmul.f32 1.0, %v2031
  %v2033 = vsel %vm182, %v1993, %v2017
  %v2034 = vsel %vm183, %v1994, %v2032
  %v2035 = vld [vmem:[#allocation4] sm:$0x3]
  %v2037 = vrot.slane %v2035, 2
  %2038 = vrot.lane.b32.xlu0 %v2037, 64
  %v2039 = vpop.permute.xlu0 %2038
  %v2041 = vmul.f32 %v2033, %v2039
  %v2042 = vmul.f32 %v2033, %v2034
  %2044 = vrot.lane.b32.xlu0 %v2042, 64
  %v2045 = vpop.permute.xlu0 %2044
  %v2047 = vadd.f32 %v2041, %v2045
  %v2048 = vtanh.pop %v2047
  %v2049 = vmul.f32 %v2034, %v2048
  %2051 = vrot.lane.b32.xlu0 %v2047, 64
  %v2052 = vpop.permute.xlu0 %2051
  %2054 = vst.msk [vmem:[#allocation4 - $0x6] sm:$0xc0] %vm803, %v2052
  %2056 = vrot.lane.b32.xlu0 %v2049, 64
  %v2057 = vpop.permute.xlu0 %2056
  %2059 = vst.msk [vmem:[#allocation3 - $0x6] sm:$0xc0] %vm803, %v2057
  %s2060 = scalar_lea.vmem %s4, 22
  %2061 = vst.msk [vmem:[%s2060 - $0x6] sm:$0xc0] %vm803, %v2057
  %v2062 = vld [vmem:[#allocation2 + $0x30] sm:$0x3]
  %v2063 = vld [vmem:[#allocation2 + $0x38] sm:$0x3]
  %v2064 = vld [vmem:[#allocation3] sm:$0x3]
  %v2065 = vpack.c.bf16 %v2064, %v2064
  %v2066 = vld [vmem:[%s2] sm:$0xff]
  %v2067 = vld [vmem:[%s2 + $0x8] sm:$0xff]
  %v2068 = vld [vmem:[%s2 + $0x10] sm:$0xff]
  %v2069 = vld [vmem:[%s2 + $0x18] sm:$0xff]
  %v2070 = vld [vmem:[%s2 + $0x20] sm:$0xff]
  %v2071 = vld [vmem:[%s2 + $0x28] sm:$0xff]
  %v2072 = vld [vmem:[%s2 + $0x30] sm:$0xff]
  %v2073 = vld [vmem:[%s2 + $0x38] sm:$0xff]
  %v2082 = vunpack.c.l.b16 %v2066
  %v2083 = vunpack.c.h.b16 %v2066
  %v2084 = vunpack.c.l.b16 %v2067
  %v2085 = vunpack.c.h.b16 %v2067
  %v2086 = vunpack.c.l.b16 %v2068
  %v2087 = vunpack.c.h.b16 %v2068
  %v2088 = vunpack.c.l.b16 %v2069
  %v2089 = vunpack.c.h.b16 %v2069
  %v2090 = vunpack.c.l.b16 %v2070
  %v2091 = vunpack.c.h.b16 %v2070
  %v2092 = vunpack.c.l.b16 %v2071
  %v2093 = vunpack.c.h.b16 %v2071
  %v2094 = vunpack.c.l.b16 %v2072
  %v2095 = vunpack.c.h.b16 %v2072
  %v2096 = vunpack.c.l.b16 %v2073
  %v2097 = vunpack.c.h.b16 %v2073
  %v2098 = vpack.c.b16 %v2084, %v2082
  %v2099 = vpack.c.b16 %v2085, %v2083
  %v2100 = vpack.c.b16 %v2088, %v2086
  %v2101 = vpack.c.b16 %v2089, %v2087
  %v2102 = vpack.c.b16 %v2092, %v2090
  %v2103 = vpack.c.b16 %v2093, %v2091
  %v2104 = vpack.c.b16 %v2096, %v2094
  %v2105 = vpack.c.b16 %v2097, %v2095
  %v2115 = vsel %vm236, %v2065, 0
  %2117 = vmatpush.bf16.msra.mxu0 0
  %2118 = vmatpush.bf16.msra.mxu0 0
  %2119 = vmatpush.bf16.msra.mxu0 0
  %2120 = vmatpush.bf16.msra.mxu0 0
  %2121 = vmatpush.bf16.msra.mxu0 %v2104
  %2122 = vmatpush.bf16.msra.mxu0 %v2102
  %2123 = vmatpush.bf16.msra.mxu0 %v2100
  %2124 = vmatpush.bf16.msra.mxu0 %v2098
  %2125 = vmatmul.bf16.gmra.mxu0 %v2115
  %v2126 = vpop.f32.mrf.mxu0
  %v2127 = vadd.f32 0.0, %v2126
  %v2128 = vpop.f32.mrf.mxu0
  %2129 = vdwg.mxu0
  %2130 = vmatpush.bf16.msra.mxu0 0
  %2131 = vmatpush.bf16.msra.mxu0 0
  %2132 = vmatpush.bf16.msra.mxu0 0
  %2133 = vmatpush.bf16.msra.mxu0 0
  %2134 = vmatpush.bf16.msra.mxu0 %v2105
  %2135 = vmatpush.bf16.msra.mxu0 %v2103
  %2136 = vmatpush.bf16.msra.mxu0 %v2101
  %2137 = vmatpush.bf16.msra.mxu0 %v2099
  %2138 = vmatmul.bf16.gmra.mxu0 %v2115
  %v2139 = vpop.f32.mrf.mxu0
  %v2140 = vadd.f32 0.0, %v2139
  %v2141 = vpop.f32.mrf.mxu0
  %2142 = vdwg.mxu0
  %v2143 = vadd.f32 %v2062, %v2127
  %v2144 = vadd.f32 %v2063, %v2140
  %v2145 = vtanh.pop %v2143
  %v2146 = vtanh.pop %v2144
  %v2147 = vxor.u32 %v2143, 2147483648
  %v2148 = vxor.u32 %v2144, 2147483648
  %v2149 = vmul.f32 %v2147, 1.442695
  %v2150 = vpow.pop %v2149
  %v2151 = vmul.f32 %v2148, 1.442695
  %v2152 = vpow.pop %v2151
  %v2153 = vadd.f32 %v2150, 1.0
  %v2154 = vadd.f32 %v2152, 1.0
  %v2155 = vrcp.pop %v2153
  %v2156 = vmul.f32 %v2153, %v2155
  %v2157 = vsub.f32 1.0, %v2156
  %v2158 = vmul.f32 %v2155, %v2157
  %v2159 = vadd.f32 %v2155, %v2158
  %vm2160 = vweird.f32 %v2153
  %vm2161 = vweird.f32 %v2155
  %vm2162 = vmor %vm2160, %vm2161
  %v2163 = vsel %vm2162, %v2155, %v2159
  %v2164 = vand.u32 2147483647, %v2153
  %vm2165 = vcmp.eq.f32.partialorder %v2164, 8.507059e+37
  %v2166 = vand.u32 %v2153, 2147483648
  %v2167 = vor.u32 1.1754944e-38, %v2166
  %v2168 = vsel %vm2165, %v2167, %v2163
  %v2169 = vmul.f32 1.0, %v2168
  %v2170 = vrcp.pop %v2154
  %v2171 = vmul.f32 %v2154, %v2170
  %v2172 = vsub.f32 1.0, %v2171
  %v2173 = vmul.f32 %v2170, %v2172
  %v2174 = vadd.f32 %v2170, %v2173
  %vm2175 = vweird.f32 %v2154
  %vm2176 = vweird.f32 %v2170
  %vm2177 = vmor %vm2175, %vm2176
  %v2178 = vsel %vm2177, %v2170, %v2174
  %v2179 = vand.u32 2147483647, %v2154
  %vm2180 = vcmp.eq.f32.partialorder %v2179, 8.507059e+37
  %v2181 = vand.u32 %v2154, 2147483648
  %v2182 = vor.u32 1.1754944e-38, %v2181
  %v2183 = vsel %vm2180, %v2182, %v2178
  %v2184 = vmul.f32 1.0, %v2183
  %v2185 = vsel %vm182, %v2145, %v2169
  %v2186 = vsel %vm183, %v2146, %v2184
  %v2187 = vld [vmem:[#allocation4] sm:$0x3]
  %2189 = vrot.lane.b32.xlu0 %v2187, 64
  %v2190 = vpop.permute.xlu0 %2189
  %v2192 = vmul.f32 %v2185, %v2190
  %v2193 = vmul.f32 %v2185, %v2186
  %2195 = vrot.lane.b32.xlu0 %v2193, 64
  %v2196 = vpop.permute.xlu0 %2195
  %v2198 = vadd.f32 %v2192, %v2196
  %v2199 = vtanh.pop %v2198
  %v2200 = vmul.f32 %v2186, %v2199
  %2202 = vrot.lane.b32.xlu0 %v2198, 64
  %v2203 = vpop.permute.xlu0 %2202
  %2205 = vst.msk [vmem:[#allocation4] sm:$0x3] %vm172, %v2203
  %2207 = vrot.lane.b32.xlu0 %v2200, 64
  %v2208 = vpop.permute.xlu0 %2207
  %2210 = vst.msk [vmem:[#allocation3] sm:$0x3] %vm172, %v2208
  %s2211 = scalar_lea.vmem %s4, 24
  %2212 = vst.msk [vmem:[%s2211] sm:$0x3] %vm172, %v2208
  %v2213 = vld [vmem:[#allocation2 + $0x30] sm:$0xc]
  %v2214 = vld [vmem:[#allocation2 + $0x38] sm:$0xc]
  %v2215 = vld [vmem:[#allocation3] sm:$0x3]
  %v2216 = vpack.c.bf16 %v2215, %v2215
  %v2217 = vld [vmem:[%s2] sm:$0xff]
  %v2218 = vld [vmem:[%s2 + $0x8] sm:$0xff]
  %v2219 = vld [vmem:[%s2 + $0x10] sm:$0xff]
  %v2220 = vld [vmem:[%s2 + $0x18] sm:$0xff]
  %v2221 = vld [vmem:[%s2 + $0x20] sm:$0xff]
  %v2222 = vld [vmem:[%s2 + $0x28] sm:$0xff]
  %v2223 = vld [vmem:[%s2 + $0x30] sm:$0xff]
  %v2224 = vld [vmem:[%s2 + $0x38] sm:$0xff]
  %v2233 = vunpack.c.l.b16 %v2217
  %v2234 = vunpack.c.h.b16 %v2217
  %v2235 = vunpack.c.l.b16 %v2218
  %v2236 = vunpack.c.h.b16 %v2218
  %v2237 = vunpack.c.l.b16 %v2219
  %v2238 = vunpack.c.h.b16 %v2219
  %v2239 = vunpack.c.l.b16 %v2220
  %v2240 = vunpack.c.h.b16 %v2220
  %v2241 = vunpack.c.l.b16 %v2221
  %v2242 = vunpack.c.h.b16 %v2221
  %v2243 = vunpack.c.l.b16 %v2222
  %v2244 = vunpack.c.h.b16 %v2222
  %v2245 = vunpack.c.l.b16 %v2223
  %v2246 = vunpack.c.h.b16 %v2223
  %v2247 = vunpack.c.l.b16 %v2224
  %v2248 = vunpack.c.h.b16 %v2224
  %v2249 = vpack.c.b16 %v2235, %v2233
  %v2250 = vpack.c.b16 %v2236, %v2234
  %v2251 = vpack.c.b16 %v2239, %v2237
  %v2252 = vpack.c.b16 %v2240, %v2238
  %v2253 = vpack.c.b16 %v2243, %v2241
  %v2254 = vpack.c.b16 %v2244, %v2242
  %v2255 = vpack.c.b16 %v2247, %v2245
  %v2256 = vpack.c.b16 %v2248, %v2246
  %v2266 = vsel %vm236, %v2216, 0
  %2268 = vmatpush.bf16.msra.mxu0 0
  %2269 = vmatpush.bf16.msra.mxu0 0
  %2270 = vmatpush.bf16.msra.mxu0 0
  %2271 = vmatpush.bf16.msra.mxu0 0
  %2272 = vmatpush.bf16.msra.mxu0 %v2255
  %2273 = vmatpush.bf16.msra.mxu0 %v2253
  %2274 = vmatpush.bf16.msra.mxu0 %v2251
  %2275 = vmatpush.bf16.msra.mxu0 %v2249
  %2276 = vmatmul.bf16.gmra.mxu0 %v2266
  %v2277 = vpop.f32.mrf.mxu0
  %v2278 = vadd.f32 0.0, %v2277
  %v2279 = vpop.f32.mrf.mxu0
  %2280 = vdwg.mxu0
  %2281 = vmatpush.bf16.msra.mxu0 0
  %2282 = vmatpush.bf16.msra.mxu0 0
  %2283 = vmatpush.bf16.msra.mxu0 0
  %2284 = vmatpush.bf16.msra.mxu0 0
  %2285 = vmatpush.bf16.msra.mxu0 %v2256
  %2286 = vmatpush.bf16.msra.mxu0 %v2254
  %2287 = vmatpush.bf16.msra.mxu0 %v2252
  %2288 = vmatpush.bf16.msra.mxu0 %v2250
  %2289 = vmatmul.bf16.gmra.mxu0 %v2266
  %v2290 = vpop.f32.mrf.mxu0
  %v2291 = vadd.f32 0.0, %v2290
  %v2292 = vpop.f32.mrf.mxu0
  %2293 = vdwg.mxu0
  %v2296 = vrot.slane %v2278, 6
  %v2297 = vrot.slane %v2291, 6
  %v2300 = vadd.f32 %v2213, %v2296
  %v2301 = vadd.f32 %v2214, %v2297
  %v2302 = vtanh.pop %v2300
  %v2303 = vtanh.pop %v2301
  %v2304 = vxor.u32 %v2300, 2147483648
  %v2305 = vxor.u32 %v2301, 2147483648
  %v2306 = vmul.f32 %v2304, 1.442695
  %v2307 = vpow.pop %v2306
  %v2308 = vmul.f32 %v2305, 1.442695
  %v2309 = vpow.pop %v2308
  %v2310 = vadd.f32 %v2307, 1.0
  %v2311 = vadd.f32 %v2309, 1.0
  %v2312 = vrcp.pop %v2310
  %v2313 = vmul.f32 %v2310, %v2312
  %v2314 = vsub.f32 1.0, %v2313
  %v2315 = vmul.f32 %v2312, %v2314
  %v2316 = vadd.f32 %v2312, %v2315
  %vm2317 = vweird.f32 %v2310
  %vm2318 = vweird.f32 %v2312
  %vm2319 = vmor %vm2317, %vm2318
  %v2320 = vsel %vm2319, %v2312, %v2316
  %v2321 = vand.u32 2147483647, %v2310
  %vm2322 = vcmp.eq.f32.partialorder %v2321, 8.507059e+37
  %v2323 = vand.u32 %v2310, 2147483648
  %v2324 = vor.u32 1.1754944e-38, %v2323
  %v2325 = vsel %vm2322, %v2324, %v2320
  %v2326 = vmul.f32 1.0, %v2325
  %v2327 = vrcp.pop %v2311
  %v2328 = vmul.f32 %v2311, %v2327
  %v2329 = vsub.f32 1.0, %v2328
  %v2330 = vmul.f32 %v2327, %v2329
  %v2331 = vadd.f32 %v2327, %v2330
  %vm2332 = vweird.f32 %v2311
  %vm2333 = vweird.f32 %v2327
  %vm2334 = vmor %vm2332, %vm2333
  %v2335 = vsel %vm2334, %v2327, %v2331
  %v2336 = vand.u32 2147483647, %v2311
  %vm2337 = vcmp.eq.f32.partialorder %v2336, 8.507059e+37
  %v2338 = vand.u32 %v2311, 2147483648
  %v2339 = vor.u32 1.1754944e-38, %v2338
  %v2340 = vsel %vm2337, %v2339, %v2335
  %v2341 = vmul.f32 1.0, %v2340
  %v2342 = vsel %vm182, %v2302, %v2326
  %v2343 = vsel %vm183, %v2303, %v2341
  %v2344 = vld [vmem:[#allocation4] sm:$0x3]
  %v2346 = vrot.slane %v2344, 6
  %2347 = vrot.lane.b32.xlu0 %v2346, 64
  %v2348 = vpop.permute.xlu0 %2347
  %v2350 = vmul.f32 %v2342, %v2348
  %v2351 = vmul.f32 %v2342, %v2343
  %2353 = vrot.lane.b32.xlu0 %v2351, 64
  %v2354 = vpop.permute.xlu0 %2353
  %v2356 = vadd.f32 %v2350, %v2354
  %v2357 = vtanh.pop %v2356
  %v2358 = vmul.f32 %v2343, %v2357
  %2360 = vrot.lane.b32.xlu0 %v2356, 64
  %v2361 = vpop.permute.xlu0 %2360
  %2363 = vst.msk [vmem:[#allocation4 - $0x2] sm:$0xc] %vm485, %v2361
  %2365 = vrot.lane.b32.xlu0 %v2358, 64
  %v2366 = vpop.permute.xlu0 %2365
  %2368 = vst.msk [vmem:[#allocation3 - $0x2] sm:$0xc] %vm485, %v2366
  %s2369 = scalar_lea.vmem %s4, 26
  %2370 = vst.msk [vmem:[%s2369 - $0x2] sm:$0xc] %vm485, %v2366
  %v2371 = vld [vmem:[#allocation2 + $0x30] sm:$0x30]
  %v2372 = vld [vmem:[#allocation2 + $0x38] sm:$0x30]
  %v2373 = vld [vmem:[#allocation3] sm:$0x3]
  %v2374 = vpack.c.bf16 %v2373, %v2373
  %v2375 = vld [vmem:[%s2] sm:$0xff]
  %v2376 = vld [vmem:[%s2 + $0x8] sm:$0xff]
  %v2377 = vld [vmem:[%s2 + $0x10] sm:$0xff]
  %v2378 = vld [vmem:[%s2 + $0x18] sm:$0xff]
  %v2379 = vld [vmem:[%s2 + $0x20] sm:$0xff]
  %v2380 = vld [vmem:[%s2 + $0x28] sm:$0xff]
  %v2381 = vld [vmem:[%s2 + $0x30] sm:$0xff]
  %v2382 = vld [vmem:[%s2 + $0x38] sm:$0xff]
  %v2391 = vunpack.c.l.b16 %v2375
  %v2392 = vunpack.c.h.b16 %v2375
  %v2393 = vunpack.c.l.b16 %v2376
  %v2394 = vunpack.c.h.b16 %v2376
  %v2395 = vunpack.c.l.b16 %v2377
  %v2396 = vunpack.c.h.b16 %v2377
  %v2397 = vunpack.c.l.b16 %v2378
  %v2398 = vunpack.c.h.b16 %v2378
  %v2399 = vunpack.c.l.b16 %v2379
  %v2400 = vunpack.c.h.b16 %v2379
  %v2401 = vunpack.c.l.b16 %v2380
  %v2402 = vunpack.c.h.b16 %v2380
  %v2403 = vunpack.c.l.b16 %v2381
  %v2404 = vunpack.c.h.b16 %v2381
  %v2405 = vunpack.c.l.b16 %v2382
  %v2406 = vunpack.c.h.b16 %v2382
  %v2407 = vpack.c.b16 %v2393, %v2391
  %v2408 = vpack.c.b16 %v2394, %v2392
  %v2409 = vpack.c.b16 %v2397, %v2395
  %v2410 = vpack.c.b16 %v2398, %v2396
  %v2411 = vpack.c.b16 %v2401, %v2399
  %v2412 = vpack.c.b16 %v2402, %v2400
  %v2413 = vpack.c.b16 %v2405, %v2403
  %v2414 = vpack.c.b16 %v2406, %v2404
  %v2424 = vsel %vm236, %v2374, 0
  %2426 = vmatpush.bf16.msra.mxu0 0
  %2427 = vmatpush.bf16.msra.mxu0 0
  %2428 = vmatpush.bf16.msra.mxu0 0
  %2429 = vmatpush.bf16.msra.mxu0 0
  %2430 = vmatpush.bf16.msra.mxu0 %v2413
  %2431 = vmatpush.bf16.msra.mxu0 %v2411
  %2432 = vmatpush.bf16.msra.mxu0 %v2409
  %2433 = vmatpush.bf16.msra.mxu0 %v2407
  %2434 = vmatmul.bf16.gmra.mxu0 %v2424
  %v2435 = vpop.f32.mrf.mxu0
  %v2436 = vadd.f32 0.0, %v2435
  %v2437 = vpop.f32.mrf.mxu0
  %2438 = vdwg.mxu0
  %2439 = vmatpush.bf16.msra.mxu0 0
  %2440 = vmatpush.bf16.msra.mxu0 0
  %2441 = vmatpush.bf16.msra.mxu0 0
  %2442 = vmatpush.bf16.msra.mxu0 0
  %2443 = vmatpush.bf16.msra.mxu0 %v2414
  %2444 = vmatpush.bf16.msra.mxu0 %v2412
  %2445 = vmatpush.bf16.msra.mxu0 %v2410
  %2446 = vmatpush.bf16.msra.mxu0 %v2408
  %2447 = vmatmul.bf16.gmra.mxu0 %v2424
  %v2448 = vpop.f32.mrf.mxu0
  %v2449 = vadd.f32 0.0, %v2448
  %v2450 = vpop.f32.mrf.mxu0
  %2451 = vdwg.mxu0
  %v2454 = vrot.slane %v2436, 4
  %v2455 = vrot.slane %v2449, 4
  %v2458 = vadd.f32 %v2371, %v2454
  %v2459 = vadd.f32 %v2372, %v2455
  %v2460 = vtanh.pop %v2458
  %v2461 = vtanh.pop %v2459
  %v2462 = vxor.u32 %v2458, 2147483648
  %v2463 = vxor.u32 %v2459, 2147483648
  %v2464 = vmul.f32 %v2462, 1.442695
  %v2465 = vpow.pop %v2464
  %v2466 = vmul.f32 %v2463, 1.442695
  %v2467 = vpow.pop %v2466
  %v2468 = vadd.f32 %v2465, 1.0
  %v2469 = vadd.f32 %v2467, 1.0
  %v2470 = vrcp.pop %v2468
  %v2471 = vmul.f32 %v2468, %v2470
  %v2472 = vsub.f32 1.0, %v2471
  %v2473 = vmul.f32 %v2470, %v2472
  %v2474 = vadd.f32 %v2470, %v2473
  %vm2475 = vweird.f32 %v2468
  %vm2476 = vweird.f32 %v2470
  %vm2477 = vmor %vm2475, %vm2476
  %v2478 = vsel %vm2477, %v2470, %v2474
  %v2479 = vand.u32 2147483647, %v2468
  %vm2480 = vcmp.eq.f32.partialorder %v2479, 8.507059e+37
  %v2481 = vand.u32 %v2468, 2147483648
  %v2482 = vor.u32 1.1754944e-38, %v2481
  %v2483 = vsel %vm2480, %v2482, %v2478
  %v2484 = vmul.f32 1.0, %v2483
  %v2485 = vrcp.pop %v2469
  %v2486 = vmul.f32 %v2469, %v2485
  %v2487 = vsub.f32 1.0, %v2486
  %v2488 = vmul.f32 %v2485, %v2487
  %v2489 = vadd.f32 %v2485, %v2488
  %vm2490 = vweird.f32 %v2469
  %vm2491 = vweird.f32 %v2485
  %vm2492 = vmor %vm2490, %vm2491
  %v2493 = vsel %vm2492, %v2485, %v2489
  %v2494 = vand.u32 2147483647, %v2469
  %vm2495 = vcmp.eq.f32.partialorder %v2494, 8.507059e+37
  %v2496 = vand.u32 %v2469, 2147483648
  %v2497 = vor.u32 1.1754944e-38, %v2496
  %v2498 = vsel %vm2495, %v2497, %v2493
  %v2499 = vmul.f32 1.0, %v2498
  %v2500 = vsel %vm182, %v2460, %v2484
  %v2501 = vsel %vm183, %v2461, %v2499
  %v2502 = vld [vmem:[#allocation4] sm:$0x3]
  %v2504 = vrot.slane %v2502, 4
  %2505 = vrot.lane.b32.xlu0 %v2504, 64
  %v2506 = vpop.permute.xlu0 %2505
  %v2508 = vmul.f32 %v2500, %v2506
  %v2509 = vmul.f32 %v2500, %v2501
  %2511 = vrot.lane.b32.xlu0 %v2509, 64
  %v2512 = vpop.permute.xlu0 %2511
  %v2514 = vadd.f32 %v2508, %v2512
  %v2515 = vtanh.pop %v2514
  %v2516 = vmul.f32 %v2501, %v2515
  %2518 = vrot.lane.b32.xlu0 %v2514, 64
  %v2519 = vpop.permute.xlu0 %2518
  %2521 = vst.msk [vmem:[#allocation4 - $0x4] sm:$0x30] %vm644, %v2519
  %2523 = vrot.lane.b32.xlu0 %v2516, 64
  %v2524 = vpop.permute.xlu0 %2523
  %2526 = vst.msk [vmem:[#allocation3 - $0x4] sm:$0x30] %vm644, %v2524
  %s2527 = scalar_lea.vmem %s4, 28
  %2528 = vst.msk [vmem:[%s2527 - $0x4] sm:$0x30] %vm644, %v2524
  %v2529 = vld [vmem:[#allocation2 + $0x30] sm:$0xc0]
  %v2530 = vld [vmem:[#allocation2 + $0x38] sm:$0xc0]
  %v2531 = vld [vmem:[#allocation3] sm:$0x3]
  %v2532 = vpack.c.bf16 %v2531, %v2531
  %v2533 = vld [vmem:[%s2] sm:$0xff]
  %v2534 = vld [vmem:[%s2 + $0x8] sm:$0xff]
  %v2535 = vld [vmem:[%s2 + $0x10] sm:$0xff]
  %v2536 = vld [vmem:[%s2 + $0x18] sm:$0xff]
  %v2537 = vld [vmem:[%s2 + $0x20] sm:$0xff]
  %v2538 = vld [vmem:[%s2 + $0x28] sm:$0xff]
  %v2539 = vld [vmem:[%s2 + $0x30] sm:$0xff]
  %v2540 = vld [vmem:[%s2 + $0x38] sm:$0xff]
  %v2549 = vunpack.c.l.b16 %v2533
  %v2550 = vunpack.c.h.b16 %v2533
  %v2551 = vunpack.c.l.b16 %v2534
  %v2552 = vunpack.c.h.b16 %v2534
  %v2553 = vunpack.c.l.b16 %v2535
  %v2554 = vunpack.c.h.b16 %v2535
  %v2555 = vunpack.c.l.b16 %v2536
  %v2556 = vunpack.c.h.b16 %v2536
  %v2557 = vunpack.c.l.b16 %v2537
  %v2558 = vunpack.c.h.b16 %v2537
  %v2559 = vunpack.c.l.b16 %v2538
  %v2560 = vunpack.c.h.b16 %v2538
  %v2561 = vunpack.c.l.b16 %v2539
  %v2562 = vunpack.c.h.b16 %v2539
  %v2563 = vunpack.c.l.b16 %v2540
  %v2564 = vunpack.c.h.b16 %v2540
  %v2565 = vpack.c.b16 %v2551, %v2549
  %v2566 = vpack.c.b16 %v2552, %v2550
  %v2567 = vpack.c.b16 %v2555, %v2553
  %v2568 = vpack.c.b16 %v2556, %v2554
  %v2569 = vpack.c.b16 %v2559, %v2557
  %v2570 = vpack.c.b16 %v2560, %v2558
  %v2571 = vpack.c.b16 %v2563, %v2561
  %v2572 = vpack.c.b16 %v2564, %v2562
  %v2582 = vsel %vm236, %v2532, 0
  %2584 = vmatpush.bf16.msra.mxu0 0
  %2585 = vmatpush.bf16.msra.mxu0 0
  %2586 = vmatpush.bf16.msra.mxu0 0
  %2587 = vmatpush.bf16.msra.mxu0 0
  %2588 = vmatpush.bf16.msra.mxu0 %v2571
  %2589 = vmatpush.bf16.msra.mxu0 %v2569
  %2590 = vmatpush.bf16.msra.mxu0 %v2567
  %2591 = vmatpush.bf16.msra.mxu0 %v2565
  %2592 = vmatmul.bf16.gmra.mxu0 %v2582
  %v2593 = vpop.f32.mrf.mxu0
  %v2594 = vadd.f32 0.0, %v2593
  %v2595 = vpop.f32.mrf.mxu0
  %2596 = vdwg.mxu0
  %2597 = vmatpush.bf16.msra.mxu0 0
  %2598 = vmatpush.bf16.msra.mxu0 0
  %2599 = vmatpush.bf16.msra.mxu0 0
  %2600 = vmatpush.bf16.msra.mxu0 0
  %2601 = vmatpush.bf16.msra.mxu0 %v2572
  %2602 = vmatpush.bf16.msra.mxu0 %v2570
  %2603 = vmatpush.bf16.msra.mxu0 %v2568
  %2604 = vmatpush.bf16.msra.mxu0 %v2566
  %2605 = vmatmul.bf16.gmra.mxu0 %v2582
  %v2606 = vpop.f32.mrf.mxu0
  %v2607 = vadd.f32 0.0, %v2606
  %v2608 = vpop.f32.mrf.mxu0
  %2609 = vdwg.mxu0
  %v2612 = vrot.slane %v2594, 2
  %v2613 = vrot.slane %v2607, 2
  %v2616 = vadd.f32 %v2529, %v2612
  %v2617 = vadd.f32 %v2530, %v2613
  %v2618 = vtanh.pop %v2616
  %v2619 = vtanh.pop %v2617
  %v2620 = vxor.u32 %v2616, 2147483648
  %v2621 = vxor.u32 %v2617, 2147483648
  %v2622 = vmul.f32 %v2620, 1.442695
  %v2623 = vpow.pop %v2622
  %v2624 = vmul.f32 %v2621, 1.442695
  %v2625 = vpow.pop %v2624
  %v2626 = vadd.f32 %v2623, 1.0
  %v2627 = vadd.f32 %v2625, 1.0
  %v2628 = vrcp.pop %v2626
  %v2629 = vmul.f32 %v2626, %v2628
  %v2630 = vsub.f32 1.0, %v2629
  %v2631 = vmul.f32 %v2628, %v2630
  %v2632 = vadd.f32 %v2628, %v2631
  %vm2633 = vweird.f32 %v2626
  %vm2634 = vweird.f32 %v2628
  %vm2635 = vmor %vm2633, %vm2634
  %v2636 = vsel %vm2635, %v2628, %v2632
  %v2637 = vand.u32 2147483647, %v2626
  %vm2638 = vcmp.eq.f32.partialorder %v2637, 8.507059e+37
  %v2639 = vand.u32 %v2626, 2147483648
  %v2640 = vor.u32 1.1754944e-38, %v2639
  %v2641 = vsel %vm2638, %v2640, %v2636
  %v2642 = vmul.f32 1.0, %v2641
  %v2643 = vrcp.pop %v2627
  %v2644 = vmul.f32 %v2627, %v2643
  %v2645 = vsub.f32 1.0, %v2644
  %v2646 = vmul.f32 %v2643, %v2645
  %v2647 = vadd.f32 %v2643, %v2646
  %vm2648 = vweird.f32 %v2627
  %vm2649 = vweird.f32 %v2643
  %vm2650 = vmor %vm2648, %vm2649
  %v2651 = vsel %vm2650, %v2643, %v2647
  %v2652 = vand.u32 2147483647, %v2627
  %vm2653 = vcmp.eq.f32.partialorder %v2652, 8.507059e+37
  %v2654 = vand.u32 %v2627, 2147483648
  %v2655 = vor.u32 1.1754944e-38, %v2654
  %v2656 = vsel %vm2653, %v2655, %v2651
  %v2657 = vmul.f32 1.0, %v2656
  %v2658 = vsel %vm182, %v2618, %v2642
  %v2659 = vsel %vm183, %v2619, %v2657
  %v2660 = vld [vmem:[#allocation4] sm:$0x3]
  %v2662 = vrot.slane %v2660, 2
  %2663 = vrot.lane.b32.xlu0 %v2662, 64
  %v2664 = vpop.permute.xlu0 %2663
  %v2666 = vmul.f32 %v2658, %v2664
  %v2667 = vmul.f32 %v2658, %v2659
  %2669 = vrot.lane.b32.xlu0 %v2667, 64
  %v2670 = vpop.permute.xlu0 %2669
  %v2672 = vadd.f32 %v2666, %v2670
  %v2673 = vtanh.pop %v2672
  %v2674 = vmul.f32 %v2659, %v2673
  %2676 = vrot.lane.b32.xlu0 %v2672, 64
  %v2677 = vpop.permute.xlu0 %2676
  %2679 = vst.msk [vmem:[#allocation4 - $0x6] sm:$0xc0] %vm803, %v2677
  %2681 = vrot.lane.b32.xlu0 %v2674, 64
  %v2682 = vpop.permute.xlu0 %2681
  %2684 = vst.msk [vmem:[#allocation3 - $0x6] sm:$0xc0] %vm803, %v2682
  %s2685 = scalar_lea.vmem %s4, 30
  %2686 = vst.msk [vmem:[%s2685 - $0x6] sm:$0xc0] %vm803, %v2682
  // Predicated region
  $region18: #{bidaf_forward.11} parent=0 // pred_check
    _
  $region19: #{bidaf_forward.11} parent=0 // pred_check_branch
    %2688 = sbr.rel (0) target = $region21
  $region20: #{bidaf_forward.11} parent=0 // pred_region
    _
  $region21: #{bidaf_forward.11} parent=0 // pred_fallthru
    _
  // Predicated region
  $region22: #{bidaf_forward.11} parent=0 // pred_check
    _
  $region23: #{bidaf_forward.11} parent=0 // pred_check_branch
    %2690 = sbr.rel (0) target = $region25
  $region24: #{bidaf_forward.11} parent=0 // pred_region
    _
  $region25: #{bidaf_forward.11} parent=0 // pred_fallthru
    _

// kernel: squeeze.2
$region0: #{squeeze.2}
  %s0 = inlined_call_operand.vmem [shape: f32[32], index: 0, kind: input, shape index: {}]
  %s1 = inlined_call_operand.hbm [shape: f32[2,16], index: 1, kind: output, shape index: {}]
  $region1: #{squeeze.2} parent=0
    #allocation0 [shape = 'u8[1024]{0}', space=vmem, size = 0x400, scoped, tag = 'operand span for operand 1']
    #allocation1 [shape = 's32[1]{0}', space=sflag, size = 0x4, scoped, tag = 'scoped memory for squeeze.2']
    #allocation2 [shape = 'u8[4096]{0}', space=vmem, size = 0x1000, scoped, tag = 'scoped mem for output reshape']
    #allocation3 [shape = 'u8[4096]{0}', space=vmem, size = 0x1000, scoped, tag = 'scoped mem for input reshape']
    %2 = vsyncpa [#allocation1], 0
    %s4 = ssub.s32 2, 1
    %v5 = vld [vmem:[%s0] sm:%s4]
    %6 = vst [vmem:[#allocation3] sm:%s4] %v5
    %v7 = vld [vmem:[#allocation3] sm:$0x1]
    %vm8 = vcmask 130048
    %9 = vst.msk [vmem:[#allocation2] sm:$0x1] %vm8, %v7
    %v10 = vld [vmem:[#allocation3] sm:$0x1]
    %11 = vrot.lane.b32.xlu0 %v10, 112
    %v12 = vpop.permute.xlu0 %11
    %vm13 = vcmask 130048
    %s14 = scalar_lea.vmem [#allocation2], 1
    %15 = vst.msk [vmem:[%s14] sm:$0x1] %vm13, %v12
    %s17 = ssub.s32 4, 1
    %v18 = vld [vmem:[#allocation2] sm:%s17]
    %s20 = ssub.s32 4, 1
    %21 = vst [vmem:[#allocation0] sm:%s20] %v18
    %23 = vsyncadd [#allocation1], 0
    %s25 = sshll.u32 [#allocation0], 4
    %s26 = int_to_ptr.vmem [resolvable:$true] %s25
    %s27 = sshll.u32 %s1, 4
    %s28 = int_to_ptr.hbm [resolvable:$true] %s27
    %30 = dma.vmem_to_hbm [thread:$0]  %s26, 32, %s28, [#allocation1]
    %32 = dma.done [#allocation1], 32
    %33 = vsyncpa [#allocation1], 1

// kernel: bidaf_forward.17
$region0: #{bidaf_forward.17}
  #allocation0 [shape = 'u32[]', space=smem, size = 0x4, offset = 0x4, fixed_abs, tag = 'smem constant byte address 0x4 - core index']
  #allocation1 [shape = 'u32[72,128]{1,0:T(1,128)}', space=vmem, size = 0x9000, scoped, tag = 'internal scratch']
  %s0 = inlined_call_operand.vmem [shape: f32[32,256], index: 0, kind: input, shape index: {}]
  %s1 = inlined_call_operand.vmem [shape: f32[32,64], index: 1, kind: input, shape index: {}]
  %s2 = inlined_call_operand.vmem [shape: f32[32,64], index: 2, kind: input, shape index: {}]
  %s3 = inlined_call_operand.vmem [shape: bf16[256,2], index: 3, kind: input, shape index: {}]
  %s4 = inlined_call_operand.vmem [shape: bf16[64,2], index: 4, kind: input, shape index: {}]
  %s5 = inlined_call_operand.vmem [shape: bf16[64,2], index: 5, kind: input, shape index: {}]
  %s6 = inlined_call_operand.vmem [shape: f32[1,2], index: 6, kind: input, shape index: {}]
  %s7 = inlined_call_operand.vmem [shape: f32[32,2], index: 7, kind: output, shape index: {}]
  %s8 = sld [smem:[#allocation0]]
  $region38: #{bidaf_forward.17} parent=0
    _
  %s10 = ssub.s32 1, %s8
  %s11 = scalar_select 0, %s10, %s8
  // Predicated region
  $region2: #{bidaf_forward.17} parent=0 // pred_check
    _
  $region3: #{bidaf_forward.17} parent=0 // pred_check_branch
    %13 = sbr.rel (0) target = $region5
  $region4: #{bidaf_forward.17} parent=0 // pred_region
    _
  $region5: #{bidaf_forward.17} parent=0 // pred_fallthru
    _
  // Predicated region
  $region6: #{bidaf_forward.17} parent=0 // pred_check
    _
  $region7: #{bidaf_forward.17} parent=0 // pred_check_branch
    %15 = sbr.rel (0) target = $region9
  $region8: #{bidaf_forward.17} parent=0 // pred_region
    _
  $region9: #{bidaf_forward.17} parent=0 // pred_fallthru
    _
  // Predicated region
  $region10: #{bidaf_forward.17} parent=0 // pred_check
    _
  $region11: #{bidaf_forward.17} parent=0 // pred_check_branch
    %17 = sbr.rel (0) target = $region13
  $region12: #{bidaf_forward.17} parent=0 // pred_region
    _
  $region13: #{bidaf_forward.17} parent=0 // pred_fallthru
    _
  // Predicated region
  $region14: #{bidaf_forward.17} parent=0 // pred_check
    _
  $region15: #{bidaf_forward.17} parent=0 // pred_check_branch
    %19 = sbr.rel (0) target = $region17
  $region16: #{bidaf_forward.17} parent=0 // pred_region
    _
  $region17: #{bidaf_forward.17} parent=0 // pred_fallthru
    _
  // Predicated region
  $region18: #{bidaf_forward.17} parent=0 // pred_check
    _
  $region19: #{bidaf_forward.17} parent=0 // pred_check_branch
    %21 = sbr.rel (0) target = $region21
  $region20: #{bidaf_forward.17} parent=0 // pred_region
    _
  $region21: #{bidaf_forward.17} parent=0 // pred_fallthru
    _
  // Predicated region
  $region22: #{bidaf_forward.17} parent=0 // pred_check
    _
  $region23: #{bidaf_forward.17} parent=0 // pred_check_branch
    %23 = sbr.rel (0) target = $region25
  $region24: #{bidaf_forward.17} parent=0 // pred_region
    _
  $region25: #{bidaf_forward.17} parent=0 // pred_fallthru
    _
  // Predicated region
  $region26: #{bidaf_forward.17} parent=0 // pred_check
    _
  $region27: #{bidaf_forward.17} parent=0 // pred_check_branch
    %25 = sbr.rel (0) target = $region29
  $region28: #{bidaf_forward.17} parent=0 // pred_region
    _
  $region29: #{bidaf_forward.17} parent=0 // pred_fallthru
    _
  %v27 = vld [vmem:[%s0] sm:$0xff]
  %v28 = vld [vmem:[%s0 + $0x8] sm:$0xff]
  %v29 = vld [vmem:[%s0 + $0x10] sm:$0xff]
  %v30 = vld [vmem:[%s0 + $0x18] sm:$0xff]
  %v31 = vld [vmem:[%s0 + $0x20] sm:$0xff]
  %v32 = vld [vmem:[%s0 + $0x28] sm:$0xff]
  %v33 = vld [vmem:[%s0 + $0x30] sm:$0xff]
  %v34 = vld [vmem:[%s0 + $0x38] sm:$0xff]
  %v35 = vpack.c.bf16 %v29, %v27
  %v36 = vpack.c.bf16 %v30, %v28
  %v37 = vpack.c.bf16 %v33, %v31
  %v38 = vpack.c.bf16 %v34, %v32
  %v39 = vld [vmem:[%s3] sm:$0xf]
  %v40 = vld [vmem:[%s3 + $0x4] sm:$0xf]
  %v41 = vld [vmem:[%s3 + $0x8] sm:$0xf]
  %v42 = vld [vmem:[%s3 + $0xc] sm:$0xf]
  %v43 = vld [vmem:[%s3 + $0x10] sm:$0xf]
  %v44 = vld [vmem:[%s3 + $0x14] sm:$0xf]
  %v45 = vld [vmem:[%s3 + $0x18] sm:$0xf]
  %v46 = vld [vmem:[%s3 + $0x1c] sm:$0xf]
  %v47 = vld [vmem:[%s3 + $0x20] sm:$0xf]
  %v48 = vld [vmem:[%s3 + $0x24] sm:$0xf]
  %v49 = vld [vmem:[%s3 + $0x28] sm:$0xf]
  %v50 = vld [vmem:[%s3 + $0x2c] sm:$0xf]
  %v51 = vld [vmem:[%s3 + $0x30] sm:$0xf]
  %v52 = vld [vmem:[%s3 + $0x34] sm:$0xf]
  %v53 = vld [vmem:[%s3 + $0x38] sm:$0xf]
  %v54 = vld [vmem:[%s3 + $0x3c] sm:$0xf]
  %v55 = vld [vmem:[%s3 + $0x40] sm:$0xf]
  %v56 = vld [vmem:[%s3 + $0x44] sm:$0xf]
  %v57 = vld [vmem:[%s3 + $0x48] sm:$0xf]
  %v58 = vld [vmem:[%s3 + $0x4c] sm:$0xf]
  %v59 = vld [vmem:[%s3 + $0x50] sm:$0xf]
  %v60 = vld [vmem:[%s3 + $0x54] sm:$0xf]
  %v61 = vld [vmem:[%s3 + $0x58] sm:$0xf]
  %v62 = vld [vmem:[%s3 + $0x5c] sm:$0xf]
  %v63 = vld [vmem:[%s3 + $0x60] sm:$0xf]
  %v64 = vld [vmem:[%s3 + $0x64] sm:$0xf]
  %v65 = vld [vmem:[%s3 + $0x68] sm:$0xf]
  %v66 = vld [vmem:[%s3 + $0x6c] sm:$0xf]
  %v67 = vld [vmem:[%s3 + $0x70] sm:$0xf]
  %v68 = vld [vmem:[%s3 + $0x74] sm:$0xf]
  %v69 = vld [vmem:[%s3 + $0x78] sm:$0xf]
  %v70 = vld [vmem:[%s3 + $0x7c] sm:$0xf]
  %v71 = vld [vmem:[%s1] sm:$0xff]
  %v72 = vld [vmem:[%s1 + $0x8] sm:$0xff]
  %v73 = vld [vmem:[%s1 + $0x10] sm:$0xff]
  %v74 = vld [vmem:[%s1 + $0x18] sm:$0xff]
  %v75 = vpack.c.bf16 %v72, %v71
  %v76 = vpack.c.bf16 %v74, %v73
  %v77 = vld [vmem:[%s4] sm:$0xf]
  %v78 = vld [vmem:[%s4 + $0x4] sm:$0xf]
  %v79 = vld [vmem:[%s4 + $0x8] sm:$0xf]
  %v80 = vld [vmem:[%s4 + $0xc] sm:$0xf]
  %v81 = vld [vmem:[%s4 + $0x10] sm:$0xf]
  %v82 = vld [vmem:[%s4 + $0x14] sm:$0xf]
  %v83 = vld [vmem:[%s4 + $0x18] sm:$0xf]
  %v84 = vld [vmem:[%s4 + $0x1c] sm:$0xf]
  %v93 = vunpack.c.l.b16 %v77
  %v94 = vunpack.c.l.b16 %v78
  %v95 = vunpack.c.l.b16 %v79
  %v96 = vunpack.c.l.b16 %v80
  %v97 = vunpack.c.l.b16 %v81
  %v98 = vunpack.c.l.b16 %v82
  %v99 = vunpack.c.l.b16 %v83
  %v100 = vunpack.c.l.b16 %v84
  %v101 = vpack.c.b16 %v94, %v93
  %v102 = vpack.c.b16 %v96, %v95
  %v103 = vpack.c.b16 %v98, %v97
  %v104 = vpack.c.b16 %v100, %v99
  %vm109 = vcmask 523264
  %v111 = vsel %vm109, %v75, 0
  %v114 = vsel %vm109, %v76, 0
  %116 = vmatpush.bf16.msra.mxu0 0
  %117 = vmatpush.bf16.msra.mxu0 0
  %118 = vmatpush.bf16.msra.mxu0 0
  %119 = vmatpush.bf16.msra.mxu0 0
  %120 = vmatpush.bf16.msra.mxu0 %v104
  %121 = vmatpush.bf16.msra.mxu0 %v103
  %122 = vmatpush.bf16.msra.mxu0 %v102
  %123 = vmatpush.bf16.msra.mxu0 %v101
  %124 = vmatmul.bf16.gmra.mxu0 %v111
  %v125 = vpop.f32.mrf.mxu0
  %v126 = vadd.f32 0.0, %v125
  %v127 = vpop.f32.mrf.mxu0
  %v128 = vadd.f32 0.0, %v127
  %129 = vmatmul.bf16.gmra.mxu0 %v114
  %v130 = vpop.f32.mrf.mxu0
  %v131 = vadd.f32 0.0, %v130
  %v132 = vpop.f32.mrf.mxu0
  %v133 = vadd.f32 0.0, %v132
  %134 = vdwg.mxu0
  %v167 = vunpack.c.l.b16 %v39
  %v168 = vunpack.c.l.b16 %v40
  %v169 = vunpack.c.l.b16 %v41
  %v170 = vunpack.c.l.b16 %v42
  %v171 = vunpack.c.l.b16 %v43
  %v172 = vunpack.c.l.b16 %v44
  %v173 = vunpack.c.l.b16 %v45
  %v174 = vunpack.c.l.b16 %v46
  %v175 = vunpack.c.l.b16 %v47
  %v176 = vunpack.c.l.b16 %v48
  %v177 = vunpack.c.l.b16 %v49
  %v178 = vunpack.c.l.b16 %v50
  %v179 = vunpack.c.l.b16 %v51
  %v180 = vunpack.c.l.b16 %v52
  %v181 = vunpack.c.l.b16 %v53
  %v182 = vunpack.c.l.b16 %v54
  %v183 = vunpack.c.l.b16 %v55
  %v184 = vunpack.c.l.b16 %v56
  %v185 = vunpack.c.l.b16 %v57
  %v186 = vunpack.c.l.b16 %v58
  %v187 = vunpack.c.l.b16 %v59
  %v188 = vunpack.c.l.b16 %v60
  %v189 = vunpack.c.l.b16 %v61
  %v190 = vunpack.c.l.b16 %v62
  %v191 = vunpack.c.l.b16 %v63
  %v192 = vunpack.c.l.b16 %v64
  %v193 = vunpack.c.l.b16 %v65
  %v194 = vunpack.c.l.b16 %v66
  %v195 = vunpack.c.l.b16 %v67
  %v196 = vunpack.c.l.b16 %v68
  %v197 = vunpack.c.l.b16 %v69
  %v198 = vunpack.c.l.b16 %v70
  %v199 = vpack.c.b16 %v168, %v167
  %v200 = vpack.c.b16 %v170, %v169
  %v201 = vpack.c.b16 %v172, %v171
  %v202 = vpack.c.b16 %v174, %v173
  %v203 = vpack.c.b16 %v176, %v175
  %v204 = vpack.c.b16 %v178, %v177
  %v205 = vpack.c.b16 %v180, %v179
  %v206 = vpack.c.b16 %v182, %v181
  %v207 = vpack.c.b16 %v184, %v183
  %v208 = vpack.c.b16 %v186, %v185
  %v209 = vpack.c.b16 %v188, %v187
  %v210 = vpack.c.b16 %v190, %v189
  %v211 = vpack.c.b16 %v192, %v191
  %v212 = vpack.c.b16 %v194, %v193
  %v213 = vpack.c.b16 %v196, %v195
  %v214 = vpack.c.b16 %v198, %v197
  %231 = vmatpush.bf16.msra.mxu0 %v206
  %232 = vmatpush.bf16.msra.mxu0 %v205
  %233 = vmatpush.bf16.msra.mxu0 %v204
  %234 = vmatpush.bf16.msra.mxu0 %v203
  %235 = vmatpush.bf16.msra.mxu0 %v202
  %236 = vmatpush.bf16.msra.mxu0 %v201
  %237 = vmatpush.bf16.msra.mxu0 %v200
  %238 = vmatpush.bf16.msra.mxu0 %v199
  %239 = vmatmul.bf16.gmra.mxu0 %v35
  %v240 = vpop.f32.mrf.mxu0
  %v241 = vadd.f32 %v126, %v240
  %v242 = vpop.f32.mrf.mxu0
  %v243 = vadd.f32 %v128, %v242
  %244 = vmatmul.bf16.gmra.mxu0 %v37
  %v245 = vpop.f32.mrf.mxu0
  %v246 = vadd.f32 %v131, %v245
  %v247 = vpop.f32.mrf.mxu0
  %v248 = vadd.f32 %v133, %v247
  %249 = vdwg.mxu0
  %250 = vmatpush.bf16.msra.mxu0 %v214
  %251 = vmatpush.bf16.msra.mxu0 %v213
  %252 = vmatpush.bf16.msra.mxu0 %v212
  %253 = vmatpush.bf16.msra.mxu0 %v211
  %254 = vmatpush.bf16.msra.mxu0 %v210
  %255 = vmatpush.bf16.msra.mxu0 %v209
  %256 = vmatpush.bf16.msra.mxu0 %v208
  %257 = vmatpush.bf16.msra.mxu0 %v207
  %258 = vmatmul.bf16.gmra.mxu0 %v36
  %v259 = vpop.f32.mrf.mxu0
  %v260 = vadd.f32 %v241, %v259
  %v261 = vpop.f32.mrf.mxu0
  %v262 = vadd.f32 %v243, %v261
  %263 = vmatmul.bf16.gmra.mxu0 %v38
  %v264 = vpop.f32.mrf.mxu0
  %v265 = vadd.f32 %v246, %v264
  %v266 = vpop.f32.mrf.mxu0
  %v267 = vadd.f32 %v248, %v266
  %268 = vdwg.mxu0
  %v269 = vld [vmem:[%s2] sm:$0xff]
  %v270 = vld [vmem:[%s2 + $0x8] sm:$0xff]
  %v271 = vld [vmem:[%s2 + $0x10] sm:$0xff]
  %v272 = vld [vmem:[%s2 + $0x18] sm:$0xff]
  %v273 = vpack.c.bf16 %v270, %v269
  %v274 = vpack.c.bf16 %v272, %v271
  %v275 = vld [vmem:[%s5] sm:$0xf]
  %v276 = vld [vmem:[%s5 + $0x4] sm:$0xf]
  %v277 = vld [vmem:[%s5 + $0x8] sm:$0xf]
  %v278 = vld [vmem:[%s5 + $0xc] sm:$0xf]
  %v279 = vld [vmem:[%s5 + $0x10] sm:$0xf]
  %v280 = vld [vmem:[%s5 + $0x14] sm:$0xf]
  %v281 = vld [vmem:[%s5 + $0x18] sm:$0xf]
  %v282 = vld [vmem:[%s5 + $0x1c] sm:$0xf]
  %v291 = vunpack.c.l.b16 %v275
  %v292 = vunpack.c.l.b16 %v276
  %v293 = vunpack.c.l.b16 %v277
  %v294 = vunpack.c.l.b16 %v278
  %v295 = vunpack.c.l.b16 %v279
  %v296 = vunpack.c.l.b16 %v280
  %v297 = vunpack.c.l.b16 %v281
  %v298 = vunpack.c.l.b16 %v282
  %v299 = vpack.c.b16 %v292, %v291
  %v300 = vpack.c.b16 %v294, %v293
  %v301 = vpack.c.b16 %v296, %v295
  %v302 = vpack.c.b16 %v298, %v297
  %v308 = vsel %vm109, %v273, 0
  %v311 = vsel %vm109, %v274, 0
  %313 = vmatpush.bf16.msra.mxu0 0
  %314 = vmatpush.bf16.msra.mxu0 0
  %315 = vmatpush.bf16.msra.mxu0 0
  %316 = vmatpush.bf16.msra.mxu0 0
  %317 = vmatpush.bf16.msra.mxu0 %v302
  %318 = vmatpush.bf16.msra.mxu0 %v301
  %319 = vmatpush.bf16.msra.mxu0 %v300
  %320 = vmatpush.bf16.msra.mxu0 %v299
  %321 = vmatmul.bf16.gmra.mxu0 %v308
  %v322 = vpop.f32.mrf.mxu0
  %v323 = vadd.f32 0.0, %v322
  %v324 = vpop.f32.mrf.mxu0
  %v325 = vadd.f32 0.0, %v324
  %326 = vmatmul.bf16.gmra.mxu0 %v311
  %v327 = vpop.f32.mrf.mxu0
  %v328 = vadd.f32 0.0, %v327
  %v329 = vpop.f32.mrf.mxu0
  %v330 = vadd.f32 0.0, %v329
  %331 = vdwg.mxu0
  %v332 = vadd.f32 %v260, %v323
  %v333 = vadd.f32 %v262, %v325
  %v334 = vadd.f32 %v265, %v328
  %v335 = vadd.f32 %v267, %v330
  %v336 = vld [vmem:[%s6] sm:$0x1]
  %v338 = vperm.slane %v336, 0
  %v340 = vadd.f32 %v332, %v338
  %v341 = vadd.f32 %v333, %v338
  %v342 = vadd.f32 %v334, %v338
  %v343 = vadd.f32 %v335, %v338
  %vm344 = vcmask 15360
  %345 = vst.msk [vmem:[%s7] sm:$0xff] %vm344, %v340
  %346 = vst.msk [vmem:[%s7 + $0x8] sm:$0xff] %vm344, %v341
  %347 = vst.msk [vmem:[%s7 + $0x10] sm:$0xff] %vm344, %v342
  %348 = vst.msk [vmem:[%s7 + $0x18] sm:$0xff] %vm344, %v343
  // Predicated region
  $region30: #{bidaf_forward.17} parent=0 // pred_check
    _
  $region31: #{bidaf_forward.17} parent=0 // pred_check_branch
    %350 = sbr.rel (0) target = $region33
  $region32: #{bidaf_forward.17} parent=0 // pred_region
    _
  $region33: #{bidaf_forward.17} parent=0 // pred_fallthru
    _
  // Predicated region
  $region34: #{bidaf_forward.17} parent=0 // pred_check
    _
  $region35: #{bidaf_forward.17} parent=0 // pred_check_branch
    %352 = sbr.rel (0) target = $region37
  $region36: #{bidaf_forward.17} parent=0 // pred_region
    _
  $region37: #{bidaf_forward.17} parent=0 // pred_fallthru
    _

// kernel: bidaf_forward.14
$region0: #{bidaf_forward.14}
  #allocation0 [shape = 'u32[]', space=smem, size = 0x4, offset = 0x4, fixed_abs, tag = 'smem constant byte address 0x4 - core index']
  #allocation1 [shape = 'u32[72,128]{1,0:T(1,128)}', space=vmem, size = 0x9000, scoped, tag = 'internal scratch']
  #allocation2 [shape = 'f32[32,256]{1,0:T(8,128)}', space=vmem, size = 0x8000, scoped, tag = 'scratch operand']
  #allocation3 [shape = 'f32[2,64]{1,0:T(2,128)}', space=vmem, size = 0x400, scoped, tag = 'scratch operand']
  #allocation4 [shape = 'f32[2,64]{1,0:T(2,128)}', space=vmem, size = 0x400, scoped, tag = 'scratch operand']
  %s0 = inlined_call_operand.vmem [shape: f32[32,512], index: 0, kind: input, shape index: {}]
  %s1 = inlined_call_operand.vmem [shape: bf16[512,256], index: 1, kind: input, shape index: {}]
  %s2 = inlined_call_operand.vmem [shape: bf16[64,256], index: 2, kind: input, shape index: {}]
  %s3 = inlined_call_operand.vmem [shape: f32[1,256], index: 3, kind: input, shape index: {}]
  %s4 = inlined_call_operand.vmem [shape: f32[16,2,64], index: 4, kind: output, shape index: {}]
  %s5 = sld [smem:[#allocation0]]
  $region26: #{bidaf_forward.14} parent=0
    _
  %s7 = ssub.s32 1, %s5
  %s8 = scalar_select 0, %s7, %s5
  // Predicated region
  $region2: #{bidaf_forward.14} parent=0 // pred_check
    _
  $region3: #{bidaf_forward.14} parent=0 // pred_check_branch
    %10 = sbr.rel (0) target = $region5
  $region4: #{bidaf_forward.14} parent=0 // pred_region
    _
  $region5: #{bidaf_forward.14} parent=0 // pred_fallthru
    _
  // Predicated region
  $region6: #{bidaf_forward.14} parent=0 // pred_check
    _
  $region7: #{bidaf_forward.14} parent=0 // pred_check_branch
    %12 = sbr.rel (0) target = $region9
  $region8: #{bidaf_forward.14} parent=0 // pred_region
    _
  $region9: #{bidaf_forward.14} parent=0 // pred_fallthru
    _
  // Predicated region
  $region10: #{bidaf_forward.14} parent=0 // pred_check
    _
  $region11: #{bidaf_forward.14} parent=0 // pred_check_branch
    %14 = sbr.rel (0) target = $region13
  $region12: #{bidaf_forward.14} parent=0 // pred_region
    _
  $region13: #{bidaf_forward.14} parent=0 // pred_fallthru
    _
  // Predicated region
  $region14: #{bidaf_forward.14} parent=0 // pred_check
    _
  $region15: #{bidaf_forward.14} parent=0 // pred_check_branch
    %16 = sbr.rel (0) target = $region17
  $region16: #{bidaf_forward.14} parent=0 // pred_region
    _
  $region17: #{bidaf_forward.14} parent=0 // pred_fallthru
    _
  %v18 = vld [vmem:[%s0] sm:$0xff]
  %v19 = vld [vmem:[%s0 + $0x8] sm:$0xff]
  %v20 = vld [vmem:[%s0 + $0x10] sm:$0xff]
  %v21 = vld [vmem:[%s0 + $0x18] sm:$0xff]
  %v22 = vld [vmem:[%s0 + $0x20] sm:$0xff]
  %v23 = vld [vmem:[%s0 + $0x28] sm:$0xff]
  %v24 = vld [vmem:[%s0 + $0x30] sm:$0xff]
  %v25 = vld [vmem:[%s0 + $0x38] sm:$0xff]
  %v26 = vld [vmem:[%s0 + $0x40] sm:$0xff]
  %v27 = vld [vmem:[%s0 + $0x48] sm:$0xff]
  %v28 = vld [vmem:[%s0 + $0x50] sm:$0xff]
  %v29 = vld [vmem:[%s0 + $0x58] sm:$0xff]
  %v30 = vld [vmem:[%s0 + $0x60] sm:$0xff]
  %v31 = vld [vmem:[%s0 + $0x68] sm:$0xff]
  %v32 = vld [vmem:[%s0 + $0x70] sm:$0xff]
  %v33 = vld [vmem:[%s0 + $0x78] sm:$0xff]
  %v34 = vpack.c.bf16 %v22, %v18
  %v35 = vpack.c.bf16 %v23, %v19
  %v36 = vpack.c.bf16 %v24, %v20
  %v37 = vpack.c.bf16 %v25, %v21
  %v38 = vpack.c.bf16 %v30, %v26
  %v39 = vpack.c.bf16 %v31, %v27
  %v40 = vpack.c.bf16 %v32, %v28
  %v41 = vpack.c.bf16 %v33, %v29
  %v42 = vld [vmem:[%s1] sm:$0xff]
  %v43 = vld [vmem:[%s1 + $0x8] sm:$0xff]
  %v44 = vld [vmem:[%s1 + $0x10] sm:$0xff]
  %v45 = vld [vmem:[%s1 + $0x18] sm:$0xff]
  %v46 = vld [vmem:[%s1 + $0x20] sm:$0xff]
  %v47 = vld [vmem:[%s1 + $0x28] sm:$0xff]
  %v48 = vld [vmem:[%s1 + $0x30] sm:$0xff]
  %v49 = vld [vmem:[%s1 + $0x38] sm:$0xff]
  %v50 = vld [vmem:[%s1 + $0x40] sm:$0xff]
  %v51 = vld [vmem:[%s1 + $0x48] sm:$0xff]
  %v52 = vld [vmem:[%s1 + $0x50] sm:$0xff]
  %v53 = vld [vmem:[%s1 + $0x58] sm:$0xff]
  %v54 = vld [vmem:[%s1 + $0x60] sm:$0xff]
  %v55 = vld [vmem:[%s1 + $0x68] sm:$0xff]
  %v56 = vld [vmem:[%s1 + $0x70] sm:$0xff]
  %v57 = vld [vmem:[%s1 + $0x78] sm:$0xff]
  %v58 = vld [vmem:[%s1 + $0x80] sm:$0xff]
  %v59 = vld [vmem:[%s1 + $0x88] sm:$0xff]
  %v60 = vld [vmem:[%s1 + $0x90] sm:$0xff]
  %v61 = vld [vmem:[%s1 + $0x98] sm:$0xff]
  %v62 = vld [vmem:[%s1 + $0xa0] sm:$0xff]
  %v63 = vld [vmem:[%s1 + $0xa8] sm:$0xff]
  %v64 = vld [vmem:[%s1 + $0xb0] sm:$0xff]
  %v65 = vld [vmem:[%s1 + $0xb8] sm:$0xff]
  %v66 = vld [vmem:[%s1 + $0xc0] sm:$0xff]
  %v67 = vld [vmem:[%s1 + $0xc8] sm:$0xff]
  %v68 = vld [vmem:[%s1 + $0xd0] sm:$0xff]
  %v69 = vld [vmem:[%s1 + $0xd8] sm:$0xff]
  %v70 = vld [vmem:[%s1 + $0xe0] sm:$0xff]
  %v71 = vld [vmem:[%s1 + $0xe8] sm:$0xff]
  %v72 = vld [vmem:[%s1 + $0xf0] sm:$0xff]
  %v73 = vld [vmem:[%s1 + $0xf8] sm:$0xff]
  %v74 = vld [vmem:[%s1 + $0x100] sm:$0xff]
  %v75 = vld [vmem:[%s1 + $0x108] sm:$0xff]
  %v76 = vld [vmem:[%s1 + $0x110] sm:$0xff]
  %v77 = vld [vmem:[%s1 + $0x118] sm:$0xff]
  %v78 = vld [vmem:[%s1 + $0x120] sm:$0xff]
  %v79 = vld [vmem:[%s1 + $0x128] sm:$0xff]
  %v80 = vld [vmem:[%s1 + $0x130] sm:$0xff]
  %v81 = vld [vmem:[%s1 + $0x138] sm:$0xff]
  %v82 = vld [vmem:[%s1 + $0x140] sm:$0xff]
  %v83 = vld [vmem:[%s1 + $0x148] sm:$0xff]
  %v84 = vld [vmem:[%s1 + $0x150] sm:$0xff]
  %v85 = vld [vmem:[%s1 + $0x158] sm:$0xff]
  %v86 = vld [vmem:[%s1 + $0x160] sm:$0xff]
  %v87 = vld [vmem:[%s1 + $0x168] sm:$0xff]
  %v88 = vld [vmem:[%s1 + $0x170] sm:$0xff]
  %v89 = vld [vmem:[%s1 + $0x178] sm:$0xff]
  %v90 = vld [vmem:[%s1 + $0x180] sm:$0xff]
  %v91 = vld [vmem:[%s1 + $0x188] sm:$0xff]
  %v92 = vld [vmem:[%s1 + $0x190] sm:$0xff]
  %v93 = vld [vmem:[%s1 + $0x198] sm:$0xff]
  %v94 = vld [vmem:[%s1 + $0x1a0] sm:$0xff]
  %v95 = vld [vmem:[%s1 + $0x1a8] sm:$0xff]
  %v96 = vld [vmem:[%s1 + $0x1b0] sm:$0xff]
  %v97 = vld [vmem:[%s1 + $0x1b8] sm:$0xff]
  %v98 = vld [vmem:[%s1 + $0x1c0] sm:$0xff]
  %v99 = vld [vmem:[%s1 + $0x1c8] sm:$0xff]
  %v100 = vld [vmem:[%s1 + $0x1d0] sm:$0xff]
  %v101 = vld [vmem:[%s1 + $0x1d8] sm:$0xff]
  %v102 = vld [vmem:[%s1 + $0x1e0] sm:$0xff]
  %v103 = vld [vmem:[%s1 + $0x1e8] sm:$0xff]
  %v104 = vld [vmem:[%s1 + $0x1f0] sm:$0xff]
  %v105 = vld [vmem:[%s1 + $0x1f8] sm:$0xff]
  %v106 = vld [vmem:[%s3] sm:$0x3]
  %v108 = vperm.slane %v106, 0
  %v109 = vperm.slane %v106, 1
  %v176 = vunpack.c.l.b16 %v42
  %v177 = vunpack.c.h.b16 %v42
  %v178 = vunpack.c.l.b16 %v43
  %v179 = vunpack.c.h.b16 %v43
  %v180 = vunpack.c.l.b16 %v44
  %v181 = vunpack.c.h.b16 %v44
  %v182 = vunpack.c.l.b16 %v45
  %v183 = vunpack.c.h.b16 %v45
  %v184 = vunpack.c.l.b16 %v46
  %v185 = vunpack.c.h.b16 %v46
  %v186 = vunpack.c.l.b16 %v47
  %v187 = vunpack.c.h.b16 %v47
  %v188 = vunpack.c.l.b16 %v48
  %v189 = vunpack.c.h.b16 %v48
  %v190 = vunpack.c.l.b16 %v49
  %v191 = vunpack.c.h.b16 %v49
  %v192 = vunpack.c.l.b16 %v50
  %v193 = vunpack.c.h.b16 %v50
  %v194 = vunpack.c.l.b16 %v51
  %v195 = vunpack.c.h.b16 %v51
  %v196 = vunpack.c.l.b16 %v52
  %v197 = vunpack.c.h.b16 %v52
  %v198 = vunpack.c.l.b16 %v53
  %v199 = vunpack.c.h.b16 %v53
  %v200 = vunpack.c.l.b16 %v54
  %v201 = vunpack.c.h.b16 %v54
  %v202 = vunpack.c.l.b16 %v55
  %v203 = vunpack.c.h.b16 %v55
  %v204 = vunpack.c.l.b16 %v56
  %v205 = vunpack.c.h.b16 %v56
  %v206 = vunpack.c.l.b16 %v57
  %v207 = vunpack.c.h.b16 %v57
  %v208 = vunpack.c.l.b16 %v58
  %v209 = vunpack.c.h.b16 %v58
  %v210 = vunpack.c.l.b16 %v59
  %v211 = vunpack.c.h.b16 %v59
  %v212 = vunpack.c.l.b16 %v60
  %v213 = vunpack.c.h.b16 %v60
  %v214 = vunpack.c.l.b16 %v61
  %v215 = vunpack.c.h.b16 %v61
  %v216 = vunpack.c.l.b16 %v62
  %v217 = vunpack.c.h.b16 %v62
  %v218 = vunpack.c.l.b16 %v63
  %v219 = vunpack.c.h.b16 %v63
  %v220 = vunpack.c.l.b16 %v64
  %v221 = vunpack.c.h.b16 %v64
  %v222 = vunpack.c.l.b16 %v65
  %v223 = vunpack.c.h.b16 %v65
  %v224 = vunpack.c.l.b16 %v66
  %v225 = vunpack.c.h.b16 %v66
  %v226 = vunpack.c.l.b16 %v67
  %v227 = vunpack.c.h.b16 %v67
  %v228 = vunpack.c.l.b16 %v68
  %v229 = vunpack.c.h.b16 %v68
  %v230 = vunpack.c.l.b16 %v69
  %v231 = vunpack.c.h.b16 %v69
  %v232 = vunpack.c.l.b16 %v70
  %v233 = vunpack.c.h.b16 %v70
  %v234 = vunpack.c.l.b16 %v71
  %v235 = vunpack.c.h.b16 %v71
  %v236 = vunpack.c.l.b16 %v72
  %v237 = vunpack.c.h.b16 %v72
  %v238 = vunpack.c.l.b16 %v73
  %v239 = vunpack.c.h.b16 %v73
  %v240 = vunpack.c.l.b16 %v74
  %v241 = vunpack.c.h.b16 %v74
  %v242 = vunpack.c.l.b16 %v75
  %v243 = vunpack.c.h.b16 %v75
  %v244 = vunpack.c.l.b16 %v76
  %v245 = vunpack.c.h.b16 %v76
  %v246 = vunpack.c.l.b16 %v77
  %v247 = vunpack.c.h.b16 %v77
  %v248 = vunpack.c.l.b16 %v78
  %v249 = vunpack.c.h.b16 %v78
  %v250 = vunpack.c.l.b16 %v79
  %v251 = vunpack.c.h.b16 %v79
  %v252 = vunpack.c.l.b16 %v80
  %v253 = vunpack.c.h.b16 %v80
  %v254 = vunpack.c.l.b16 %v81
  %v255 = vunpack.c.h.b16 %v81
  %v256 = vunpack.c.l.b16 %v82
  %v257 = vunpack.c.h.b16 %v82
  %v258 = vunpack.c.l.b16 %v83
  %v259 = vunpack.c.h.b16 %v83
  %v260 = vunpack.c.l.b16 %v84
  %v261 = vunpack.c.h.b16 %v84
  %v262 = vunpack.c.l.b16 %v85
  %v263 = vunpack.c.h.b16 %v85
  %v264 = vunpack.c.l.b16 %v86
  %v265 = vunpack.c.h.b16 %v86
  %v266 = vunpack.c.l.b16 %v87
  %v267 = vunpack.c.h.b16 %v87
  %v268 = vunpack.c.l.b16 %v88
  %v269 = vunpack.c.h.b16 %v88
  %v270 = vunpack.c.l.b16 %v89
  %v271 = vunpack.c.h.b16 %v89
  %v272 = vunpack.c.l.b16 %v90
  %v273 = vunpack.c.h.b16 %v90
  %v274 = vunpack.c.l.b16 %v91
  %v275 = vunpack.c.h.b16 %v91
  %v276 = vunpack.c.l.b16 %v92
  %v277 = vunpack.c.h.b16 %v92
  %v278 = vunpack.c.l.b16 %v93
  %v279 = vunpack.c.h.b16 %v93
  %v280 = vunpack.c.l.b16 %v94
  %v281 = vunpack.c.h.b16 %v94
  %v282 = vunpack.c.l.b16 %v95
  %v283 = vunpack.c.h.b16 %v95
  %v284 = vunpack.c.l.b16 %v96
  %v285 = vunpack.c.h.b16 %v96
  %v286 = vunpack.c.l.b16 %v97
  %v287 = vunpack.c.h.b16 %v97
  %v288 = vunpack.c.l.b16 %v98
  %v289 = vunpack.c.h.b16 %v98
  %v290 = vunpack.c.l.b16 %v99
  %v291 = vunpack.c.h.b16 %v99
  %v292 = vunpack.c.l.b16 %v100
  %v293 = vunpack.c.h.b16 %v100
  %v294 = vunpack.c.l.b16 %v101
  %v295 = vunpack.c.h.b16 %v101
  %v296 = vunpack.c.l.b16 %v102
  %v297 = vunpack.c.h.b16 %v102
  %v298 = vunpack.c.l.b16 %v103
  %v299 = vunpack.c.h.b16 %v103
  %v300 = vunpack.c.l.b16 %v104
  %v301 = vunpack.c.h.b16 %v104
  %v302 = vunpack.c.l.b16 %v105
  %v303 = vunpack.c.h.b16 %v105
  %v304 = vpack.c.b16 %v178, %v176
  %v305 = vpack.c.b16 %v179, %v177
  %v306 = vpack.c.b16 %v182, %v180
  %v307 = vpack.c.b16 %v183, %v181
  %v308 = vpack.c.b16 %v186, %v184
  %v309 = vpack.c.b16 %v187, %v185
  %v310 = vpack.c.b16 %v190, %v188
  %v311 = vpack.c.b16 %v191, %v189
  %v312 = vpack.c.b16 %v194, %v192
  %v313 = vpack.c.b16 %v195, %v193
  %v314 = vpack.c.b16 %v198, %v196
  %v315 = vpack.c.b16 %v199, %v197
  %v316 = vpack.c.b16 %v202, %v200
  %v317 = vpack.c.b16 %v203, %v201
  %v318 = vpack.c.b16 %v206, %v204
  %v319 = vpack.c.b16 %v207, %v205
  %v320 = vpack.c.b16 %v210, %v208
  %v321 = vpack.c.b16 %v211, %v209
  %v322 = vpack.c.b16 %v214, %v212
  %v323 = vpack.c.b16 %v215, %v213
  %v324 = vpack.c.b16 %v218, %v216
  %v325 = vpack.c.b16 %v219, %v217
  %v326 = vpack.c.b16 %v222, %v220
  %v327 = vpack.c.b16 %v223, %v221
  %v328 = vpack.c.b16 %v226, %v224
  %v329 = vpack.c.b16 %v227, %v225
  %v330 = vpack.c.b16 %v230, %v228
  %v331 = vpack.c.b16 %v231, %v229
  %v332 = vpack.c.b16 %v234, %v232
  %v333 = vpack.c.b16 %v235, %v233
  %v334 = vpack.c.b16 %v238, %v236
  %v335 = vpack.c.b16 %v239, %v237
  %v336 = vpack.c.b16 %v242, %v240
  %v337 = vpack.c.b16 %v243, %v241
  %v338 = vpack.c.b16 %v246, %v244
  %v339 = vpack.c.b16 %v247, %v245
  %v340 = vpack.c.b16 %v250, %v248
  %v341 = vpack.c.b16 %v251, %v249
  %v342 = vpack.c.b16 %v254, %v252
  %v343 = vpack.c.b16 %v255, %v253
  %v344 = vpack.c.b16 %v258, %v256
  %v345 = vpack.c.b16 %v259, %v257
  %v346 = vpack.c.b16 %v262, %v260
  %v347 = vpack.c.b16 %v263, %v261
  %v348 = vpack.c.b16 %v266, %v264
  %v349 = vpack.c.b16 %v267, %v265
  %v350 = vpack.c.b16 %v270, %v268
  %v351 = vpack.c.b16 %v271, %v269
  %v352 = vpack.c.b16 %v274, %v272
  %v353 = vpack.c.b16 %v275, %v273
  %v354 = vpack.c.b16 %v278, %v276
  %v355 = vpack.c.b16 %v279, %v277
  %v356 = vpack.c.b16 %v282, %v280
  %v357 = vpack.c.b16 %v283, %v281
  %v358 = vpack.c.b16 %v286, %v284
  %v359 = vpack.c.b16 %v287, %v285
  %v360 = vpack.c.b16 %v290, %v288
  %v361 = vpack.c.b16 %v291, %v289
  %v362 = vpack.c.b16 %v294, %v292
  %v363 = vpack.c.b16 %v295, %v293
  %v364 = vpack.c.b16 %v298, %v296
  %v365 = vpack.c.b16 %v299, %v297
  %v366 = vpack.c.b16 %v302, %v300
  %v367 = vpack.c.b16 %v303, %v301
  %432 = vmatpush.bf16.msra.mxu0 %v318
  %433 = vmatpush.bf16.msra.mxu0 %v316
  %434 = vmatpush.bf16.msra.mxu0 %v314
  %435 = vmatpush.bf16.msra.mxu0 %v312
  %436 = vmatpush.bf16.msra.mxu0 %v310
  %437 = vmatpush.bf16.msra.mxu0 %v308
  %438 = vmatpush.bf16.msra.mxu0 %v306
  %439 = vmatpush.bf16.msra.mxu0 %v304
  %440 = vmatmul.bf16.gmra.mxu0 %v34
  %v441 = vpop.f32.mrf.mxu0
  %v442 = vadd.f32 %v108, %v441
  %v443 = vpop.f32.mrf.mxu0
  %v444 = vadd.f32 %v108, %v443
  %445 = vmatmul.bf16.gmra.mxu0 %v38
  %v446 = vpop.f32.mrf.mxu0
  %v447 = vadd.f32 %v108, %v446
  %v448 = vpop.f32.mrf.mxu0
  %v449 = vadd.f32 %v108, %v448
  %450 = vdwg.mxu0
  %451 = vmatpush.bf16.msra.mxu0 %v334
  %452 = vmatpush.bf16.msra.mxu0 %v332
  %453 = vmatpush.bf16.msra.mxu0 %v330
  %454 = vmatpush.bf16.msra.mxu0 %v328
  %455 = vmatpush.bf16.msra.mxu0 %v326
  %456 = vmatpush.bf16.msra.mxu0 %v324
  %457 = vmatpush.bf16.msra.mxu0 %v322
  %458 = vmatpush.bf16.msra.mxu0 %v320
  %459 = vmatmul.bf16.gmra.mxu0 %v35
  %v460 = vpop.f32.mrf.mxu0
  %v461 = vadd.f32 %v442, %v460
  %v462 = vpop.f32.mrf.mxu0
  %v463 = vadd.f32 %v444, %v462
  %464 = vmatmul.bf16.gmra.mxu0 %v39
  %v465 = vpop.f32.mrf.mxu0
  %v466 = vadd.f32 %v447, %v465
  %v467 = vpop.f32.mrf.mxu0
  %v468 = vadd.f32 %v449, %v467
  %469 = vdwg.mxu0
  %470 = vmatpush.bf16.msra.mxu0 %v350
  %471 = vmatpush.bf16.msra.mxu0 %v348
  %472 = vmatpush.bf16.msra.mxu0 %v346
  %473 = vmatpush.bf16.msra.mxu0 %v344
  %474 = vmatpush.bf16.msra.mxu0 %v342
  %475 = vmatpush.bf16.msra.mxu0 %v340
  %476 = vmatpush.bf16.msra.mxu0 %v338
  %477 = vmatpush.bf16.msra.mxu0 %v336
  %478 = vmatmul.bf16.gmra.mxu0 %v36
  %v479 = vpop.f32.mrf.mxu0
  %v480 = vadd.f32 %v461, %v479
  %v481 = vpop.f32.mrf.mxu0
  %v482 = vadd.f32 %v463, %v481
  %483 = vmatmul.bf16.gmra.mxu0 %v40
  %v484 = vpop.f32.mrf.mxu0
  %v485 = vadd.f32 %v466, %v484
  %v486 = vpop.f32.mrf.mxu0
  %v487 = vadd.f32 %v468, %v486
  %488 = vdwg.mxu0
  %489 = vmatpush.bf16.msra.mxu0 %v366
  %490 = vmatpush.bf16.msra.mxu0 %v364
  %491 = vmatpush.bf16.msra.mxu0 %v362
  %492 = vmatpush.bf16.msra.mxu0 %v360
  %493 = vmatpush.bf16.msra.mxu0 %v358
  %494 = vmatpush.bf16.msra.mxu0 %v356
  %495 = vmatpush.bf16.msra.mxu0 %v354
  %496 = vmatpush.bf16.msra.mxu0 %v352
  %497 = vmatmul.bf16.gmra.mxu0 %v37
  %v498 = vpop.f32.mrf.mxu0
  %v499 = vadd.f32 %v480, %v498
  %v500 = vpop.f32.mrf.mxu0
  %v501 = vadd.f32 %v482, %v500
  %502 = vmatmul.bf16.gmra.mxu0 %v41
  %v503 = vpop.f32.mrf.mxu0
  %v504 = vadd.f32 %v485, %v503
  %v505 = vpop.f32.mrf.mxu0
  %v506 = vadd.f32 %v487, %v505
  %507 = vdwg.mxu0
  %508 = vmatpush.bf16.msra.mxu0 %v319
  %509 = vmatpush.bf16.msra.mxu0 %v317
  %510 = vmatpush.bf16.msra.mxu0 %v315
  %511 = vmatpush.bf16.msra.mxu0 %v313
  %512 = vmatpush.bf16.msra.mxu0 %v311
  %513 = vmatpush.bf16.msra.mxu0 %v309
  %514 = vmatpush.bf16.msra.mxu0 %v307
  %515 = vmatpush.bf16.msra.mxu0 %v305
  %516 = vmatmul.bf16.gmra.mxu0 %v34
  %v517 = vpop.f32.mrf.mxu0
  %v518 = vadd.f32 %v109, %v517
  %v519 = vpop.f32.mrf.mxu0
  %v520 = vadd.f32 %v109, %v519
  %521 = vmatmul.bf16.gmra.mxu0 %v38
  %v522 = vpop.f32.mrf.mxu0
  %v523 = vadd.f32 %v109, %v522
  %v524 = vpop.f32.mrf.mxu0
  %v525 = vadd.f32 %v109, %v524
  %526 = vdwg.mxu0
  %527 = vmatpush.bf16.msra.mxu0 %v335
  %528 = vmatpush.bf16.msra.mxu0 %v333
  %529 = vmatpush.bf16.msra.mxu0 %v331
  %530 = vmatpush.bf16.msra.mxu0 %v329
  %531 = vmatpush.bf16.msra.mxu0 %v327
  %532 = vmatpush.bf16.msra.mxu0 %v325
  %533 = vmatpush.bf16.msra.mxu0 %v323
  %534 = vmatpush.bf16.msra.mxu0 %v321
  %535 = vmatmul.bf16.gmra.mxu0 %v35
  %v536 = vpop.f32.mrf.mxu0
  %v537 = vadd.f32 %v518, %v536
  %v538 = vpop.f32.mrf.mxu0
  %v539 = vadd.f32 %v520, %v538
  %540 = vmatmul.bf16.gmra.mxu0 %v39
  %v541 = vpop.f32.mrf.mxu0
  %v542 = vadd.f32 %v523, %v541
  %v543 = vpop.f32.mrf.mxu0
  %v544 = vadd.f32 %v525, %v543
  %545 = vdwg.mxu0
  %546 = vmatpush.bf16.msra.mxu0 %v351
  %547 = vmatpush.bf16.msra.mxu0 %v349
  %548 = vmatpush.bf16.msra.mxu0 %v347
  %549 = vmatpush.bf16.msra.mxu0 %v345
  %550 = vmatpush.bf16.msra.mxu0 %v343
  %551 = vmatpush.bf16.msra.mxu0 %v341
  %552 = vmatpush.bf16.msra.mxu0 %v339
  %553 = vmatpush.bf16.msra.mxu0 %v337
  %554 = vmatmul.bf16.gmra.mxu0 %v36
  %v555 = vpop.f32.mrf.mxu0
  %v556 = vadd.f32 %v537, %v555
  %v557 = vpop.f32.mrf.mxu0
  %v558 = vadd.f32 %v539, %v557
  %559 = vmatmul.bf16.gmra.mxu0 %v40
  %v560 = vpop.f32.mrf.mxu0
  %v561 = vadd.f32 %v542, %v560
  %v562 = vpop.f32.mrf.mxu0
  %v563 = vadd.f32 %v544, %v562
  %564 = vdwg.mxu0
  %565 = vmatpush.bf16.msra.mxu0 %v367
  %566 = vmatpush.bf16.msra.mxu0 %v365
  %567 = vmatpush.bf16.msra.mxu0 %v363
  %568 = vmatpush.bf16.msra.mxu0 %v361
  %569 = vmatpush.bf16.msra.mxu0 %v359
  %570 = vmatpush.bf16.msra.mxu0 %v357
  %571 = vmatpush.bf16.msra.mxu0 %v355
  %572 = vmatpush.bf16.msra.mxu0 %v353
  %573 = vmatmul.bf16.gmra.mxu0 %v37
  %v574 = vpop.f32.mrf.mxu0
  %v575 = vadd.f32 %v556, %v574
  %v576 = vpop.f32.mrf.mxu0
  %v577 = vadd.f32 %v558, %v576
  %578 = vmatmul.bf16.gmra.mxu0 %v41
  %v579 = vpop.f32.mrf.mxu0
  %v580 = vadd.f32 %v561, %v579
  %v581 = vpop.f32.mrf.mxu0
  %v582 = vadd.f32 %v563, %v581
  %583 = vdwg.mxu0
  %584 = vst [vmem:[#allocation2] sm:$0xff] %v499
  %585 = vst [vmem:[#allocation2 + $0x8] sm:$0xff] %v575
  %586 = vst [vmem:[#allocation2 + $0x10] sm:$0xff] %v501
  %587 = vst [vmem:[#allocation2 + $0x18] sm:$0xff] %v577
  %588 = vst [vmem:[#allocation2 + $0x20] sm:$0xff] %v504
  %589 = vst [vmem:[#allocation2 + $0x28] sm:$0xff] %v580
  %590 = vst [vmem:[#allocation2 + $0x30] sm:$0xff] %v506
  %591 = vst [vmem:[#allocation2 + $0x38] sm:$0xff] %v582
  %vm592 = vcmask 517120
  %593 = vst.msk [vmem:[#allocation3] sm:$0x3] %vm592, 0.0
  %594 = vst.msk [vmem:[#allocation4] sm:$0x3] %vm592, 0.0
  %v595 = vlaneseq
  %v596 = vand.u32 %v595, 127
  %v597 = vadd.s32 %v596, 128
  %vm598 = vcmp.ge.s32.totalorder %v596, 128
  %vm599 = vcmp.ge.s32.totalorder %v597, 128
  %vm600 = vcmp.lt.s32.totalorder %v596, 192
  %vm601 = vcmp.lt.s32.totalorder %v597, 192
  %vm602 = vmand %vm598, %vm600
  %vm603 = vmand %vm599, %vm601
  %v604 = vld [vmem:[#allocation2] sm:$0x3]
  %v605 = vld [vmem:[#allocation2 + $0x8] sm:$0x3]
  %v606 = vld [vmem:[#allocation3] sm:$0x3]
  %v607 = vpack.c.bf16 %v606, %v606
  %v608 = vld [vmem:[%s2] sm:$0xff]
  %v609 = vld [vmem:[%s2 + $0x8] sm:$0xff]
  %v610 = vld [vmem:[%s2 + $0x10] sm:$0xff]
  %v611 = vld [vmem:[%s2 + $0x18] sm:$0xff]
  %v612 = vld [vmem:[%s2 + $0x20] sm:$0xff]
  %v613 = vld [vmem:[%s2 + $0x28] sm:$0xff]
  %v614 = vld [vmem:[%s2 + $0x30] sm:$0xff]
  %v615 = vld [vmem:[%s2 + $0x38] sm:$0xff]
  %v624 = vunpack.c.l.b16 %v608
  %v625 = vunpack.c.h.b16 %v608
  %v626 = vunpack.c.l.b16 %v609
  %v627 = vunpack.c.h.b16 %v609
  %v628 = vunpack.c.l.b16 %v610
  %v629 = vunpack.c.h.b16 %v610
  %v630 = vunpack.c.l.b16 %v611
  %v631 = vunpack.c.h.b16 %v611
  %v632 = vunpack.c.l.b16 %v612
  %v633 = vunpack.c.h.b16 %v612
  %v634 = vunpack.c.l.b16 %v613
  %v635 = vunpack.c.h.b16 %v613
  %v636 = vunpack.c.l.b16 %v614
  %v637 = vunpack.c.h.b16 %v614
  %v638 = vunpack.c.l.b16 %v615
  %v639 = vunpack.c.h.b16 %v615
  %v640 = vpack.c.b16 %v626, %v624
  %v641 = vpack.c.b16 %v627, %v625
  %v642 = vpack.c.b16 %v630, %v628
  %v643 = vpack.c.b16 %v631, %v629
  %v644 = vpack.c.b16 %v634, %v632
  %v645 = vpack.c.b16 %v635, %v633
  %v646 = vpack.c.b16 %v638, %v636
  %v647 = vpack.c.b16 %v639, %v637
  %vm656 = vcmask 523264
  %v658 = vsel %vm656, %v607, 0
  %660 = vmatpush.bf16.msra.mxu0 0
  %661 = vmatpush.bf16.msra.mxu0 0
  %662 = vmatpush.bf16.msra.mxu0 0
  %663 = vmatpush.bf16.msra.mxu0 0
  %664 = vmatpush.bf16.msra.mxu0 %v646
  %665 = vmatpush.bf16.msra.mxu0 %v644
  %666 = vmatpush.bf16.msra.mxu0 %v642
  %667 = vmatpush.bf16.msra.mxu0 %v640
  %668 = vmatmul.bf16.gmra.mxu0 %v658
  %v669 = vpop.f32.mrf.mxu0
  %v670 = vadd.f32 0.0, %v669
  %v671 = vpop.f32.mrf.mxu0
  %672 = vdwg.mxu0
  %673 = vmatpush.bf16.msra.mxu0 0
  %674 = vmatpush.bf16.msra.mxu0 0
  %675 = vmatpush.bf16.msra.mxu0 0
  %676 = vmatpush.bf16.msra.mxu0 0
  %677 = vmatpush.bf16.msra.mxu0 %v647
  %678 = vmatpush.bf16.msra.mxu0 %v645
  %679 = vmatpush.bf16.msra.mxu0 %v643
  %680 = vmatpush.bf16.msra.mxu0 %v641
  %681 = vmatmul.bf16.gmra.mxu0 %v658
  %v682 = vpop.f32.mrf.mxu0
  %v683 = vadd.f32 0.0, %v682
  %v684 = vpop.f32.mrf.mxu0
  %685 = vdwg.mxu0
  %v686 = vadd.f32 %v604, %v670
  %v687 = vadd.f32 %v605, %v683
  %v688 = vtanh.pop %v686
  %v689 = vtanh.pop %v687
  %v690 = vxor.u32 %v686, 2147483648
  %v691 = vxor.u32 %v687, 2147483648
  %v692 = vmul.f32 %v690, 1.442695
  %v693 = vpow.pop %v692
  %v694 = vmul.f32 %v691, 1.442695
  %v695 = vpow.pop %v694
  %v696 = vadd.f32 %v693, 1.0
  %v697 = vadd.f32 %v695, 1.0
  %v698 = vrcp.pop %v696
  %v699 = vmul.f32 %v696, %v698
  %v700 = vsub.f32 1.0, %v699
  %v701 = vmul.f32 %v698, %v700
  %v702 = vadd.f32 %v698, %v701
  %vm703 = vweird.f32 %v696
  %vm704 = vweird.f32 %v698
  %vm705 = vmor %vm703, %vm704
  %v706 = vsel %vm705, %v698, %v702
  %v707 = vand.u32 2147483647, %v696
  %vm708 = vcmp.eq.f32.partialorder %v707, 8.507059e+37
  %v709 = vand.u32 %v696, 2147483648
  %v710 = vor.u32 1.1754944e-38, %v709
  %v711 = vsel %vm708, %v710, %v706
  %v712 = vmul.f32 1.0, %v711
  %v713 = vrcp.pop %v697
  %v714 = vmul.f32 %v697, %v713
  %v715 = vsub.f32 1.0, %v714
  %v716 = vmul.f32 %v713, %v715
  %v717 = vadd.f32 %v713, %v716
  %vm718 = vweird.f32 %v697
  %vm719 = vweird.f32 %v713
  %vm720 = vmor %vm718, %vm719
  %v721 = vsel %vm720, %v713, %v717
  %v722 = vand.u32 2147483647, %v697
  %vm723 = vcmp.eq.f32.partialorder %v722, 8.507059e+37
  %v724 = vand.u32 %v697, 2147483648
  %v725 = vor.u32 1.1754944e-38, %v724
  %v726 = vsel %vm723, %v725, %v721
  %v727 = vmul.f32 1.0, %v726
  %v728 = vsel %vm602, %v688, %v712
  %v729 = vsel %vm603, %v689, %v727
  %v730 = vld [vmem:[#allocation4] sm:$0x3]
  %732 = vrot.lane.b32.xlu0 %v730, 64
  %v733 = vpop.permute.xlu0 %732
  %v735 = vmul.f32 %v728, %v733
  %v736 = vmul.f32 %v728, %v729
  %738 = vrot.lane.b32.xlu0 %v736, 64
  %v739 = vpop.permute.xlu0 %738
  %v741 = vadd.f32 %v735, %v739
  %v742 = vtanh.pop %v741
  %v743 = vmul.f32 %v729, %v742
  %745 = vrot.lane.b32.xlu0 %v741, 64
  %v746 = vpop.permute.xlu0 %745
  %748 = vst.msk [vmem:[#allocation4] sm:$0x3] %vm592, %v746
  %750 = vrot.lane.b32.xlu0 %v743, 64
  %v751 = vpop.permute.xlu0 %750
  %753 = vst.msk [vmem:[#allocation3] sm:$0x3] %vm592, %v751
  %754 = vst.msk [vmem:[%s4] sm:$0x3] %vm592, %v751
  %v755 = vld [vmem:[#allocation2] sm:$0xc]
  %v756 = vld [vmem:[#allocation2 + $0x8] sm:$0xc]
  %v757 = vld [vmem:[#allocation3] sm:$0x3]
  %v758 = vpack.c.bf16 %v757, %v757
  %v759 = vld [vmem:[%s2] sm:$0xff]
  %v760 = vld [vmem:[%s2 + $0x8] sm:$0xff]
  %v761 = vld [vmem:[%s2 + $0x10] sm:$0xff]
  %v762 = vld [vmem:[%s2 + $0x18] sm:$0xff]
  %v763 = vld [vmem:[%s2 + $0x20] sm:$0xff]
  %v764 = vld [vmem:[%s2 + $0x28] sm:$0xff]
  %v765 = vld [vmem:[%s2 + $0x30] sm:$0xff]
  %v766 = vld [vmem:[%s2 + $0x38] sm:$0xff]
  %v775 = vunpack.c.l.b16 %v759
  %v776 = vunpack.c.h.b16 %v759
  %v777 = vunpack.c.l.b16 %v760
  %v778 = vunpack.c.h.b16 %v760
  %v779 = vunpack.c.l.b16 %v761
  %v780 = vunpack.c.h.b16 %v761
  %v781 = vunpack.c.l.b16 %v762
  %v782 = vunpack.c.h.b16 %v762
  %v783 = vunpack.c.l.b16 %v763
  %v784 = vunpack.c.h.b16 %v763
  %v785 = vunpack.c.l.b16 %v764
  %v786 = vunpack.c.h.b16 %v764
  %v787 = vunpack.c.l.b16 %v765
  %v788 = vunpack.c.h.b16 %v765
  %v789 = vunpack.c.l.b16 %v766
  %v790 = vunpack.c.h.b16 %v766
  %v791 = vpack.c.b16 %v777, %v775
  %v792 = vpack.c.b16 %v778, %v776
  %v793 = vpack.c.b16 %v781, %v779
  %v794 = vpack.c.b16 %v782, %v780
  %v795 = vpack.c.b16 %v785, %v783
  %v796 = vpack.c.b16 %v786, %v784
  %v797 = vpack.c.b16 %v789, %v787
  %v798 = vpack.c.b16 %v790, %v788
  %v808 = vsel %vm656, %v758, 0
  %810 = vmatpush.bf16.msra.mxu0 0
  %811 = vmatpush.bf16.msra.mxu0 0
  %812 = vmatpush.bf16.msra.mxu0 0
  %813 = vmatpush.bf16.msra.mxu0 0
  %814 = vmatpush.bf16.msra.mxu0 %v797
  %815 = vmatpush.bf16.msra.mxu0 %v795
  %816 = vmatpush.bf16.msra.mxu0 %v793
  %817 = vmatpush.bf16.msra.mxu0 %v791
  %818 = vmatmul.bf16.gmra.mxu0 %v808
  %v819 = vpop.f32.mrf.mxu0
  %v820 = vadd.f32 0.0, %v819
  %v821 = vpop.f32.mrf.mxu0
  %822 = vdwg.mxu0
  %823 = vmatpush.bf16.msra.mxu0 0
  %824 = vmatpush.bf16.msra.mxu0 0
  %825 = vmatpush.bf16.msra.mxu0 0
  %826 = vmatpush.bf16.msra.mxu0 0
  %827 = vmatpush.bf16.msra.mxu0 %v798
  %828 = vmatpush.bf16.msra.mxu0 %v796
  %829 = vmatpush.bf16.msra.mxu0 %v794
  %830 = vmatpush.bf16.msra.mxu0 %v792
  %831 = vmatmul.bf16.gmra.mxu0 %v808
  %v832 = vpop.f32.mrf.mxu0
  %v833 = vadd.f32 0.0, %v832
  %v834 = vpop.f32.mrf.mxu0
  %835 = vdwg.mxu0
  %v838 = vrot.slane %v820, 6
  %v839 = vrot.slane %v833, 6
  %v842 = vadd.f32 %v755, %v838
  %v843 = vadd.f32 %v756, %v839
  %v844 = vtanh.pop %v842
  %v845 = vtanh.pop %v843
  %v846 = vxor.u32 %v842, 2147483648
  %v847 = vxor.u32 %v843, 2147483648
  %v848 = vmul.f32 %v846, 1.442695
  %v849 = vpow.pop %v848
  %v850 = vmul.f32 %v847, 1.442695
  %v851 = vpow.pop %v850
  %v852 = vadd.f32 %v849, 1.0
  %v853 = vadd.f32 %v851, 1.0
  %v854 = vrcp.pop %v852
  %v855 = vmul.f32 %v852, %v854
  %v856 = vsub.f32 1.0, %v855
  %v857 = vmul.f32 %v854, %v856
  %v858 = vadd.f32 %v854, %v857
  %vm859 = vweird.f32 %v852
  %vm860 = vweird.f32 %v854
  %vm861 = vmor %vm859, %vm860
  %v862 = vsel %vm861, %v854, %v858
  %v863 = vand.u32 2147483647, %v852
  %vm864 = vcmp.eq.f32.partialorder %v863, 8.507059e+37
  %v865 = vand.u32 %v852, 2147483648
  %v866 = vor.u32 1.1754944e-38, %v865
  %v867 = vsel %vm864, %v866, %v862
  %v868 = vmul.f32 1.0, %v867
  %v869 = vrcp.pop %v853
  %v870 = vmul.f32 %v853, %v869
  %v871 = vsub.f32 1.0, %v870
  %v872 = vmul.f32 %v869, %v871
  %v873 = vadd.f32 %v869, %v872
  %vm874 = vweird.f32 %v853
  %vm875 = vweird.f32 %v869
  %vm876 = vmor %vm874, %vm875
  %v877 = vsel %vm876, %v869, %v873
  %v878 = vand.u32 2147483647, %v853
  %vm879 = vcmp.eq.f32.partialorder %v878, 8.507059e+37
  %v880 = vand.u32 %v853, 2147483648
  %v881 = vor.u32 1.1754944e-38, %v880
  %v882 = vsel %vm879, %v881, %v877
  %v883 = vmul.f32 1.0, %v882
  %v884 = vsel %vm602, %v844, %v868
  %v885 = vsel %vm603, %v845, %v883
  %v886 = vld [vmem:[#allocation4] sm:$0x3]
  %v888 = vrot.slane %v886, 6
  %889 = vrot.lane.b32.xlu0 %v888, 64
  %v890 = vpop.permute.xlu0 %889
  %v892 = vmul.f32 %v884, %v890
  %v893 = vmul.f32 %v884, %v885
  %895 = vrot.lane.b32.xlu0 %v893, 64
  %v896 = vpop.permute.xlu0 %895
  %v898 = vadd.f32 %v892, %v896
  %v899 = vtanh.pop %v898
  %v900 = vmul.f32 %v885, %v899
  %902 = vrot.lane.b32.xlu0 %v898, 64
  %v903 = vpop.permute.xlu0 %902
  %vm905 = vcmask 519170
  %906 = vst.msk [vmem:[#allocation4 - $0x2] sm:$0xc] %vm905, %v903
  %908 = vrot.lane.b32.xlu0 %v900, 64
  %v909 = vpop.permute.xlu0 %908
  %911 = vst.msk [vmem:[#allocation3 - $0x2] sm:$0xc] %vm905, %v909
  %s912 = scalar_lea.vmem %s4, 2
  %913 = vst.msk [vmem:[%s912 - $0x2] sm:$0xc] %vm905, %v909
  %v914 = vld [vmem:[#allocation2] sm:$0x30]
  %v915 = vld [vmem:[#allocation2 + $0x8] sm:$0x30]
  %v916 = vld [vmem:[#allocation3] sm:$0x3]
  %v917 = vpack.c.bf16 %v916, %v916
  %v918 = vld [vmem:[%s2] sm:$0xff]
  %v919 = vld [vmem:[%s2 + $0x8] sm:$0xff]
  %v920 = vld [vmem:[%s2 + $0x10] sm:$0xff]
  %v921 = vld [vmem:[%s2 + $0x18] sm:$0xff]
  %v922 = vld [vmem:[%s2 + $0x20] sm:$0xff]
  %v923 = vld [vmem:[%s2 + $0x28] sm:$0xff]
  %v924 = vld [vmem:[%s2 + $0x30] sm:$0xff]
  %v925 = vld [vmem:[%s2 + $0x38] sm:$0xff]
  %v934 = vunpack.c.l.b16 %v918
  %v935 = vunpack.c.h.b16 %v918
  %v936 = vunpack.c.l.b16 %v919
  %v937 = vunpack.c.h.b16 %v919
  %v938 = vunpack.c.l.b16 %v920
  %v939 = vunpack.c.h.b16 %v920
  %v940 = vunpack.c.l.b16 %v921
  %v941 = vunpack.c.h.b16 %v921
  %v942 = vunpack.c.l.b16 %v922
  %v943 = vunpack.c.h.b16 %v922
  %v944 = vunpack.c.l.b16 %v923
  %v945 = vunpack.c.h.b16 %v923
  %v946 = vunpack.c.l.b16 %v924
  %v947 = vunpack.c.h.b16 %v924
  %v948 = vunpack.c.l.b16 %v925
  %v949 = vunpack.c.h.b16 %v925
  %v950 = vpack.c.b16 %v936, %v934
  %v951 = vpack.c.b16 %v937, %v935
  %v952 = vpack.c.b16 %v940, %v938
  %v953 = vpack.c.b16 %v941, %v939
  %v954 = vpack.c.b16 %v944, %v942
  %v955 = vpack.c.b16 %v945, %v943
  %v956 = vpack.c.b16 %v948, %v946
  %v957 = vpack.c.b16 %v949, %v947
  %v967 = vsel %vm656, %v917, 0
  %969 = vmatpush.bf16.msra.mxu0 0
  %970 = vmatpush.bf16.msra.mxu0 0
  %971 = vmatpush.bf16.msra.mxu0 0
  %972 = vmatpush.bf16.msra.mxu0 0
  %973 = vmatpush.bf16.msra.mxu0 %v956
  %974 = vmatpush.bf16.msra.mxu0 %v954
  %975 = vmatpush.bf16.msra.mxu0 %v952
  %976 = vmatpush.bf16.msra.mxu0 %v950
  %977 = vmatmul.bf16.gmra.mxu0 %v967
  %v978 = vpop.f32.mrf.mxu0
  %v979 = vadd.f32 0.0, %v978
  %v980 = vpop.f32.mrf.mxu0
  %981 = vdwg.mxu0
  %982 = vmatpush.bf16.msra.mxu0 0
  %983 = vmatpush.bf16.msra.mxu0 0
  %984 = vmatpush.bf16.msra.mxu0 0
  %985 = vmatpush.bf16.msra.mxu0 0
  %986 = vmatpush.bf16.msra.mxu0 %v957
  %987 = vmatpush.bf16.msra.mxu0 %v955
  %988 = vmatpush.bf16.msra.mxu0 %v953
  %989 = vmatpush.bf16.msra.mxu0 %v951
  %990 = vmatmul.bf16.gmra.mxu0 %v967
  %v991 = vpop.f32.mrf.mxu0
  %v992 = vadd.f32 0.0, %v991
  %v993 = vpop.f32.mrf.mxu0
  %994 = vdwg.mxu0
  %v997 = vrot.slane %v979, 4
  %v998 = vrot.slane %v992, 4
  %v1001 = vadd.f32 %v914, %v997
  %v1002 = vadd.f32 %v915, %v998
  %v1003 = vtanh.pop %v1001
  %v1004 = vtanh.pop %v1002
  %v1005 = vxor.u32 %v1001, 2147483648
  %v1006 = vxor.u32 %v1002, 2147483648
  %v1007 = vmul.f32 %v1005, 1.442695
  %v1008 = vpow.pop %v1007
  %v1009 = vmul.f32 %v1006, 1.442695
  %v1010 = vpow.pop %v1009
  %v1011 = vadd.f32 %v1008, 1.0
  %v1012 = vadd.f32 %v1010, 1.0
  %v1013 = vrcp.pop %v1011
  %v1014 = vmul.f32 %v1011, %v1013
  %v1015 = vsub.f32 1.0, %v1014
  %v1016 = vmul.f32 %v1013, %v1015
  %v1017 = vadd.f32 %v1013, %v1016
  %vm1018 = vweird.f32 %v1011
  %vm1019 = vweird.f32 %v1013
  %vm1020 = vmor %vm1018, %vm1019
  %v1021 = vsel %vm1020, %v1013, %v1017
  %v1022 = vand.u32 2147483647, %v1011
  %vm1023 = vcmp.eq.f32.partialorder %v1022, 8.507059e+37
  %v1024 = vand.u32 %v1011, 2147483648
  %v1025 = vor.u32 1.1754944e-38, %v1024
  %v1026 = vsel %vm1023, %v1025, %v1021
  %v1027 = vmul.f32 1.0, %v1026
  %v1028 = vrcp.pop %v1012
  %v1029 = vmul.f32 %v1012, %v1028
  %v1030 = vsub.f32 1.0, %v1029
  %v1031 = vmul.f32 %v1028, %v1030
  %v1032 = vadd.f32 %v1028, %v1031
  %vm1033 = vweird.f32 %v1012
  %vm1034 = vweird.f32 %v1028
  %vm1035 = vmor %vm1033, %vm1034
  %v1036 = vsel %vm1035, %v1028, %v1032
  %v1037 = vand.u32 2147483647, %v1012
  %vm1038 = vcmp.eq.f32.partialorder %v1037, 8.507059e+37
  %v1039 = vand.u32 %v1012, 2147483648
  %v1040 = vor.u32 1.1754944e-38, %v1039
  %v1041 = vsel %vm1038, %v1040, %v1036
  %v1042 = vmul.f32 1.0, %v1041
  %v1043 = vsel %vm602, %v1003, %v1027
  %v1044 = vsel %vm603, %v1004, %v1042
  %v1045 = vld [vmem:[#allocation4] sm:$0x3]
  %v1047 = vrot.slane %v1045, 4
  %1048 = vrot.lane.b32.xlu0 %v1047, 64
  %v1049 = vpop.permute.xlu0 %1048
  %v1051 = vmul.f32 %v1043, %v1049
  %v1052 = vmul.f32 %v1043, %v1044
  %1054 = vrot.lane.b32.xlu0 %v1052, 64
  %v1055 = vpop.permute.xlu0 %1054
  %v1057 = vadd.f32 %v1051, %v1055
  %v1058 = vtanh.pop %v1057
  %v1059 = vmul.f32 %v1044, %v1058
  %1061 = vrot.lane.b32.xlu0 %v1057, 64
  %v1062 = vpop.permute.xlu0 %1061
  %vm1064 = vcmask 521220
  %1065 = vst.msk [vmem:[#allocation4 - $0x4] sm:$0x30] %vm1064, %v1062
  %1067 = vrot.lane.b32.xlu0 %v1059, 64
  %v1068 = vpop.permute.xlu0 %1067
  %1070 = vst.msk [vmem:[#allocation3 - $0x4] sm:$0x30] %vm1064, %v1068
  %s1071 = scalar_lea.vmem %s4, 4
  %1072 = vst.msk [vmem:[%s1071 - $0x4] sm:$0x30] %vm1064, %v1068
  %v1073 = vld [vmem:[#allocation2] sm:$0xc0]
  %v1074 = vld [vmem:[#allocation2 + $0x8] sm:$0xc0]
  %v1075 = vld [vmem:[#allocation3] sm:$0x3]
  %v1076 = vpack.c.bf16 %v1075, %v1075
  %v1077 = vld [vmem:[%s2] sm:$0xff]
  %v1078 = vld [vmem:[%s2 + $0x8] sm:$0xff]
  %v1079 = vld [vmem:[%s2 + $0x10] sm:$0xff]
  %v1080 = vld [vmem:[%s2 + $0x18] sm:$0xff]
  %v1081 = vld [vmem:[%s2 + $0x20] sm:$0xff]
  %v1082 = vld [vmem:[%s2 + $0x28] sm:$0xff]
  %v1083 = vld [vmem:[%s2 + $0x30] sm:$0xff]
  %v1084 = vld [vmem:[%s2 + $0x38] sm:$0xff]
  %v1093 = vunpack.c.l.b16 %v1077
  %v1094 = vunpack.c.h.b16 %v1077
  %v1095 = vunpack.c.l.b16 %v1078
  %v1096 = vunpack.c.h.b16 %v1078
  %v1097 = vunpack.c.l.b16 %v1079
  %v1098 = vunpack.c.h.b16 %v1079
  %v1099 = vunpack.c.l.b16 %v1080
  %v1100 = vunpack.c.h.b16 %v1080
  %v1101 = vunpack.c.l.b16 %v1081
  %v1102 = vunpack.c.h.b16 %v1081
  %v1103 = vunpack.c.l.b16 %v1082
  %v1104 = vunpack.c.h.b16 %v1082
  %v1105 = vunpack.c.l.b16 %v1083
  %v1106 = vunpack.c.h.b16 %v1083
  %v1107 = vunpack.c.l.b16 %v1084
  %v1108 = vunpack.c.h.b16 %v1084
  %v1109 = vpack.c.b16 %v1095, %v1093
  %v1110 = vpack.c.b16 %v1096, %v1094
  %v1111 = vpack.c.b16 %v1099, %v1097
  %v1112 = vpack.c.b16 %v1100, %v1098
  %v1113 = vpack.c.b16 %v1103, %v1101
  %v1114 = vpack.c.b16 %v1104, %v1102
  %v1115 = vpack.c.b16 %v1107, %v1105
  %v1116 = vpack.c.b16 %v1108, %v1106
  %v1126 = vsel %vm656, %v1076, 0
  %1128 = vmatpush.bf16.msra.mxu0 0
  %1129 = vmatpush.bf16.msra.mxu0 0
  %1130 = vmatpush.bf16.msra.mxu0 0
  %1131 = vmatpush.bf16.msra.mxu0 0
  %1132 = vmatpush.bf16.msra.mxu0 %v1115
  %1133 = vmatpush.bf16.msra.mxu0 %v1113
  %1134 = vmatpush.bf16.msra.mxu0 %v1111
  %1135 = vmatpush.bf16.msra.mxu0 %v1109
  %1136 = vmatmul.bf16.gmra.mxu0 %v1126
  %v1137 = vpop.f32.mrf.mxu0
  %v1138 = vadd.f32 0.0, %v1137
  %v1139 = vpop.f32.mrf.mxu0
  %1140 = vdwg.mxu0
  %1141 = vmatpush.bf16.msra.mxu0 0
  %1142 = vmatpush.bf16.msra.mxu0 0
  %1143 = vmatpush.bf16.msra.mxu0 0
  %1144 = vmatpush.bf16.msra.mxu0 0
  %1145 = vmatpush.bf16.msra.mxu0 %v1116
  %1146 = vmatpush.bf16.msra.mxu0 %v1114
  %1147 = vmatpush.bf16.msra.mxu0 %v1112
  %1148 = vmatpush.bf16.msra.mxu0 %v1110
  %1149 = vmatmul.bf16.gmra.mxu0 %v1126
  %v1150 = vpop.f32.mrf.mxu0
  %v1151 = vadd.f32 0.0, %v1150
  %v1152 = vpop.f32.mrf.mxu0
  %1153 = vdwg.mxu0
  %v1156 = vrot.slane %v1138, 2
  %v1157 = vrot.slane %v1151, 2
  %v1160 = vadd.f32 %v1073, %v1156
  %v1161 = vadd.f32 %v1074, %v1157
  %v1162 = vtanh.pop %v1160
  %v1163 = vtanh.pop %v1161
  %v1164 = vxor.u32 %v1160, 2147483648
  %v1165 = vxor.u32 %v1161, 2147483648
  %v1166 = vmul.f32 %v1164, 1.442695
  %v1167 = vpow.pop %v1166
  %v1168 = vmul.f32 %v1165, 1.442695
  %v1169 = vpow.pop %v1168
  %v1170 = vadd.f32 %v1167, 1.0
  %v1171 = vadd.f32 %v1169, 1.0
  %v1172 = vrcp.pop %v1170
  %v1173 = vmul.f32 %v1170, %v1172
  %v1174 = vsub.f32 1.0, %v1173
  %v1175 = vmul.f32 %v1172, %v1174
  %v1176 = vadd.f32 %v1172, %v1175
  %vm1177 = vweird.f32 %v1170
  %vm1178 = vweird.f32 %v1172
  %vm1179 = vmor %vm1177, %vm1178
  %v1180 = vsel %vm1179, %v1172, %v1176
  %v1181 = vand.u32 2147483647, %v1170
  %vm1182 = vcmp.eq.f32.partialorder %v1181, 8.507059e+37
  %v1183 = vand.u32 %v1170, 2147483648
  %v1184 = vor.u32 1.1754944e-38, %v1183
  %v1185 = vsel %vm1182, %v1184, %v1180
  %v1186 = vmul.f32 1.0, %v1185
  %v1187 = vrcp.pop %v1171
  %v1188 = vmul.f32 %v1171, %v1187
  %v1189 = vsub.f32 1.0, %v1188
  %v1190 = vmul.f32 %v1187, %v1189
  %v1191 = vadd.f32 %v1187, %v1190
  %vm1192 = vweird.f32 %v1171
  %vm1193 = vweird.f32 %v1187
  %vm1194 = vmor %vm1192, %vm1193
  %v1195 = vsel %vm1194, %v1187, %v1191
  %v1196 = vand.u32 2147483647, %v1171
  %vm1197 = vcmp.eq.f32.partialorder %v1196, 8.507059e+37
  %v1198 = vand.u32 %v1171, 2147483648
  %v1199 = vor.u32 1.1754944e-38, %v1198
  %v1200 = vsel %vm1197, %v1199, %v1195
  %v1201 = vmul.f32 1.0, %v1200
  %v1202 = vsel %vm602, %v1162, %v1186
  %v1203 = vsel %vm603, %v1163, %v1201
  %v1204 = vld [vmem:[#allocation4] sm:$0x3]
  %v1206 = vrot.slane %v1204, 2
  %1207 = vrot.lane.b32.xlu0 %v1206, 64
  %v1208 = vpop.permute.xlu0 %1207
  %v1210 = vmul.f32 %v1202, %v1208
  %v1211 = vmul.f32 %v1202, %v1203
  %1213 = vrot.lane.b32.xlu0 %v1211, 64
  %v1214 = vpop.permute.xlu0 %1213
  %v1216 = vadd.f32 %v1210, %v1214
  %v1217 = vtanh.pop %v1216
  %v1218 = vmul.f32 %v1203, %v1217
  %1220 = vrot.lane.b32.xlu0 %v1216, 64
  %v1221 = vpop.permute.xlu0 %1220
  %vm1223 = vcmask 523270
  %1224 = vst.msk [vmem:[#allocation4 - $0x6] sm:$0xc0] %vm1223, %v1221
  %1226 = vrot.lane.b32.xlu0 %v1218, 64
  %v1227 = vpop.permute.xlu0 %1226
  %1229 = vst.msk [vmem:[#allocation3 - $0x6] sm:$0xc0] %vm1223, %v1227
  %s1230 = scalar_lea.vmem %s4, 6
  %1231 = vst.msk [vmem:[%s1230 - $0x6] sm:$0xc0] %vm1223, %v1227
  %v1232 = vld [vmem:[#allocation2 + $0x10] sm:$0x3]
  %v1233 = vld [vmem:[#allocation2 + $0x18] sm:$0x3]
  %v1234 = vld [vmem:[#allocation3] sm:$0x3]
  %v1235 = vpack.c.bf16 %v1234, %v1234
  %v1236 = vld [vmem:[%s2] sm:$0xff]
  %v1237 = vld [vmem:[%s2 + $0x8] sm:$0xff]
  %v1238 = vld [vmem:[%s2 + $0x10] sm:$0xff]
  %v1239 = vld [vmem:[%s2 + $0x18] sm:$0xff]
  %v1240 = vld [vmem:[%s2 + $0x20] sm:$0xff]
  %v1241 = vld [vmem:[%s2 + $0x28] sm:$0xff]
  %v1242 = vld [vmem:[%s2 + $0x30] sm:$0xff]
  %v1243 = vld [vmem:[%s2 + $0x38] sm:$0xff]
  %v1252 = vunpack.c.l.b16 %v1236
  %v1253 = vunpack.c.h.b16 %v1236
  %v1254 = vunpack.c.l.b16 %v1237
  %v1255 = vunpack.c.h.b16 %v1237
  %v1256 = vunpack.c.l.b16 %v1238
  %v1257 = vunpack.c.h.b16 %v1238
  %v1258 = vunpack.c.l.b16 %v1239
  %v1259 = vunpack.c.h.b16 %v1239
  %v1260 = vunpack.c.l.b16 %v1240
  %v1261 = vunpack.c.h.b16 %v1240
  %v1262 = vunpack.c.l.b16 %v1241
  %v1263 = vunpack.c.h.b16 %v1241
  %v1264 = vunpack.c.l.b16 %v1242
  %v1265 = vunpack.c.h.b16 %v1242
  %v1266 = vunpack.c.l.b16 %v1243
  %v1267 = vunpack.c.h.b16 %v1243
  %v1268 = vpack.c.b16 %v1254, %v1252
  %v1269 = vpack.c.b16 %v1255, %v1253
  %v1270 = vpack.c.b16 %v1258, %v1256
  %v1271 = vpack.c.b16 %v1259, %v1257
  %v1272 = vpack.c.b16 %v1262, %v1260
  %v1273 = vpack.c.b16 %v1263, %v1261
  %v1274 = vpack.c.b16 %v1266, %v1264
  %v1275 = vpack.c.b16 %v1267, %v1265
  %v1285 = vsel %vm656, %v1235, 0
  %1287 = vmatpush.bf16.msra.mxu0 0
  %1288 = vmatpush.bf16.msra.mxu0 0
  %1289 = vmatpush.bf16.msra.mxu0 0
  %1290 = vmatpush.bf16.msra.mxu0 0
  %1291 = vmatpush.bf16.msra.mxu0 %v1274
  %1292 = vmatpush.bf16.msra.mxu0 %v1272
  %1293 = vmatpush.bf16.msra.mxu0 %v1270
  %1294 = vmatpush.bf16.msra.mxu0 %v1268
  %1295 = vmatmul.bf16.gmra.mxu0 %v1285
  %v1296 = vpop.f32.mrf.mxu0
  %v1297 = vadd.f32 0.0, %v1296
  %v1298 = vpop.f32.mrf.mxu0
  %1299 = vdwg.mxu0
  %1300 = vmatpush.bf16.msra.mxu0 0
  %1301 = vmatpush.bf16.msra.mxu0 0
  %1302 = vmatpush.bf16.msra.mxu0 0
  %1303 = vmatpush.bf16.msra.mxu0 0
  %1304 = vmatpush.bf16.msra.mxu0 %v1275
  %1305 = vmatpush.bf16.msra.mxu0 %v1273
  %1306 = vmatpush.bf16.msra.mxu0 %v1271
  %1307 = vmatpush.bf16.msra.mxu0 %v1269
  %1308 = vmatmul.bf16.gmra.mxu0 %v1285
  %v1309 = vpop.f32.mrf.mxu0
  %v1310 = vadd.f32 0.0, %v1309
  %v1311 = vpop.f32.mrf.mxu0
  %1312 = vdwg.mxu0
  %v1313 = vadd.f32 %v1232, %v1297
  %v1314 = vadd.f32 %v1233, %v1310
  %v1315 = vtanh.pop %v1313
  %v1316 = vtanh.pop %v1314
  %v1317 = vxor.u32 %v1313, 2147483648
  %v1318 = vxor.u32 %v1314, 2147483648
  %v1319 = vmul.f32 %v1317, 1.442695
  %v1320 = vpow.pop %v1319
  %v1321 = vmul.f32 %v1318, 1.442695
  %v1322 = vpow.pop %v1321
  %v1323 = vadd.f32 %v1320, 1.0
  %v1324 = vadd.f32 %v1322, 1.0
  %v1325 = vrcp.pop %v1323
  %v1326 = vmul.f32 %v1323, %v1325
  %v1327 = vsub.f32 1.0, %v1326
  %v1328 = vmul.f32 %v1325, %v1327
  %v1329 = vadd.f32 %v1325, %v1328
  %vm1330 = vweird.f32 %v1323
  %vm1331 = vweird.f32 %v1325
  %vm1332 = vmor %vm1330, %vm1331
  %v1333 = vsel %vm1332, %v1325, %v1329
  %v1334 = vand.u32 2147483647, %v1323
  %vm1335 = vcmp.eq.f32.partialorder %v1334, 8.507059e+37
  %v1336 = vand.u32 %v1323, 2147483648
  %v1337 = vor.u32 1.1754944e-38, %v1336
  %v1338 = vsel %vm1335, %v1337, %v1333
  %v1339 = vmul.f32 1.0, %v1338
  %v1340 = vrcp.pop %v1324
  %v1341 = vmul.f32 %v1324, %v1340
  %v1342 = vsub.f32 1.0, %v1341
  %v1343 = vmul.f32 %v1340, %v1342
  %v1344 = vadd.f32 %v1340, %v1343
  %vm1345 = vweird.f32 %v1324
  %vm1346 = vweird.f32 %v1340
  %vm1347 = vmor %vm1345, %vm1346
  %v1348 = vsel %vm1347, %v1340, %v1344
  %v1349 = vand.u32 2147483647, %v1324
  %vm1350 = vcmp.eq.f32.partialorder %v1349, 8.507059e+37
  %v1351 = vand.u32 %v1324, 2147483648
  %v1352 = vor.u32 1.1754944e-38, %v1351
  %v1353 = vsel %vm1350, %v1352, %v1348
  %v1354 = vmul.f32 1.0, %v1353
  %v1355 = vsel %vm602, %v1315, %v1339
  %v1356 = vsel %vm603, %v1316, %v1354
  %v1357 = vld [vmem:[#allocation4] sm:$0x3]
  %1359 = vrot.lane.b32.xlu0 %v1357, 64
  %v1360 = vpop.permute.xlu0 %1359
  %v1362 = vmul.f32 %v1355, %v1360
  %v1363 = vmul.f32 %v1355, %v1356
  %1365 = vrot.lane.b32.xlu0 %v1363, 64
  %v1366 = vpop.permute.xlu0 %1365
  %v1368 = vadd.f32 %v1362, %v1366
  %v1369 = vtanh.pop %v1368
  %v1370 = vmul.f32 %v1356, %v1369
  %1372 = vrot.lane.b32.xlu0 %v1368, 64
  %v1373 = vpop.permute.xlu0 %1372
  %1375 = vst.msk [vmem:[#allocation4] sm:$0x3] %vm592, %v1373
  %1377 = vrot.lane.b32.xlu0 %v1370, 64
  %v1378 = vpop.permute.xlu0 %1377
  %1380 = vst.msk [vmem:[#allocation3] sm:$0x3] %vm592, %v1378
  %s1381 = scalar_lea.vmem %s4, 8
  %1382 = vst.msk [vmem:[%s1381] sm:$0x3] %vm592, %v1378
  %v1383 = vld [vmem:[#allocation2 + $0x10] sm:$0xc]
  %v1384 = vld [vmem:[#allocation2 + $0x18] sm:$0xc]
  %v1385 = vld [vmem:[#allocation3] sm:$0x3]
  %v1386 = vpack.c.bf16 %v1385, %v1385
  %v1387 = vld [vmem:[%s2] sm:$0xff]
  %v1388 = vld [vmem:[%s2 + $0x8] sm:$0xff]
  %v1389 = vld [vmem:[%s2 + $0x10] sm:$0xff]
  %v1390 = vld [vmem:[%s2 + $0x18] sm:$0xff]
  %v1391 = vld [vmem:[%s2 + $0x20] sm:$0xff]
  %v1392 = vld [vmem:[%s2 + $0x28] sm:$0xff]
  %v1393 = vld [vmem:[%s2 + $0x30] sm:$0xff]
  %v1394 = vld [vmem:[%s2 + $0x38] sm:$0xff]
  %v1403 = vunpack.c.l.b16 %v1387
  %v1404 = vunpack.c.h.b16 %v1387
  %v1405 = vunpack.c.l.b16 %v1388
  %v1406 = vunpack.c.h.b16 %v1388
  %v1407 = vunpack.c.l.b16 %v1389
  %v1408 = vunpack.c.h.b16 %v1389
  %v1409 = vunpack.c.l.b16 %v1390
  %v1410 = vunpack.c.h.b16 %v1390
  %v1411 = vunpack.c.l.b16 %v1391
  %v1412 = vunpack.c.h.b16 %v1391
  %v1413 = vunpack.c.l.b16 %v1392
  %v1414 = vunpack.c.h.b16 %v1392
  %v1415 = vunpack.c.l.b16 %v1393
  %v1416 = vunpack.c.h.b16 %v1393
  %v1417 = vunpack.c.l.b16 %v1394
  %v1418 = vunpack.c.h.b16 %v1394
  %v1419 = vpack.c.b16 %v1405, %v1403
  %v1420 = vpack.c.b16 %v1406, %v1404
  %v1421 = vpack.c.b16 %v1409, %v1407
  %v1422 = vpack.c.b16 %v1410, %v1408
  %v1423 = vpack.c.b16 %v1413, %v1411
  %v1424 = vpack.c.b16 %v1414, %v1412
  %v1425 = vpack.c.b16 %v1417, %v1415
  %v1426 = vpack.c.b16 %v1418, %v1416
  %v1436 = vsel %vm656, %v1386, 0
  %1438 = vmatpush.bf16.msra.mxu0 0
  %1439 = vmatpush.bf16.msra.mxu0 0
  %1440 = vmatpush.bf16.msra.mxu0 0
  %1441 = vmatpush.bf16.msra.mxu0 0
  %1442 = vmatpush.bf16.msra.mxu0 %v1425
  %1443 = vmatpush.bf16.msra.mxu0 %v1423
  %1444 = vmatpush.bf16.msra.mxu0 %v1421
  %1445 = vmatpush.bf16.msra.mxu0 %v1419
  %1446 = vmatmul.bf16.gmra.mxu0 %v1436
  %v1447 = vpop.f32.mrf.mxu0
  %v1448 = vadd.f32 0.0, %v1447
  %v1449 = vpop.f32.mrf.mxu0
  %1450 = vdwg.mxu0
  %1451 = vmatpush.bf16.msra.mxu0 0
  %1452 = vmatpush.bf16.msra.mxu0 0
  %1453 = vmatpush.bf16.msra.mxu0 0
  %1454 = vmatpush.bf16.msra.mxu0 0
  %1455 = vmatpush.bf16.msra.mxu0 %v1426
  %1456 = vmatpush.bf16.msra.mxu0 %v1424
  %1457 = vmatpush.bf16.msra.mxu0 %v1422
  %1458 = vmatpush.bf16.msra.mxu0 %v1420
  %1459 = vmatmul.bf16.gmra.mxu0 %v1436
  %v1460 = vpop.f32.mrf.mxu0
  %v1461 = vadd.f32 0.0, %v1460
  %v1462 = vpop.f32.mrf.mxu0
  %1463 = vdwg.mxu0
  %v1466 = vrot.slane %v1448, 6
  %v1467 = vrot.slane %v1461, 6
  %v1470 = vadd.f32 %v1383, %v1466
  %v1471 = vadd.f32 %v1384, %v1467
  %v1472 = vtanh.pop %v1470
  %v1473 = vtanh.pop %v1471
  %v1474 = vxor.u32 %v1470, 2147483648
  %v1475 = vxor.u32 %v1471, 2147483648
  %v1476 = vmul.f32 %v1474, 1.442695
  %v1477 = vpow.pop %v1476
  %v1478 = vmul.f32 %v1475, 1.442695
  %v1479 = vpow.pop %v1478
  %v1480 = vadd.f32 %v1477, 1.0
  %v1481 = vadd.f32 %v1479, 1.0
  %v1482 = vrcp.pop %v1480
  %v1483 = vmul.f32 %v1480, %v1482
  %v1484 = vsub.f32 1.0, %v1483
  %v1485 = vmul.f32 %v1482, %v1484
  %v1486 = vadd.f32 %v1482, %v1485
  %vm1487 = vweird.f32 %v1480
  %vm1488 = vweird.f32 %v1482
  %vm1489 = vmor %vm1487, %vm1488
  %v1490 = vsel %vm1489, %v1482, %v1486
  %v1491 = vand.u32 2147483647, %v1480
  %vm1492 = vcmp.eq.f32.partialorder %v1491, 8.507059e+37
  %v1493 = vand.u32 %v1480, 2147483648
  %v1494 = vor.u32 1.1754944e-38, %v1493
  %v1495 = vsel %vm1492, %v1494, %v1490
  %v1496 = vmul.f32 1.0, %v1495
  %v1497 = vrcp.pop %v1481
  %v1498 = vmul.f32 %v1481, %v1497
  %v1499 = vsub.f32 1.0, %v1498
  %v1500 = vmul.f32 %v1497, %v1499
  %v1501 = vadd.f32 %v1497, %v1500
  %vm1502 = vweird.f32 %v1481
  %vm1503 = vweird.f32 %v1497
  %vm1504 = vmor %vm1502, %vm1503
  %v1505 = vsel %vm1504, %v1497, %v1501
  %v1506 = vand.u32 2147483647, %v1481
  %vm1507 = vcmp.eq.f32.partialorder %v1506, 8.507059e+37
  %v1508 = vand.u32 %v1481, 2147483648
  %v1509 = vor.u32 1.1754944e-38, %v1508
  %v1510 = vsel %vm1507, %v1509, %v1505
  %v1511 = vmul.f32 1.0, %v1510
  %v1512 = vsel %vm602, %v1472, %v1496
  %v1513 = vsel %vm603, %v1473, %v1511
  %v1514 = vld [vmem:[#allocation4] sm:$0x3]
  %v1516 = vrot.slane %v1514, 6
  %1517 = vrot.lane.b32.xlu0 %v1516, 64
  %v1518 = vpop.permute.xlu0 %1517
  %v1520 = vmul.f32 %v1512, %v1518
  %v1521 = vmul.f32 %v1512, %v1513
  %1523 = vrot.lane.b32.xlu0 %v1521, 64
  %v1524 = vpop.permute.xlu0 %1523
  %v1526 = vadd.f32 %v1520, %v1524
  %v1527 = vtanh.pop %v1526
  %v1528 = vmul.f32 %v1513, %v1527
  %1530 = vrot.lane.b32.xlu0 %v1526, 64
  %v1531 = vpop.permute.xlu0 %1530
  %1533 = vst.msk [vmem:[#allocation4 - $0x2] sm:$0xc] %vm905, %v1531
  %1535 = vrot.lane.b32.xlu0 %v1528, 64
  %v1536 = vpop.permute.xlu0 %1535
  %1538 = vst.msk [vmem:[#allocation3 - $0x2] sm:$0xc] %vm905, %v1536
  %s1539 = scalar_lea.vmem %s4, 10
  %1540 = vst.msk [vmem:[%s1539 - $0x2] sm:$0xc] %vm905, %v1536
  %v1541 = vld [vmem:[#allocation2 + $0x10] sm:$0x30]
  %v1542 = vld [vmem:[#allocation2 + $0x18] sm:$0x30]
  %v1543 = vld [vmem:[#allocation3] sm:$0x3]
  %v1544 = vpack.c.bf16 %v1543, %v1543
  %v1545 = vld [vmem:[%s2] sm:$0xff]
  %v1546 = vld [vmem:[%s2 + $0x8] sm:$0xff]
  %v1547 = vld [vmem:[%s2 + $0x10] sm:$0xff]
  %v1548 = vld [vmem:[%s2 + $0x18] sm:$0xff]
  %v1549 = vld [vmem:[%s2 + $0x20] sm:$0xff]
  %v1550 = vld [vmem:[%s2 + $0x28] sm:$0xff]
  %v1551 = vld [vmem:[%s2 + $0x30] sm:$0xff]
  %v1552 = vld [vmem:[%s2 + $0x38] sm:$0xff]
  %v1561 = vunpack.c.l.b16 %v1545
  %v1562 = vunpack.c.h.b16 %v1545
  %v1563 = vunpack.c.l.b16 %v1546
  %v1564 = vunpack.c.h.b16 %v1546
  %v1565 = vunpack.c.l.b16 %v1547
  %v1566 = vunpack.c.h.b16 %v1547
  %v1567 = vunpack.c.l.b16 %v1548
  %v1568 = vunpack.c.h.b16 %v1548
  %v1569 = vunpack.c.l.b16 %v1549
  %v1570 = vunpack.c.h.b16 %v1549
  %v1571 = vunpack.c.l.b16 %v1550
  %v1572 = vunpack.c.h.b16 %v1550
  %v1573 = vunpack.c.l.b16 %v1551
  %v1574 = vunpack.c.h.b16 %v1551
  %v1575 = vunpack.c.l.b16 %v1552
  %v1576 = vunpack.c.h.b16 %v1552
  %v1577 = vpack.c.b16 %v1563, %v1561
  %v1578 = vpack.c.b16 %v1564, %v1562
  %v1579 = vpack.c.b16 %v1567, %v1565
  %v1580 = vpack.c.b16 %v1568, %v1566
  %v1581 = vpack.c.b16 %v1571, %v1569
  %v1582 = vpack.c.b16 %v1572, %v1570
  %v1583 = vpack.c.b16 %v1575, %v1573
  %v1584 = vpack.c.b16 %v1576, %v1574
  %v1594 = vsel %vm656, %v1544, 0
  %1596 = vmatpush.bf16.msra.mxu0 0
  %1597 = vmatpush.bf16.msra.mxu0 0
  %1598 = vmatpush.bf16.msra.mxu0 0
  %1599 = vmatpush.bf16.msra.mxu0 0
  %1600 = vmatpush.bf16.msra.mxu0 %v1583
  %1601 = vmatpush.bf16.msra.mxu0 %v1581
  %1602 = vmatpush.bf16.msra.mxu0 %v1579
  %1603 = vmatpush.bf16.msra.mxu0 %v1577
  %1604 = vmatmul.bf16.gmra.mxu0 %v1594
  %v1605 = vpop.f32.mrf.mxu0
  %v1606 = vadd.f32 0.0, %v1605
  %v1607 = vpop.f32.mrf.mxu0
  %1608 = vdwg.mxu0
  %1609 = vmatpush.bf16.msra.mxu0 0
  %1610 = vmatpush.bf16.msra.mxu0 0
  %1611 = vmatpush.bf16.msra.mxu0 0
  %1612 = vmatpush.bf16.msra.mxu0 0
  %1613 = vmatpush.bf16.msra.mxu0 %v1584
  %1614 = vmatpush.bf16.msra.mxu0 %v1582
  %1615 = vmatpush.bf16.msra.mxu0 %v1580
  %1616 = vmatpush.bf16.msra.mxu0 %v1578
  %1617 = vmatmul.bf16.gmra.mxu0 %v1594
  %v1618 = vpop.f32.mrf.mxu0
  %v1619 = vadd.f32 0.0, %v1618
  %v1620 = vpop.f32.mrf.mxu0
  %1621 = vdwg.mxu0
  %v1624 = vrot.slane %v1606, 4
  %v1625 = vrot.slane %v1619, 4
  %v1628 = vadd.f32 %v1541, %v1624
  %v1629 = vadd.f32 %v1542, %v1625
  %v1630 = vtanh.pop %v1628
  %v1631 = vtanh.pop %v1629
  %v1632 = vxor.u32 %v1628, 2147483648
  %v1633 = vxor.u32 %v1629, 2147483648
  %v1634 = vmul.f32 %v1632, 1.442695
  %v1635 = vpow.pop %v1634
  %v1636 = vmul.f32 %v1633, 1.442695
  %v1637 = vpow.pop %v1636
  %v1638 = vadd.f32 %v1635, 1.0
  %v1639 = vadd.f32 %v1637, 1.0
  %v1640 = vrcp.pop %v1638
  %v1641 = vmul.f32 %v1638, %v1640
  %v1642 = vsub.f32 1.0, %v1641
  %v1643 = vmul.f32 %v1640, %v1642
  %v1644 = vadd.f32 %v1640, %v1643
  %vm1645 = vweird.f32 %v1638
  %vm1646 = vweird.f32 %v1640
  %vm1647 = vmor %vm1645, %vm1646
  %v1648 = vsel %vm1647, %v1640, %v1644
  %v1649 = vand.u32 2147483647, %v1638
  %vm1650 = vcmp.eq.f32.partialorder %v1649, 8.507059e+37
  %v1651 = vand.u32 %v1638, 2147483648
  %v1652 = vor.u32 1.1754944e-38, %v1651
  %v1653 = vsel %vm1650, %v1652, %v1648
  %v1654 = vmul.f32 1.0, %v1653
  %v1655 = vrcp.pop %v1639
  %v1656 = vmul.f32 %v1639, %v1655
  %v1657 = vsub.f32 1.0, %v1656
  %v1658 = vmul.f32 %v1655, %v1657
  %v1659 = vadd.f32 %v1655, %v1658
  %vm1660 = vweird.f32 %v1639
  %vm1661 = vweird.f32 %v1655
  %vm1662 = vmor %vm1660, %vm1661
  %v1663 = vsel %vm1662, %v1655, %v1659
  %v1664 = vand.u32 2147483647, %v1639
  %vm1665 = vcmp.eq.f32.partialorder %v1664, 8.507059e+37
  %v1666 = vand.u32 %v1639, 2147483648
  %v1667 = vor.u32 1.1754944e-38, %v1666
  %v1668 = vsel %vm1665, %v1667, %v1663
  %v1669 = vmul.f32 1.0, %v1668
  %v1670 = vsel %vm602, %v1630, %v1654
  %v1671 = vsel %vm603, %v1631, %v1669
  %v1672 = vld [vmem:[#allocation4] sm:$0x3]
  %v1674 = vrot.slane %v1672, 4
  %1675 = vrot.lane.b32.xlu0 %v1674, 64
  %v1676 = vpop.permute.xlu0 %1675
  %v1678 = vmul.f32 %v1670, %v1676
  %v1679 = vmul.f32 %v1670, %v1671
  %1681 = vrot.lane.b32.xlu0 %v1679, 64
  %v1682 = vpop.permute.xlu0 %1681
  %v1684 = vadd.f32 %v1678, %v1682
  %v1685 = vtanh.pop %v1684
  %v1686 = vmul.f32 %v1671, %v1685
  %1688 = vrot.lane.b32.xlu0 %v1684, 64
  %v1689 = vpop.permute.xlu0 %1688
  %1691 = vst.msk [vmem:[#allocation4 - $0x4] sm:$0x30] %vm1064, %v1689
  %1693 = vrot.lane.b32.xlu0 %v1686, 64
  %v1694 = vpop.permute.xlu0 %1693
  %1696 = vst.msk [vmem:[#allocation3 - $0x4] sm:$0x30] %vm1064, %v1694
  %s1697 = scalar_lea.vmem %s4, 12
  %1698 = vst.msk [vmem:[%s1697 - $0x4] sm:$0x30] %vm1064, %v1694
  %v1699 = vld [vmem:[#allocation2 + $0x10] sm:$0xc0]
  %v1700 = vld [vmem:[#allocation2 + $0x18] sm:$0xc0]
  %v1701 = vld [vmem:[#allocation3] sm:$0x3]
  %v1702 = vpack.c.bf16 %v1701, %v1701
  %v1703 = vld [vmem:[%s2] sm:$0xff]
  %v1704 = vld [vmem:[%s2 + $0x8] sm:$0xff]
  %v1705 = vld [vmem:[%s2 + $0x10] sm:$0xff]
  %v1706 = vld [vmem:[%s2 + $0x18] sm:$0xff]
  %v1707 = vld [vmem:[%s2 + $0x20] sm:$0xff]
  %v1708 = vld [vmem:[%s2 + $0x28] sm:$0xff]
  %v1709 = vld [vmem:[%s2 + $0x30] sm:$0xff]
  %v1710 = vld [vmem:[%s2 + $0x38] sm:$0xff]
  %v1719 = vunpack.c.l.b16 %v1703
  %v1720 = vunpack.c.h.b16 %v1703
  %v1721 = vunpack.c.l.b16 %v1704
  %v1722 = vunpack.c.h.b16 %v1704
  %v1723 = vunpack.c.l.b16 %v1705
  %v1724 = vunpack.c.h.b16 %v1705
  %v1725 = vunpack.c.l.b16 %v1706
  %v1726 = vunpack.c.h.b16 %v1706
  %v1727 = vunpack.c.l.b16 %v1707
  %v1728 = vunpack.c.h.b16 %v1707
  %v1729 = vunpack.c.l.b16 %v1708
  %v1730 = vunpack.c.h.b16 %v1708
  %v1731 = vunpack.c.l.b16 %v1709
  %v1732 = vunpack.c.h.b16 %v1709
  %v1733 = vunpack.c.l.b16 %v1710
  %v1734 = vunpack.c.h.b16 %v1710
  %v1735 = vpack.c.b16 %v1721, %v1719
  %v1736 = vpack.c.b16 %v1722, %v1720
  %v1737 = vpack.c.b16 %v1725, %v1723
  %v1738 = vpack.c.b16 %v1726, %v1724
  %v1739 = vpack.c.b16 %v1729, %v1727
  %v1740 = vpack.c.b16 %v1730, %v1728
  %v1741 = vpack.c.b16 %v1733, %v1731
  %v1742 = vpack.c.b16 %v1734, %v1732
  %v1752 = vsel %vm656, %v1702, 0
  %1754 = vmatpush.bf16.msra.mxu0 0
  %1755 = vmatpush.bf16.msra.mxu0 0
  %1756 = vmatpush.bf16.msra.mxu0 0
  %1757 = vmatpush.bf16.msra.mxu0 0
  %1758 = vmatpush.bf16.msra.mxu0 %v1741
  %1759 = vmatpush.bf16.msra.mxu0 %v1739
  %1760 = vmatpush.bf16.msra.mxu0 %v1737
  %1761 = vmatpush.bf16.msra.mxu0 %v1735
  %1762 = vmatmul.bf16.gmra.mxu0 %v1752
  %v1763 = vpop.f32.mrf.mxu0
  %v1764 = vadd.f32 0.0, %v1763
  %v1765 = vpop.f32.mrf.mxu0
  %1766 = vdwg.mxu0
  %1767 = vmatpush.bf16.msra.mxu0 0
  %1768 = vmatpush.bf16.msra.mxu0 0
  %1769 = vmatpush.bf16.msra.mxu0 0
  %1770 = vmatpush.bf16.msra.mxu0 0
  %1771 = vmatpush.bf16.msra.mxu0 %v1742
  %1772 = vmatpush.bf16.msra.mxu0 %v1740
  %1773 = vmatpush.bf16.msra.mxu0 %v1738
  %1774 = vmatpush.bf16.msra.mxu0 %v1736
  %1775 = vmatmul.bf16.gmra.mxu0 %v1752
  %v1776 = vpop.f32.mrf.mxu0
  %v1777 = vadd.f32 0.0, %v1776
  %v1778 = vpop.f32.mrf.mxu0
  %1779 = vdwg.mxu0
  %v1782 = vrot.slane %v1764, 2
  %v1783 = vrot.slane %v1777, 2
  %v1786 = vadd.f32 %v1699, %v1782
  %v1787 = vadd.f32 %v1700, %v1783
  %v1788 = vtanh.pop %v1786
  %v1789 = vtanh.pop %v1787
  %v1790 = vxor.u32 %v1786, 2147483648
  %v1791 = vxor.u32 %v1787, 2147483648
  %v1792 = vmul.f32 %v1790, 1.442695
  %v1793 = vpow.pop %v1792
  %v1794 = vmul.f32 %v1791, 1.442695
  %v1795 = vpow.pop %v1794
  %v1796 = vadd.f32 %v1793, 1.0
  %v1797 = vadd.f32 %v1795, 1.0
  %v1798 = vrcp.pop %v1796
  %v1799 = vmul.f32 %v1796, %v1798
  %v1800 = vsub.f32 1.0, %v1799
  %v1801 = vmul.f32 %v1798, %v1800
  %v1802 = vadd.f32 %v1798, %v1801
  %vm1803 = vweird.f32 %v1796
  %vm1804 = vweird.f32 %v1798
  %vm1805 = vmor %vm1803, %vm1804
  %v1806 = vsel %vm1805, %v1798, %v1802
  %v1807 = vand.u32 2147483647, %v1796
  %vm1808 = vcmp.eq.f32.partialorder %v1807, 8.507059e+37
  %v1809 = vand.u32 %v1796, 2147483648
  %v1810 = vor.u32 1.1754944e-38, %v1809
  %v1811 = vsel %vm1808, %v1810, %v1806
  %v1812 = vmul.f32 1.0, %v1811
  %v1813 = vrcp.pop %v1797
  %v1814 = vmul.f32 %v1797, %v1813
  %v1815 = vsub.f32 1.0, %v1814
  %v1816 = vmul.f32 %v1813, %v1815
  %v1817 = vadd.f32 %v1813, %v1816
  %vm1818 = vweird.f32 %v1797
  %vm1819 = vweird.f32 %v1813
  %vm1820 = vmor %vm1818, %vm1819
  %v1821 = vsel %vm1820, %v1813, %v1817
  %v1822 = vand.u32 2147483647, %v1797
  %vm1823 = vcmp.eq.f32.partialorder %v1822, 8.507059e+37
  %v1824 = vand.u32 %v1797, 2147483648
  %v1825 = vor.u32 1.1754944e-38, %v1824
  %v1826 = vsel %vm1823, %v1825, %v1821
  %v1827 = vmul.f32 1.0, %v1826
  %v1828 = vsel %vm602, %v1788, %v1812
  %v1829 = vsel %vm603, %v1789, %v1827
  %v1830 = vld [vmem:[#allocation4] sm:$0x3]
  %v1832 = vrot.slane %v1830, 2
  %1833 = vrot.lane.b32.xlu0 %v1832, 64
  %v1834 = vpop.permute.xlu0 %1833
  %v1836 = vmul.f32 %v1828, %v1834
  %v1837 = vmul.f32 %v1828, %v1829
  %1839 = vrot.lane.b32.xlu0 %v1837, 64
  %v1840 = vpop.permute.xlu0 %1839
  %v1842 = vadd.f32 %v1836, %v1840
  %v1843 = vtanh.pop %v1842
  %v1844 = vmul.f32 %v1829, %v1843
  %1846 = vrot.lane.b32.xlu0 %v1842, 64
  %v1847 = vpop.permute.xlu0 %1846
  %1849 = vst.msk [vmem:[#allocation4 - $0x6] sm:$0xc0] %vm1223, %v1847
  %1851 = vrot.lane.b32.xlu0 %v1844, 64
  %v1852 = vpop.permute.xlu0 %1851
  %1854 = vst.msk [vmem:[#allocation3 - $0x6] sm:$0xc0] %vm1223, %v1852
  %s1855 = scalar_lea.vmem %s4, 14
  %1856 = vst.msk [vmem:[%s1855 - $0x6] sm:$0xc0] %vm1223, %v1852
  %v1857 = vld [vmem:[#allocation2 + $0x20] sm:$0x3]
  %v1858 = vld [vmem:[#allocation2 + $0x28] sm:$0x3]
  %v1859 = vld [vmem:[#allocation3] sm:$0x3]
  %v1860 = vpack.c.bf16 %v1859, %v1859
  %v1861 = vld [vmem:[%s2] sm:$0xff]
  %v1862 = vld [vmem:[%s2 + $0x8] sm:$0xff]
  %v1863 = vld [vmem:[%s2 + $0x10] sm:$0xff]
  %v1864 = vld [vmem:[%s2 + $0x18] sm:$0xff]
  %v1865 = vld [vmem:[%s2 + $0x20] sm:$0xff]
  %v1866 = vld [vmem:[%s2 + $0x28] sm:$0xff]
  %v1867 = vld [vmem:[%s2 + $0x30] sm:$0xff]
  %v1868 = vld [vmem:[%s2 + $0x38] sm:$0xff]
  %v1877 = vunpack.c.l.b16 %v1861
  %v1878 = vunpack.c.h.b16 %v1861
  %v1879 = vunpack.c.l.b16 %v1862
  %v1880 = vunpack.c.h.b16 %v1862
  %v1881 = vunpack.c.l.b16 %v1863
  %v1882 = vunpack.c.h.b16 %v1863
  %v1883 = vunpack.c.l.b16 %v1864
  %v1884 = vunpack.c.h.b16 %v1864
  %v1885 = vunpack.c.l.b16 %v1865
  %v1886 = vunpack.c.h.b16 %v1865
  %v1887 = vunpack.c.l.b16 %v1866
  %v1888 = vunpack.c.h.b16 %v1866
  %v1889 = vunpack.c.l.b16 %v1867
  %v1890 = vunpack.c.h.b16 %v1867
  %v1891 = vunpack.c.l.b16 %v1868
  %v1892 = vunpack.c.h.b16 %v1868
  %v1893 = vpack.c.b16 %v1879, %v1877
  %v1894 = vpack.c.b16 %v1880, %v1878
  %v1895 = vpack.c.b16 %v1883, %v1881
  %v1896 = vpack.c.b16 %v1884, %v1882
  %v1897 = vpack.c.b16 %v1887, %v1885
  %v1898 = vpack.c.b16 %v1888, %v1886
  %v1899 = vpack.c.b16 %v1891, %v1889
  %v1900 = vpack.c.b16 %v1892, %v1890
  %v1910 = vsel %vm656, %v1860, 0
  %1912 = vmatpush.bf16.msra.mxu0 0
  %1913 = vmatpush.bf16.msra.mxu0 0
  %1914 = vmatpush.bf16.msra.mxu0 0
  %1915 = vmatpush.bf16.msra.mxu0 0
  %1916 = vmatpush.bf16.msra.mxu0 %v1899
  %1917 = vmatpush.bf16.msra.mxu0 %v1897
  %1918 = vmatpush.bf16.msra.mxu0 %v1895
  %1919 = vmatpush.bf16.msra.mxu0 %v1893
  %1920 = vmatmul.bf16.gmra.mxu0 %v1910
  %v1921 = vpop.f32.mrf.mxu0
  %v1922 = vadd.f32 0.0, %v1921
  %v1923 = vpop.f32.mrf.mxu0
  %1924 = vdwg.mxu0
  %1925 = vmatpush.bf16.msra.mxu0 0
  %1926 = vmatpush.bf16.msra.mxu0 0
  %1927 = vmatpush.bf16.msra.mxu0 0
  %1928 = vmatpush.bf16.msra.mxu0 0
  %1929 = vmatpush.bf16.msra.mxu0 %v1900
  %1930 = vmatpush.bf16.msra.mxu0 %v1898
  %1931 = vmatpush.bf16.msra.mxu0 %v1896
  %1932 = vmatpush.bf16.msra.mxu0 %v1894
  %1933 = vmatmul.bf16.gmra.mxu0 %v1910
  %v1934 = vpop.f32.mrf.mxu0
  %v1935 = vadd.f32 0.0, %v1934
  %v1936 = vpop.f32.mrf.mxu0
  %1937 = vdwg.mxu0
  %v1938 = vadd.f32 %v1857, %v1922
  %v1939 = vadd.f32 %v1858, %v1935
  %v1940 = vtanh.pop %v1938
  %v1941 = vtanh.pop %v1939
  %v1942 = vxor.u32 %v1938, 2147483648
  %v1943 = vxor.u32 %v1939, 2147483648
  %v1944 = vmul.f32 %v1942, 1.442695
  %v1945 = vpow.pop %v1944
  %v1946 = vmul.f32 %v1943, 1.442695
  %v1947 = vpow.pop %v1946
  %v1948 = vadd.f32 %v1945, 1.0
  %v1949 = vadd.f32 %v1947, 1.0
  %v1950 = vrcp.pop %v1948
  %v1951 = vmul.f32 %v1948, %v1950
  %v1952 = vsub.f32 1.0, %v1951
  %v1953 = vmul.f32 %v1950, %v1952
  %v1954 = vadd.f32 %v1950, %v1953
  %vm1955 = vweird.f32 %v1948
  %vm1956 = vweird.f32 %v1950
  %vm1957 = vmor %vm1955, %vm1956
  %v1958 = vsel %vm1957, %v1950, %v1954
  %v1959 = vand.u32 2147483647, %v1948
  %vm1960 = vcmp.eq.f32.partialorder %v1959, 8.507059e+37
  %v1961 = vand.u32 %v1948, 2147483648
  %v1962 = vor.u32 1.1754944e-38, %v1961
  %v1963 = vsel %vm1960, %v1962, %v1958
  %v1964 = vmul.f32 1.0, %v1963
  %v1965 = vrcp.pop %v1949
  %v1966 = vmul.f32 %v1949, %v1965
  %v1967 = vsub.f32 1.0, %v1966
  %v1968 = vmul.f32 %v1965, %v1967
  %v1969 = vadd.f32 %v1965, %v1968
  %vm1970 = vweird.f32 %v1949
  %vm1971 = vweird.f32 %v1965
  %vm1972 = vmor %vm1970, %vm1971
  %v1973 = vsel %vm1972, %v1965, %v1969
  %v1974 = vand.u32 2147483647, %v1949
  %vm1975 = vcmp.eq.f32.partialorder %v1974, 8.507059e+37
  %v1976 = vand.u32 %v1949, 2147483648
  %v1977 = vor.u32 1.1754944e-38, %v1976
  %v1978 = vsel %vm1975, %v1977, %v1973
  %v1979 = vmul.f32 1.0, %v1978
  %v1980 = vsel %vm602, %v1940, %v1964
  %v1981 = vsel %vm603, %v1941, %v1979
  %v1982 = vld [vmem:[#allocation4] sm:$0x3]
  %1984 = vrot.lane.b32.xlu0 %v1982, 64
  %v1985 = vpop.permute.xlu0 %1984
  %v1987 = vmul.f32 %v1980, %v1985
  %v1988 = vmul.f32 %v1980, %v1981
  %1990 = vrot.lane.b32.xlu0 %v1988, 64
  %v1991 = vpop.permute.xlu0 %1990
  %v1993 = vadd.f32 %v1987, %v1991
  %v1994 = vtanh.pop %v1993
  %v1995 = vmul.f32 %v1981, %v1994
  %1997 = vrot.lane.b32.xlu0 %v1993, 64
  %v1998 = vpop.permute.xlu0 %1997
  %2000 = vst.msk [vmem:[#allocation4] sm:$0x3] %vm592, %v1998
  %2002 = vrot.lane.b32.xlu0 %v1995, 64
  %v2003 = vpop.permute.xlu0 %2002
  %2005 = vst.msk [vmem:[#allocation3] sm:$0x3] %vm592, %v2003
  %s2006 = scalar_lea.vmem %s4, 16
  %2007 = vst.msk [vmem:[%s2006] sm:$0x3] %vm592, %v2003
  %v2008 = vld [vmem:[#allocation2 + $0x20] sm:$0xc]
  %v2009 = vld [vmem:[#allocation2 + $0x28] sm:$0xc]
  %v2010 = vld [vmem:[#allocation3] sm:$0x3]
  %v2011 = vpack.c.bf16 %v2010, %v2010
  %v2012 = vld [vmem:[%s2] sm:$0xff]
  %v2013 = vld [vmem:[%s2 + $0x8] sm:$0xff]
  %v2014 = vld [vmem:[%s2 + $0x10] sm:$0xff]
  %v2015 = vld [vmem:[%s2 + $0x18] sm:$0xff]
  %v2016 = vld [vmem:[%s2 + $0x20] sm:$0xff]
  %v2017 = vld [vmem:[%s2 + $0x28] sm:$0xff]
  %v2018 = vld [vmem:[%s2 + $0x30] sm:$0xff]
  %v2019 = vld [vmem:[%s2 + $0x38] sm:$0xff]
  %v2028 = vunpack.c.l.b16 %v2012
  %v2029 = vunpack.c.h.b16 %v2012
  %v2030 = vunpack.c.l.b16 %v2013
  %v2031 = vunpack.c.h.b16 %v2013
  %v2032 = vunpack.c.l.b16 %v2014
  %v2033 = vunpack.c.h.b16 %v2014
  %v2034 = vunpack.c.l.b16 %v2015
  %v2035 = vunpack.c.h.b16 %v2015
  %v2036 = vunpack.c.l.b16 %v2016
  %v2037 = vunpack.c.h.b16 %v2016
  %v2038 = vunpack.c.l.b16 %v2017
  %v2039 = vunpack.c.h.b16 %v2017
  %v2040 = vunpack.c.l.b16 %v2018
  %v2041 = vunpack.c.h.b16 %v2018
  %v2042 = vunpack.c.l.b16 %v2019
  %v2043 = vunpack.c.h.b16 %v2019
  %v2044 = vpack.c.b16 %v2030, %v2028
  %v2045 = vpack.c.b16 %v2031, %v2029
  %v2046 = vpack.c.b16 %v2034, %v2032
  %v2047 = vpack.c.b16 %v2035, %v2033
  %v2048 = vpack.c.b16 %v2038, %v2036
  %v2049 = vpack.c.b16 %v2039, %v2037
  %v2050 = vpack.c.b16 %v2042, %v2040
  %v2051 = vpack.c.b16 %v2043, %v2041
  %v2061 = vsel %vm656, %v2011, 0
  %2063 = vmatpush.bf16.msra.mxu0 0
  %2064 = vmatpush.bf16.msra.mxu0 0
  %2065 = vmatpush.bf16.msra.mxu0 0
  %2066 = vmatpush.bf16.msra.mxu0 0
  %2067 = vmatpush.bf16.msra.mxu0 %v2050
  %2068 = vmatpush.bf16.msra.mxu0 %v2048
  %2069 = vmatpush.bf16.msra.mxu0 %v2046
  %2070 = vmatpush.bf16.msra.mxu0 %v2044
  %2071 = vmatmul.bf16.gmra.mxu0 %v2061
  %v2072 = vpop.f32.mrf.mxu0
  %v2073 = vadd.f32 0.0, %v2072
  %v2074 = vpop.f32.mrf.mxu0
  %2075 = vdwg.mxu0
  %2076 = vmatpush.bf16.msra.mxu0 0
  %2077 = vmatpush.bf16.msra.mxu0 0
  %2078 = vmatpush.bf16.msra.mxu0 0
  %2079 = vmatpush.bf16.msra.mxu0 0
  %2080 = vmatpush.bf16.msra.mxu0 %v2051
  %2081 = vmatpush.bf16.msra.mxu0 %v2049
  %2082 = vmatpush.bf16.msra.mxu0 %v2047
  %2083 = vmatpush.bf16.msra.mxu0 %v2045
  %2084 = vmatmul.bf16.gmra.mxu0 %v2061
  %v2085 = vpop.f32.mrf.mxu0
  %v2086 = vadd.f32 0.0, %v2085
  %v2087 = vpop.f32.mrf.mxu0
  %2088 = vdwg.mxu0
  %v2091 = vrot.slane %v2073, 6
  %v2092 = vrot.slane %v2086, 6
  %v2095 = vadd.f32 %v2008, %v2091
  %v2096 = vadd.f32 %v2009, %v2092
  %v2097 = vtanh.pop %v2095
  %v2098 = vtanh.pop %v2096
  %v2099 = vxor.u32 %v2095, 2147483648
  %v2100 = vxor.u32 %v2096, 2147483648
  %v2101 = vmul.f32 %v2099, 1.442695
  %v2102 = vpow.pop %v2101
  %v2103 = vmul.f32 %v2100, 1.442695
  %v2104 = vpow.pop %v2103
  %v2105 = vadd.f32 %v2102, 1.0
  %v2106 = vadd.f32 %v2104, 1.0
  %v2107 = vrcp.pop %v2105
  %v2108 = vmul.f32 %v2105, %v2107
  %v2109 = vsub.f32 1.0, %v2108
  %v2110 = vmul.f32 %v2107, %v2109
  %v2111 = vadd.f32 %v2107, %v2110
  %vm2112 = vweird.f32 %v2105
  %vm2113 = vweird.f32 %v2107
  %vm2114 = vmor %vm2112, %vm2113
  %v2115 = vsel %vm2114, %v2107, %v2111
  %v2116 = vand.u32 2147483647, %v2105
  %vm2117 = vcmp.eq.f32.partialorder %v2116, 8.507059e+37
  %v2118 = vand.u32 %v2105, 2147483648
  %v2119 = vor.u32 1.1754944e-38, %v2118
  %v2120 = vsel %vm2117, %v2119, %v2115
  %v2121 = vmul.f32 1.0, %v2120
  %v2122 = vrcp.pop %v2106
  %v2123 = vmul.f32 %v2106, %v2122
  %v2124 = vsub.f32 1.0, %v2123
  %v2125 = vmul.f32 %v2122, %v2124
  %v2126 = vadd.f32 %v2122, %v2125
  %vm2127 = vweird.f32 %v2106
  %vm2128 = vweird.f32 %v2122
  %vm2129 = vmor %vm2127, %vm2128
  %v2130 = vsel %vm2129, %v2122, %v2126
  %v2131 = vand.u32 2147483647, %v2106
  %vm2132 = vcmp.eq.f32.partialorder %v2131, 8.507059e+37
  %v2133 = vand.u32 %v2106, 2147483648
  %v2134 = vor.u32 1.1754944e-38, %v2133
  %v2135 = vsel %vm2132, %v2134, %v2130
  %v2136 = vmul.f32 1.0, %v2135
  %v2137 = vsel %vm602, %v2097, %v2121
  %v2138 = vsel %vm603, %v2098, %v2136
  %v2139 = vld [vmem:[#allocation4] sm:$0x3]
  %v2141 = vrot.slane %v2139, 6
  %2142 = vrot.lane.b32.xlu0 %v2141, 64
  %v2143 = vpop.permute.xlu0 %2142
  %v2145 = vmul.f32 %v2137, %v2143
  %v2146 = vmul.f32 %v2137, %v2138
  %2148 = vrot.lane.b32.xlu0 %v2146, 64
  %v2149 = vpop.permute.xlu0 %2148
  %v2151 = vadd.f32 %v2145, %v2149
  %v2152 = vtanh.pop %v2151
  %v2153 = vmul.f32 %v2138, %v2152
  %2155 = vrot.lane.b32.xlu0 %v2151, 64
  %v2156 = vpop.permute.xlu0 %2155
  %2158 = vst.msk [vmem:[#allocation4 - $0x2] sm:$0xc] %vm905, %v2156
  %2160 = vrot.lane.b32.xlu0 %v2153, 64
  %v2161 = vpop.permute.xlu0 %2160
  %2163 = vst.msk [vmem:[#allocation3 - $0x2] sm:$0xc] %vm905, %v2161
  %s2164 = scalar_lea.vmem %s4, 18
  %2165 = vst.msk [vmem:[%s2164 - $0x2] sm:$0xc] %vm905, %v2161
  %v2166 = vld [vmem:[#allocation2 + $0x20] sm:$0x30]
  %v2167 = vld [vmem:[#allocation2 + $0x28] sm:$0x30]
  %v2168 = vld [vmem:[#allocation3] sm:$0x3]
  %v2169 = vpack.c.bf16 %v2168, %v2168
  %v2170 = vld [vmem:[%s2] sm:$0xff]
  %v2171 = vld [vmem:[%s2 + $0x8] sm:$0xff]
  %v2172 = vld [vmem:[%s2 + $0x10] sm:$0xff]
  %v2173 = vld [vmem:[%s2 + $0x18] sm:$0xff]
  %v2174 = vld [vmem:[%s2 + $0x20] sm:$0xff]
  %v2175 = vld [vmem:[%s2 + $0x28] sm:$0xff]
  %v2176 = vld [vmem:[%s2 + $0x30] sm:$0xff]
  %v2177 = vld [vmem:[%s2 + $0x38] sm:$0xff]
  %v2186 = vunpack.c.l.b16 %v2170
  %v2187 = vunpack.c.h.b16 %v2170
  %v2188 = vunpack.c.l.b16 %v2171
  %v2189 = vunpack.c.h.b16 %v2171
  %v2190 = vunpack.c.l.b16 %v2172
  %v2191 = vunpack.c.h.b16 %v2172
  %v2192 = vunpack.c.l.b16 %v2173
  %v2193 = vunpack.c.h.b16 %v2173
  %v2194 = vunpack.c.l.b16 %v2174
  %v2195 = vunpack.c.h.b16 %v2174
  %v2196 = vunpack.c.l.b16 %v2175
  %v2197 = vunpack.c.h.b16 %v2175
  %v2198 = vunpack.c.l.b16 %v2176
  %v2199 = vunpack.c.h.b16 %v2176
  %v2200 = vunpack.c.l.b16 %v2177
  %v2201 = vunpack.c.h.b16 %v2177
  %v2202 = vpack.c.b16 %v2188, %v2186
  %v2203 = vpack.c.b16 %v2189, %v2187
  %v2204 = vpack.c.b16 %v2192, %v2190
  %v2205 = vpack.c.b16 %v2193, %v2191
  %v2206 = vpack.c.b16 %v2196, %v2194
  %v2207 = vpack.c.b16 %v2197, %v2195
  %v2208 = vpack.c.b16 %v2200, %v2198
  %v2209 = vpack.c.b16 %v2201, %v2199
  %v2219 = vsel %vm656, %v2169, 0
  %2221 = vmatpush.bf16.msra.mxu0 0
  %2222 = vmatpush.bf16.msra.mxu0 0
  %2223 = vmatpush.bf16.msra.mxu0 0
  %2224 = vmatpush.bf16.msra.mxu0 0
  %2225 = vmatpush.bf16.msra.mxu0 %v2208
  %2226 = vmatpush.bf16.msra.mxu0 %v2206
  %2227 = vmatpush.bf16.msra.mxu0 %v2204
  %2228 = vmatpush.bf16.msra.mxu0 %v2202
  %2229 = vmatmul.bf16.gmra.mxu0 %v2219
  %v2230 = vpop.f32.mrf.mxu0
  %v2231 = vadd.f32 0.0, %v2230
  %v2232 = vpop.f32.mrf.mxu0
  %2233 = vdwg.mxu0
  %2234 = vmatpush.bf16.msra.mxu0 0
  %2235 = vmatpush.bf16.msra.mxu0 0
  %2236 = vmatpush.bf16.msra.mxu0 0
  %2237 = vmatpush.bf16.msra.mxu0 0
  %2238 = vmatpush.bf16.msra.mxu0 %v2209
  %2239 = vmatpush.bf16.msra.mxu0 %v2207
  %2240 = vmatpush.bf16.msra.mxu0 %v2205
  %2241 = vmatpush.bf16.msra.mxu0 %v2203
  %2242 = vmatmul.bf16.gmra.mxu0 %v2219
  %v2243 = vpop.f32.mrf.mxu0
  %v2244 = vadd.f32 0.0, %v2243
  %v2245 = vpop.f32.mrf.mxu0
  %2246 = vdwg.mxu0
  %v2249 = vrot.slane %v2231, 4
  %v2250 = vrot.slane %v2244, 4
  %v2253 = vadd.f32 %v2166, %v2249
  %v2254 = vadd.f32 %v2167, %v2250
  %v2255 = vtanh.pop %v2253
  %v2256 = vtanh.pop %v2254
  %v2257 = vxor.u32 %v2253, 2147483648
  %v2258 = vxor.u32 %v2254, 2147483648
  %v2259 = vmul.f32 %v2257, 1.442695
  %v2260 = vpow.pop %v2259
  %v2261 = vmul.f32 %v2258, 1.442695
  %v2262 = vpow.pop %v2261
  %v2263 = vadd.f32 %v2260, 1.0
  %v2264 = vadd.f32 %v2262, 1.0
  %v2265 = vrcp.pop %v2263
  %v2266 = vmul.f32 %v2263, %v2265
  %v2267 = vsub.f32 1.0, %v2266
  %v2268 = vmul.f32 %v2265, %v2267
  %v2269 = vadd.f32 %v2265, %v2268
  %vm2270 = vweird.f32 %v2263
  %vm2271 = vweird.f32 %v2265
  %vm2272 = vmor %vm2270, %vm2271
  %v2273 = vsel %vm2272, %v2265, %v2269
  %v2274 = vand.u32 2147483647, %v2263
  %vm2275 = vcmp.eq.f32.partialorder %v2274, 8.507059e+37
  %v2276 = vand.u32 %v2263, 2147483648
  %v2277 = vor.u32 1.1754944e-38, %v2276
  %v2278 = vsel %vm2275, %v2277, %v2273
  %v2279 = vmul.f32 1.0, %v2278
  %v2280 = vrcp.pop %v2264
  %v2281 = vmul.f32 %v2264, %v2280
  %v2282 = vsub.f32 1.0, %v2281
  %v2283 = vmul.f32 %v2280, %v2282
  %v2284 = vadd.f32 %v2280, %v2283
  %vm2285 = vweird.f32 %v2264
  %vm2286 = vweird.f32 %v2280
  %vm2287 = vmor %vm2285, %vm2286
  %v2288 = vsel %vm2287, %v2280, %v2284
  %v2289 = vand.u32 2147483647, %v2264
  %vm2290 = vcmp.eq.f32.partialorder %v2289, 8.507059e+37
  %v2291 = vand.u32 %v2264, 2147483648
  %v2292 = vor.u32 1.1754944e-38, %v2291
  %v2293 = vsel %vm2290, %v2292, %v2288
  %v2294 = vmul.f32 1.0, %v2293
  %v2295 = vsel %vm602, %v2255, %v2279
  %v2296 = vsel %vm603, %v2256, %v2294
  %v2297 = vld [vmem:[#allocation4] sm:$0x3]
  %v2299 = vrot.slane %v2297, 4
  %2300 = vrot.lane.b32.xlu0 %v2299, 64
  %v2301 = vpop.permute.xlu0 %2300
  %v2303 = vmul.f32 %v2295, %v2301
  %v2304 = vmul.f32 %v2295, %v2296
  %2306 = vrot.lane.b32.xlu0 %v2304, 64
  %v2307 = vpop.permute.xlu0 %2306
  %v2309 = vadd.f32 %v2303, %v2307
  %v2310 = vtanh.pop %v2309
  %v2311 = vmul.f32 %v2296, %v2310
  %2313 = vrot.lane.b32.xlu0 %v2309, 64
  %v2314 = vpop.permute.xlu0 %2313
  %2316 = vst.msk [vmem:[#allocation4 - $0x4] sm:$0x30] %vm1064, %v2314
  %2318 = vrot.lane.b32.xlu0 %v2311, 64
  %v2319 = vpop.permute.xlu0 %2318
  %2321 = vst.msk [vmem:[#allocation3 - $0x4] sm:$0x30] %vm1064, %v2319
  %s2322 = scalar_lea.vmem %s4, 20
  %2323 = vst.msk [vmem:[%s2322 - $0x4] sm:$0x30] %vm1064, %v2319
  %v2324 = vld [vmem:[#allocation2 + $0x20] sm:$0xc0]
  %v2325 = vld [vmem:[#allocation2 + $0x28] sm:$0xc0]
  %v2326 = vld [vmem:[#allocation3] sm:$0x3]
  %v2327 = vpack.c.bf16 %v2326, %v2326
  %v2328 = vld [vmem:[%s2] sm:$0xff]
  %v2329 = vld [vmem:[%s2 + $0x8] sm:$0xff]
  %v2330 = vld [vmem:[%s2 + $0x10] sm:$0xff]
  %v2331 = vld [vmem:[%s2 + $0x18] sm:$0xff]
  %v2332 = vld [vmem:[%s2 + $0x20] sm:$0xff]
  %v2333 = vld [vmem:[%s2 + $0x28] sm:$0xff]
  %v2334 = vld [vmem:[%s2 + $0x30] sm:$0xff]
  %v2335 = vld [vmem:[%s2 + $0x38] sm:$0xff]
  %v2344 = vunpack.c.l.b16 %v2328
  %v2345 = vunpack.c.h.b16 %v2328
  %v2346 = vunpack.c.l.b16 %v2329
  %v2347 = vunpack.c.h.b16 %v2329
  %v2348 = vunpack.c.l.b16 %v2330
  %v2349 = vunpack.c.h.b16 %v2330
  %v2350 = vunpack.c.l.b16 %v2331
  %v2351 = vunpack.c.h.b16 %v2331
  %v2352 = vunpack.c.l.b16 %v2332
  %v2353 = vunpack.c.h.b16 %v2332
  %v2354 = vunpack.c.l.b16 %v2333
  %v2355 = vunpack.c.h.b16 %v2333
  %v2356 = vunpack.c.l.b16 %v2334
  %v2357 = vunpack.c.h.b16 %v2334
  %v2358 = vunpack.c.l.b16 %v2335
  %v2359 = vunpack.c.h.b16 %v2335
  %v2360 = vpack.c.b16 %v2346, %v2344
  %v2361 = vpack.c.b16 %v2347, %v2345
  %v2362 = vpack.c.b16 %v2350, %v2348
  %v2363 = vpack.c.b16 %v2351, %v2349
  %v2364 = vpack.c.b16 %v2354, %v2352
  %v2365 = vpack.c.b16 %v2355, %v2353
  %v2366 = vpack.c.b16 %v2358, %v2356
  %v2367 = vpack.c.b16 %v2359, %v2357
  %v2377 = vsel %vm656, %v2327, 0
  %2379 = vmatpush.bf16.msra.mxu0 0
  %2380 = vmatpush.bf16.msra.mxu0 0
  %2381 = vmatpush.bf16.msra.mxu0 0
  %2382 = vmatpush.bf16.msra.mxu0 0
  %2383 = vmatpush.bf16.msra.mxu0 %v2366
  %2384 = vmatpush.bf16.msra.mxu0 %v2364
  %2385 = vmatpush.bf16.msra.mxu0 %v2362
  %2386 = vmatpush.bf16.msra.mxu0 %v2360
  %2387 = vmatmul.bf16.gmra.mxu0 %v2377
  %v2388 = vpop.f32.mrf.mxu0
  %v2389 = vadd.f32 0.0, %v2388
  %v2390 = vpop.f32.mrf.mxu0
  %2391 = vdwg.mxu0
  %2392 = vmatpush.bf16.msra.mxu0 0
  %2393 = vmatpush.bf16.msra.mxu0 0
  %2394 = vmatpush.bf16.msra.mxu0 0
  %2395 = vmatpush.bf16.msra.mxu0 0
  %2396 = vmatpush.bf16.msra.mxu0 %v2367
  %2397 = vmatpush.bf16.msra.mxu0 %v2365
  %2398 = vmatpush.bf16.msra.mxu0 %v2363
  %2399 = vmatpush.bf16.msra.mxu0 %v2361
  %2400 = vmatmul.bf16.gmra.mxu0 %v2377
  %v2401 = vpop.f32.mrf.mxu0
  %v2402 = vadd.f32 0.0, %v2401
  %v2403 = vpop.f32.mrf.mxu0
  %2404 = vdwg.mxu0
  %v2407 = vrot.slane %v2389, 2
  %v2408 = vrot.slane %v2402, 2
  %v2411 = vadd.f32 %v2324, %v2407
  %v2412 = vadd.f32 %v2325, %v2408
  %v2413 = vtanh.pop %v2411
  %v2414 = vtanh.pop %v2412
  %v2415 = vxor.u32 %v2411, 2147483648
  %v2416 = vxor.u32 %v2412, 2147483648
  %v2417 = vmul.f32 %v2415, 1.442695
  %v2418 = vpow.pop %v2417
  %v2419 = vmul.f32 %v2416, 1.442695
  %v2420 = vpow.pop %v2419
  %v2421 = vadd.f32 %v2418, 1.0
  %v2422 = vadd.f32 %v2420, 1.0
  %v2423 = vrcp.pop %v2421
  %v2424 = vmul.f32 %v2421, %v2423
  %v2425 = vsub.f32 1.0, %v2424
  %v2426 = vmul.f32 %v2423, %v2425
  %v2427 = vadd.f32 %v2423, %v2426
  %vm2428 = vweird.f32 %v2421
  %vm2429 = vweird.f32 %v2423
  %vm2430 = vmor %vm2428, %vm2429
  %v2431 = vsel %vm2430, %v2423, %v2427
  %v2432 = vand.u32 2147483647, %v2421
  %vm2433 = vcmp.eq.f32.partialorder %v2432, 8.507059e+37
  %v2434 = vand.u32 %v2421, 2147483648
  %v2435 = vor.u32 1.1754944e-38, %v2434
  %v2436 = vsel %vm2433, %v2435, %v2431
  %v2437 = vmul.f32 1.0, %v2436
  %v2438 = vrcp.pop %v2422
  %v2439 = vmul.f32 %v2422, %v2438
  %v2440 = vsub.f32 1.0, %v2439
  %v2441 = vmul.f32 %v2438, %v2440
  %v2442 = vadd.f32 %v2438, %v2441
  %vm2443 = vweird.f32 %v2422
  %vm2444 = vweird.f32 %v2438
  %vm2445 = vmor %vm2443, %vm2444
  %v2446 = vsel %vm2445, %v2438, %v2442
  %v2447 = vand.u32 2147483647, %v2422
  %vm2448 = vcmp.eq.f32.partialorder %v2447, 8.507059e+37
  %v2449 = vand.u32 %v2422, 2147483648
  %v2450 = vor.u32 1.1754944e-38, %v2449
  %v2451 = vsel %vm2448, %v2450, %v2446
  %v2452 = vmul.f32 1.0, %v2451
  %v2453 = vsel %vm602, %v2413, %v2437
  %v2454 = vsel %vm603, %v2414, %v2452
  %v2455 = vld [vmem:[#allocation4] sm:$0x3]
  %v2457 = vrot.slane %v2455, 2
  %2458 = vrot.lane.b32.xlu0 %v2457, 64
  %v2459 = vpop.permute.xlu0 %2458
  %v2461 = vmul.f32 %v2453, %v2459
  %v2462 = vmul.f32 %v2453, %v2454
  %2464 = vrot.lane.b32.xlu0 %v2462, 64
  %v2465 = vpop.permute.xlu0 %2464
  %v2467 = vadd.f32 %v2461, %v2465
  %v2468 = vtanh.pop %v2467
  %v2469 = vmul.f32 %v2454, %v2468
  %2471 = vrot.lane.b32.xlu0 %v2467, 64
  %v2472 = vpop.permute.xlu0 %2471
  %2474 = vst.msk [vmem:[#allocation4 - $0x6] sm:$0xc0] %vm1223, %v2472
  %2476 = vrot.lane.b32.xlu0 %v2469, 64
  %v2477 = vpop.permute.xlu0 %2476
  %2479 = vst.msk [vmem:[#allocation3 - $0x6] sm:$0xc0] %vm1223, %v2477
  %s2480 = scalar_lea.vmem %s4, 22
  %2481 = vst.msk [vmem:[%s2480 - $0x6] sm:$0xc0] %vm1223, %v2477
  %v2482 = vld [vmem:[#allocation2 + $0x30] sm:$0x3]
  %v2483 = vld [vmem:[#allocation2 + $0x38] sm:$0x3]
  %v2484 = vld [vmem:[#allocation3] sm:$0x3]
  %v2485 = vpack.c.bf16 %v2484, %v2484
  %v2486 = vld [vmem:[%s2] sm:$0xff]
  %v2487 = vld [vmem:[%s2 + $0x8] sm:$0xff]
  %v2488 = vld [vmem:[%s2 + $0x10] sm:$0xff]
  %v2489 = vld [vmem:[%s2 + $0x18] sm:$0xff]
  %v2490 = vld [vmem:[%s2 + $0x20] sm:$0xff]
  %v2491 = vld [vmem:[%s2 + $0x28] sm:$0xff]
  %v2492 = vld [vmem:[%s2 + $0x30] sm:$0xff]
  %v2493 = vld [vmem:[%s2 + $0x38] sm:$0xff]
  %v2502 = vunpack.c.l.b16 %v2486
  %v2503 = vunpack.c.h.b16 %v2486
  %v2504 = vunpack.c.l.b16 %v2487
  %v2505 = vunpack.c.h.b16 %v2487
  %v2506 = vunpack.c.l.b16 %v2488
  %v2507 = vunpack.c.h.b16 %v2488
  %v2508 = vunpack.c.l.b16 %v2489
  %v2509 = vunpack.c.h.b16 %v2489
  %v2510 = vunpack.c.l.b16 %v2490
  %v2511 = vunpack.c.h.b16 %v2490
  %v2512 = vunpack.c.l.b16 %v2491
  %v2513 = vunpack.c.h.b16 %v2491
  %v2514 = vunpack.c.l.b16 %v2492
  %v2515 = vunpack.c.h.b16 %v2492
  %v2516 = vunpack.c.l.b16 %v2493
  %v2517 = vunpack.c.h.b16 %v2493
  %v2518 = vpack.c.b16 %v2504, %v2502
  %v2519 = vpack.c.b16 %v2505, %v2503
  %v2520 = vpack.c.b16 %v2508, %v2506
  %v2521 = vpack.c.b16 %v2509, %v2507
  %v2522 = vpack.c.b16 %v2512, %v2510
  %v2523 = vpack.c.b16 %v2513, %v2511
  %v2524 = vpack.c.b16 %v2516, %v2514
  %v2525 = vpack.c.b16 %v2517, %v2515
  %v2535 = vsel %vm656, %v2485, 0
  %2537 = vmatpush.bf16.msra.mxu0 0
  %2538 = vmatpush.bf16.msra.mxu0 0
  %2539 = vmatpush.bf16.msra.mxu0 0
  %2540 = vmatpush.bf16.msra.mxu0 0
  %2541 = vmatpush.bf16.msra.mxu0 %v2524
  %2542 = vmatpush.bf16.msra.mxu0 %v2522
  %2543 = vmatpush.bf16.msra.mxu0 %v2520
  %2544 = vmatpush.bf16.msra.mxu0 %v2518
  %2545 = vmatmul.bf16.gmra.mxu0 %v2535
  %v2546 = vpop.f32.mrf.mxu0
  %v2547 = vadd.f32 0.0, %v2546
  %v2548 = vpop.f32.mrf.mxu0
  %2549 = vdwg.mxu0
  %2550 = vmatpush.bf16.msra.mxu0 0
  %2551 = vmatpush.bf16.msra.mxu0 0
  %2552 = vmatpush.bf16.msra.mxu0 0
  %2553 = vmatpush.bf16.msra.mxu0 0
  %2554 = vmatpush.bf16.msra.mxu0 %v2525
  %2555 = vmatpush.bf16.msra.mxu0 %v2523
  %2556 = vmatpush.bf16.msra.mxu0 %v2521
  %2557 = vmatpush.bf16.msra.mxu0 %v2519
  %2558 = vmatmul.bf16.gmra.mxu0 %v2535
  %v2559 = vpop.f32.mrf.mxu0
  %v2560 = vadd.f32 0.0, %v2559
  %v2561 = vpop.f32.mrf.mxu0
  %2562 = vdwg.mxu0
  %v2563 = vadd.f32 %v2482, %v2547
  %v2564 = vadd.f32 %v2483, %v2560
  %v2565 = vtanh.pop %v2563
  %v2566 = vtanh.pop %v2564
  %v2567 = vxor.u32 %v2563, 2147483648
  %v2568 = vxor.u32 %v2564, 2147483648
  %v2569 = vmul.f32 %v2567, 1.442695
  %v2570 = vpow.pop %v2569
  %v2571 = vmul.f32 %v2568, 1.442695
  %v2572 = vpow.pop %v2571
  %v2573 = vadd.f32 %v2570, 1.0
  %v2574 = vadd.f32 %v2572, 1.0
  %v2575 = vrcp.pop %v2573
  %v2576 = vmul.f32 %v2573, %v2575
  %v2577 = vsub.f32 1.0, %v2576
  %v2578 = vmul.f32 %v2575, %v2577
  %v2579 = vadd.f32 %v2575, %v2578
  %vm2580 = vweird.f32 %v2573
  %vm2581 = vweird.f32 %v2575
  %vm2582 = vmor %vm2580, %vm2581
  %v2583 = vsel %vm2582, %v2575, %v2579
  %v2584 = vand.u32 2147483647, %v2573
  %vm2585 = vcmp.eq.f32.partialorder %v2584, 8.507059e+37
  %v2586 = vand.u32 %v2573, 2147483648
  %v2587 = vor.u32 1.1754944e-38, %v2586
  %v2588 = vsel %vm2585, %v2587, %v2583
  %v2589 = vmul.f32 1.0, %v2588
  %v2590 = vrcp.pop %v2574
  %v2591 = vmul.f32 %v2574, %v2590
  %v2592 = vsub.f32 1.0, %v2591
  %v2593 = vmul.f32 %v2590, %v2592
  %v2594 = vadd.f32 %v2590, %v2593
  %vm2595 = vweird.f32 %v2574
  %vm2596 = vweird.f32 %v2590
  %vm2597 = vmor %vm2595, %vm2596
  %v2598 = vsel %vm2597, %v2590, %v2594
  %v2599 = vand.u32 2147483647, %v2574
  %vm2600 = vcmp.eq.f32.partialorder %v2599, 8.507059e+37
  %v2601 = vand.u32 %v2574, 2147483648
  %v2602 = vor.u32 1.1754944e-38, %v2601
  %v2603 = vsel %vm2600, %v2602, %v2598
  %v2604 = vmul.f32 1.0, %v2603
  %v2605 = vsel %vm602, %v2565, %v2589
  %v2606 = vsel %vm603, %v2566, %v2604
  %v2607 = vld [vmem:[#allocation4] sm:$0x3]
  %2609 = vrot.lane.b32.xlu0 %v2607, 64
  %v2610 = vpop.permute.xlu0 %2609
  %v2612 = vmul.f32 %v2605, %v2610
  %v2613 = vmul.f32 %v2605, %v2606
  %2615 = vrot.lane.b32.xlu0 %v2613, 64
  %v2616 = vpop.permute.xlu0 %2615
  %v2618 = vadd.f32 %v2612, %v2616
  %v2619 = vtanh.pop %v2618
  %v2620 = vmul.f32 %v2606, %v2619
  %2622 = vrot.lane.b32.xlu0 %v2618, 64
  %v2623 = vpop.permute.xlu0 %2622
  %2625 = vst.msk [vmem:[#allocation4] sm:$0x3] %vm592, %v2623
  %2627 = vrot.lane.b32.xlu0 %v2620, 64
  %v2628 = vpop.permute.xlu0 %2627
  %2630 = vst.msk [vmem:[#allocation3] sm:$0x3] %vm592, %v2628
  %s2631 = scalar_lea.vmem %s4, 24
  %2632 = vst.msk [vmem:[%s2631] sm:$0x3] %vm592, %v2628
  %v2633 = vld [vmem:[#allocation2 + $0x30] sm:$0xc]
  %v2634 = vld [vmem:[#allocation2 + $0x38] sm:$0xc]
  %v2635 = vld [vmem:[#allocation3] sm:$0x3]
  %v2636 = vpack.c.bf16 %v2635, %v2635
  %v2637 = vld [vmem:[%s2] sm:$0xff]
  %v2638 = vld [vmem:[%s2 + $0x8] sm:$0xff]
  %v2639 = vld [vmem:[%s2 + $0x10] sm:$0xff]
  %v2640 = vld [vmem:[%s2 + $0x18] sm:$0xff]
  %v2641 = vld [vmem:[%s2 + $0x20] sm:$0xff]
  %v2642 = vld [vmem:[%s2 + $0x28] sm:$0xff]
  %v2643 = vld [vmem:[%s2 + $0x30] sm:$0xff]
  %v2644 = vld [vmem:[%s2 + $0x38] sm:$0xff]
  %v2653 = vunpack.c.l.b16 %v2637
  %v2654 = vunpack.c.h.b16 %v2637
  %v2655 = vunpack.c.l.b16 %v2638
  %v2656 = vunpack.c.h.b16 %v2638
  %v2657 = vunpack.c.l.b16 %v2639
  %v2658 = vunpack.c.h.b16 %v2639
  %v2659 = vunpack.c.l.b16 %v2640
  %v2660 = vunpack.c.h.b16 %v2640
  %v2661 = vunpack.c.l.b16 %v2641
  %v2662 = vunpack.c.h.b16 %v2641
  %v2663 = vunpack.c.l.b16 %v2642
  %v2664 = vunpack.c.h.b16 %v2642
  %v2665 = vunpack.c.l.b16 %v2643
  %v2666 = vunpack.c.h.b16 %v2643
  %v2667 = vunpack.c.l.b16 %v2644
  %v2668 = vunpack.c.h.b16 %v2644
  %v2669 = vpack.c.b16 %v2655, %v2653
  %v2670 = vpack.c.b16 %v2656, %v2654
  %v2671 = vpack.c.b16 %v2659, %v2657
  %v2672 = vpack.c.b16 %v2660, %v2658
  %v2673 = vpack.c.b16 %v2663, %v2661
  %v2674 = vpack.c.b16 %v2664, %v2662
  %v2675 = vpack.c.b16 %v2667, %v2665
  %v2676 = vpack.c.b16 %v2668, %v2666
  %v2686 = vsel %vm656, %v2636, 0
  %2688 = vmatpush.bf16.msra.mxu0 0
  %2689 = vmatpush.bf16.msra.mxu0 0
  %2690 = vmatpush.bf16.msra.mxu0 0
  %2691 = vmatpush.bf16.msra.mxu0 0
  %2692 = vmatpush.bf16.msra.mxu0 %v2675
  %2693 = vmatpush.bf16.msra.mxu0 %v2673
  %2694 = vmatpush.bf16.msra.mxu0 %v2671
  %2695 = vmatpush.bf16.msra.mxu0 %v2669
  %2696 = vmatmul.bf16.gmra.mxu0 %v2686
  %v2697 = vpop.f32.mrf.mxu0
  %v2698 = vadd.f32 0.0, %v2697
  %v2699 = vpop.f32.mrf.mxu0
  %2700 = vdwg.mxu0
  %2701 = vmatpush.bf16.msra.mxu0 0
  %2702 = vmatpush.bf16.msra.mxu0 0
  %2703 = vmatpush.bf16.msra.mxu0 0
  %2704 = vmatpush.bf16.msra.mxu0 0
  %2705 = vmatpush.bf16.msra.mxu0 %v2676
  %2706 = vmatpush.bf16.msra.mxu0 %v2674
  %2707 = vmatpush.bf16.msra.mxu0 %v2672
  %2708 = vmatpush.bf16.msra.mxu0 %v2670
  %2709 = vmatmul.bf16.gmra.mxu0 %v2686
  %v2710 = vpop.f32.mrf.mxu0
  %v2711 = vadd.f32 0.0, %v2710
  %v2712 = vpop.f32.mrf.mxu0
  %2713 = vdwg.mxu0
  %v2716 = vrot.slane %v2698, 6
  %v2717 = vrot.slane %v2711, 6
  %v2720 = vadd.f32 %v2633, %v2716
  %v2721 = vadd.f32 %v2634, %v2717
  %v2722 = vtanh.pop %v2720
  %v2723 = vtanh.pop %v2721
  %v2724 = vxor.u32 %v2720, 2147483648
  %v2725 = vxor.u32 %v2721, 2147483648
  %v2726 = vmul.f32 %v2724, 1.442695
  %v2727 = vpow.pop %v2726
  %v2728 = vmul.f32 %v2725, 1.442695
  %v2729 = vpow.pop %v2728
  %v2730 = vadd.f32 %v2727, 1.0
  %v2731 = vadd.f32 %v2729, 1.0
  %v2732 = vrcp.pop %v2730
  %v2733 = vmul.f32 %v2730, %v2732
  %v2734 = vsub.f32 1.0, %v2733
  %v2735 = vmul.f32 %v2732, %v2734
  %v2736 = vadd.f32 %v2732, %v2735
  %vm2737 = vweird.f32 %v2730
  %vm2738 = vweird.f32 %v2732
  %vm2739 = vmor %vm2737, %vm2738
  %v2740 = vsel %vm2739, %v2732, %v2736
  %v2741 = vand.u32 2147483647, %v2730
  %vm2742 = vcmp.eq.f32.partialorder %v2741, 8.507059e+37
  %v2743 = vand.u32 %v2730, 2147483648
  %v2744 = vor.u32 1.1754944e-38, %v2743
  %v2745 = vsel %vm2742, %v2744, %v2740
  %v2746 = vmul.f32 1.0, %v2745
  %v2747 = vrcp.pop %v2731
  %v2748 = vmul.f32 %v2731, %v2747
  %v2749 = vsub.f32 1.0, %v2748
  %v2750 = vmul.f32 %v2747, %v2749
  %v2751 = vadd.f32 %v2747, %v2750
  %vm2752 = vweird.f32 %v2731
  %vm2753 = vweird.f32 %v2747
  %vm2754 = vmor %vm2752, %vm2753
  %v2755 = vsel %vm2754, %v2747, %v2751
  %v2756 = vand.u32 2147483647, %v2731
  %vm2757 = vcmp.eq.f32.partialorder %v2756, 8.507059e+37
  %v2758 = vand.u32 %v2731, 2147483648
  %v2759 = vor.u32 1.1754944e-38, %v2758
  %v2760 = vsel %vm2757, %v2759, %v2755
  %v2761 = vmul.f32 1.0, %v2760
  %v2762 = vsel %vm602, %v2722, %v2746
  %v2763 = vsel %vm603, %v2723, %v2761
  %v2764 = vld [vmem:[#allocation4] sm:$0x3]
  %v2766 = vrot.slane %v2764, 6
  %2767 = vrot.lane.b32.xlu0 %v2766, 64
  %v2768 = vpop.permute.xlu0 %2767
  %v2770 = vmul.f32 %v2762, %v2768
  %v2771 = vmul.f32 %v2762, %v2763
  %2773 = vrot.lane.b32.xlu0 %v2771, 64
  %v2774 = vpop.permute.xlu0 %2773
  %v2776 = vadd.f32 %v2770, %v2774
  %v2777 = vtanh.pop %v2776
  %v2778 = vmul.f32 %v2763, %v2777
  %2780 = vrot.lane.b32.xlu0 %v2776, 64
  %v2781 = vpop.permute.xlu0 %2780
  %2783 = vst.msk [vmem:[#allocation4 - $0x2] sm:$0xc] %vm905, %v2781
  %2785 = vrot.lane.b32.xlu0 %v2778, 64
  %v2786 = vpop.permute.xlu0 %2785
  %2788 = vst.msk [vmem:[#allocation3 - $0x2] sm:$0xc] %vm905, %v2786
  %s2789 = scalar_lea.vmem %s4, 26
  %2790 = vst.msk [vmem:[%s2789 - $0x2] sm:$0xc] %vm905, %v2786
  %v2791 = vld [vmem:[#allocation2 + $0x30] sm:$0x30]
  %v2792 = vld [vmem:[#allocation2 + $0x38] sm:$0x30]
  %v2793 = vld [vmem:[#allocation3] sm:$0x3]
  %v2794 = vpack.c.bf16 %v2793, %v2793
  %v2795 = vld [vmem:[%s2] sm:$0xff]
  %v2796 = vld [vmem:[%s2 + $0x8] sm:$0xff]
  %v2797 = vld [vmem:[%s2 + $0x10] sm:$0xff]
  %v2798 = vld [vmem:[%s2 + $0x18] sm:$0xff]
  %v2799 = vld [vmem:[%s2 + $0x20] sm:$0xff]
  %v2800 = vld [vmem:[%s2 + $0x28] sm:$0xff]
  %v2801 = vld [vmem:[%s2 + $0x30] sm:$0xff]
  %v2802 = vld [vmem:[%s2 + $0x38] sm:$0xff]
  %v2811 = vunpack.c.l.b16 %v2795
  %v2812 = vunpack.c.h.b16 %v2795
  %v2813 = vunpack.c.l.b16 %v2796
  %v2814 = vunpack.c.h.b16 %v2796
  %v2815 = vunpack.c.l.b16 %v2797
  %v2816 = vunpack.c.h.b16 %v2797
  %v2817 = vunpack.c.l.b16 %v2798
  %v2818 = vunpack.c.h.b16 %v2798
  %v2819 = vunpack.c.l.b16 %v2799
  %v2820 = vunpack.c.h.b16 %v2799
  %v2821 = vunpack.c.l.b16 %v2800
  %v2822 = vunpack.c.h.b16 %v2800
  %v2823 = vunpack.c.l.b16 %v2801
  %v2824 = vunpack.c.h.b16 %v2801
  %v2825 = vunpack.c.l.b16 %v2802
  %v2826 = vunpack.c.h.b16 %v2802
  %v2827 = vpack.c.b16 %v2813, %v2811
  %v2828 = vpack.c.b16 %v2814, %v2812
  %v2829 = vpack.c.b16 %v2817, %v2815
  %v2830 = vpack.c.b16 %v2818, %v2816
  %v2831 = vpack.c.b16 %v2821, %v2819
  %v2832 = vpack.c.b16 %v2822, %v2820
  %v2833 = vpack.c.b16 %v2825, %v2823
  %v2834 = vpack.c.b16 %v2826, %v2824
  %v2844 = vsel %vm656, %v2794, 0
  %2846 = vmatpush.bf16.msra.mxu0 0
  %2847 = vmatpush.bf16.msra.mxu0 0
  %2848 = vmatpush.bf16.msra.mxu0 0
  %2849 = vmatpush.bf16.msra.mxu0 0
  %2850 = vmatpush.bf16.msra.mxu0 %v2833
  %2851 = vmatpush.bf16.msra.mxu0 %v2831
  %2852 = vmatpush.bf16.msra.mxu0 %v2829
  %2853 = vmatpush.bf16.msra.mxu0 %v2827
  %2854 = vmatmul.bf16.gmra.mxu0 %v2844
  %v2855 = vpop.f32.mrf.mxu0
  %v2856 = vadd.f32 0.0, %v2855
  %v2857 = vpop.f32.mrf.mxu0
  %2858 = vdwg.mxu0
  %2859 = vmatpush.bf16.msra.mxu0 0
  %2860 = vmatpush.bf16.msra.mxu0 0
  %2861 = vmatpush.bf16.msra.mxu0 0
  %2862 = vmatpush.bf16.msra.mxu0 0
  %2863 = vmatpush.bf16.msra.mxu0 %v2834
  %2864 = vmatpush.bf16.msra.mxu0 %v2832
  %2865 = vmatpush.bf16.msra.mxu0 %v2830
  %2866 = vmatpush.bf16.msra.mxu0 %v2828
  %2867 = vmatmul.bf16.gmra.mxu0 %v2844
  %v2868 = vpop.f32.mrf.mxu0
  %v2869 = vadd.f32 0.0, %v2868
  %v2870 = vpop.f32.mrf.mxu0
  %2871 = vdwg.mxu0
  %v2874 = vrot.slane %v2856, 4
  %v2875 = vrot.slane %v2869, 4
  %v2878 = vadd.f32 %v2791, %v2874
  %v2879 = vadd.f32 %v2792, %v2875
  %v2880 = vtanh.pop %v2878
  %v2881 = vtanh.pop %v2879
  %v2882 = vxor.u32 %v2878, 2147483648
  %v2883 = vxor.u32 %v2879, 2147483648
  %v2884 = vmul.f32 %v2882, 1.442695
  %v2885 = vpow.pop %v2884
  %v2886 = vmul.f32 %v2883, 1.442695
  %v2887 = vpow.pop %v2886
  %v2888 = vadd.f32 %v2885, 1.0
  %v2889 = vadd.f32 %v2887, 1.0
  %v2890 = vrcp.pop %v2888
  %v2891 = vmul.f32 %v2888, %v2890
  %v2892 = vsub.f32 1.0, %v2891
  %v2893 = vmul.f32 %v2890, %v2892
  %v2894 = vadd.f32 %v2890, %v2893
  %vm2895 = vweird.f32 %v2888
  %vm2896 = vweird.f32 %v2890
  %vm2897 = vmor %vm2895, %vm2896
  %v2898 = vsel %vm2897, %v2890, %v2894
  %v2899 = vand.u32 2147483647, %v2888
  %vm2900 = vcmp.eq.f32.partialorder %v2899, 8.507059e+37
  %v2901 = vand.u32 %v2888, 2147483648
  %v2902 = vor.u32 1.1754944e-38, %v2901
  %v2903 = vsel %vm2900, %v2902, %v2898
  %v2904 = vmul.f32 1.0, %v2903
  %v2905 = vrcp.pop %v2889
  %v2906 = vmul.f32 %v2889, %v2905
  %v2907 = vsub.f32 1.0, %v2906
  %v2908 = vmul.f32 %v2905, %v2907
  %v2909 = vadd.f32 %v2905, %v2908
  %vm2910 = vweird.f32 %v2889
  %vm2911 = vweird.f32 %v2905
  %vm2912 = vmor %vm2910, %vm2911
  %v2913 = vsel %vm2912, %v2905, %v2909
  %v2914 = vand.u32 2147483647, %v2889
  %vm2915 = vcmp.eq.f32.partialorder %v2914, 8.507059e+37
  %v2916 = vand.u32 %v2889, 2147483648
  %v2917 = vor.u32 1.1754944e-38, %v2916
  %v2918 = vsel %vm2915, %v2917, %v2913
  %v2919 = vmul.f32 1.0, %v2918
  %v2920 = vsel %vm602, %v2880, %v2904
  %v2921 = vsel %vm603, %v2881, %v2919
  %v2922 = vld [vmem:[#allocation4] sm:$0x3]
  %v2924 = vrot.slane %v2922, 4
  %2925 = vrot.lane.b32.xlu0 %v2924, 64
  %v2926 = vpop.permute.xlu0 %2925
  %v2928 = vmul.f32 %v2920, %v2926
  %v2929 = vmul.f32 %v2920, %v2921
  %2931 = vrot.lane.b32.xlu0 %v2929, 64
  %v2932 = vpop.permute.xlu0 %2931
  %v2934 = vadd.f32 %v2928, %v2932
  %v2935 = vtanh.pop %v2934
  %v2936 = vmul.f32 %v2921, %v2935
  %2938 = vrot.lane.b32.xlu0 %v2934, 64
  %v2939 = vpop.permute.xlu0 %2938
  %2941 = vst.msk [vmem:[#allocation4 - $0x4] sm:$0x30] %vm1064, %v2939
  %2943 = vrot.lane.b32.xlu0 %v2936, 64
  %v2944 = vpop.permute.xlu0 %2943
  %2946 = vst.msk [vmem:[#allocation3 - $0x4] sm:$0x30] %vm1064, %v2944
  %s2947 = scalar_lea.vmem %s4, 28
  %2948 = vst.msk [vmem:[%s2947 - $0x4] sm:$0x30] %vm1064, %v2944
  %v2949 = vld [vmem:[#allocation2 + $0x30] sm:$0xc0]
  %v2950 = vld [vmem:[#allocation2 + $0x38] sm:$0xc0]
  %v2951 = vld [vmem:[#allocation3] sm:$0x3]
  %v2952 = vpack.c.bf16 %v2951, %v2951
  %v2953 = vld [vmem:[%s2] sm:$0xff]
  %v2954 = vld [vmem:[%s2 + $0x8] sm:$0xff]
  %v2955 = vld [vmem:[%s2 + $0x10] sm:$0xff]
  %v2956 = vld [vmem:[%s2 + $0x18] sm:$0xff]
  %v2957 = vld [vmem:[%s2 + $0x20] sm:$0xff]
  %v2958 = vld [vmem:[%s2 + $0x28] sm:$0xff]
  %v2959 = vld [vmem:[%s2 + $0x30] sm:$0xff]
  %v2960 = vld [vmem:[%s2 + $0x38] sm:$0xff]
  %v2969 = vunpack.c.l.b16 %v2953
  %v2970 = vunpack.c.h.b16 %v2953
  %v2971 = vunpack.c.l.b16 %v2954
  %v2972 = vunpack.c.h.b16 %v2954
  %v2973 = vunpack.c.l.b16 %v2955
  %v2974 = vunpack.c.h.b16 %v2955
  %v2975 = vunpack.c.l.b16 %v2956
  %v2976 = vunpack.c.h.b16 %v2956
  %v2977 = vunpack.c.l.b16 %v2957
  %v2978 = vunpack.c.h.b16 %v2957
  %v2979 = vunpack.c.l.b16 %v2958
  %v2980 = vunpack.c.h.b16 %v2958
  %v2981 = vunpack.c.l.b16 %v2959
  %v2982 = vunpack.c.h.b16 %v2959
  %v2983 = vunpack.c.l.b16 %v2960
  %v2984 = vunpack.c.h.b16 %v2960
  %v2985 = vpack.c.b16 %v2971, %v2969
  %v2986 = vpack.c.b16 %v2972, %v2970
  %v2987 = vpack.c.b16 %v2975, %v2973
  %v2988 = vpack.c.b16 %v2976, %v2974
  %v2989 = vpack.c.b16 %v2979, %v2977
  %v2990 = vpack.c.b16 %v2980, %v2978
  %v2991 = vpack.c.b16 %v2983, %v2981
  %v2992 = vpack.c.b16 %v2984, %v2982
  %v3002 = vsel %vm656, %v2952, 0
  %3004 = vmatpush.bf16.msra.mxu0 0
  %3005 = vmatpush.bf16.msra.mxu0 0
  %3006 = vmatpush.bf16.msra.mxu0 0
  %3007 = vmatpush.bf16.msra.mxu0 0
  %3008 = vmatpush.bf16.msra.mxu0 %v2991
  %3009 = vmatpush.bf16.msra.mxu0 %v2989
  %3010 = vmatpush.bf16.msra.mxu0 %v2987
  %3011 = vmatpush.bf16.msra.mxu0 %v2985
  %3012 = vmatmul.bf16.gmra.mxu0 %v3002
  %v3013 = vpop.f32.mrf.mxu0
  %v3014 = vadd.f32 0.0, %v3013
  %v3015 = vpop.f32.mrf.mxu0
  %3016 = vdwg.mxu0
  %3017 = vmatpush.bf16.msra.mxu0 0
  %3018 = vmatpush.bf16.msra.mxu0 0
  %3019 = vmatpush.bf16.msra.mxu0 0
  %3020 = vmatpush.bf16.msra.mxu0 0
  %3021 = vmatpush.bf16.msra.mxu0 %v2992
  %3022 = vmatpush.bf16.msra.mxu0 %v2990
  %3023 = vmatpush.bf16.msra.mxu0 %v2988
  %3024 = vmatpush.bf16.msra.mxu0 %v2986
  %3025 = vmatmul.bf16.gmra.mxu0 %v3002
  %v3026 = vpop.f32.mrf.mxu0
  %v3027 = vadd.f32 0.0, %v3026
  %v3028 = vpop.f32.mrf.mxu0
  %3029 = vdwg.mxu0
  %v3032 = vrot.slane %v3014, 2
  %v3033 = vrot.slane %v3027, 2
  %v3036 = vadd.f32 %v2949, %v3032
  %v3037 = vadd.f32 %v2950, %v3033
  %v3038 = vtanh.pop %v3036
  %v3039 = vtanh.pop %v3037
  %v3040 = vxor.u32 %v3036, 2147483648
  %v3041 = vxor.u32 %v3037, 2147483648
  %v3042 = vmul.f32 %v3040, 1.442695
  %v3043 = vpow.pop %v3042
  %v3044 = vmul.f32 %v3041, 1.442695
  %v3045 = vpow.pop %v3044
  %v3046 = vadd.f32 %v3043, 1.0
  %v3047 = vadd.f32 %v3045, 1.0
  %v3048 = vrcp.pop %v3046
  %v3049 = vmul.f32 %v3046, %v3048
  %v3050 = vsub.f32 1.0, %v3049
  %v3051 = vmul.f32 %v3048, %v3050
  %v3052 = vadd.f32 %v3048, %v3051
  %vm3053 = vweird.f32 %v3046
  %vm3054 = vweird.f32 %v3048
  %vm3055 = vmor %vm3053, %vm3054
  %v3056 = vsel %vm3055, %v3048, %v3052
  %v3057 = vand.u32 2147483647, %v3046
  %vm3058 = vcmp.eq.f32.partialorder %v3057, 8.507059e+37
  %v3059 = vand.u32 %v3046, 2147483648
  %v3060 = vor.u32 1.1754944e-38, %v3059
  %v3061 = vsel %vm3058, %v3060, %v3056
  %v3062 = vmul.f32 1.0, %v3061
  %v3063 = vrcp.pop %v3047
  %v3064 = vmul.f32 %v3047, %v3063
  %v3065 = vsub.f32 1.0, %v3064
  %v3066 = vmul.f32 %v3063, %v3065
  %v3067 = vadd.f32 %v3063, %v3066
  %vm3068 = vweird.f32 %v3047
  %vm3069 = vweird.f32 %v3063
  %vm3070 = vmor %vm3068, %vm3069
  %v3071 = vsel %vm3070, %v3063, %v3067
  %v3072 = vand.u32 2147483647, %v3047
  %vm3073 = vcmp.eq.f32.partialorder %v3072, 8.507059e+37
  %v3074 = vand.u32 %v3047, 2147483648
  %v3075 = vor.u32 1.1754944e-38, %v3074
  %v3076 = vsel %vm3073, %v3075, %v3071
  %v3077 = vmul.f32 1.0, %v3076
  %v3078 = vsel %vm602, %v3038, %v3062
  %v3079 = vsel %vm603, %v3039, %v3077
  %v3080 = vld [vmem:[#allocation4] sm:$0x3]
  %v3082 = vrot.slane %v3080, 2
  %3083 = vrot.lane.b32.xlu0 %v3082, 64
  %v3084 = vpop.permute.xlu0 %3083
  %v3086 = vmul.f32 %v3078, %v3084
  %v3087 = vmul.f32 %v3078, %v3079
  %3089 = vrot.lane.b32.xlu0 %v3087, 64
  %v3090 = vpop.permute.xlu0 %3089
  %v3092 = vadd.f32 %v3086, %v3090
  %v3093 = vtanh.pop %v3092
  %v3094 = vmul.f32 %v3079, %v3093
  %3096 = vrot.lane.b32.xlu0 %v3092, 64
  %v3097 = vpop.permute.xlu0 %3096
  %3099 = vst.msk [vmem:[#allocation4 - $0x6] sm:$0xc0] %vm1223, %v3097
  %3101 = vrot.lane.b32.xlu0 %v3094, 64
  %v3102 = vpop.permute.xlu0 %3101
  %3104 = vst.msk [vmem:[#allocation3 - $0x6] sm:$0xc0] %vm1223, %v3102
  %s3105 = scalar_lea.vmem %s4, 30
  %3106 = vst.msk [vmem:[%s3105 - $0x6] sm:$0xc0] %vm1223, %v3102
  // Predicated region
  $region18: #{bidaf_forward.14} parent=0 // pred_check
    _
  $region19: #{bidaf_forward.14} parent=0 // pred_check_branch
    %3108 = sbr.rel (0) target = $region21
  $region20: #{bidaf_forward.14} parent=0 // pred_region
    _
  $region21: #{bidaf_forward.14} parent=0 // pred_fallthru
    _
  // Predicated region
  $region22: #{bidaf_forward.14} parent=0 // pred_check
    _
  $region23: #{bidaf_forward.14} parent=0 // pred_check_branch
    %3110 = sbr.rel (0) target = $region25
  $region24: #{bidaf_forward.14} parent=0 // pred_region
    _
  $region25: #{bidaf_forward.14} parent=0 // pred_fallthru
    _

</llo_original>
